<compile_context>
chip_gen: v7x
topology: tpu7x:2x2x1
jax: 0.10.0
libtpu: 0.0.40
codegen_flags: <defaults>
</compile_context>

<pallas_src>
import functools

import jax
import jax.numpy as jnp
from jax import lax
from jax.experimental import pallas as pl
from jax.experimental.pallas import tpu as pltpu

_BN_EPS = 1e-5
_VMEM_LIMIT = 32 * 1024 * 1024  # safe on v5e/v6e (128 MiB) and v7x (64 MiB)


# ---------------------------------------------------------------------------
# Kernel 1: 3x3 conv (stride 1, pad 1, no bias) for one image + partial BN stats
# ---------------------------------------------------------------------------
def _conv_kernel_factory(H, W, Cin, Cout, compute_dtype):
    dot_kwargs = {}
    if compute_dtype == jnp.float32:
        dot_kwargs["precision"] = lax.Precision.HIGHEST

    def kernel(xpad_ref, w_ref, y_ref, stats_ref, xcol_ref):
        # Build the im2col tile for this image entirely in VMEM (no HBM copy).
        # xcol[:, :, k*Cin:(k+1)*Cin] = shifted (H, W, Cin) halo window for tap k.
        for k in range(9):
            dy, dx = divmod(k, 3)
            xcol_ref[:, :, k * Cin:(k + 1) * Cin] = xpad_ref[0, dy:dy + H, dx:dx + W, :]

        # Single K = 9*Cin matmul on the MXU (f32 accumulation).
        xcol = xcol_ref[...].reshape(H * W, 9 * Cin)
        acc = jnp.dot(xcol, w_ref[...], preferred_element_type=jnp.float32, **dot_kwargs)

        # Per-tile partial BatchNorm statistics (combined across the grid outside;
        # a persistent-scratch accumulator would break "parallel" megacore sharding).
        stats_ref[:, 0:1, :] = jnp.sum(acc, axis=0, keepdims=True)[None]
        stats_ref[:, 1:2, :] = jnp.sum(acc * acc, axis=0, keepdims=True)[None]

        y_ref[...] = acc.reshape(1, H * W, Cout).astype(y_ref.dtype)

    return kernel


def conv3x3(x_nhwc, w_oihw, compute_dtype):
    """Returns (conv output (N, H*W, Cout) in compute_dtype, partial stats (N, 2, Cout) f32)."""
    N, H, W, Cin = x_nhwc.shape
    Cout = w_oihw.shape[0]

    x_pad = jnp.pad(x_nhwc.astype(compute_dtype), ((0, 0), (1, 1), (1, 1), (0, 0)))
    w = jnp.transpose(w_oihw, (2, 3, 1, 0)).reshape(9 * Cin, Cout).astype(compute_dtype)

    isz = jnp.dtype(compute_dtype).itemsize
    cost = pl.CostEstimate(
        flops=2 * N * H * W * 9 * Cin * Cout,
        transcendentals=0,
        bytes_accessed=int(x_pad.size * isz + w.size * isz
                           + N * H * W * Cout * isz + N * 2 * Cout * 4),
    )

    y, stats = pl.pallas_call(
        _conv_kernel_factory(H, W, Cin, Cout, compute_dtype),
        grid=(N,),
        in_specs=[
            pl.BlockSpec((1, H + 2, W + 2, Cin), lambda n: (n, 0, 0, 0)),
            pl.BlockSpec((9 * Cin, Cout), lambda n: (0, 0)),
        ],
        out_specs=(
            pl.BlockSpec((1, H * W, Cout), lambda n: (n, 0, 0)),
            pl.BlockSpec((1, 2, Cout), lambda n: (n, 0, 0)),
        ),
        out_shape=(
            jax.ShapeDtypeStruct((N, H * W, Cout), compute_dtype),
            jax.ShapeDtypeStruct((N, 2, Cout), jnp.float32),
        ),
        scratch_shapes=[pltpu.VMEM((H, W, 9 * Cin), compute_dtype)],
        compiler_params=pltpu.CompilerParams(
            dimension_semantics=("parallel",),
            vmem_limit_bytes=_VMEM_LIMIT,
        ),
        cost_estimate=cost,
    )(x_pad, w)
    # TODO(synk): for very large H*W, additionally tile H (halo tiles) inside each image.
    return y, stats


# ---------------------------------------------------------------------------
# Kernel 2: lane-dense BN affine [+ residual] + ReLU
# ---------------------------------------------------------------------------
def _bn_act_kernel_factory(with_residual):
    if with_residual:
        def kernel(y_ref, scale_ref, shift_ref, res_ref, out_ref):
            out = y_ref[...].astype(jnp.float32) * scale_ref[...] + shift_ref[...]
            out = out + res_ref[...].astype(jnp.float32)
            out_ref[...] = jnp.maximum(out, 0.0).astype(out_ref.dtype)
    else:
        def kernel(y_ref, scale_ref, shift_ref, out_ref):
            out = y_ref[...].astype(jnp.float32) * scale_ref[...] + shift_ref[...]
            out_ref[...] = jnp.maximum(out, 0.0).astype(out_ref.dtype)
    return kernel


def bn_act(y_conv, scale, shift, *, H, W, residual=None, out_dtype):
    """relu(y*scale + shift [+ residual]) on lane-dense (N, H, W*Cout) tiles."""
    N = y_conv.shape[0]
    Cout = scale.shape[0]
    WC = W * Cout
    y_ld = y_conv.reshape(N, H, WC)                     # free: identical HBM layout
    scale_t = jnp.tile(scale, W).reshape(1, WC).astype(jnp.float32)
    shift_t = jnp.tile(shift, W).reshape(1, WC).astype(jnp.float32)

    ins = [y_ld, scale_t, shift_t]
    in_specs = [
        pl.BlockSpec((1, H, WC), lambda n: (n, 0, 0)),
        pl.BlockSpec((1, WC), lambda n: (0, 0)),
        pl.BlockSpec((1, WC), lambda n: (0, 0)),
    ]
    if residual is not None:
        ins.append(residual)
        in_specs.append(pl.BlockSpec((1, H, WC), lambda n: (n, 0, 0)))

    bytes_accessed = sum(int(a.size * a.dtype.itemsize) for a in ins) \
        + N * H * WC * jnp.dtype(out_dtype).itemsize
    cost = pl.CostEstimate(
        flops=N * H * WC * (3 + (1 if residual is not None else 0)),
        transcendentals=0,
        bytes_accessed=int(bytes_accessed),
    )

    return pl.pallas_call(
        _bn_act_kernel_factory(residual is not None),
        grid=(N,),
        in_specs=in_specs,
        out_specs=pl.BlockSpec((1, H, WC), lambda n: (n, 0, 0)),
        out_shape=jax.ShapeDtypeStruct((N, H, WC), out_dtype),
        compiler_params=pltpu.CompilerParams(
            dimension_semantics=("parallel",),
            vmem_limit_bytes=_VMEM_LIMIT,
        ),
        cost_estimate=cost,
    )(*ins)


def _bn_scale_shift(stats, gamma, beta, count):
    """Combine per-tile partial sums into the global (scale, shift) affine."""
    total = jnp.sum(stats[:, 0, :], axis=0)
    total_sq = jnp.sum(stats[:, 1, :], axis=0)
    mean = total / count
    var = jnp.maximum(total_sq / count - mean * mean, 0.0)   # biased, like PyTorch train mode
    scale = gamma * lax.rsqrt(var + _BN_EPS)
    shift = beta - mean * scale
    return scale, shift


# ---------------------------------------------------------------------------
# Full residual block forward
# ---------------------------------------------------------------------------
@functools.partial(jax.jit, static_argnames=("compute_dtype",))
def residual_block_forward(x_nchw, params, compute_dtype=jnp.float32):
    """Equivalent of ResidualBlock.forward with shortcut=None, stride=1."""
    N, C, H, W = x_nchw.shape
    assert params["w1"].shape == (C, C, 3, 3) and params["w2"].shape == (C, C, 3, 3)
    x_nhwc = jnp.transpose(x_nchw, (0, 2, 3, 1))
    count = N * H * W

    # left branch: conv1 + bn1 + relu
    y1c, st1 = conv3x3(x_nhwc, params["w1"], compute_dtype)
    s1, sh1 = _bn_scale_shift(st1, params["g1"], params["b1"], count)
    y1 = bn_act(y1c, s1, sh1, H=H, W=W, residual=None, out_dtype=compute_dtype)

    # conv2 + bn2, fused identity-residual add + final relu
    y2c, st2 = conv3x3(y1.reshape(N, H, W, C), params["w2"], compute_dtype)
    s2, sh2 = _bn_scale_shift(st2, params["g2"], params["b2"], count)
    res_ld = x_nhwc.reshape(N, H, W * C)
    out = bn_act(y2c, s2, sh2, H=H, W=W, residual=res_ld, out_dtype=x_nchw.dtype)

    return jnp.transpose(out.reshape(N, H, W, C), (0, 3, 1, 2))
    # TODO(synk): strided / projection shortcuts (self.right != None) not implemented.


# ---------------------------------------------------------------------------
# Pure-JAX reference (XLA conv, training-mode BN) for correctness check
# ---------------------------------------------------------------------------
def _reference(x_nchw, params):
    def conv(x, w):
        return lax.conv_general_dilated(
            x, w, (1, 1), ((1, 1), (1, 1)),
            dimension_numbers=("NCHW", "OIHW", "NCHW"),
            precision=lax.Precision.HIGHEST)

    def bn(x, g, b):
        mean = jnp.mean(x, axis=(0, 2, 3), keepdims=True)
        var = jnp.mean((x - mean) ** 2, axis=(0, 2, 3), keepdims=True)
        return (x - mean) / jnp.sqrt(var + _BN_EPS) * g[None, :, None, None] \
            + b[None, :, None, None]

    out = jax.nn.relu(bn(conv(x_nchw, params["w1"]), params["g1"], params["b1"]))
    out = bn(conv(out, params["w2"]), params["g2"], params["b2"])
    return jax.nn.relu(out + x_nchw)


if __name__ == "__main__":
    # inchannel == outchannel (identity shortcut), stride = 1
    N, C, H, W = 2, 32, 16, 16
    keys = jax.random.split(jax.random.PRNGKey(0), 7)
    x = jax.random.normal(keys[0], (N, C, H, W), jnp.float32)
    params = dict(
        w1=jax.random.normal(keys[1], (C, C, 3, 3), jnp.float32) * 0.1,
        g1=jax.random.uniform(keys[2], (C,), jnp.float32, 0.5, 1.5),
        b1=jax.random.normal(keys[3], (C,), jnp.float32) * 0.1,
        w2=jax.random.normal(keys[4], (C, C, 3, 3), jnp.float32) * 0.1,
        g2=jax.random.uniform(keys[5], (C,), jnp.float32, 0.5, 1.5),
        b2=jax.random.normal(keys[6], (C,), jnp.float32) * 0.1,
    )

    ref = jax.block_until_ready(_reference(x, params))

    # f32 path: tight check (typical error ~1e-5 with f32 accumulation).
    out_f32 = jax.block_until_ready(
        residual_block_forward(x, params, compute_dtype=jnp.float32))
    assert out_f32.shape == (N, C, H, W), out_f32.shape
    err_f32 = float(jnp.max(jnp.abs(out_f32 - ref)))
    assert err_f32 < 1e-3, f"f32 path max abs error too large: {err_f32}"

    # bf16 MXU-operand path: looser, normalized check.
    out_bf16 = jax.block_until_ready(
        residual_block_forward(x, params, compute_dtype=jnp.bfloat16))
    err_bf16 = float(jnp.max(jnp.abs(out_bf16 - ref) / (1.0 + jnp.abs(ref))))
    assert err_bf16 < 5e-2, f"bf16 path normalized error too large: {err_bf16}"

    print("KERNEL_OK")
</pallas_src>

<mosaic_0001>
module attributes {stable_mosaic.version = 11 : i64} {
  func.func @kernel(%arg0: i32, %arg1: memref<1x18x18x32xf32, #tpu.memory_space<vmem>>, %arg2: memref<288x32xf32, #tpu.memory_space<vmem>>, %arg3: memref<1x256x32xf32, #tpu.memory_space<vmem>>, %arg4: memref<1x2x32xf32, #tpu.memory_space<vmem>>, %arg5: memref<16x16x288xf32, #tpu.memory_space<vmem>>) attributes {dimension_semantics = [#tpu.dimension_semantics<parallel>], iteration_bounds = array<i64: 2>, scalar_prefetch = 0 : i64, scratch_operands = 1 : i64, tpu.core_type = #tpu.core_type<tc>, window_params = [{transform_indices = @transform_0, window_bounds = array<i64: 1, 18, 18, 32>}, {pipeline_mode = #tpu.pipeline_mode<synchronous>, transform_indices = @transform_1, window_bounds = array<i64: 288, 32>}, {transform_indices = @transform_2, window_bounds = array<i64: 1, 256, 32>}, {transform_indices = @transform_3, window_bounds = array<i64: 1, 2, 32>}]} {
    %c0 = arith.constant 0 : index
    %c0_0 = arith.constant 0 : index
    %c0_1 = arith.constant 0 : index
    %c0_2 = arith.constant 0 : index
    %0 = vector.load %arg1[%c0, %c0_0, %c0_1, %c0_2] : memref<1x18x18x32xf32, #tpu.memory_space<vmem>>, vector<1x16x16x32xf32>
    %1 = vector.shape_cast %0 : vector<1x16x16x32xf32> to vector<16x16x32xf32>
    %c0_3 = arith.constant 0 : index
    %c0_4 = arith.constant 0 : index
    %c0_5 = arith.constant 0 : index
    %2 = vector.load %arg5[%c0_3, %c0_4, %c0_5] : memref<16x16x288xf32, #tpu.memory_space<vmem>>, vector<16x16x32xf32>
    tpu.vector_store %arg5[%c0_3, %c0_4, %c0_5], %1 {strides = array<i32>} : memref<16x16x288xf32, #tpu.memory_space<vmem>>, vector<16x16x32xf32>,
    %c0_6 = arith.constant 0 : index
    %c0_7 = arith.constant 0 : index
    %c1 = arith.constant 1 : index
    %c0_8 = arith.constant 0 : index
    %3 = vector.load %arg1[%c0_6, %c0_7, %c1, %c0_8] : memref<1x18x18x32xf32, #tpu.memory_space<vmem>>, vector<1x16x16x32xf32>
    %4 = vector.shape_cast %3 : vector<1x16x16x32xf32> to vector<16x16x32xf32>
    %c0_9 = arith.constant 0 : index
    %c0_10 = arith.constant 0 : index
    %c32 = arith.constant 32 : index
    %5 = vector.load %arg5[%c0_9, %c0_10, %c32] : memref<16x16x288xf32, #tpu.memory_space<vmem>>, vector<16x16x32xf32>
    tpu.vector_store %arg5[%c0_9, %c0_10, %c32], %4 {strides = array<i32>} : memref<16x16x288xf32, #tpu.memory_space<vmem>>, vector<16x16x32xf32>,
    %c0_11 = arith.constant 0 : index
    %c0_12 = arith.constant 0 : index
    %c2 = arith.constant 2 : index
    %c0_13 = arith.constant 0 : index
    %6 = vector.load %arg1[%c0_11, %c0_12, %c2, %c0_13] : memref<1x18x18x32xf32, #tpu.memory_space<vmem>>, vector<1x16x16x32xf32>
    %7 = vector.shape_cast %6 : vector<1x16x16x32xf32> to vector<16x16x32xf32>
    %c0_14 = arith.constant 0 : index
    %c0_15 = arith.constant 0 : index
    %c64 = arith.constant 64 : index
    %8 = vector.load %arg5[%c0_14, %c0_15, %c64] : memref<16x16x288xf32, #tpu.memory_space<vmem>>, vector<16x16x32xf32>
    tpu.vector_store %arg5[%c0_14, %c0_15, %c64], %7 {strides = array<i32>} : memref<16x16x288xf32, #tpu.memory_space<vmem>>, vector<16x16x32xf32>,
    %c0_16 = arith.constant 0 : index
    %c1_17 = arith.constant 1 : index
    %c0_18 = arith.constant 0 : index
    %c0_19 = arith.constant 0 : index
    %9 = vector.load %arg1[%c0_16, %c1_17, %c0_18, %c0_19] : memref<1x18x18x32xf32, #tpu.memory_space<vmem>>, vector<1x16x16x32xf32>
    %10 = vector.shape_cast %9 : vector<1x16x16x32xf32> to vector<16x16x32xf32>
    %c0_20 = arith.constant 0 : index
    %c0_21 = arith.constant 0 : index
    %c96 = arith.constant 96 : index
    %11 = vector.load %arg5[%c0_20, %c0_21, %c96] : memref<16x16x288xf32, #tpu.memory_space<vmem>>, vector<16x16x32xf32>
    tpu.vector_store %arg5[%c0_20, %c0_21, %c96], %10 {strides = array<i32>} : memref<16x16x288xf32, #tpu.memory_space<vmem>>, vector<16x16x32xf32>,
    %c0_22 = arith.constant 0 : index
    %c1_23 = arith.constant 1 : index
    %c1_24 = arith.constant 1 : index
    %c0_25 = arith.constant 0 : index
    %12 = vector.load %arg1[%c0_22, %c1_23, %c1_24, %c0_25] : memref<1x18x18x32xf32, #tpu.memory_space<vmem>>, vector<1x16x16x32xf32>
    %13 = vector.shape_cast %12 : vector<1x16x16x32xf32> to vector<16x16x32xf32>
    %c0_26 = arith.constant 0 : index
    %c0_27 = arith.constant 0 : index
    %c128 = arith.constant 128 : index
    %14 = vector.load %arg5[%c0_26, %c0_27, %c128] : memref<16x16x288xf32, #tpu.memory_space<vmem>>, vector<16x16x32xf32>
    tpu.vector_store %arg5[%c0_26, %c0_27, %c128], %13 {strides = array<i32>} : memref<16x16x288xf32, #tpu.memory_space<vmem>>, vector<16x16x32xf32>,
    %c0_28 = arith.constant 0 : index
    %c1_29 = arith.constant 1 : index
    %c2_30 = arith.constant 2 : index
    %c0_31 = arith.constant 0 : index
    %15 = vector.load %arg1[%c0_28, %c1_29, %c2_30, %c0_31] : memref<1x18x18x32xf32, #tpu.memory_space<vmem>>, vector<1x16x16x32xf32>
    %16 = vector.shape_cast %15 : vector<1x16x16x32xf32> to vector<16x16x32xf32>
    %c0_32 = arith.constant 0 : index
    %c0_33 = arith.constant 0 : index
    %c160 = arith.constant 160 : index
    %17 = vector.load %arg5[%c0_32, %c0_33, %c160] : memref<16x16x288xf32, #tpu.memory_space<vmem>>, vector<16x16x32xf32>
    tpu.vector_store %arg5[%c0_32, %c0_33, %c160], %16 {strides = array<i32>} : memref<16x16x288xf32, #tpu.memory_space<vmem>>, vector<16x16x32xf32>,
    %c0_34 = arith.constant 0 : index
    %c2_35 = arith.constant 2 : index
    %c0_36 = arith.constant 0 : index
    %c0_37 = arith.constant 0 : index
    %18 = vector.load %arg1[%c0_34, %c2_35, %c0_36, %c0_37] : memref<1x18x18x32xf32, #tpu.memory_space<vmem>>, vector<1x16x16x32xf32>
    %19 = vector.shape_cast %18 : vector<1x16x16x32xf32> to vector<16x16x32xf32>
    %c0_38 = arith.constant 0 : index
    %c0_39 = arith.constant 0 : index
    %c192 = arith.constant 192 : index
    %20 = vector.load %arg5[%c0_38, %c0_39, %c192] : memref<16x16x288xf32, #tpu.memory_space<vmem>>, vector<16x16x32xf32>
    tpu.vector_store %arg5[%c0_38, %c0_39, %c192], %19 {strides = array<i32>} : memref<16x16x288xf32, #tpu.memory_space<vmem>>, vector<16x16x32xf32>,
    %c0_40 = arith.constant 0 : index
    %c2_41 = arith.constant 2 : index
    %c1_42 = arith.constant 1 : index
    %c0_43 = arith.constant 0 : index
    %21 = vector.load %arg1[%c0_40, %c2_41, %c1_42, %c0_43] : memref<1x18x18x32xf32, #tpu.memory_space<vmem>>, vector<1x16x16x32xf32>
    %22 = vector.shape_cast %21 : vector<1x16x16x32xf32> to vector<16x16x32xf32>
    %c0_44 = arith.constant 0 : index
    %c0_45 = arith.constant 0 : index
    %c224 = arith.constant 224 : index
    %23 = vector.load %arg5[%c0_44, %c0_45, %c224] : memref<16x16x288xf32, #tpu.memory_space<vmem>>, vector<16x16x32xf32>
    tpu.vector_store %arg5[%c0_44, %c0_45, %c224], %22 {strides = array<i32>} : memref<16x16x288xf32, #tpu.memory_space<vmem>>, vector<16x16x32xf32>,
    %c0_46 = arith.constant 0 : index
    %c2_47 = arith.constant 2 : index
    %c2_48 = arith.constant 2 : index
    %c0_49 = arith.constant 0 : index
    %24 = vector.load %arg1[%c0_46, %c2_47, %c2_48, %c0_49] : memref<1x18x18x32xf32, #tpu.memory_space<vmem>>, vector<1x16x16x32xf32>
    %25 = vector.shape_cast %24 : vector<1x16x16x32xf32> to vector<16x16x32xf32>
    %c0_50 = arith.constant 0 : index
    %c0_51 = arith.constant 0 : index
    %c256 = arith.constant 256 : index
    %26 = vector.load %arg5[%c0_50, %c0_51, %c256] : memref<16x16x288xf32, #tpu.memory_space<vmem>>, vector<16x16x32xf32>
    tpu.vector_store %arg5[%c0_50, %c0_51, %c256], %25 {strides = array<i32>} : memref<16x16x288xf32, #tpu.memory_space<vmem>>, vector<16x16x32xf32>,
    %c0_52 = arith.constant 0 : index
    %c0_53 = arith.constant 0 : index
    %c0_54 = arith.constant 0 : index
    %27 = vector.load %arg5[%c0_52, %c0_53, %c0_54] : memref<16x16x288xf32, #tpu.memory_space<vmem>>, vector<16x16x288xf32>
    %28 = vector.shape_cast %27 : vector<16x16x288xf32> to vector<256x288xf32>
    %c0_55 = arith.constant 0 : index
    %c0_56 = arith.constant 0 : index
    %29 = vector.load %arg2[%c0_55, %c0_56] : memref<288x32xf32, #tpu.memory_space<vmem>>, vector<288x32xf32>
    %cst = arith.constant dense<0.000000e+00> : vector<256x32xf32>
    %30 = tpu.matmul %28, %29, %cst {dimension_numbers = #tpu.dot_dimension_numbers<[1], [0], [0], [1], [0, 0, 1, 1], [], []>, precision = #tpu.contract_precision<fp32>} : vector<256x288xf32>, vector<288x32xf32>, vector<256x32xf32> -> vector<256x32xf32>
    %cst_57 = arith.constant dense<0.000000e+00> : vector<32xf32>
    %31 = vector.multi_reduction <add>, %30, %cst_57 [0] : vector<256x32xf32> to vector<32xf32>
    %32 = vector.shape_cast %31 : vector<32xf32> to vector<1x32xf32>
    %33 = vector.shape_cast %32 : vector<1x32xf32> to vector<1x1x32xf32>
    %c0_58 = arith.constant 0 : index
    %c0_59 = arith.constant 0 : index
    %c0_60 = arith.constant 0 : index
    %34 = vector.load %arg4[%c0_58, %c0_59, %c0_60] : memref<1x2x32xf32, #tpu.memory_space<vmem>>, vector<1x1x32xf32>
    tpu.vector_store %arg4[%c0_58, %c0_59, %c0_60], %33 {strides = array<i32>} : memref<1x2x32xf32, #tpu.memory_space<vmem>>, vector<1x1x32xf32>,
    %35 = arith.mulf %30, %30 : vector<256x32xf32>
    %cst_61 = arith.constant dense<0.000000e+00> : vector<32xf32>
    %36 = vector.multi_reduction <add>, %35, %cst_61 [0] : vector<256x32xf32> to vector<32xf32>
    %37 = vector.shape_cast %36 : vector<32xf32> to vector<1x32xf32>
    %38 = vector.shape_cast %37 : vector<1x32xf32> to vector<1x1x32xf32>
    %c0_62 = arith.constant 0 : index
    %c1_63 = arith.constant 1 : index
    %c0_64 = arith.constant 0 : index
    %39 = vector.load %arg4[%c0_62, %c1_63, %c0_64] : memref<1x2x32xf32, #tpu.memory_space<vmem>>, vector<1x1x32xf32>
    tpu.vector_store %arg4[%c0_62, %c1_63, %c0_64], %38 {strides = array<i32>} : memref<1x2x32xf32, #tpu.memory_space<vmem>>, vector<1x1x32xf32>,
    %40 = vector.shape_cast %30 : vector<256x32xf32> to vector<1x256x32xf32>
    %c0_65 = arith.constant 0 : index
    %c0_66 = arith.constant 0 : index
    %c0_67 = arith.constant 0 : index
    %41 = vector.load %arg3[%c0_65, %c0_66, %c0_67] : memref<1x256x32xf32, #tpu.memory_space<vmem>>, vector<1x256x32xf32>
    tpu.vector_store %arg3[%c0_65, %c0_66, %c0_67], %40 {strides = array<i32>} : memref<1x256x32xf32, #tpu.memory_space<vmem>>, vector<1x256x32xf32>,
    return
  }
  func.func @transform_0(%arg0: i32) -> (i32, i32, i32, i32) {
    %c0_i32 = arith.constant 0 : i32
    %c0_i32_0 = arith.constant 0 : i32
    %c0_i32_1 = arith.constant 0 : i32
    %c0_i32_2 = arith.constant 0 : i32
    return %arg0, %c0_i32, %c0_i32_0, %c0_i32_1 : i32, i32, i32, i32
  }
  func.func @transform_1(%arg0: i32) -> (i32, i32) {
    %c0_i32 = arith.constant 0 : i32
    %c0_i32_0 = arith.constant 0 : i32
    %c0_i32_1 = arith.constant 0 : i32
    return %c0_i32, %c0_i32_0 : i32, i32
  }
  func.func @transform_2(%arg0: i32) -> (i32, i32, i32) {
    %c0_i32 = arith.constant 0 : i32
    %c0_i32_0 = arith.constant 0 : i32
    %c0_i32_1 = arith.constant 0 : i32
    return %arg0, %c0_i32, %c0_i32_0 : i32, i32, i32
  }
  func.func @transform_3(%arg0: i32) -> (i32, i32, i32) {
    %c0_i32 = arith.constant 0 : i32
    %c0_i32_0 = arith.constant 0 : i32
    %c0_i32_1 = arith.constant 0 : i32
    return %arg0, %c0_i32, %c0_i32_0 : i32, i32, i32
  }
}

module attributes {stable_mosaic.version = 11 : i64} {
  func.func @kernel(%arg0: i32, %arg1: memref<1x16x512xf32, #tpu.memory_space<vmem>>, %arg2: memref<1x512xf32, #tpu.memory_space<vmem>>, %arg3: memref<1x512xf32, #tpu.memory_space<vmem>>, %arg4: memref<1x16x512xf32, #tpu.memory_space<vmem>>) attributes {dimension_semantics = [#tpu.dimension_semantics<parallel>], iteration_bounds = array<i64: 2>, scalar_prefetch = 0 : i64, scratch_operands = 0 : i64, tpu.core_type = #tpu.core_type<tc>, window_params = [{transform_indices = @transform_0, window_bounds = array<i64: 1, 16, 512>}, {pipeline_mode = #tpu.pipeline_mode<synchronous>, transform_indices = @transform_1, window_bounds = array<i64: 1, 512>}, {pipeline_mode = #tpu.pipeline_mode<synchronous>, transform_indices = @transform_2, window_bounds = array<i64: 1, 512>}, {transform_indices = @transform_3, window_bounds = array<i64: 1, 16, 512>}]} {
    %c0 = arith.constant 0 : index
    %c0_0 = arith.constant 0 : index
    %c0_1 = arith.constant 0 : index
    %0 = vector.load %arg1[%c0, %c0_0, %c0_1] : memref<1x16x512xf32, #tpu.memory_space<vmem>>, vector<1x16x512xf32>
    %c0_2 = arith.constant 0 : index
    %c0_3 = arith.constant 0 : index
    %1 = vector.load %arg2[%c0_2, %c0_3] : memref<1x512xf32, #tpu.memory_space<vmem>>, vector<1x512xf32>
    %2 = vector.shape_cast %1 : vector<1x512xf32> to vector<1x1x512xf32>
    %3 = vector.broadcast %2 : vector<1x1x512xf32> to vector<1x16x512xf32>
    %4 = arith.mulf %0, %3 : vector<1x16x512xf32>
    %c0_4 = arith.constant 0 : index
    %c0_5 = arith.constant 0 : index
    %5 = vector.load %arg3[%c0_4, %c0_5] : memref<1x512xf32, #tpu.memory_space<vmem>>, vector<1x512xf32>
    %6 = vector.shape_cast %5 : vector<1x512xf32> to vector<1x1x512xf32>
    %7 = vector.broadcast %6 : vector<1x1x512xf32> to vector<1x16x512xf32>
    %8 = arith.addf %4, %7 : vector<1x16x512xf32>
    %cst = arith.constant 0.000000e+00 : f32
    %9 = vector.broadcast %cst : f32 to vector<1x16x512xf32>
    %10 = arith.maximumf %8, %9 : vector<1x16x512xf32>
    %c0_6 = arith.constant 0 : index
    %c0_7 = arith.constant 0 : index
    %c0_8 = arith.constant 0 : index
    %11 = vector.load %arg4[%c0_6, %c0_7, %c0_8] : memref<1x16x512xf32, #tpu.memory_space<vmem>>, vector<1x16x512xf32>
    tpu.vector_store %arg4[%c0_6, %c0_7, %c0_8], %10 {strides = array<i32>} : memref<1x16x512xf32, #tpu.memory_space<vmem>>, vector<1x16x512xf32>,
    return
  }
  func.func @transform_0(%arg0: i32) -> (i32, i32, i32) {
    %c0_i32 = arith.constant 0 : i32
    %c0_i32_0 = arith.constant 0 : i32
    %c0_i32_1 = arith.constant 0 : i32
    return %arg0, %c0_i32, %c0_i32_0 : i32, i32, i32
  }
  func.func @transform_1(%arg0: i32) -> (i32, i32) {
    %c0_i32 = arith.constant 0 : i32
    %c0_i32_0 = arith.constant 0 : i32
    %c0_i32_1 = arith.constant 0 : i32
    return %c0_i32, %c0_i32_0 : i32, i32
  }
  func.func @transform_2(%arg0: i32) -> (i32, i32) {
    %c0_i32 = arith.constant 0 : i32
    %c0_i32_0 = arith.constant 0 : i32
    %c0_i32_1 = arith.constant 0 : i32
    return %c0_i32, %c0_i32_0 : i32, i32
  }
  func.func @transform_3(%arg0: i32) -> (i32, i32, i32) {
    %c0_i32 = arith.constant 0 : i32
    %c0_i32_0 = arith.constant 0 : i32
    %c0_i32_1 = arith.constant 0 : i32
    return %arg0, %c0_i32, %c0_i32_0 : i32, i32, i32
  }
}

module attributes {stable_mosaic.version = 11 : i64} {
  func.func @kernel(%arg0: i32, %arg1: memref<1x16x512xf32, #tpu.memory_space<vmem>>, %arg2: memref<1x512xf32, #tpu.memory_space<vmem>>, %arg3: memref<1x512xf32, #tpu.memory_space<vmem>>, %arg4: memref<1x16x512xf32, #tpu.memory_space<vmem>>, %arg5: memref<1x16x512xf32, #tpu.memory_space<vmem>>) attributes {dimension_semantics = [#tpu.dimension_semantics<parallel>], iteration_bounds = array<i64: 2>, scalar_prefetch = 0 : i64, scratch_operands = 0 : i64, tpu.core_type = #tpu.core_type<tc>, window_params = [{transform_indices = @transform_0, window_bounds = array<i64: 1, 16, 512>}, {pipeline_mode = #tpu.pipeline_mode<synchronous>, transform_indices = @transform_1, window_bounds = array<i64: 1, 512>}, {pipeline_mode = #tpu.pipeline_mode<synchronous>, transform_indices = @transform_2, window_bounds = array<i64: 1, 512>}, {transform_indices = @transform_3, window_bounds = array<i64: 1, 16, 512>}, {transform_indices = @transform_4, window_bounds = array<i64: 1, 16, 512>}]} {
    %c0 = arith.constant 0 : index
    %c0_0 = arith.constant 0 : index
    %c0_1 = arith.constant 0 : index
    %0 = vector.load %arg1[%c0, %c0_0, %c0_1] : memref<1x16x512xf32, #tpu.memory_space<vmem>>, vector<1x16x512xf32>
    %c0_2 = arith.constant 0 : index
    %c0_3 = arith.constant 0 : index
    %1 = vector.load %arg2[%c0_2, %c0_3] : memref<1x512xf32, #tpu.memory_space<vmem>>, vector<1x512xf32>
    %2 = vector.shape_cast %1 : vector<1x512xf32> to vector<1x1x512xf32>
    %3 = vector.broadcast %2 : vector<1x1x512xf32> to vector<1x16x512xf32>
    %4 = arith.mulf %0, %3 : vector<1x16x512xf32>
    %c0_4 = arith.constant 0 : index
    %c0_5 = arith.constant 0 : index
    %5 = vector.load %arg3[%c0_4, %c0_5] : memref<1x512xf32, #tpu.memory_space<vmem>>, vector<1x512xf32>
    %6 = vector.shape_cast %5 : vector<1x512xf32> to vector<1x1x512xf32>
    %7 = vector.broadcast %6 : vector<1x1x512xf32> to vector<1x16x512xf32>
    %8 = arith.addf %4, %7 : vector<1x16x512xf32>
    %c0_6 = arith.constant 0 : index
    %c0_7 = arith.constant 0 : index
    %c0_8 = arith.constant 0 : index
    %9 = vector.load %arg4[%c0_6, %c0_7, %c0_8] : memref<1x16x512xf32, #tpu.memory_space<vmem>>, vector<1x16x512xf32>
    %10 = arith.addf %8, %9 : vector<1x16x512xf32>
    %cst = arith.constant 0.000000e+00 : f32
    %11 = vector.broadcast %cst : f32 to vector<1x16x512xf32>
    %12 = arith.maximumf %10, %11 : vector<1x16x512xf32>
    %c0_9 = arith.constant 0 : index
    %c0_10 = arith.constant 0 : index
    %c0_11 = arith.constant 0 : index
    %13 = vector.load %arg5[%c0_9, %c0_10, %c0_11] : memref<1x16x512xf32, #tpu.memory_space<vmem>>, vector<1x16x512xf32>
    tpu.vector_store %arg5[%c0_9, %c0_10, %c0_11], %12 {strides = array<i32>} : memref<1x16x512xf32, #tpu.memory_space<vmem>>, vector<1x16x512xf32>,
    return
  }
  func.func @transform_0(%arg0: i32) -> (i32, i32, i32) {
    %c0_i32 = arith.constant 0 : i32
    %c0_i32_0 = arith.constant 0 : i32
    %c0_i32_1 = arith.constant 0 : i32
    return %arg0, %c0_i32, %c0_i32_0 : i32, i32, i32
  }
  func.func @transform_1(%arg0: i32) -> (i32, i32) {
    %c0_i32 = arith.constant 0 : i32
    %c0_i32_0 = arith.constant 0 : i32
    %c0_i32_1 = arith.constant 0 : i32
    return %c0_i32, %c0_i32_0 : i32, i32
  }
  func.func @transform_2(%arg0: i32) -> (i32, i32) {
    %c0_i32 = arith.constant 0 : i32
    %c0_i32_0 = arith.constant 0 : i32
    %c0_i32_1 = arith.constant 0 : i32
    return %c0_i32, %c0_i32_0 : i32, i32
  }
  func.func @transform_3(%arg0: i32) -> (i32, i32, i32) {
    %c0_i32 = arith.constant 0 : i32
    %c0_i32_0 = arith.constant 0 : i32
    %c0_i32_1 = arith.constant 0 : i32
    return %arg0, %c0_i32, %c0_i32_0 : i32, i32, i32
  }
  func.func @transform_4(%arg0: i32) -> (i32, i32, i32) {
    %c0_i32 = arith.constant 0 : i32
    %c0_i32_0 = arith.constant 0 : i32
    %c0_i32_1 = arith.constant 0 : i32
    return %arg0, %c0_i32, %c0_i32_0 : i32, i32, i32
  }
}

</mosaic_0001>

<llo_original>
// kernel: tile.23
$region0: #{tile.23}
  #allocation0 [shape = 's32[1]{0}', space=sflag, size = 0x4, scoped, tag = 'scoped memory for tile.23']
  %s0 = inlined_call_operand.vmem [shape: f32[32], index: 0, kind: input, shape index: {}]
  %s1 = inlined_call_operand.vmem [shape: f32[16,32], index: 1, kind: output, shape index: {}]
  // Predicated region
  $region2: #{tile.23} parent=0 // pred_check
    _
  $region3: #{tile.23} parent=0 // pred_check_branch
    %3 = sbr.rel (0) target = $region5
  $region4: #{tile.23} parent=0 // pred_region
    _
  $region5: #{tile.23} parent=0 // pred_fallthru
    _
  %v4 = vld [vmem:[%s0] ss:$0 sm:$0xff]
  %5 = vst [vmem:[%s1] sm:$0xff] %v4
  %s6 = scalar_lea.vmem %s1, 8
  %7 = vst [vmem:[%s6] sm:$0xff] %v4

// kernel: tile.24
$region0: #{tile.24}
  %s0 = inlined_call_operand.vmem [shape: f32[16,32], index: 0, kind: input, shape index: {}]
  %s1 = inlined_call_operand.vmem [shape: f32[1,512], index: 1, kind: output, shape index: {}]
  $region1: #{tile.24} parent=0
    #allocation0 [shape = 'u8[16384]{0}', space=vmem, size = 0x4000, scoped, tag = 'scoped mem for output reshape']
    %v2 = vld [vmem:[%s0] ss:$4 sm:$0xf]
    %vm3 = vcmask 261120
    %4 = vst.msk [vmem:[#allocation0] ss:$8 sm:$0xf] %vm3, %v2
    %s5 = scalar_lea.vmem %s0, 3
    %v6 = vld [vmem:[%s5] ss:$4 sm:$0xf]
    %7 = vrot.lane.b32.xlu0 %v6, 96
    %v8 = vpop.permute.xlu0 %7
    %vm9 = vcmask 1048320
    %10 = vst.msk [vmem:[#allocation0] ss:$8 sm:$0xf] %vm9, %v8
    %s11 = scalar_lea.vmem %s0, 2
    %v12 = vld [vmem:[%s11] ss:$4 sm:$0xf]
    %13 = vrot.lane.b32.xlu0 %v12, 64
    %v14 = vpop.permute.xlu0 %13
    %vm15 = vcmask 785920
    %16 = vst.msk [vmem:[#allocation0] ss:$8 sm:$0xf] %vm15, %v14
    %s17 = scalar_lea.vmem %s0, 1
    %v18 = vld [vmem:[%s17] ss:$4 sm:$0xf]
    %19 = vrot.lane.b32.xlu0 %v18, 32
    %v20 = vpop.permute.xlu0 %19
    %vm21 = vcmask 523520
    %22 = vst.msk [vmem:[#allocation0] ss:$8 sm:$0xf] %vm21, %v20
    %s24 = sshllo.u32 0, 1
    %v26 = vld [vmem:[#allocation0] sm:%s24]
    %s27 = sshllo.u32 0, 1
    %28 = vst [vmem:[%s1] sm:%s27] %v26
    %s29 = scalar_lea.vmem [#allocation0], 8
    %v30 = vld [vmem:[%s29] sm:%s24]
    %s31 = sshllo.u32 0, 1
    %s32 = scalar_lea.vmem %s1, 1
    %33 = vst [vmem:[%s32] sm:%s31] %v30
    %s34 = scalar_lea.vmem [#allocation0], 16
    %v35 = vld [vmem:[%s34] sm:%s24]
    %s36 = sshllo.u32 0, 1
    %s37 = smul.addr 1, 2
    %s38 = scalar_lea.vmem %s1, %s37
    %39 = vst [vmem:[%s38] sm:%s36] %v35
    %s40 = scalar_lea.vmem [#allocation0], 24
    %v41 = vld [vmem:[%s40] sm:%s24]
    %s42 = sshllo.u32 0, 1
    %s43 = smul.addr 1, 3
    %s44 = scalar_lea.vmem %s1, %s43
    %45 = vst [vmem:[%s44] sm:%s42] %v41

// kernel: residual_block_forward.5
$region0: #{residual_block_forward.5}
  #allocation0 [shape = 'u32[]', space=smem, size = 0x4, offset = 0x4, fixed_abs, tag = 'smem constant byte address 0x4 - core index']
  #allocation1 [shape = 'u32[144,128]{1,0:T(1,128)}', space=vmem, size = 0x12000, scoped, tag = 'internal scratch']
  %s0 = inlined_call_operand.vmem [shape: f32[2,16,512], index: 0, kind: input, shape index: {}]
  %s1 = inlined_call_operand.vmem [shape: f32[1,512], index: 1, kind: input, shape index: {}]
  %s2 = inlined_call_operand.vmem [shape: f32[1,512], index: 2, kind: input, shape index: {}]
  %s3 = inlined_call_operand.vmem [shape: f32[2,16,512], index: 3, kind: output, shape index: {}]
  %s4 = sld [smem:[#allocation0]]
  $region45: #{residual_block_forward.5} parent=0
    _
  %s6 = ssub.s32 1, %s4
  %s7 = scalar_select 0, %s6, %s4
  loop: start=0, step=1, limit=4
  $region2: #{residual_block_forward.5} parent=0 // loop_pre_header
    _
  $region3: #{residual_block_forward.5} parent=0 // loop_header
    %s9 = sphi 0, %s13
    %p10 = scmp.ge.s32.totalorder %s9, 4
    %s19 = sphi 0, %s21
    %s22 = sphi 0, %s19
    %s23 = sphi 0, %s22
    %s39 = sphi 0, %s23
    %s43 = sphi 0, %s43
    %s45 = sphi 0, %s43
    %s46 = sphi 0, %s45
    %s60 = sphi 0, %s46
    %s64 = sphi 0, %s64
    %s66 = sphi 0, %s64
    %s67 = sphi 0, %s66
    %s81 = sphi 0, %s67
    %s87 = sphi 0, %s89
    %s90 = sphi 0, %s87
    %s91 = sphi 0, %s90
    %s107 = sphi 0, %s91
  $region4: #{residual_block_forward.5} parent=0 // loop_header_branch
    %12 = sbr.rel (%p10) target = $region8
  $region5: #{residual_block_forward.5} parent=0 // loop_body
    %s14 = ssub.s32 %s9, 1
    %s15 = ssub.s32 %s9, 2
    %s16 = sadd.s32 %s9, 1
    %s17 = ssub.s32 %s9, %s16
    %p18 = scmp.eq.s32.totalorder %s17, 0
    %s20 = sadd.s32 %s19, 1
    %s21 = scalar_select %p18, %s19, %s20
    %p24 = pneg %p18
    %p25 = scmp.eq.s32.totalorder %s9, 1
    %p26 = por %p24, %p25
    %p27 = scmp.ne.s32.totalorder %s19, %s22
    %p28 = scmp.eq.s32.totalorder %s9, 0
    %p29 = por %p27, %p28
    %p30 = scmp.ne.s32.totalorder %s19, %s22
    %p31 = scmp.eq.s32.totalorder %s14, 1
    %p32 = por %p30, %p31
    %p33 = scmp.ne.s32.totalorder %s22, %s23
    %p34 = scmp.eq.s32.totalorder %s14, 0
    %p35 = por %p33, %p34
    %p36 = scmp.ne.s32.totalorder %s22, %s23
    %p37 = scmp.eq.s32.totalorder %s15, 1
    %p38 = por %p36, %p37
    %p40 = scmp.ne.s32.totalorder %s23, %s39
    %p41 = scmp.eq.s32.totalorder %s15, 0
    %p42 = por %p40, %p41
    %s44 = sadd.s32 %s43, 1
    %p47 = scmp.eq.s32.totalorder %s9, 1
    %p48 = scmp.ne.s32.totalorder %s43, %s45
    %p49 = scmp.eq.s32.totalorder %s9, 0
    %p50 = por %p48, %p49
    %p51 = scmp.ne.s32.totalorder %s43, %s45
    %p52 = scmp.eq.s32.totalorder %s14, 1
    %p53 = por %p51, %p52
    %p54 = scmp.ne.s32.totalorder %s45, %s46
    %p55 = scmp.eq.s32.totalorder %s14, 0
    %p56 = por %p54, %p55
    %p57 = scmp.ne.s32.totalorder %s45, %s46
    %p58 = scmp.eq.s32.totalorder %s15, 1
    %p59 = por %p57, %p58
    %p61 = scmp.ne.s32.totalorder %s46, %s60
    %p62 = scmp.eq.s32.totalorder %s15, 0
    %p63 = por %p61, %p62
    %s65 = sadd.s32 %s64, 1
    %p68 = scmp.eq.s32.totalorder %s9, 1
    %p69 = scmp.ne.s32.totalorder %s64, %s66
    %p70 = scmp.eq.s32.totalorder %s9, 0
    %p71 = por %p69, %p70
    %p72 = scmp.ne.s32.totalorder %s64, %s66
    %p73 = scmp.eq.s32.totalorder %s14, 1
    %p74 = por %p72, %p73
    %p75 = scmp.ne.s32.totalorder %s66, %s67
    %p76 = scmp.eq.s32.totalorder %s14, 0
    %p77 = por %p75, %p76
    %p78 = scmp.ne.s32.totalorder %s66, %s67
    %p79 = scmp.eq.s32.totalorder %s15, 1
    %p80 = por %p78, %p79
    %p82 = scmp.ne.s32.totalorder %s67, %s81
    %p83 = scmp.eq.s32.totalorder %s15, 0
    %p84 = por %p82, %p83
    %s85 = ssub.s32 %s9, %s16
    %p86 = scmp.eq.s32.totalorder %s85, 0
    %s88 = sadd.s32 %s87, 1
    %s89 = scalar_select %p86, %s87, %s88
    %p92 = pneg %p86
    %p93 = scmp.eq.s32.totalorder %s9, 1
    %p94 = por %p92, %p93
    %p95 = scmp.ne.s32.totalorder %s87, %s90
    %p96 = scmp.eq.s32.totalorder %s9, 0
    %p97 = por %p95, %p96
    %p98 = scmp.ne.s32.totalorder %s87, %s90
    %p99 = scmp.eq.s32.totalorder %s14, 1
    %p100 = por %p98, %p99
    %p101 = scmp.ne.s32.totalorder %s90, %s91
    %p102 = scmp.eq.s32.totalorder %s14, 0
    %p103 = por %p101, %p102
    %p104 = scmp.ne.s32.totalorder %s90, %s91
    %p105 = scmp.eq.s32.totalorder %s15, 1
    %p106 = por %p104, %p105
    %p108 = scmp.ne.s32.totalorder %s91, %s107
    %p109 = scmp.eq.s32.totalorder %s15, 0
    %p110 = por %p108, %p109
    %p111 = scmp.le.s32.totalorder 1, %s9
    %p112 = scmp.lt.s32.totalorder %s9, 3
    %p113 = pnand %p111, %p112
    %p114 = pneg %p113
    // Predicated region
    $region9: #{residual_block_forward.5} parent=5 // pred_check
      _
    $region10: #{residual_block_forward.5} parent=5 // pred_check_branch
      %116 = sbr.rel (%p113) target = $region12
    $region11: #{residual_block_forward.5} parent=5 // pred_region
      %s117 = ssub.s32 %s9, 1
      // Predicated region
      $region13: #{residual_block_forward.5} parent=11 // pred_check
        %p118 = pneg %p56
      $region14: #{residual_block_forward.5} parent=11 // pred_check_branch
        %120 = sbr.rel (%p118) target = $region16
      $region15: #{residual_block_forward.5} parent=11 // pred_region
        _
      $region16: #{residual_block_forward.5} parent=11 // pred_fallthru
        _
      // Predicated region
      $region17: #{residual_block_forward.5} parent=11 // pred_check
        %p121 = pneg %p77
      $region18: #{residual_block_forward.5} parent=11 // pred_check_branch
        %123 = sbr.rel (%p121) target = $region20
      $region19: #{residual_block_forward.5} parent=11 // pred_region
        _
      $region20: #{residual_block_forward.5} parent=11 // pred_fallthru
        _
    $region12: #{residual_block_forward.5} parent=5 // pred_fallthru
      _
    %p124 = scmp.lt.s32.totalorder %s9, 2
    // Predicated region
    $region21: #{residual_block_forward.5} parent=5 // pred_check
      %p125 = pneg %p124
    $region22: #{residual_block_forward.5} parent=5 // pred_check_branch
      %127 = sbr.rel (%p125) target = $region24
    $region23: #{residual_block_forward.5} parent=5 // pred_region
      // Predicated region
      $region25: #{residual_block_forward.5} parent=23 // pred_check
        %p128 = pneg %p29
      $region26: #{residual_block_forward.5} parent=23 // pred_check_branch
        %130 = sbr.rel (%p128) target = $region28
      $region27: #{residual_block_forward.5} parent=23 // pred_region
        %p131 = scmp.lt.s32.totalorder %s9, 1
        %s132 = scalar_select %p131, %s9, 1
        %s133 = smul.addr %s132, 8
        %s134 = smul.addr %s133, 8
        %s135 = scalar_lea.vmem %s0, %s134
      $region28: #{residual_block_forward.5} parent=23 // pred_fallthru
        _
    $region24: #{residual_block_forward.5} parent=5 // pred_fallthru
      _
    %p136 = scmp.le.s32.totalorder 1, %s9
    %p137 = scmp.lt.s32.totalorder %s9, 3
    %p138 = pnand %p136, %p137
    %p139 = pneg %p138
    // Predicated region
    $region29: #{residual_block_forward.5} parent=5 // pred_check
      _
    $region30: #{residual_block_forward.5} parent=5 // pred_check_branch
      %141 = sbr.rel (%p138) target = $region32
    $region31: #{residual_block_forward.5} parent=5 // pred_region
      %s142 = ssub.s32 %s9, 1
      %p143 = scmp.lt.s32.totalorder %s14, 1
      %s144 = scalar_select %p143, %s14, 1
      %s145 = smul.addr %s144, 8
      %s146 = smul.addr %s145, 8
      %s147 = scalar_lea.vmem %s0, %s146
      %p148 = pneg %p35
      %p149 = pneg %p32
      %p150 = pneg %p56
      %p151 = pneg %p53
      %p152 = pneg %p77
      %p153 = pneg %p74
      %p154 = pneg %p103
      %p155 = pneg %p100
      %p156 = scmp.lt.s32.totalorder %s14, 1
      %s157 = scalar_select %p156, %s14, 1
      %s158 = smul.addr %s157, 8
      %s159 = smul.addr %s158, 8
      %s160 = scalar_lea.vmem %s3, %s159
      %p161 = scmp.lt.s32.totalorder %s14, 1
      %s162 = scalar_select %p161, %s14, 1
      %s163 = smul.addr %s162, 8
      %s164 = smul.addr %s163, 8
      %s165 = scalar_lea.vmem %s0, %s164
      %p166 = scmp.lt.s32.totalorder %s14, 1
      %s167 = scalar_select %p166, %s14, 1
      %s168 = smul.addr %s167, 8
      %s169 = smul.addr %s168, 8
      %s170 = scalar_lea.vmem %s3, %s169
      %v171 = vld [vmem:[%s165] sm:$0xff]
      %v172 = vld [vmem:[%s165 + $0x8] sm:$0xff]
      %v173 = vld [vmem:[%s165 + $0x10] sm:$0xff]
      %v174 = vld [vmem:[%s165 + $0x18] sm:$0xff]
      %v175 = vld [vmem:[%s165 + $0x20] sm:$0xff]
      %v176 = vld [vmem:[%s165 + $0x28] sm:$0xff]
      %v177 = vld [vmem:[%s165 + $0x30] sm:$0xff]
      %v178 = vld [vmem:[%s165 + $0x38] sm:$0xff]
      %v179 = vld [vmem:[%s1] sm:$0xf]
      %v181 = vlaneseq
      %v182 = vshrl.u32 %v181, 7
      %v183 = vsub.s32 0, %v182
      %v184 = vrot.slane %v179, %v183
      %v185 = vlaneseq
      %v186 = vshrl.u32 %v185, 7
      %v187 = vsub.s32 1, %v186
      %v188 = vrot.slane %v179, %v187
      %v189 = vlaneseq
      %v190 = vshrl.u32 %v189, 7
      %v191 = vsub.s32 2, %v190
      %v192 = vrot.slane %v179, %v191
      %v193 = vlaneseq
      %v194 = vshrl.u32 %v193, 7
      %v195 = vsub.s32 3, %v194
      %v196 = vrot.slane %v179, %v195
      %v201 = vmul.f32 %v171, %v184
      %v202 = vmul.f32 %v172, %v188
      %v203 = vmul.f32 %v173, %v192
      %v204 = vmul.f32 %v174, %v196
      %v205 = vmul.f32 %v175, %v184
      %v206 = vmul.f32 %v176, %v188
      %v207 = vmul.f32 %v177, %v192
      %v208 = vmul.f32 %v178, %v196
      %v209 = vld [vmem:[%s2] sm:$0xf]
      %v211 = vlaneseq
      %v212 = vshrl.u32 %v211, 7
      %v213 = vsub.s32 0, %v212
      %v214 = vrot.slane %v209, %v213
      %v215 = vlaneseq
      %v216 = vshrl.u32 %v215, 7
      %v217 = vsub.s32 1, %v216
      %v218 = vrot.slane %v209, %v217
      %v219 = vlaneseq
      %v220 = vshrl.u32 %v219, 7
      %v221 = vsub.s32 2, %v220
      %v222 = vrot.slane %v209, %v221
      %v223 = vlaneseq
      %v224 = vshrl.u32 %v223, 7
      %v225 = vsub.s32 3, %v224
      %v226 = vrot.slane %v209, %v225
      %v231 = vadd.f32 %v201, %v214
      %v232 = vadd.f32 %v202, %v218
      %v233 = vadd.f32 %v203, %v222
      %v234 = vadd.f32 %v204, %v226
      %v235 = vadd.f32 %v205, %v214
      %v236 = vadd.f32 %v206, %v218
      %v237 = vadd.f32 %v207, %v222
      %v238 = vadd.f32 %v208, %v226
      %v239 = vmax.f32 %v231, 0.0
      %v240 = vmax.f32 %v232, 0.0
      %v241 = vmax.f32 %v233, 0.0
      %v242 = vmax.f32 %v234, 0.0
      %v243 = vmax.f32 %v235, 0.0
      %v244 = vmax.f32 %v236, 0.0
      %v245 = vmax.f32 %v237, 0.0
      %v246 = vmax.f32 %v238, 0.0
      %247 = vst [vmem:[%s170] sm:$0xff] %v239
      %248 = vst [vmem:[%s170 + $0x8] sm:$0xff] %v240
      %249 = vst [vmem:[%s170 + $0x10] sm:$0xff] %v241
      %250 = vst [vmem:[%s170 + $0x18] sm:$0xff] %v242
      %251 = vst [vmem:[%s170 + $0x20] sm:$0xff] %v243
      %252 = vst [vmem:[%s170 + $0x28] sm:$0xff] %v244
      %253 = vst [vmem:[%s170 + $0x30] sm:$0xff] %v245
      %254 = vst [vmem:[%s170 + $0x38] sm:$0xff] %v246
      %p255 = scmp.lt.s32.totalorder %s14, 1
      %s256 = scalar_select %p255, %s14, 1
      %s257 = smul.addr %s256, 8
      %s258 = smul.addr %s257, 8
      %s259 = scalar_lea.vmem %s3, %s258
      // Predicated region
      $region33: #{residual_block_forward.5} parent=31 // pred_check
        %p260 = pneg %p100
      $region34: #{residual_block_forward.5} parent=31 // pred_check_branch
        %262 = sbr.rel (%p260) target = $region36
      $region35: #{residual_block_forward.5} parent=31 // pred_region
        _
      $region36: #{residual_block_forward.5} parent=31 // pred_fallthru
        _
    $region32: #{residual_block_forward.5} parent=5 // pred_fallthru
      _
    %p263 = scmp.le.s32.totalorder 2, %s9
    // Predicated region
    $region37: #{residual_block_forward.5} parent=5 // pred_check
      %p264 = pneg %p263
    $region38: #{residual_block_forward.5} parent=5 // pred_check_branch
      %266 = sbr.rel (%p264) target = $region40
    $region39: #{residual_block_forward.5} parent=5 // pred_region
      %s267 = ssub.s32 %s9, 2
      // Predicated region
      $region41: #{residual_block_forward.5} parent=39 // pred_check
        %p268 = pneg %p106
      $region42: #{residual_block_forward.5} parent=39 // pred_check_branch
        %270 = sbr.rel (%p268) target = $region44
      $region43: #{residual_block_forward.5} parent=39 // pred_region
        %p271 = scmp.lt.s32.totalorder %s15, 1
        %s272 = scalar_select %p271, %s15, 1
        %s273 = smul.addr %s272, 8
        %s274 = smul.addr %s273, 8
        %s275 = scalar_lea.vmem %s3, %s274
      $region44: #{residual_block_forward.5} parent=39 // pred_fallthru
        _
    $region40: #{residual_block_forward.5} parent=5 // pred_fallthru
      _
  $region6: #{residual_block_forward.5} parent=0 // loop_footer
    %s13 = sadd.s32 1, %s9
  $region7: #{residual_block_forward.5} parent=0 // loop_footer_branch
    %8 = sbr.rel target = $region3
  $region8: #{residual_block_forward.5} parent=0 // loop_exit
    _

// kernel: residual_block_forward.7
$region0: #{residual_block_forward.7}
  #allocation0 [shape = 'u32[]', space=smem, size = 0x4, offset = 0x4, fixed_abs, tag = 'smem constant byte address 0x4 - core index']
  #allocation1 [shape = 'u32[144,128]{1,0:T(1,128)}', space=vmem, size = 0x12000, scoped, tag = 'internal scratch']
  %s0 = inlined_call_operand.vmem [shape: f32[2,16,512], index: 0, kind: input, shape index: {}]
  %s1 = inlined_call_operand.vmem [shape: f32[1,512], index: 1, kind: input, shape index: {}]
  %s2 = inlined_call_operand.vmem [shape: f32[1,512], index: 2, kind: input, shape index: {}]
  %s3 = inlined_call_operand.vmem [shape: f32[2,16,512], index: 3, kind: input, shape index: {}]
  %s4 = inlined_call_operand.vmem [shape: f32[2,16,512], index: 4, kind: output, shape index: {}]
  %s5 = sld [smem:[#allocation0]]
  $region49: #{residual_block_forward.7} parent=0
    _
  %s7 = ssub.s32 1, %s5
  %s8 = scalar_select 0, %s7, %s5
  loop: start=0, step=1, limit=4
  $region2: #{residual_block_forward.7} parent=0 // loop_pre_header
    _
  $region3: #{residual_block_forward.7} parent=0 // loop_header
    %s10 = sphi 0, %s14
    %p11 = scmp.ge.s32.totalorder %s10, 4
    %s20 = sphi 0, %s22
    %s23 = sphi 0, %s20
    %s24 = sphi 0, %s23
    %s40 = sphi 0, %s24
    %s44 = sphi 0, %s44
    %s46 = sphi 0, %s44
    %s47 = sphi 0, %s46
    %s61 = sphi 0, %s47
    %s65 = sphi 0, %s65
    %s67 = sphi 0, %s65
    %s68 = sphi 0, %s67
    %s82 = sphi 0, %s68
    %s88 = sphi 0, %s90
    %s91 = sphi 0, %s88
    %s92 = sphi 0, %s91
    %s108 = sphi 0, %s92
    %s114 = sphi 0, %s116
    %s117 = sphi 0, %s114
    %s118 = sphi 0, %s117
    %s134 = sphi 0, %s118
  $region4: #{residual_block_forward.7} parent=0 // loop_header_branch
    %13 = sbr.rel (%p11) target = $region8
  $region5: #{residual_block_forward.7} parent=0 // loop_body
    %s15 = ssub.s32 %s10, 1
    %s16 = ssub.s32 %s10, 2
    %s17 = sadd.s32 %s10, 1
    %s18 = ssub.s32 %s10, %s17
    %p19 = scmp.eq.s32.totalorder %s18, 0
    %s21 = sadd.s32 %s20, 1
    %s22 = scalar_select %p19, %s20, %s21
    %p25 = pneg %p19
    %p26 = scmp.eq.s32.totalorder %s10, 1
    %p27 = por %p25, %p26
    %p28 = scmp.ne.s32.totalorder %s20, %s23
    %p29 = scmp.eq.s32.totalorder %s10, 0
    %p30 = por %p28, %p29
    %p31 = scmp.ne.s32.totalorder %s20, %s23
    %p32 = scmp.eq.s32.totalorder %s15, 1
    %p33 = por %p31, %p32
    %p34 = scmp.ne.s32.totalorder %s23, %s24
    %p35 = scmp.eq.s32.totalorder %s15, 0
    %p36 = por %p34, %p35
    %p37 = scmp.ne.s32.totalorder %s23, %s24
    %p38 = scmp.eq.s32.totalorder %s16, 1
    %p39 = por %p37, %p38
    %p41 = scmp.ne.s32.totalorder %s24, %s40
    %p42 = scmp.eq.s32.totalorder %s16, 0
    %p43 = por %p41, %p42
    %s45 = sadd.s32 %s44, 1
    %p48 = scmp.eq.s32.totalorder %s10, 1
    %p49 = scmp.ne.s32.totalorder %s44, %s46
    %p50 = scmp.eq.s32.totalorder %s10, 0
    %p51 = por %p49, %p50
    %p52 = scmp.ne.s32.totalorder %s44, %s46
    %p53 = scmp.eq.s32.totalorder %s15, 1
    %p54 = por %p52, %p53
    %p55 = scmp.ne.s32.totalorder %s46, %s47
    %p56 = scmp.eq.s32.totalorder %s15, 0
    %p57 = por %p55, %p56
    %p58 = scmp.ne.s32.totalorder %s46, %s47
    %p59 = scmp.eq.s32.totalorder %s16, 1
    %p60 = por %p58, %p59
    %p62 = scmp.ne.s32.totalorder %s47, %s61
    %p63 = scmp.eq.s32.totalorder %s16, 0
    %p64 = por %p62, %p63
    %s66 = sadd.s32 %s65, 1
    %p69 = scmp.eq.s32.totalorder %s10, 1
    %p70 = scmp.ne.s32.totalorder %s65, %s67
    %p71 = scmp.eq.s32.totalorder %s10, 0
    %p72 = por %p70, %p71
    %p73 = scmp.ne.s32.totalorder %s65, %s67
    %p74 = scmp.eq.s32.totalorder %s15, 1
    %p75 = por %p73, %p74
    %p76 = scmp.ne.s32.totalorder %s67, %s68
    %p77 = scmp.eq.s32.totalorder %s15, 0
    %p78 = por %p76, %p77
    %p79 = scmp.ne.s32.totalorder %s67, %s68
    %p80 = scmp.eq.s32.totalorder %s16, 1
    %p81 = por %p79, %p80
    %p83 = scmp.ne.s32.totalorder %s68, %s82
    %p84 = scmp.eq.s32.totalorder %s16, 0
    %p85 = por %p83, %p84
    %s86 = ssub.s32 %s10, %s17
    %p87 = scmp.eq.s32.totalorder %s86, 0
    %s89 = sadd.s32 %s88, 1
    %s90 = scalar_select %p87, %s88, %s89
    %p93 = pneg %p87
    %p94 = scmp.eq.s32.totalorder %s10, 1
    %p95 = por %p93, %p94
    %p96 = scmp.ne.s32.totalorder %s88, %s91
    %p97 = scmp.eq.s32.totalorder %s10, 0
    %p98 = por %p96, %p97
    %p99 = scmp.ne.s32.totalorder %s88, %s91
    %p100 = scmp.eq.s32.totalorder %s15, 1
    %p101 = por %p99, %p100
    %p102 = scmp.ne.s32.totalorder %s91, %s92
    %p103 = scmp.eq.s32.totalorder %s15, 0
    %p104 = por %p102, %p103
    %p105 = scmp.ne.s32.totalorder %s91, %s92
    %p106 = scmp.eq.s32.totalorder %s16, 1
    %p107 = por %p105, %p106
    %p109 = scmp.ne.s32.totalorder %s92, %s108
    %p110 = scmp.eq.s32.totalorder %s16, 0
    %p111 = por %p109, %p110
    %s112 = ssub.s32 %s10, %s17
    %p113 = scmp.eq.s32.totalorder %s112, 0
    %s115 = sadd.s32 %s114, 1
    %s116 = scalar_select %p113, %s114, %s115
    %p119 = pneg %p113
    %p120 = scmp.eq.s32.totalorder %s10, 1
    %p121 = por %p119, %p120
    %p122 = scmp.ne.s32.totalorder %s114, %s117
    %p123 = scmp.eq.s32.totalorder %s10, 0
    %p124 = por %p122, %p123
    %p125 = scmp.ne.s32.totalorder %s114, %s117
    %p126 = scmp.eq.s32.totalorder %s15, 1
    %p127 = por %p125, %p126
    %p128 = scmp.ne.s32.totalorder %s117, %s118
    %p129 = scmp.eq.s32.totalorder %s15, 0
    %p130 = por %p128, %p129
    %p131 = scmp.ne.s32.totalorder %s117, %s118
    %p132 = scmp.eq.s32.totalorder %s16, 1
    %p133 = por %p131, %p132
    %p135 = scmp.ne.s32.totalorder %s118, %s134
    %p136 = scmp.eq.s32.totalorder %s16, 0
    %p137 = por %p135, %p136
    %p138 = scmp.le.s32.totalorder 1, %s10
    %p139 = scmp.lt.s32.totalorder %s10, 3
    %p140 = pnand %p138, %p139
    %p141 = pneg %p140
    // Predicated region
    $region9: #{residual_block_forward.7} parent=5 // pred_check
      _
    $region10: #{residual_block_forward.7} parent=5 // pred_check_branch
      %143 = sbr.rel (%p140) target = $region12
    $region11: #{residual_block_forward.7} parent=5 // pred_region
      %s144 = ssub.s32 %s10, 1
      // Predicated region
      $region13: #{residual_block_forward.7} parent=11 // pred_check
        %p145 = pneg %p57
      $region14: #{residual_block_forward.7} parent=11 // pred_check_branch
        %147 = sbr.rel (%p145) target = $region16
      $region15: #{residual_block_forward.7} parent=11 // pred_region
        _
      $region16: #{residual_block_forward.7} parent=11 // pred_fallthru
        _
      // Predicated region
      $region17: #{residual_block_forward.7} parent=11 // pred_check
        %p148 = pneg %p78
      $region18: #{residual_block_forward.7} parent=11 // pred_check_branch
        %150 = sbr.rel (%p148) target = $region20
      $region19: #{residual_block_forward.7} parent=11 // pred_region
        _
      $region20: #{residual_block_forward.7} parent=11 // pred_fallthru
        _
    $region12: #{residual_block_forward.7} parent=5 // pred_fallthru
      _
    %p151 = scmp.lt.s32.totalorder %s10, 2
    // Predicated region
    $region21: #{residual_block_forward.7} parent=5 // pred_check
      %p152 = pneg %p151
    $region22: #{residual_block_forward.7} parent=5 // pred_check_branch
      %154 = sbr.rel (%p152) target = $region24
    $region23: #{residual_block_forward.7} parent=5 // pred_region
      // Predicated region
      $region25: #{residual_block_forward.7} parent=23 // pred_check
        %p155 = pneg %p30
      $region26: #{residual_block_forward.7} parent=23 // pred_check_branch
        %157 = sbr.rel (%p155) target = $region28
      $region27: #{residual_block_forward.7} parent=23 // pred_region
        %p158 = scmp.lt.s32.totalorder %s10, 1
        %s159 = scalar_select %p158, %s10, 1
        %s160 = smul.addr %s159, 8
        %s161 = smul.addr %s160, 8
        %s162 = scalar_lea.vmem %s0, %s161
      $region28: #{residual_block_forward.7} parent=23 // pred_fallthru
        _
      // Predicated region
      $region29: #{residual_block_forward.7} parent=23 // pred_check
        %p163 = pneg %p98
      $region30: #{residual_block_forward.7} parent=23 // pred_check_branch
        %165 = sbr.rel (%p163) target = $region32
      $region31: #{residual_block_forward.7} parent=23 // pred_region
        %p166 = scmp.lt.s32.totalorder %s10, 1
        %s167 = scalar_select %p166, %s10, 1
        %s168 = smul.addr %s167, 8
        %s169 = smul.addr %s168, 8
        %s170 = scalar_lea.vmem %s3, %s169
      $region32: #{residual_block_forward.7} parent=23 // pred_fallthru
        _
    $region24: #{residual_block_forward.7} parent=5 // pred_fallthru
      _
    %p171 = scmp.le.s32.totalorder 1, %s10
    %p172 = scmp.lt.s32.totalorder %s10, 3
    %p173 = pnand %p171, %p172
    %p174 = pneg %p173
    // Predicated region
    $region33: #{residual_block_forward.7} parent=5 // pred_check
      _
    $region34: #{residual_block_forward.7} parent=5 // pred_check_branch
      %176 = sbr.rel (%p173) target = $region36
    $region35: #{residual_block_forward.7} parent=5 // pred_region
      %s177 = ssub.s32 %s10, 1
      %p178 = scmp.lt.s32.totalorder %s15, 1
      %s179 = scalar_select %p178, %s15, 1
      %s180 = smul.addr %s179, 8
      %s181 = smul.addr %s180, 8
      %s182 = scalar_lea.vmem %s0, %s181
      %p183 = pneg %p36
      %p184 = pneg %p33
      %p185 = pneg %p57
      %p186 = pneg %p54
      %p187 = pneg %p78
      %p188 = pneg %p75
      %p189 = scmp.lt.s32.totalorder %s15, 1
      %s190 = scalar_select %p189, %s15, 1
      %s191 = smul.addr %s190, 8
      %s192 = smul.addr %s191, 8
      %s193 = scalar_lea.vmem %s3, %s192
      %p194 = pneg %p104
      %p195 = pneg %p101
      %p196 = pneg %p130
      %p197 = pneg %p127
      %p198 = scmp.lt.s32.totalorder %s15, 1
      %s199 = scalar_select %p198, %s15, 1
      %s200 = smul.addr %s199, 8
      %s201 = smul.addr %s200, 8
      %s202 = scalar_lea.vmem %s4, %s201
      %p203 = scmp.lt.s32.totalorder %s15, 1
      %s204 = scalar_select %p203, %s15, 1
      %s205 = smul.addr %s204, 8
      %s206 = smul.addr %s205, 8
      %s207 = scalar_lea.vmem %s0, %s206
      %p208 = scmp.lt.s32.totalorder %s15, 1
      %s209 = scalar_select %p208, %s15, 1
      %s210 = smul.addr %s209, 8
      %s211 = smul.addr %s210, 8
      %s212 = scalar_lea.vmem %s3, %s211
      %p213 = scmp.lt.s32.totalorder %s15, 1
      %s214 = scalar_select %p213, %s15, 1
      %s215 = smul.addr %s214, 8
      %s216 = smul.addr %s215, 8
      %s217 = scalar_lea.vmem %s4, %s216
      %v218 = vld [vmem:[%s207] sm:$0xff]
      %v219 = vld [vmem:[%s207 + $0x8] sm:$0xff]
      %v220 = vld [vmem:[%s207 + $0x10] sm:$0xff]
      %v221 = vld [vmem:[%s207 + $0x18] sm:$0xff]
      %v222 = vld [vmem:[%s207 + $0x20] sm:$0xff]
      %v223 = vld [vmem:[%s207 + $0x28] sm:$0xff]
      %v224 = vld [vmem:[%s207 + $0x30] sm:$0xff]
      %v225 = vld [vmem:[%s207 + $0x38] sm:$0xff]
      %v226 = vld [vmem:[%s1] sm:$0xf]
      %v228 = vlaneseq
      %v229 = vshrl.u32 %v228, 7
      %v230 = vsub.s32 0, %v229
      %v231 = vrot.slane %v226, %v230
      %v232 = vlaneseq
      %v233 = vshrl.u32 %v232, 7
      %v234 = vsub.s32 1, %v233
      %v235 = vrot.slane %v226, %v234
      %v236 = vlaneseq
      %v237 = vshrl.u32 %v236, 7
      %v238 = vsub.s32 2, %v237
      %v239 = vrot.slane %v226, %v238
      %v240 = vlaneseq
      %v241 = vshrl.u32 %v240, 7
      %v242 = vsub.s32 3, %v241
      %v243 = vrot.slane %v226, %v242
      %v248 = vmul.f32 %v218, %v231
      %v249 = vmul.f32 %v219, %v235
      %v250 = vmul.f32 %v220, %v239
      %v251 = vmul.f32 %v221, %v243
      %v252 = vmul.f32 %v222, %v231
      %v253 = vmul.f32 %v223, %v235
      %v254 = vmul.f32 %v224, %v239
      %v255 = vmul.f32 %v225, %v243
      %v256 = vld [vmem:[%s2] sm:$0xf]
      %v258 = vlaneseq
      %v259 = vshrl.u32 %v258, 7
      %v260 = vsub.s32 0, %v259
      %v261 = vrot.slane %v256, %v260
      %v262 = vlaneseq
      %v263 = vshrl.u32 %v262, 7
      %v264 = vsub.s32 1, %v263
      %v265 = vrot.slane %v256, %v264
      %v266 = vlaneseq
      %v267 = vshrl.u32 %v266, 7
      %v268 = vsub.s32 2, %v267
      %v269 = vrot.slane %v256, %v268
      %v270 = vlaneseq
      %v271 = vshrl.u32 %v270, 7
      %v272 = vsub.s32 3, %v271
      %v273 = vrot.slane %v256, %v272
      %v278 = vadd.f32 %v248, %v261
      %v279 = vadd.f32 %v249, %v265
      %v280 = vadd.f32 %v250, %v269
      %v281 = vadd.f32 %v251, %v273
      %v282 = vadd.f32 %v252, %v261
      %v283 = vadd.f32 %v253, %v265
      %v284 = vadd.f32 %v254, %v269
      %v285 = vadd.f32 %v255, %v273
      %v286 = vld [vmem:[%s212] sm:$0xff]
      %v287 = vld [vmem:[%s212 + $0x8] sm:$0xff]
      %v288 = vld [vmem:[%s212 + $0x10] sm:$0xff]
      %v289 = vld [vmem:[%s212 + $0x18] sm:$0xff]
      %v290 = vld [vmem:[%s212 + $0x20] sm:$0xff]
      %v291 = vld [vmem:[%s212 + $0x28] sm:$0xff]
      %v292 = vld [vmem:[%s212 + $0x30] sm:$0xff]
      %v293 = vld [vmem:[%s212 + $0x38] sm:$0xff]
      %v294 = vadd.f32 %v278, %v286
      %v295 = vadd.f32 %v279, %v287
      %v296 = vadd.f32 %v280, %v288
      %v297 = vadd.f32 %v281, %v289
      %v298 = vadd.f32 %v282, %v290
      %v299 = vadd.f32 %v283, %v291
      %v300 = vadd.f32 %v284, %v292
      %v301 = vadd.f32 %v285, %v293
      %v302 = vmax.f32 %v294, 0.0
      %v303 = vmax.f32 %v295, 0.0
      %v304 = vmax.f32 %v296, 0.0
      %v305 = vmax.f32 %v297, 0.0
      %v306 = vmax.f32 %v298, 0.0
      %v307 = vmax.f32 %v299, 0.0
      %v308 = vmax.f32 %v300, 0.0
      %v309 = vmax.f32 %v301, 0.0
      %310 = vst [vmem:[%s217] sm:$0xff] %v302
      %311 = vst [vmem:[%s217 + $0x8] sm:$0xff] %v303
      %312 = vst [vmem:[%s217 + $0x10] sm:$0xff] %v304
      %313 = vst [vmem:[%s217 + $0x18] sm:$0xff] %v305
      %314 = vst [vmem:[%s217 + $0x20] sm:$0xff] %v306
      %315 = vst [vmem:[%s217 + $0x28] sm:$0xff] %v307
      %316 = vst [vmem:[%s217 + $0x30] sm:$0xff] %v308
      %317 = vst [vmem:[%s217 + $0x38] sm:$0xff] %v309
      %p318 = scmp.lt.s32.totalorder %s15, 1
      %s319 = scalar_select %p318, %s15, 1
      %s320 = smul.addr %s319, 8
      %s321 = smul.addr %s320, 8
      %s322 = scalar_lea.vmem %s4, %s321
      // Predicated region
      $region37: #{residual_block_forward.7} parent=35 // pred_check
        %p323 = pneg %p127
      $region38: #{residual_block_forward.7} parent=35 // pred_check_branch
        %325 = sbr.rel (%p323) target = $region40
      $region39: #{residual_block_forward.7} parent=35 // pred_region
        _
      $region40: #{residual_block_forward.7} parent=35 // pred_fallthru
        _
    $region36: #{residual_block_forward.7} parent=5 // pred_fallthru
      _
    %p326 = scmp.le.s32.totalorder 2, %s10
    // Predicated region
    $region41: #{residual_block_forward.7} parent=5 // pred_check
      %p327 = pneg %p326
    $region42: #{residual_block_forward.7} parent=5 // pred_check_branch
      %329 = sbr.rel (%p327) target = $region44
    $region43: #{residual_block_forward.7} parent=5 // pred_region
      %s330 = ssub.s32 %s10, 2
      // Predicated region
      $region45: #{residual_block_forward.7} parent=43 // pred_check
        %p331 = pneg %p133
      $region46: #{residual_block_forward.7} parent=43 // pred_check_branch
        %333 = sbr.rel (%p331) target = $region48
      $region47: #{residual_block_forward.7} parent=43 // pred_region
        %p334 = scmp.lt.s32.totalorder %s16, 1
        %s335 = scalar_select %p334, %s16, 1
        %s336 = smul.addr %s335, 8
        %s337 = smul.addr %s336, 8
        %s338 = scalar_lea.vmem %s4, %s337
      $region48: #{residual_block_forward.7} parent=43 // pred_fallthru
        _
    $region44: #{residual_block_forward.7} parent=5 // pred_fallthru
      _
  $region6: #{residual_block_forward.7} parent=0 // loop_footer
    %s14 = sadd.s32 1, %s10
  $region7: #{residual_block_forward.7} parent=0 // loop_footer_branch
    %9 = sbr.rel target = $region3
  $region8: #{residual_block_forward.7} parent=0 // loop_exit
    _

// kernel: residual_block_forward.4
$region0: #{residual_block_forward.4}
  #allocation0 [shape = 'u32[]', space=smem, size = 0x4, offset = 0x4, fixed_abs, tag = 'smem constant byte address 0x4 - core index']
  #allocation1 [shape = 'u32[144,128]{1,0:T(1,128)}', space=vmem, size = 0x12000, scoped, tag = 'internal scratch']
  #allocation2 [shape = 'f32[16,16,288]{2,1,0:T(8,128)}', space=vmem, size = 0x60000, scoped, tag = 'scratch operand']
  %s0 = inlined_call_operand.vmem [shape: f32[2,18,18,32], index: 0, kind: input, shape index: {}]
  %s1 = inlined_call_operand.vmem [shape: f32[288,32], index: 1, kind: input, shape index: {}]
  %s2 = inlined_call_operand.vmem [shape: f32[2,256,32], index: 2, kind: output, shape index: {0}]
  %s3 = inlined_call_operand.vmem [shape: f32[2,2,32], index: 3, kind: output, shape index: {1}]
  %4 = xla_tuple %s2, %s3
  %s5 = sld [smem:[#allocation0]]
  $region49: #{residual_block_forward.4} parent=0
    _
  %s7 = ssub.s32 1, %s5
  %s8 = scalar_select 0, %s7, %s5
  loop: start=0, step=1, limit=4
  $region2: #{residual_block_forward.4} parent=0 // loop_pre_header
    _
  $region3: #{residual_block_forward.4} parent=0 // loop_header
    %s10 = sphi 0, %s14
    %p11 = scmp.ge.s32.totalorder %s10, 4
    %s20 = sphi 0, %s22
    %s23 = sphi 0, %s20
    %s24 = sphi 0, %s23
    %s40 = sphi 0, %s24
    %s44 = sphi 0, %s44
    %s46 = sphi 0, %s44
    %s47 = sphi 0, %s46
    %s61 = sphi 0, %s47
    %s67 = sphi 0, %s69
    %s70 = sphi 0, %s67
    %s71 = sphi 0, %s70
    %s87 = sphi 0, %s71
    %s93 = sphi 0, %s95
    %s96 = sphi 0, %s93
    %s97 = sphi 0, %s96
    %s113 = sphi 0, %s97
  $region4: #{residual_block_forward.4} parent=0 // loop_header_branch
    %13 = sbr.rel (%p11) target = $region8
  $region5: #{residual_block_forward.4} parent=0 // loop_body
    %s15 = ssub.s32 %s10, 1
    %s16 = ssub.s32 %s10, 2
    %s17 = sadd.s32 %s10, 1
    %s18 = ssub.s32 %s10, %s17
    %p19 = scmp.eq.s32.totalorder %s18, 0
    %s21 = sadd.s32 %s20, 1
    %s22 = scalar_select %p19, %s20, %s21
    %p25 = pneg %p19
    %p26 = scmp.eq.s32.totalorder %s10, 1
    %p27 = por %p25, %p26
    %p28 = scmp.ne.s32.totalorder %s20, %s23
    %p29 = scmp.eq.s32.totalorder %s10, 0
    %p30 = por %p28, %p29
    %p31 = scmp.ne.s32.totalorder %s20, %s23
    %p32 = scmp.eq.s32.totalorder %s15, 1
    %p33 = por %p31, %p32
    %p34 = scmp.ne.s32.totalorder %s23, %s24
    %p35 = scmp.eq.s32.totalorder %s15, 0
    %p36 = por %p34, %p35
    %p37 = scmp.ne.s32.totalorder %s23, %s24
    %p38 = scmp.eq.s32.totalorder %s16, 1
    %p39 = por %p37, %p38
    %p41 = scmp.ne.s32.totalorder %s24, %s40
    %p42 = scmp.eq.s32.totalorder %s16, 0
    %p43 = por %p41, %p42
    %s45 = sadd.s32 %s44, 1
    %p48 = scmp.eq.s32.totalorder %s10, 1
    %p49 = scmp.ne.s32.totalorder %s44, %s46
    %p50 = scmp.eq.s32.totalorder %s10, 0
    %p51 = por %p49, %p50
    %p52 = scmp.ne.s32.totalorder %s44, %s46
    %p53 = scmp.eq.s32.totalorder %s15, 1
    %p54 = por %p52, %p53
    %p55 = scmp.ne.s32.totalorder %s46, %s47
    %p56 = scmp.eq.s32.totalorder %s15, 0
    %p57 = por %p55, %p56
    %p58 = scmp.ne.s32.totalorder %s46, %s47
    %p59 = scmp.eq.s32.totalorder %s16, 1
    %p60 = por %p58, %p59
    %p62 = scmp.ne.s32.totalorder %s47, %s61
    %p63 = scmp.eq.s32.totalorder %s16, 0
    %p64 = por %p62, %p63
    %s65 = ssub.s32 %s10, %s17
    %p66 = scmp.eq.s32.totalorder %s65, 0
    %s68 = sadd.s32 %s67, 1
    %s69 = scalar_select %p66, %s67, %s68
    %p72 = pneg %p66
    %p73 = scmp.eq.s32.totalorder %s10, 1
    %p74 = por %p72, %p73
    %p75 = scmp.ne.s32.totalorder %s67, %s70
    %p76 = scmp.eq.s32.totalorder %s10, 0
    %p77 = por %p75, %p76
    %p78 = scmp.ne.s32.totalorder %s67, %s70
    %p79 = scmp.eq.s32.totalorder %s15, 1
    %p80 = por %p78, %p79
    %p81 = scmp.ne.s32.totalorder %s70, %s71
    %p82 = scmp.eq.s32.totalorder %s15, 0
    %p83 = por %p81, %p82
    %p84 = scmp.ne.s32.totalorder %s70, %s71
    %p85 = scmp.eq.s32.totalorder %s16, 1
    %p86 = por %p84, %p85
    %p88 = scmp.ne.s32.totalorder %s71, %s87
    %p89 = scmp.eq.s32.totalorder %s16, 0
    %p90 = por %p88, %p89
    %s91 = ssub.s32 %s10, %s17
    %p92 = scmp.eq.s32.totalorder %s91, 0
    %s94 = sadd.s32 %s93, 1
    %s95 = scalar_select %p92, %s93, %s94
    %p98 = pneg %p92
    %p99 = scmp.eq.s32.totalorder %s10, 1
    %p100 = por %p98, %p99
    %p101 = scmp.ne.s32.totalorder %s93, %s96
    %p102 = scmp.eq.s32.totalorder %s10, 0
    %p103 = por %p101, %p102
    %p104 = scmp.ne.s32.totalorder %s93, %s96
    %p105 = scmp.eq.s32.totalorder %s15, 1
    %p106 = por %p104, %p105
    %p107 = scmp.ne.s32.totalorder %s96, %s97
    %p108 = scmp.eq.s32.totalorder %s15, 0
    %p109 = por %p107, %p108
    %p110 = scmp.ne.s32.totalorder %s96, %s97
    %p111 = scmp.eq.s32.totalorder %s16, 1
    %p112 = por %p110, %p111
    %p114 = scmp.ne.s32.totalorder %s97, %s113
    %p115 = scmp.eq.s32.totalorder %s16, 0
    %p116 = por %p114, %p115
    %p117 = scmp.le.s32.totalorder 1, %s10
    %p118 = scmp.lt.s32.totalorder %s10, 3
    %p119 = pnand %p117, %p118
    %p120 = pneg %p119
    // Predicated region
    $region9: #{residual_block_forward.4} parent=5 // pred_check
      _
    $region10: #{residual_block_forward.4} parent=5 // pred_check_branch
      %122 = sbr.rel (%p119) target = $region12
    $region11: #{residual_block_forward.4} parent=5 // pred_region
      %s123 = ssub.s32 %s10, 1
      // Predicated region
      $region13: #{residual_block_forward.4} parent=11 // pred_check
        %p124 = pneg %p57
      $region14: #{residual_block_forward.4} parent=11 // pred_check_branch
        %126 = sbr.rel (%p124) target = $region16
      $region15: #{residual_block_forward.4} parent=11 // pred_region
        _
      $region16: #{residual_block_forward.4} parent=11 // pred_fallthru
        _
    $region12: #{residual_block_forward.4} parent=5 // pred_fallthru
      _
    %p127 = scmp.lt.s32.totalorder %s10, 2
    // Predicated region
    $region17: #{residual_block_forward.4} parent=5 // pred_check
      %p128 = pneg %p127
    $region18: #{residual_block_forward.4} parent=5 // pred_check_branch
      %130 = sbr.rel (%p128) target = $region20
    $region19: #{residual_block_forward.4} parent=5 // pred_region
      // Predicated region
      $region21: #{residual_block_forward.4} parent=19 // pred_check
        %p131 = pneg %p30
      $region22: #{residual_block_forward.4} parent=19 // pred_check_branch
        %133 = sbr.rel (%p131) target = $region24
      $region23: #{residual_block_forward.4} parent=19 // pred_region
        %p134 = scmp.lt.s32.totalorder %s10, 1
        %s135 = scalar_select %p134, %s10, 1
        %s136 = smul.addr %s135, 54
        %s137 = smul.addr %s136, 8
        %s138 = scalar_lea.vmem %s0, %s137
      $region24: #{residual_block_forward.4} parent=19 // pred_fallthru
        _
    $region20: #{residual_block_forward.4} parent=5 // pred_fallthru
      _
    %p139 = scmp.le.s32.totalorder 1, %s10
    %p140 = scmp.lt.s32.totalorder %s10, 3
    %p141 = pnand %p139, %p140
    %p142 = pneg %p141
    // Predicated region
    $region25: #{residual_block_forward.4} parent=5 // pred_check
      _
    $region26: #{residual_block_forward.4} parent=5 // pred_check_branch
      %144 = sbr.rel (%p141) target = $region28
    $region27: #{residual_block_forward.4} parent=5 // pred_region
      %s145 = ssub.s32 %s10, 1
      %p146 = scmp.lt.s32.totalorder %s15, 1
      %s147 = scalar_select %p146, %s15, 1
      %s148 = smul.addr %s147, 54
      %s149 = smul.addr %s148, 8
      %s150 = scalar_lea.vmem %s0, %s149
      %p151 = pneg %p36
      %p152 = pneg %p33
      %p153 = pneg %p57
      %p154 = pneg %p54
      %p155 = pneg %p83
      %p156 = pneg %p80
      %p157 = scmp.lt.s32.totalorder %s15, 1
      %s158 = scalar_select %p157, %s15, 1
      %s159 = smul.addr %s158, 32
      %s160 = smul.addr %s159, 8
      %s161 = scalar_lea.vmem %s2, %s160
      %p162 = pneg %p109
      %p163 = pneg %p106
      %p164 = scmp.lt.s32.totalorder %s15, 1
      %s165 = scalar_select %p164, %s15, 1
      %s166 = smul.addr %s165, 2
      %s167 = scalar_lea.vmem %s3, %s166
      %p168 = scmp.lt.s32.totalorder %s15, 1
      %s169 = scalar_select %p168, %s15, 1
      %s170 = smul.addr %s169, 54
      %s171 = smul.addr %s170, 8
      %s172 = scalar_lea.vmem %s0, %s171
      %p173 = scmp.lt.s32.totalorder %s15, 1
      %s174 = scalar_select %p173, %s15, 1
      %s175 = smul.addr %s174, 32
      %s176 = smul.addr %s175, 8
      %s177 = scalar_lea.vmem %s2, %s176
      %p178 = scmp.lt.s32.totalorder %s15, 1
      %s179 = scalar_select %p178, %s15, 1
      %s180 = smul.addr %s179, 2
      %s181 = scalar_lea.vmem %s3, %s180
      %v182 = vld [vmem:[%s172] sm:$0xff]
      %v183 = vld [vmem:[%s172 + $0x8] sm:$0xff]
      %v184 = vld [vmem:[%s172 + $0x18] sm:$0xff]
      %v185 = vld [vmem:[%s172 + $0x20] sm:$0xff]
      %v186 = vld [vmem:[%s172 + $0x30] sm:$0xff]
      %v187 = vld [vmem:[%s172 + $0x38] sm:$0xff]
      %v188 = vld [vmem:[%s172 + $0x48] sm:$0xff]
      %v189 = vld [vmem:[%s172 + $0x50] sm:$0xff]
      %v190 = vld [vmem:[%s172 + $0x60] sm:$0xff]
      %v191 = vld [vmem:[%s172 + $0x68] sm:$0xff]
      %v192 = vld [vmem:[%s172 + $0x78] sm:$0xff]
      %v193 = vld [vmem:[%s172 + $0x80] sm:$0xff]
      %v194 = vld [vmem:[%s172 + $0x90] sm:$0xff]
      %v195 = vld [vmem:[%s172 + $0x98] sm:$0xff]
      %v196 = vld [vmem:[%s172 + $0xa8] sm:$0xff]
      %v197 = vld [vmem:[%s172 + $0xb0] sm:$0xff]
      %v198 = vld [vmem:[%s172 + $0xc0] sm:$0xff]
      %v199 = vld [vmem:[%s172 + $0xc8] sm:$0xff]
      %v200 = vld [vmem:[%s172 + $0xd8] sm:$0xff]
      %v201 = vld [vmem:[%s172 + $0xe0] sm:$0xff]
      %v202 = vld [vmem:[%s172 + $0xf0] sm:$0xff]
      %v203 = vld [vmem:[%s172 + $0xf8] sm:$0xff]
      %v204 = vld [vmem:[%s172 + $0x108] sm:$0xff]
      %v205 = vld [vmem:[%s172 + $0x110] sm:$0xff]
      %v206 = vld [vmem:[%s172 + $0x120] sm:$0xff]
      %v207 = vld [vmem:[%s172 + $0x128] sm:$0xff]
      %v208 = vld [vmem:[%s172 + $0x138] sm:$0xff]
      %v209 = vld [vmem:[%s172 + $0x140] sm:$0xff]
      %v210 = vld [vmem:[%s172 + $0x150] sm:$0xff]
      %v211 = vld [vmem:[%s172 + $0x158] sm:$0xff]
      %v212 = vld [vmem:[%s172 + $0x168] sm:$0xff]
      %v213 = vld [vmem:[%s172 + $0x170] sm:$0xff]
      %vm214 = vcmask 261120
      %215 = vst.msk [vmem:[#allocation2] sm:$0xff] %vm214, %v182
      %216 = vst.msk [vmem:[#allocation2 + $0x18] sm:$0xff] %vm214, %v183
      %217 = vst.msk [vmem:[#allocation2 + $0x30] sm:$0xff] %vm214, %v184
      %218 = vst.msk [vmem:[#allocation2 + $0x48] sm:$0xff] %vm214, %v185
      %219 = vst.msk [vmem:[#allocation2 + $0x60] sm:$0xff] %vm214, %v186
      %220 = vst.msk [vmem:[#allocation2 + $0x78] sm:$0xff] %vm214, %v187
      %221 = vst.msk [vmem:[#allocation2 + $0x90] sm:$0xff] %vm214, %v188
      %222 = vst.msk [vmem:[#allocation2 + $0xa8] sm:$0xff] %vm214, %v189
      %223 = vst.msk [vmem:[#allocation2 + $0xc0] sm:$0xff] %vm214, %v190
      %224 = vst.msk [vmem:[#allocation2 + $0xd8] sm:$0xff] %vm214, %v191
      %225 = vst.msk [vmem:[#allocation2 + $0xf0] sm:$0xff] %vm214, %v192
      %226 = vst.msk [vmem:[#allocation2 + $0x108] sm:$0xff] %vm214, %v193
      %227 = vst.msk [vmem:[#allocation2 + $0x120] sm:$0xff] %vm214, %v194
      %228 = vst.msk [vmem:[#allocation2 + $0x138] sm:$0xff] %vm214, %v195
      %229 = vst.msk [vmem:[#allocation2 + $0x150] sm:$0xff] %vm214, %v196
      %230 = vst.msk [vmem:[#allocation2 + $0x168] sm:$0xff] %vm214, %v197
      %231 = vst.msk [vmem:[#allocation2 + $0x180] sm:$0xff] %vm214, %v198
      %232 = vst.msk [vmem:[#allocation2 + $0x198] sm:$0xff] %vm214, %v199
      %233 = vst.msk [vmem:[#allocation2 + $0x1b0] sm:$0xff] %vm214, %v200
      %234 = vst.msk [vmem:[#allocation2 + $0x1c8] sm:$0xff] %vm214, %v201
      %235 = vst.msk [vmem:[#allocation2 + $0x1e0] sm:$0xff] %vm214, %v202
      %236 = vst.msk [vmem:[#allocation2 + $0x1f8] sm:$0xff] %vm214, %v203
      %237 = vst.msk [vmem:[#allocation2 + $0x210] sm:$0xff] %vm214, %v204
      %238 = vst.msk [vmem:[#allocation2 + $0x228] sm:$0xff] %vm214, %v205
      %239 = vst.msk [vmem:[#allocation2 + $0x240] sm:$0xff] %vm214, %v206
      %240 = vst.msk [vmem:[#allocation2 + $0x258] sm:$0xff] %vm214, %v207
      %241 = vst.msk [vmem:[#allocation2 + $0x270] sm:$0xff] %vm214, %v208
      %242 = vst.msk [vmem:[#allocation2 + $0x288] sm:$0xff] %vm214, %v209
      %243 = vst.msk [vmem:[#allocation2 + $0x2a0] sm:$0xff] %vm214, %v210
      %244 = vst.msk [vmem:[#allocation2 + $0x2b8] sm:$0xff] %vm214, %v211
      %245 = vst.msk [vmem:[#allocation2 + $0x2d0] sm:$0xff] %vm214, %v212
      %246 = vst.msk [vmem:[#allocation2 + $0x2e8] sm:$0xff] %vm214, %v213
      %v247 = vld [vmem:[%s172 + $0x1] sm:$0xff]
      %v248 = vld [vmem:[%s172 + $0x9] sm:$0xff]
      %v249 = vld [vmem:[%s172 + $0x19] sm:$0xff]
      %v250 = vld [vmem:[%s172 + $0x21] sm:$0xff]
      %v251 = vld [vmem:[%s172 + $0x31] sm:$0xff]
      %v252 = vld [vmem:[%s172 + $0x39] sm:$0xff]
      %v253 = vld [vmem:[%s172 + $0x49] sm:$0xff]
      %v254 = vld [vmem:[%s172 + $0x51] sm:$0xff]
      %v255 = vld [vmem:[%s172 + $0x61] sm:$0xff]
      %v256 = vld [vmem:[%s172 + $0x69] sm:$0xff]
      %v257 = vld [vmem:[%s172 + $0x79] sm:$0xff]
      %v258 = vld [vmem:[%s172 + $0x81] sm:$0xff]
      %v259 = vld [vmem:[%s172 + $0x91] sm:$0xff]
      %v260 = vld [vmem:[%s172 + $0x99] sm:$0xff]
      %v261 = vld [vmem:[%s172 + $0xa9] sm:$0xff]
      %v262 = vld [vmem:[%s172 + $0xb1] sm:$0xff]
      %v263 = vld [vmem:[%s172 + $0xc1] sm:$0xff]
      %v264 = vld [vmem:[%s172 + $0xc9] sm:$0xff]
      %v265 = vld [vmem:[%s172 + $0xd9] sm:$0xff]
      %v266 = vld [vmem:[%s172 + $0xe1] sm:$0xff]
      %v267 = vld [vmem:[%s172 + $0xf1] sm:$0xff]
      %v268 = vld [vmem:[%s172 + $0xf9] sm:$0xff]
      %v269 = vld [vmem:[%s172 + $0x109] sm:$0xff]
      %v270 = vld [vmem:[%s172 + $0x111] sm:$0xff]
      %v271 = vld [vmem:[%s172 + $0x121] sm:$0xff]
      %v272 = vld [vmem:[%s172 + $0x129] sm:$0xff]
      %v273 = vld [vmem:[%s172 + $0x139] sm:$0xff]
      %v274 = vld [vmem:[%s172 + $0x141] sm:$0xff]
      %v275 = vld [vmem:[%s172 + $0x151] sm:$0xff]
      %v276 = vld [vmem:[%s172 + $0x159] sm:$0xff]
      %v277 = vld [vmem:[%s172 + $0x169] sm:$0xff]
      %v278 = vld [vmem:[%s172 + $0x171] sm:$0xff]
      %311 = vrot.lane.b32.xlu0 %v247, 32
      %v312 = vpop.permute.xlu0 %311
      %313 = vrot.lane.b32.xlu0 %v248, 32
      %v314 = vpop.permute.xlu0 %313
      %315 = vrot.lane.b32.xlu0 %v249, 32
      %v316 = vpop.permute.xlu0 %315
      %317 = vrot.lane.b32.xlu0 %v250, 32
      %v318 = vpop.permute.xlu0 %317
      %319 = vrot.lane.b32.xlu0 %v251, 32
      %v320 = vpop.permute.xlu0 %319
      %321 = vrot.lane.b32.xlu0 %v252, 32
      %v322 = vpop.permute.xlu0 %321
      %323 = vrot.lane.b32.xlu0 %v253, 32
      %v324 = vpop.permute.xlu0 %323
      %325 = vrot.lane.b32.xlu0 %v254, 32
      %v326 = vpop.permute.xlu0 %325
      %327 = vrot.lane.b32.xlu0 %v255, 32
      %v328 = vpop.permute.xlu0 %327
      %329 = vrot.lane.b32.xlu0 %v256, 32
      %v330 = vpop.permute.xlu0 %329
      %331 = vrot.lane.b32.xlu0 %v257, 32
      %v332 = vpop.permute.xlu0 %331
      %333 = vrot.lane.b32.xlu0 %v258, 32
      %v334 = vpop.permute.xlu0 %333
      %335 = vrot.lane.b32.xlu0 %v259, 32
      %v336 = vpop.permute.xlu0 %335
      %337 = vrot.lane.b32.xlu0 %v260, 32
      %v338 = vpop.permute.xlu0 %337
      %339 = vrot.lane.b32.xlu0 %v261, 32
      %v340 = vpop.permute.xlu0 %339
      %341 = vrot.lane.b32.xlu0 %v262, 32
      %v342 = vpop.permute.xlu0 %341
      %343 = vrot.lane.b32.xlu0 %v263, 32
      %v344 = vpop.permute.xlu0 %343
      %345 = vrot.lane.b32.xlu0 %v264, 32
      %v346 = vpop.permute.xlu0 %345
      %347 = vrot.lane.b32.xlu0 %v265, 32
      %v348 = vpop.permute.xlu0 %347
      %349 = vrot.lane.b32.xlu0 %v266, 32
      %v350 = vpop.permute.xlu0 %349
      %351 = vrot.lane.b32.xlu0 %v267, 32
      %v352 = vpop.permute.xlu0 %351
      %353 = vrot.lane.b32.xlu0 %v268, 32
      %v354 = vpop.permute.xlu0 %353
      %355 = vrot.lane.b32.xlu0 %v269, 32
      %v356 = vpop.permute.xlu0 %355
      %357 = vrot.lane.b32.xlu0 %v270, 32
      %v358 = vpop.permute.xlu0 %357
      %359 = vrot.lane.b32.xlu0 %v271, 32
      %v360 = vpop.permute.xlu0 %359
      %361 = vrot.lane.b32.xlu0 %v272, 32
      %v362 = vpop.permute.xlu0 %361
      %363 = vrot.lane.b32.xlu0 %v273, 32
      %v364 = vpop.permute.xlu0 %363
      %365 = vrot.lane.b32.xlu0 %v274, 32
      %v366 = vpop.permute.xlu0 %365
      %367 = vrot.lane.b32.xlu0 %v275, 32
      %v368 = vpop.permute.xlu0 %367
      %369 = vrot.lane.b32.xlu0 %v276, 32
      %v370 = vpop.permute.xlu0 %369
      %371 = vrot.lane.b32.xlu0 %v277, 32
      %v372 = vpop.permute.xlu0 %371
      %373 = vrot.lane.b32.xlu0 %v278, 32
      %v374 = vpop.permute.xlu0 %373
      %vm407 = vcmask 523520
      %408 = vst.msk [vmem:[#allocation2] sm:$0xff] %vm407, %v312
      %409 = vst.msk [vmem:[#allocation2 + $0x18] sm:$0xff] %vm407, %v314
      %410 = vst.msk [vmem:[#allocation2 + $0x30] sm:$0xff] %vm407, %v316
      %411 = vst.msk [vmem:[#allocation2 + $0x48] sm:$0xff] %vm407, %v318
      %412 = vst.msk [vmem:[#allocation2 + $0x60] sm:$0xff] %vm407, %v320
      %413 = vst.msk [vmem:[#allocation2 + $0x78] sm:$0xff] %vm407, %v322
      %414 = vst.msk [vmem:[#allocation2 + $0x90] sm:$0xff] %vm407, %v324
      %415 = vst.msk [vmem:[#allocation2 + $0xa8] sm:$0xff] %vm407, %v326
      %416 = vst.msk [vmem:[#allocation2 + $0xc0] sm:$0xff] %vm407, %v328
      %417 = vst.msk [vmem:[#allocation2 + $0xd8] sm:$0xff] %vm407, %v330
      %418 = vst.msk [vmem:[#allocation2 + $0xf0] sm:$0xff] %vm407, %v332
      %419 = vst.msk [vmem:[#allocation2 + $0x108] sm:$0xff] %vm407, %v334
      %420 = vst.msk [vmem:[#allocation2 + $0x120] sm:$0xff] %vm407, %v336
      %421 = vst.msk [vmem:[#allocation2 + $0x138] sm:$0xff] %vm407, %v338
      %422 = vst.msk [vmem:[#allocation2 + $0x150] sm:$0xff] %vm407, %v340
      %423 = vst.msk [vmem:[#allocation2 + $0x168] sm:$0xff] %vm407, %v342
      %424 = vst.msk [vmem:[#allocation2 + $0x180] sm:$0xff] %vm407, %v344
      %425 = vst.msk [vmem:[#allocation2 + $0x198] sm:$0xff] %vm407, %v346
      %426 = vst.msk [vmem:[#allocation2 + $0x1b0] sm:$0xff] %vm407, %v348
      %427 = vst.msk [vmem:[#allocation2 + $0x1c8] sm:$0xff] %vm407, %v350
      %428 = vst.msk [vmem:[#allocation2 + $0x1e0] sm:$0xff] %vm407, %v352
      %429 = vst.msk [vmem:[#allocation2 + $0x1f8] sm:$0xff] %vm407, %v354
      %430 = vst.msk [vmem:[#allocation2 + $0x210] sm:$0xff] %vm407, %v356
      %431 = vst.msk [vmem:[#allocation2 + $0x228] sm:$0xff] %vm407, %v358
      %432 = vst.msk [vmem:[#allocation2 + $0x240] sm:$0xff] %vm407, %v360
      %433 = vst.msk [vmem:[#allocation2 + $0x258] sm:$0xff] %vm407, %v362
      %434 = vst.msk [vmem:[#allocation2 + $0x270] sm:$0xff] %vm407, %v364
      %435 = vst.msk [vmem:[#allocation2 + $0x288] sm:$0xff] %vm407, %v366
      %436 = vst.msk [vmem:[#allocation2 + $0x2a0] sm:$0xff] %vm407, %v368
      %437 = vst.msk [vmem:[#allocation2 + $0x2b8] sm:$0xff] %vm407, %v370
      %438 = vst.msk [vmem:[#allocation2 + $0x2d0] sm:$0xff] %vm407, %v372
      %439 = vst.msk [vmem:[#allocation2 + $0x2e8] sm:$0xff] %vm407, %v374
      %v440 = vld [vmem:[%s172 + $0x2] sm:$0xff]
      %v441 = vld [vmem:[%s172 + $0xa] sm:$0xff]
      %v442 = vld [vmem:[%s172 + $0x1a] sm:$0xff]
      %v443 = vld [vmem:[%s172 + $0x22] sm:$0xff]
      %v444 = vld [vmem:[%s172 + $0x32] sm:$0xff]
      %v445 = vld [vmem:[%s172 + $0x3a] sm:$0xff]
      %v446 = vld [vmem:[%s172 + $0x4a] sm:$0xff]
      %v447 = vld [vmem:[%s172 + $0x52] sm:$0xff]
      %v448 = vld [vmem:[%s172 + $0x62] sm:$0xff]
      %v449 = vld [vmem:[%s172 + $0x6a] sm:$0xff]
      %v450 = vld [vmem:[%s172 + $0x7a] sm:$0xff]
      %v451 = vld [vmem:[%s172 + $0x82] sm:$0xff]
      %v452 = vld [vmem:[%s172 + $0x92] sm:$0xff]
      %v453 = vld [vmem:[%s172 + $0x9a] sm:$0xff]
      %v454 = vld [vmem:[%s172 + $0xaa] sm:$0xff]
      %v455 = vld [vmem:[%s172 + $0xb2] sm:$0xff]
      %v456 = vld [vmem:[%s172 + $0xc2] sm:$0xff]
      %v457 = vld [vmem:[%s172 + $0xca] sm:$0xff]
      %v458 = vld [vmem:[%s172 + $0xda] sm:$0xff]
      %v459 = vld [vmem:[%s172 + $0xe2] sm:$0xff]
      %v460 = vld [vmem:[%s172 + $0xf2] sm:$0xff]
      %v461 = vld [vmem:[%s172 + $0xfa] sm:$0xff]
      %v462 = vld [vmem:[%s172 + $0x10a] sm:$0xff]
      %v463 = vld [vmem:[%s172 + $0x112] sm:$0xff]
      %v464 = vld [vmem:[%s172 + $0x122] sm:$0xff]
      %v465 = vld [vmem:[%s172 + $0x12a] sm:$0xff]
      %v466 = vld [vmem:[%s172 + $0x13a] sm:$0xff]
      %v467 = vld [vmem:[%s172 + $0x142] sm:$0xff]
      %v468 = vld [vmem:[%s172 + $0x152] sm:$0xff]
      %v469 = vld [vmem:[%s172 + $0x15a] sm:$0xff]
      %v470 = vld [vmem:[%s172 + $0x16a] sm:$0xff]
      %v471 = vld [vmem:[%s172 + $0x172] sm:$0xff]
      %504 = vrot.lane.b32.xlu0 %v440, 64
      %v505 = vpop.permute.xlu0 %504
      %506 = vrot.lane.b32.xlu0 %v441, 64
      %v507 = vpop.permute.xlu0 %506
      %508 = vrot.lane.b32.xlu0 %v442, 64
      %v509 = vpop.permute.xlu0 %508
      %510 = vrot.lane.b32.xlu0 %v443, 64
      %v511 = vpop.permute.xlu0 %510
      %512 = vrot.lane.b32.xlu0 %v444, 64
      %v513 = vpop.permute.xlu0 %512
      %514 = vrot.lane.b32.xlu0 %v445, 64
      %v515 = vpop.permute.xlu0 %514
      %516 = vrot.lane.b32.xlu0 %v446, 64
      %v517 = vpop.permute.xlu0 %516
      %518 = vrot.lane.b32.xlu0 %v447, 64
      %v519 = vpop.permute.xlu0 %518
      %520 = vrot.lane.b32.xlu0 %v448, 64
      %v521 = vpop.permute.xlu0 %520
      %522 = vrot.lane.b32.xlu0 %v449, 64
      %v523 = vpop.permute.xlu0 %522
      %524 = vrot.lane.b32.xlu0 %v450, 64
      %v525 = vpop.permute.xlu0 %524
      %526 = vrot.lane.b32.xlu0 %v451, 64
      %v527 = vpop.permute.xlu0 %526
      %528 = vrot.lane.b32.xlu0 %v452, 64
      %v529 = vpop.permute.xlu0 %528
      %530 = vrot.lane.b32.xlu0 %v453, 64
      %v531 = vpop.permute.xlu0 %530
      %532 = vrot.lane.b32.xlu0 %v454, 64
      %v533 = vpop.permute.xlu0 %532
      %534 = vrot.lane.b32.xlu0 %v455, 64
      %v535 = vpop.permute.xlu0 %534
      %536 = vrot.lane.b32.xlu0 %v456, 64
      %v537 = vpop.permute.xlu0 %536
      %538 = vrot.lane.b32.xlu0 %v457, 64
      %v539 = vpop.permute.xlu0 %538
      %540 = vrot.lane.b32.xlu0 %v458, 64
      %v541 = vpop.permute.xlu0 %540
      %542 = vrot.lane.b32.xlu0 %v459, 64
      %v543 = vpop.permute.xlu0 %542
      %544 = vrot.lane.b32.xlu0 %v460, 64
      %v545 = vpop.permute.xlu0 %544
      %546 = vrot.lane.b32.xlu0 %v461, 64
      %v547 = vpop.permute.xlu0 %546
      %548 = vrot.lane.b32.xlu0 %v462, 64
      %v549 = vpop.permute.xlu0 %548
      %550 = vrot.lane.b32.xlu0 %v463, 64
      %v551 = vpop.permute.xlu0 %550
      %552 = vrot.lane.b32.xlu0 %v464, 64
      %v553 = vpop.permute.xlu0 %552
      %554 = vrot.lane.b32.xlu0 %v465, 64
      %v555 = vpop.permute.xlu0 %554
      %556 = vrot.lane.b32.xlu0 %v466, 64
      %v557 = vpop.permute.xlu0 %556
      %558 = vrot.lane.b32.xlu0 %v467, 64
      %v559 = vpop.permute.xlu0 %558
      %560 = vrot.lane.b32.xlu0 %v468, 64
      %v561 = vpop.permute.xlu0 %560
      %562 = vrot.lane.b32.xlu0 %v469, 64
      %v563 = vpop.permute.xlu0 %562
      %564 = vrot.lane.b32.xlu0 %v470, 64
      %v565 = vpop.permute.xlu0 %564
      %566 = vrot.lane.b32.xlu0 %v471, 64
      %v567 = vpop.permute.xlu0 %566
      %vm600 = vcmask 785920
      %601 = vst.msk [vmem:[#allocation2] sm:$0xff] %vm600, %v505
      %602 = vst.msk [vmem:[#allocation2 + $0x18] sm:$0xff] %vm600, %v507
      %603 = vst.msk [vmem:[#allocation2 + $0x30] sm:$0xff] %vm600, %v509
      %604 = vst.msk [vmem:[#allocation2 + $0x48] sm:$0xff] %vm600, %v511
      %605 = vst.msk [vmem:[#allocation2 + $0x60] sm:$0xff] %vm600, %v513
      %606 = vst.msk [vmem:[#allocation2 + $0x78] sm:$0xff] %vm600, %v515
      %607 = vst.msk [vmem:[#allocation2 + $0x90] sm:$0xff] %vm600, %v517
      %608 = vst.msk [vmem:[#allocation2 + $0xa8] sm:$0xff] %vm600, %v519
      %609 = vst.msk [vmem:[#allocation2 + $0xc0] sm:$0xff] %vm600, %v521
      %610 = vst.msk [vmem:[#allocation2 + $0xd8] sm:$0xff] %vm600, %v523
      %611 = vst.msk [vmem:[#allocation2 + $0xf0] sm:$0xff] %vm600, %v525
      %612 = vst.msk [vmem:[#allocation2 + $0x108] sm:$0xff] %vm600, %v527
      %613 = vst.msk [vmem:[#allocation2 + $0x120] sm:$0xff] %vm600, %v529
      %614 = vst.msk [vmem:[#allocation2 + $0x138] sm:$0xff] %vm600, %v531
      %615 = vst.msk [vmem:[#allocation2 + $0x150] sm:$0xff] %vm600, %v533
      %616 = vst.msk [vmem:[#allocation2 + $0x168] sm:$0xff] %vm600, %v535
      %617 = vst.msk [vmem:[#allocation2 + $0x180] sm:$0xff] %vm600, %v537
      %618 = vst.msk [vmem:[#allocation2 + $0x198] sm:$0xff] %vm600, %v539
      %619 = vst.msk [vmem:[#allocation2 + $0x1b0] sm:$0xff] %vm600, %v541
      %620 = vst.msk [vmem:[#allocation2 + $0x1c8] sm:$0xff] %vm600, %v543
      %621 = vst.msk [vmem:[#allocation2 + $0x1e0] sm:$0xff] %vm600, %v545
      %622 = vst.msk [vmem:[#allocation2 + $0x1f8] sm:$0xff] %vm600, %v547
      %623 = vst.msk [vmem:[#allocation2 + $0x210] sm:$0xff] %vm600, %v549
      %624 = vst.msk [vmem:[#allocation2 + $0x228] sm:$0xff] %vm600, %v551
      %625 = vst.msk [vmem:[#allocation2 + $0x240] sm:$0xff] %vm600, %v553
      %626 = vst.msk [vmem:[#allocation2 + $0x258] sm:$0xff] %vm600, %v555
      %627 = vst.msk [vmem:[#allocation2 + $0x270] sm:$0xff] %vm600, %v557
      %628 = vst.msk [vmem:[#allocation2 + $0x288] sm:$0xff] %vm600, %v559
      %629 = vst.msk [vmem:[#allocation2 + $0x2a0] sm:$0xff] %vm600, %v561
      %630 = vst.msk [vmem:[#allocation2 + $0x2b8] sm:$0xff] %vm600, %v563
      %631 = vst.msk [vmem:[#allocation2 + $0x2d0] sm:$0xff] %vm600, %v565
      %632 = vst.msk [vmem:[#allocation2 + $0x2e8] sm:$0xff] %vm600, %v567
      %s633 = scalar_lea.vmem %s172, 24
      %v634 = vld [vmem:[%s633] sm:$0xff]
      %v635 = vld [vmem:[%s633 + $0x8] sm:$0xff]
      %v636 = vld [vmem:[%s633 + $0x18] sm:$0xff]
      %v637 = vld [vmem:[%s633 + $0x20] sm:$0xff]
      %v638 = vld [vmem:[%s633 + $0x30] sm:$0xff]
      %v639 = vld [vmem:[%s633 + $0x38] sm:$0xff]
      %v640 = vld [vmem:[%s633 + $0x48] sm:$0xff]
      %v641 = vld [vmem:[%s633 + $0x50] sm:$0xff]
      %v642 = vld [vmem:[%s633 + $0x60] sm:$0xff]
      %v643 = vld [vmem:[%s633 + $0x68] sm:$0xff]
      %v644 = vld [vmem:[%s633 + $0x78] sm:$0xff]
      %v645 = vld [vmem:[%s633 + $0x80] sm:$0xff]
      %v646 = vld [vmem:[%s633 + $0x90] sm:$0xff]
      %v647 = vld [vmem:[%s633 + $0x98] sm:$0xff]
      %v648 = vld [vmem:[%s633 + $0xa8] sm:$0xff]
      %v649 = vld [vmem:[%s633 + $0xb0] sm:$0xff]
      %v650 = vld [vmem:[%s633 + $0xc0] sm:$0xff]
      %v651 = vld [vmem:[%s633 + $0xc8] sm:$0xff]
      %v652 = vld [vmem:[%s633 + $0xd8] sm:$0xff]
      %v653 = vld [vmem:[%s633 + $0xe0] sm:$0xff]
      %v654 = vld [vmem:[%s633 + $0xf0] sm:$0xff]
      %v655 = vld [vmem:[%s633 + $0xf8] sm:$0xff]
      %v656 = vld [vmem:[%s633 + $0x108] sm:$0xff]
      %v657 = vld [vmem:[%s633 + $0x110] sm:$0xff]
      %v658 = vld [vmem:[%s633 + $0x120] sm:$0xff]
      %v659 = vld [vmem:[%s633 + $0x128] sm:$0xff]
      %v660 = vld [vmem:[%s633 + $0x138] sm:$0xff]
      %v661 = vld [vmem:[%s633 + $0x140] sm:$0xff]
      %v662 = vld [vmem:[%s633 + $0x150] sm:$0xff]
      %v663 = vld [vmem:[%s633 + $0x158] sm:$0xff]
      %v664 = vld [vmem:[%s633 + $0x168] sm:$0xff]
      %v665 = vld [vmem:[%s633 + $0x170] sm:$0xff]
      %698 = vrot.lane.b32.xlu0 %v634, 96
      %v699 = vpop.permute.xlu0 %698
      %700 = vrot.lane.b32.xlu0 %v635, 96
      %v701 = vpop.permute.xlu0 %700
      %702 = vrot.lane.b32.xlu0 %v636, 96
      %v703 = vpop.permute.xlu0 %702
      %704 = vrot.lane.b32.xlu0 %v637, 96
      %v705 = vpop.permute.xlu0 %704
      %706 = vrot.lane.b32.xlu0 %v638, 96
      %v707 = vpop.permute.xlu0 %706
      %708 = vrot.lane.b32.xlu0 %v639, 96
      %v709 = vpop.permute.xlu0 %708
      %710 = vrot.lane.b32.xlu0 %v640, 96
      %v711 = vpop.permute.xlu0 %710
      %712 = vrot.lane.b32.xlu0 %v641, 96
      %v713 = vpop.permute.xlu0 %712
      %714 = vrot.lane.b32.xlu0 %v642, 96
      %v715 = vpop.permute.xlu0 %714
      %716 = vrot.lane.b32.xlu0 %v643, 96
      %v717 = vpop.permute.xlu0 %716
      %718 = vrot.lane.b32.xlu0 %v644, 96
      %v719 = vpop.permute.xlu0 %718
      %720 = vrot.lane.b32.xlu0 %v645, 96
      %v721 = vpop.permute.xlu0 %720
      %722 = vrot.lane.b32.xlu0 %v646, 96
      %v723 = vpop.permute.xlu0 %722
      %724 = vrot.lane.b32.xlu0 %v647, 96
      %v725 = vpop.permute.xlu0 %724
      %726 = vrot.lane.b32.xlu0 %v648, 96
      %v727 = vpop.permute.xlu0 %726
      %728 = vrot.lane.b32.xlu0 %v649, 96
      %v729 = vpop.permute.xlu0 %728
      %730 = vrot.lane.b32.xlu0 %v650, 96
      %v731 = vpop.permute.xlu0 %730
      %732 = vrot.lane.b32.xlu0 %v651, 96
      %v733 = vpop.permute.xlu0 %732
      %734 = vrot.lane.b32.xlu0 %v652, 96
      %v735 = vpop.permute.xlu0 %734
      %736 = vrot.lane.b32.xlu0 %v653, 96
      %v737 = vpop.permute.xlu0 %736
      %738 = vrot.lane.b32.xlu0 %v654, 96
      %v739 = vpop.permute.xlu0 %738
      %740 = vrot.lane.b32.xlu0 %v655, 96
      %v741 = vpop.permute.xlu0 %740
      %742 = vrot.lane.b32.xlu0 %v656, 96
      %v743 = vpop.permute.xlu0 %742
      %744 = vrot.lane.b32.xlu0 %v657, 96
      %v745 = vpop.permute.xlu0 %744
      %746 = vrot.lane.b32.xlu0 %v658, 96
      %v747 = vpop.permute.xlu0 %746
      %748 = vrot.lane.b32.xlu0 %v659, 96
      %v749 = vpop.permute.xlu0 %748
      %750 = vrot.lane.b32.xlu0 %v660, 96
      %v751 = vpop.permute.xlu0 %750
      %752 = vrot.lane.b32.xlu0 %v661, 96
      %v753 = vpop.permute.xlu0 %752
      %754 = vrot.lane.b32.xlu0 %v662, 96
      %v755 = vpop.permute.xlu0 %754
      %756 = vrot.lane.b32.xlu0 %v663, 96
      %v757 = vpop.permute.xlu0 %756
      %758 = vrot.lane.b32.xlu0 %v664, 96
      %v759 = vpop.permute.xlu0 %758
      %760 = vrot.lane.b32.xlu0 %v665, 96
      %v761 = vpop.permute.xlu0 %760
      %vm794 = vcmask 1048320
      %795 = vst.msk [vmem:[#allocation2] sm:$0xff] %vm794, %v699
      %796 = vst.msk [vmem:[#allocation2 + $0x18] sm:$0xff] %vm794, %v701
      %797 = vst.msk [vmem:[#allocation2 + $0x30] sm:$0xff] %vm794, %v703
      %798 = vst.msk [vmem:[#allocation2 + $0x48] sm:$0xff] %vm794, %v705
      %799 = vst.msk [vmem:[#allocation2 + $0x60] sm:$0xff] %vm794, %v707
      %800 = vst.msk [vmem:[#allocation2 + $0x78] sm:$0xff] %vm794, %v709
      %801 = vst.msk [vmem:[#allocation2 + $0x90] sm:$0xff] %vm794, %v711
      %802 = vst.msk [vmem:[#allocation2 + $0xa8] sm:$0xff] %vm794, %v713
      %803 = vst.msk [vmem:[#allocation2 + $0xc0] sm:$0xff] %vm794, %v715
      %804 = vst.msk [vmem:[#allocation2 + $0xd8] sm:$0xff] %vm794, %v717
      %805 = vst.msk [vmem:[#allocation2 + $0xf0] sm:$0xff] %vm794, %v719
      %806 = vst.msk [vmem:[#allocation2 + $0x108] sm:$0xff] %vm794, %v721
      %807 = vst.msk [vmem:[#allocation2 + $0x120] sm:$0xff] %vm794, %v723
      %808 = vst.msk [vmem:[#allocation2 + $0x138] sm:$0xff] %vm794, %v725
      %809 = vst.msk [vmem:[#allocation2 + $0x150] sm:$0xff] %vm794, %v727
      %810 = vst.msk [vmem:[#allocation2 + $0x168] sm:$0xff] %vm794, %v729
      %811 = vst.msk [vmem:[#allocation2 + $0x180] sm:$0xff] %vm794, %v731
      %812 = vst.msk [vmem:[#allocation2 + $0x198] sm:$0xff] %vm794, %v733
      %813 = vst.msk [vmem:[#allocation2 + $0x1b0] sm:$0xff] %vm794, %v735
      %814 = vst.msk [vmem:[#allocation2 + $0x1c8] sm:$0xff] %vm794, %v737
      %815 = vst.msk [vmem:[#allocation2 + $0x1e0] sm:$0xff] %vm794, %v739
      %816 = vst.msk [vmem:[#allocation2 + $0x1f8] sm:$0xff] %vm794, %v741
      %817 = vst.msk [vmem:[#allocation2 + $0x210] sm:$0xff] %vm794, %v743
      %818 = vst.msk [vmem:[#allocation2 + $0x228] sm:$0xff] %vm794, %v745
      %819 = vst.msk [vmem:[#allocation2 + $0x240] sm:$0xff] %vm794, %v747
      %820 = vst.msk [vmem:[#allocation2 + $0x258] sm:$0xff] %vm794, %v749
      %821 = vst.msk [vmem:[#allocation2 + $0x270] sm:$0xff] %vm794, %v751
      %822 = vst.msk [vmem:[#allocation2 + $0x288] sm:$0xff] %vm794, %v753
      %823 = vst.msk [vmem:[#allocation2 + $0x2a0] sm:$0xff] %vm794, %v755
      %824 = vst.msk [vmem:[#allocation2 + $0x2b8] sm:$0xff] %vm794, %v757
      %825 = vst.msk [vmem:[#allocation2 + $0x2d0] sm:$0xff] %vm794, %v759
      %826 = vst.msk [vmem:[#allocation2 + $0x2e8] sm:$0xff] %vm794, %v761
      %v827 = vld [vmem:[%s633 + $0x1] sm:$0xff]
      %v828 = vld [vmem:[%s633 + $0x9] sm:$0xff]
      %v829 = vld [vmem:[%s633 + $0x19] sm:$0xff]
      %v830 = vld [vmem:[%s633 + $0x21] sm:$0xff]
      %v831 = vld [vmem:[%s633 + $0x31] sm:$0xff]
      %v832 = vld [vmem:[%s633 + $0x39] sm:$0xff]
      %v833 = vld [vmem:[%s633 + $0x49] sm:$0xff]
      %v834 = vld [vmem:[%s633 + $0x51] sm:$0xff]
      %v835 = vld [vmem:[%s633 + $0x61] sm:$0xff]
      %v836 = vld [vmem:[%s633 + $0x69] sm:$0xff]
      %v837 = vld [vmem:[%s633 + $0x79] sm:$0xff]
      %v838 = vld [vmem:[%s633 + $0x81] sm:$0xff]
      %v839 = vld [vmem:[%s633 + $0x91] sm:$0xff]
      %v840 = vld [vmem:[%s633 + $0x99] sm:$0xff]
      %v841 = vld [vmem:[%s633 + $0xa9] sm:$0xff]
      %v842 = vld [vmem:[%s633 + $0xb1] sm:$0xff]
      %v843 = vld [vmem:[%s633 + $0xc1] sm:$0xff]
      %v844 = vld [vmem:[%s633 + $0xc9] sm:$0xff]
      %v845 = vld [vmem:[%s633 + $0xd9] sm:$0xff]
      %v846 = vld [vmem:[%s633 + $0xe1] sm:$0xff]
      %v847 = vld [vmem:[%s633 + $0xf1] sm:$0xff]
      %v848 = vld [vmem:[%s633 + $0xf9] sm:$0xff]
      %v849 = vld [vmem:[%s633 + $0x109] sm:$0xff]
      %v850 = vld [vmem:[%s633 + $0x111] sm:$0xff]
      %v851 = vld [vmem:[%s633 + $0x121] sm:$0xff]
      %v852 = vld [vmem:[%s633 + $0x129] sm:$0xff]
      %v853 = vld [vmem:[%s633 + $0x139] sm:$0xff]
      %v854 = vld [vmem:[%s633 + $0x141] sm:$0xff]
      %v855 = vld [vmem:[%s633 + $0x151] sm:$0xff]
      %v856 = vld [vmem:[%s633 + $0x159] sm:$0xff]
      %v857 = vld [vmem:[%s633 + $0x169] sm:$0xff]
      %v858 = vld [vmem:[%s633 + $0x171] sm:$0xff]
      %859 = vst.msk [vmem:[#allocation2 + $0x8] sm:$0xff] %vm214, %v827
      %860 = vst.msk [vmem:[#allocation2 + $0x20] sm:$0xff] %vm214, %v828
      %861 = vst.msk [vmem:[#allocation2 + $0x38] sm:$0xff] %vm214, %v829
      %862 = vst.msk [vmem:[#allocation2 + $0x50] sm:$0xff] %vm214, %v830
      %863 = vst.msk [vmem:[#allocation2 + $0x68] sm:$0xff] %vm214, %v831
      %864 = vst.msk [vmem:[#allocation2 + $0x80] sm:$0xff] %vm214, %v832
      %865 = vst.msk [vmem:[#allocation2 + $0x98] sm:$0xff] %vm214, %v833
      %866 = vst.msk [vmem:[#allocation2 + $0xb0] sm:$0xff] %vm214, %v834
      %867 = vst.msk [vmem:[#allocation2 + $0xc8] sm:$0xff] %vm214, %v835
      %868 = vst.msk [vmem:[#allocation2 + $0xe0] sm:$0xff] %vm214, %v836
      %869 = vst.msk [vmem:[#allocation2 + $0xf8] sm:$0xff] %vm214, %v837
      %870 = vst.msk [vmem:[#allocation2 + $0x110] sm:$0xff] %vm214, %v838
      %871 = vst.msk [vmem:[#allocation2 + $0x128] sm:$0xff] %vm214, %v839
      %872 = vst.msk [vmem:[#allocation2 + $0x140] sm:$0xff] %vm214, %v840
      %873 = vst.msk [vmem:[#allocation2 + $0x158] sm:$0xff] %vm214, %v841
      %874 = vst.msk [vmem:[#allocation2 + $0x170] sm:$0xff] %vm214, %v842
      %875 = vst.msk [vmem:[#allocation2 + $0x188] sm:$0xff] %vm214, %v843
      %876 = vst.msk [vmem:[#allocation2 + $0x1a0] sm:$0xff] %vm214, %v844
      %877 = vst.msk [vmem:[#allocation2 + $0x1b8] sm:$0xff] %vm214, %v845
      %878 = vst.msk [vmem:[#allocation2 + $0x1d0] sm:$0xff] %vm214, %v846
      %879 = vst.msk [vmem:[#allocation2 + $0x1e8] sm:$0xff] %vm214, %v847
      %880 = vst.msk [vmem:[#allocation2 + $0x200] sm:$0xff] %vm214, %v848
      %881 = vst.msk [vmem:[#allocation2 + $0x218] sm:$0xff] %vm214, %v849
      %882 = vst.msk [vmem:[#allocation2 + $0x230] sm:$0xff] %vm214, %v850
      %883 = vst.msk [vmem:[#allocation2 + $0x248] sm:$0xff] %vm214, %v851
      %884 = vst.msk [vmem:[#allocation2 + $0x260] sm:$0xff] %vm214, %v852
      %885 = vst.msk [vmem:[#allocation2 + $0x278] sm:$0xff] %vm214, %v853
      %886 = vst.msk [vmem:[#allocation2 + $0x290] sm:$0xff] %vm214, %v854
      %887 = vst.msk [vmem:[#allocation2 + $0x2a8] sm:$0xff] %vm214, %v855
      %888 = vst.msk [vmem:[#allocation2 + $0x2c0] sm:$0xff] %vm214, %v856
      %889 = vst.msk [vmem:[#allocation2 + $0x2d8] sm:$0xff] %vm214, %v857
      %890 = vst.msk [vmem:[#allocation2 + $0x2f0] sm:$0xff] %vm214, %v858
      %v891 = vld [vmem:[%s633 + $0x2] sm:$0xff]
      %v892 = vld [vmem:[%s633 + $0xa] sm:$0xff]
      %v893 = vld [vmem:[%s633 + $0x1a] sm:$0xff]
      %v894 = vld [vmem:[%s633 + $0x22] sm:$0xff]
      %v895 = vld [vmem:[%s633 + $0x32] sm:$0xff]
      %v896 = vld [vmem:[%s633 + $0x3a] sm:$0xff]
      %v897 = vld [vmem:[%s633 + $0x4a] sm:$0xff]
      %v898 = vld [vmem:[%s633 + $0x52] sm:$0xff]
      %v899 = vld [vmem:[%s633 + $0x62] sm:$0xff]
      %v900 = vld [vmem:[%s633 + $0x6a] sm:$0xff]
      %v901 = vld [vmem:[%s633 + $0x7a] sm:$0xff]
      %v902 = vld [vmem:[%s633 + $0x82] sm:$0xff]
      %v903 = vld [vmem:[%s633 + $0x92] sm:$0xff]
      %v904 = vld [vmem:[%s633 + $0x9a] sm:$0xff]
      %v905 = vld [vmem:[%s633 + $0xaa] sm:$0xff]
      %v906 = vld [vmem:[%s633 + $0xb2] sm:$0xff]
      %v907 = vld [vmem:[%s633 + $0xc2] sm:$0xff]
      %v908 = vld [vmem:[%s633 + $0xca] sm:$0xff]
      %v909 = vld [vmem:[%s633 + $0xda] sm:$0xff]
      %v910 = vld [vmem:[%s633 + $0xe2] sm:$0xff]
      %v911 = vld [vmem:[%s633 + $0xf2] sm:$0xff]
      %v912 = vld [vmem:[%s633 + $0xfa] sm:$0xff]
      %v913 = vld [vmem:[%s633 + $0x10a] sm:$0xff]
      %v914 = vld [vmem:[%s633 + $0x112] sm:$0xff]
      %v915 = vld [vmem:[%s633 + $0x122] sm:$0xff]
      %v916 = vld [vmem:[%s633 + $0x12a] sm:$0xff]
      %v917 = vld [vmem:[%s633 + $0x13a] sm:$0xff]
      %v918 = vld [vmem:[%s633 + $0x142] sm:$0xff]
      %v919 = vld [vmem:[%s633 + $0x152] sm:$0xff]
      %v920 = vld [vmem:[%s633 + $0x15a] sm:$0xff]
      %v921 = vld [vmem:[%s633 + $0x16a] sm:$0xff]
      %v922 = vld [vmem:[%s633 + $0x172] sm:$0xff]
      %955 = vrot.lane.b32.xlu0 %v891, 32
      %v956 = vpop.permute.xlu0 %955
      %957 = vrot.lane.b32.xlu0 %v892, 32
      %v958 = vpop.permute.xlu0 %957
      %959 = vrot.lane.b32.xlu0 %v893, 32
      %v960 = vpop.permute.xlu0 %959
      %961 = vrot.lane.b32.xlu0 %v894, 32
      %v962 = vpop.permute.xlu0 %961
      %963 = vrot.lane.b32.xlu0 %v895, 32
      %v964 = vpop.permute.xlu0 %963
      %965 = vrot.lane.b32.xlu0 %v896, 32
      %v966 = vpop.permute.xlu0 %965
      %967 = vrot.lane.b32.xlu0 %v897, 32
      %v968 = vpop.permute.xlu0 %967
      %969 = vrot.lane.b32.xlu0 %v898, 32
      %v970 = vpop.permute.xlu0 %969
      %971 = vrot.lane.b32.xlu0 %v899, 32
      %v972 = vpop.permute.xlu0 %971
      %973 = vrot.lane.b32.xlu0 %v900, 32
      %v974 = vpop.permute.xlu0 %973
      %975 = vrot.lane.b32.xlu0 %v901, 32
      %v976 = vpop.permute.xlu0 %975
      %977 = vrot.lane.b32.xlu0 %v902, 32
      %v978 = vpop.permute.xlu0 %977
      %979 = vrot.lane.b32.xlu0 %v903, 32
      %v980 = vpop.permute.xlu0 %979
      %981 = vrot.lane.b32.xlu0 %v904, 32
      %v982 = vpop.permute.xlu0 %981
      %983 = vrot.lane.b32.xlu0 %v905, 32
      %v984 = vpop.permute.xlu0 %983
      %985 = vrot.lane.b32.xlu0 %v906, 32
      %v986 = vpop.permute.xlu0 %985
      %987 = vrot.lane.b32.xlu0 %v907, 32
      %v988 = vpop.permute.xlu0 %987
      %989 = vrot.lane.b32.xlu0 %v908, 32
      %v990 = vpop.permute.xlu0 %989
      %991 = vrot.lane.b32.xlu0 %v909, 32
      %v992 = vpop.permute.xlu0 %991
      %993 = vrot.lane.b32.xlu0 %v910, 32
      %v994 = vpop.permute.xlu0 %993
      %995 = vrot.lane.b32.xlu0 %v911, 32
      %v996 = vpop.permute.xlu0 %995
      %997 = vrot.lane.b32.xlu0 %v912, 32
      %v998 = vpop.permute.xlu0 %997
      %999 = vrot.lane.b32.xlu0 %v913, 32
      %v1000 = vpop.permute.xlu0 %999
      %1001 = vrot.lane.b32.xlu0 %v914, 32
      %v1002 = vpop.permute.xlu0 %1001
      %1003 = vrot.lane.b32.xlu0 %v915, 32
      %v1004 = vpop.permute.xlu0 %1003
      %1005 = vrot.lane.b32.xlu0 %v916, 32
      %v1006 = vpop.permute.xlu0 %1005
      %1007 = vrot.lane.b32.xlu0 %v917, 32
      %v1008 = vpop.permute.xlu0 %1007
      %1009 = vrot.lane.b32.xlu0 %v918, 32
      %v1010 = vpop.permute.xlu0 %1009
      %1011 = vrot.lane.b32.xlu0 %v919, 32
      %v1012 = vpop.permute.xlu0 %1011
      %1013 = vrot.lane.b32.xlu0 %v920, 32
      %v1014 = vpop.permute.xlu0 %1013
      %1015 = vrot.lane.b32.xlu0 %v921, 32
      %v1016 = vpop.permute.xlu0 %1015
      %1017 = vrot.lane.b32.xlu0 %v922, 32
      %v1018 = vpop.permute.xlu0 %1017
      %1051 = vst.msk [vmem:[#allocation2 + $0x8] sm:$0xff] %vm407, %v956
      %1052 = vst.msk [vmem:[#allocation2 + $0x20] sm:$0xff] %vm407, %v958
      %1053 = vst.msk [vmem:[#allocation2 + $0x38] sm:$0xff] %vm407, %v960
      %1054 = vst.msk [vmem:[#allocation2 + $0x50] sm:$0xff] %vm407, %v962
      %1055 = vst.msk [vmem:[#allocation2 + $0x68] sm:$0xff] %vm407, %v964
      %1056 = vst.msk [vmem:[#allocation2 + $0x80] sm:$0xff] %vm407, %v966
      %1057 = vst.msk [vmem:[#allocation2 + $0x98] sm:$0xff] %vm407, %v968
      %1058 = vst.msk [vmem:[#allocation2 + $0xb0] sm:$0xff] %vm407, %v970
      %1059 = vst.msk [vmem:[#allocation2 + $0xc8] sm:$0xff] %vm407, %v972
      %1060 = vst.msk [vmem:[#allocation2 + $0xe0] sm:$0xff] %vm407, %v974
      %1061 = vst.msk [vmem:[#allocation2 + $0xf8] sm:$0xff] %vm407, %v976
      %1062 = vst.msk [vmem:[#allocation2 + $0x110] sm:$0xff] %vm407, %v978
      %1063 = vst.msk [vmem:[#allocation2 + $0x128] sm:$0xff] %vm407, %v980
      %1064 = vst.msk [vmem:[#allocation2 + $0x140] sm:$0xff] %vm407, %v982
      %1065 = vst.msk [vmem:[#allocation2 + $0x158] sm:$0xff] %vm407, %v984
      %1066 = vst.msk [vmem:[#allocation2 + $0x170] sm:$0xff] %vm407, %v986
      %1067 = vst.msk [vmem:[#allocation2 + $0x188] sm:$0xff] %vm407, %v988
      %1068 = vst.msk [vmem:[#allocation2 + $0x1a0] sm:$0xff] %vm407, %v990
      %1069 = vst.msk [vmem:[#allocation2 + $0x1b8] sm:$0xff] %vm407, %v992
      %1070 = vst.msk [vmem:[#allocation2 + $0x1d0] sm:$0xff] %vm407, %v994
      %1071 = vst.msk [vmem:[#allocation2 + $0x1e8] sm:$0xff] %vm407, %v996
      %1072 = vst.msk [vmem:[#allocation2 + $0x200] sm:$0xff] %vm407, %v998
      %1073 = vst.msk [vmem:[#allocation2 + $0x218] sm:$0xff] %vm407, %v1000
      %1074 = vst.msk [vmem:[#allocation2 + $0x230] sm:$0xff] %vm407, %v1002
      %1075 = vst.msk [vmem:[#allocation2 + $0x248] sm:$0xff] %vm407, %v1004
      %1076 = vst.msk [vmem:[#allocation2 + $0x260] sm:$0xff] %vm407, %v1006
      %1077 = vst.msk [vmem:[#allocation2 + $0x278] sm:$0xff] %vm407, %v1008
      %1078 = vst.msk [vmem:[#allocation2 + $0x290] sm:$0xff] %vm407, %v1010
      %1079 = vst.msk [vmem:[#allocation2 + $0x2a8] sm:$0xff] %vm407, %v1012
      %1080 = vst.msk [vmem:[#allocation2 + $0x2c0] sm:$0xff] %vm407, %v1014
      %1081 = vst.msk [vmem:[#allocation2 + $0x2d8] sm:$0xff] %vm407, %v1016
      %1082 = vst.msk [vmem:[#allocation2 + $0x2f0] sm:$0xff] %vm407, %v1018
      %s1083 = scalar_lea.vmem %s172, 48
      %v1084 = vld [vmem:[%s1083] sm:$0xff]
      %v1085 = vld [vmem:[%s1083 + $0x8] sm:$0xff]
      %v1086 = vld [vmem:[%s1083 + $0x18] sm:$0xff]
      %v1087 = vld [vmem:[%s1083 + $0x20] sm:$0xff]
      %v1088 = vld [vmem:[%s1083 + $0x30] sm:$0xff]
      %v1089 = vld [vmem:[%s1083 + $0x38] sm:$0xff]
      %v1090 = vld [vmem:[%s1083 + $0x48] sm:$0xff]
      %v1091 = vld [vmem:[%s1083 + $0x50] sm:$0xff]
      %v1092 = vld [vmem:[%s1083 + $0x60] sm:$0xff]
      %v1093 = vld [vmem:[%s1083 + $0x68] sm:$0xff]
      %v1094 = vld [vmem:[%s1083 + $0x78] sm:$0xff]
      %v1095 = vld [vmem:[%s1083 + $0x80] sm:$0xff]
      %v1096 = vld [vmem:[%s1083 + $0x90] sm:$0xff]
      %v1097 = vld [vmem:[%s1083 + $0x98] sm:$0xff]
      %v1098 = vld [vmem:[%s1083 + $0xa8] sm:$0xff]
      %v1099 = vld [vmem:[%s1083 + $0xb0] sm:$0xff]
      %v1100 = vld [vmem:[%s1083 + $0xc0] sm:$0xff]
      %v1101 = vld [vmem:[%s1083 + $0xc8] sm:$0xff]
      %v1102 = vld [vmem:[%s1083 + $0xd8] sm:$0xff]
      %v1103 = vld [vmem:[%s1083 + $0xe0] sm:$0xff]
      %v1104 = vld [vmem:[%s1083 + $0xf0] sm:$0xff]
      %v1105 = vld [vmem:[%s1083 + $0xf8] sm:$0xff]
      %v1106 = vld [vmem:[%s1083 + $0x108] sm:$0xff]
      %v1107 = vld [vmem:[%s1083 + $0x110] sm:$0xff]
      %v1108 = vld [vmem:[%s1083 + $0x120] sm:$0xff]
      %v1109 = vld [vmem:[%s1083 + $0x128] sm:$0xff]
      %v1110 = vld [vmem:[%s1083 + $0x138] sm:$0xff]
      %v1111 = vld [vmem:[%s1083 + $0x140] sm:$0xff]
      %v1112 = vld [vmem:[%s1083 + $0x150] sm:$0xff]
      %v1113 = vld [vmem:[%s1083 + $0x158] sm:$0xff]
      %v1114 = vld [vmem:[%s1083 + $0x168] sm:$0xff]
      %v1115 = vld [vmem:[%s1083 + $0x170] sm:$0xff]
      %1148 = vrot.lane.b32.xlu0 %v1084, 64
      %v1149 = vpop.permute.xlu0 %1148
      %1150 = vrot.lane.b32.xlu0 %v1085, 64
      %v1151 = vpop.permute.xlu0 %1150
      %1152 = vrot.lane.b32.xlu0 %v1086, 64
      %v1153 = vpop.permute.xlu0 %1152
      %1154 = vrot.lane.b32.xlu0 %v1087, 64
      %v1155 = vpop.permute.xlu0 %1154
      %1156 = vrot.lane.b32.xlu0 %v1088, 64
      %v1157 = vpop.permute.xlu0 %1156
      %1158 = vrot.lane.b32.xlu0 %v1089, 64
      %v1159 = vpop.permute.xlu0 %1158
      %1160 = vrot.lane.b32.xlu0 %v1090, 64
      %v1161 = vpop.permute.xlu0 %1160
      %1162 = vrot.lane.b32.xlu0 %v1091, 64
      %v1163 = vpop.permute.xlu0 %1162
      %1164 = vrot.lane.b32.xlu0 %v1092, 64
      %v1165 = vpop.permute.xlu0 %1164
      %1166 = vrot.lane.b32.xlu0 %v1093, 64
      %v1167 = vpop.permute.xlu0 %1166
      %1168 = vrot.lane.b32.xlu0 %v1094, 64
      %v1169 = vpop.permute.xlu0 %1168
      %1170 = vrot.lane.b32.xlu0 %v1095, 64
      %v1171 = vpop.permute.xlu0 %1170
      %1172 = vrot.lane.b32.xlu0 %v1096, 64
      %v1173 = vpop.permute.xlu0 %1172
      %1174 = vrot.lane.b32.xlu0 %v1097, 64
      %v1175 = vpop.permute.xlu0 %1174
      %1176 = vrot.lane.b32.xlu0 %v1098, 64
      %v1177 = vpop.permute.xlu0 %1176
      %1178 = vrot.lane.b32.xlu0 %v1099, 64
      %v1179 = vpop.permute.xlu0 %1178
      %1180 = vrot.lane.b32.xlu0 %v1100, 64
      %v1181 = vpop.permute.xlu0 %1180
      %1182 = vrot.lane.b32.xlu0 %v1101, 64
      %v1183 = vpop.permute.xlu0 %1182
      %1184 = vrot.lane.b32.xlu0 %v1102, 64
      %v1185 = vpop.permute.xlu0 %1184
      %1186 = vrot.lane.b32.xlu0 %v1103, 64
      %v1187 = vpop.permute.xlu0 %1186
      %1188 = vrot.lane.b32.xlu0 %v1104, 64
      %v1189 = vpop.permute.xlu0 %1188
      %1190 = vrot.lane.b32.xlu0 %v1105, 64
      %v1191 = vpop.permute.xlu0 %1190
      %1192 = vrot.lane.b32.xlu0 %v1106, 64
      %v1193 = vpop.permute.xlu0 %1192
      %1194 = vrot.lane.b32.xlu0 %v1107, 64
      %v1195 = vpop.permute.xlu0 %1194
      %1196 = vrot.lane.b32.xlu0 %v1108, 64
      %v1197 = vpop.permute.xlu0 %1196
      %1198 = vrot.lane.b32.xlu0 %v1109, 64
      %v1199 = vpop.permute.xlu0 %1198
      %1200 = vrot.lane.b32.xlu0 %v1110, 64
      %v1201 = vpop.permute.xlu0 %1200
      %1202 = vrot.lane.b32.xlu0 %v1111, 64
      %v1203 = vpop.permute.xlu0 %1202
      %1204 = vrot.lane.b32.xlu0 %v1112, 64
      %v1205 = vpop.permute.xlu0 %1204
      %1206 = vrot.lane.b32.xlu0 %v1113, 64
      %v1207 = vpop.permute.xlu0 %1206
      %1208 = vrot.lane.b32.xlu0 %v1114, 64
      %v1209 = vpop.permute.xlu0 %1208
      %1210 = vrot.lane.b32.xlu0 %v1115, 64
      %v1211 = vpop.permute.xlu0 %1210
      %1244 = vst.msk [vmem:[#allocation2 + $0x8] sm:$0xff] %vm600, %v1149
      %1245 = vst.msk [vmem:[#allocation2 + $0x20] sm:$0xff] %vm600, %v1151
      %1246 = vst.msk [vmem:[#allocation2 + $0x38] sm:$0xff] %vm600, %v1153
      %1247 = vst.msk [vmem:[#allocation2 + $0x50] sm:$0xff] %vm600, %v1155
      %1248 = vst.msk [vmem:[#allocation2 + $0x68] sm:$0xff] %vm600, %v1157
      %1249 = vst.msk [vmem:[#allocation2 + $0x80] sm:$0xff] %vm600, %v1159
      %1250 = vst.msk [vmem:[#allocation2 + $0x98] sm:$0xff] %vm600, %v1161
      %1251 = vst.msk [vmem:[#allocation2 + $0xb0] sm:$0xff] %vm600, %v1163
      %1252 = vst.msk [vmem:[#allocation2 + $0xc8] sm:$0xff] %vm600, %v1165
      %1253 = vst.msk [vmem:[#allocation2 + $0xe0] sm:$0xff] %vm600, %v1167
      %1254 = vst.msk [vmem:[#allocation2 + $0xf8] sm:$0xff] %vm600, %v1169
      %1255 = vst.msk [vmem:[#allocation2 + $0x110] sm:$0xff] %vm600, %v1171
      %1256 = vst.msk [vmem:[#allocation2 + $0x128] sm:$0xff] %vm600, %v1173
      %1257 = vst.msk [vmem:[#allocation2 + $0x140] sm:$0xff] %vm600, %v1175
      %1258 = vst.msk [vmem:[#allocation2 + $0x158] sm:$0xff] %vm600, %v1177
      %1259 = vst.msk [vmem:[#allocation2 + $0x170] sm:$0xff] %vm600, %v1179
      %1260 = vst.msk [vmem:[#allocation2 + $0x188] sm:$0xff] %vm600, %v1181
      %1261 = vst.msk [vmem:[#allocation2 + $0x1a0] sm:$0xff] %vm600, %v1183
      %1262 = vst.msk [vmem:[#allocation2 + $0x1b8] sm:$0xff] %vm600, %v1185
      %1263 = vst.msk [vmem:[#allocation2 + $0x1d0] sm:$0xff] %vm600, %v1187
      %1264 = vst.msk [vmem:[#allocation2 + $0x1e8] sm:$0xff] %vm600, %v1189
      %1265 = vst.msk [vmem:[#allocation2 + $0x200] sm:$0xff] %vm600, %v1191
      %1266 = vst.msk [vmem:[#allocation2 + $0x218] sm:$0xff] %vm600, %v1193
      %1267 = vst.msk [vmem:[#allocation2 + $0x230] sm:$0xff] %vm600, %v1195
      %1268 = vst.msk [vmem:[#allocation2 + $0x248] sm:$0xff] %vm600, %v1197
      %1269 = vst.msk [vmem:[#allocation2 + $0x260] sm:$0xff] %vm600, %v1199
      %1270 = vst.msk [vmem:[#allocation2 + $0x278] sm:$0xff] %vm600, %v1201
      %1271 = vst.msk [vmem:[#allocation2 + $0x290] sm:$0xff] %vm600, %v1203
      %1272 = vst.msk [vmem:[#allocation2 + $0x2a8] sm:$0xff] %vm600, %v1205
      %1273 = vst.msk [vmem:[#allocation2 + $0x2c0] sm:$0xff] %vm600, %v1207
      %1274 = vst.msk [vmem:[#allocation2 + $0x2d8] sm:$0xff] %vm600, %v1209
      %1275 = vst.msk [vmem:[#allocation2 + $0x2f0] sm:$0xff] %vm600, %v1211
      %v1276 = vld [vmem:[%s1083 + $0x1] sm:$0xff]
      %v1277 = vld [vmem:[%s1083 + $0x9] sm:$0xff]
      %v1278 = vld [vmem:[%s1083 + $0x19] sm:$0xff]
      %v1279 = vld [vmem:[%s1083 + $0x21] sm:$0xff]
      %v1280 = vld [vmem:[%s1083 + $0x31] sm:$0xff]
      %v1281 = vld [vmem:[%s1083 + $0x39] sm:$0xff]
      %v1282 = vld [vmem:[%s1083 + $0x49] sm:$0xff]
      %v1283 = vld [vmem:[%s1083 + $0x51] sm:$0xff]
      %v1284 = vld [vmem:[%s1083 + $0x61] sm:$0xff]
      %v1285 = vld [vmem:[%s1083 + $0x69] sm:$0xff]
      %v1286 = vld [vmem:[%s1083 + $0x79] sm:$0xff]
      %v1287 = vld [vmem:[%s1083 + $0x81] sm:$0xff]
      %v1288 = vld [vmem:[%s1083 + $0x91] sm:$0xff]
      %v1289 = vld [vmem:[%s1083 + $0x99] sm:$0xff]
      %v1290 = vld [vmem:[%s1083 + $0xa9] sm:$0xff]
      %v1291 = vld [vmem:[%s1083 + $0xb1] sm:$0xff]
      %v1292 = vld [vmem:[%s1083 + $0xc1] sm:$0xff]
      %v1293 = vld [vmem:[%s1083 + $0xc9] sm:$0xff]
      %v1294 = vld [vmem:[%s1083 + $0xd9] sm:$0xff]
      %v1295 = vld [vmem:[%s1083 + $0xe1] sm:$0xff]
      %v1296 = vld [vmem:[%s1083 + $0xf1] sm:$0xff]
      %v1297 = vld [vmem:[%s1083 + $0xf9] sm:$0xff]
      %v1298 = vld [vmem:[%s1083 + $0x109] sm:$0xff]
      %v1299 = vld [vmem:[%s1083 + $0x111] sm:$0xff]
      %v1300 = vld [vmem:[%s1083 + $0x121] sm:$0xff]
      %v1301 = vld [vmem:[%s1083 + $0x129] sm:$0xff]
      %v1302 = vld [vmem:[%s1083 + $0x139] sm:$0xff]
      %v1303 = vld [vmem:[%s1083 + $0x141] sm:$0xff]
      %v1304 = vld [vmem:[%s1083 + $0x151] sm:$0xff]
      %v1305 = vld [vmem:[%s1083 + $0x159] sm:$0xff]
      %v1306 = vld [vmem:[%s1083 + $0x169] sm:$0xff]
      %v1307 = vld [vmem:[%s1083 + $0x171] sm:$0xff]
      %1340 = vrot.lane.b32.xlu0 %v1276, 96
      %v1341 = vpop.permute.xlu0 %1340
      %1342 = vrot.lane.b32.xlu0 %v1277, 96
      %v1343 = vpop.permute.xlu0 %1342
      %1344 = vrot.lane.b32.xlu0 %v1278, 96
      %v1345 = vpop.permute.xlu0 %1344
      %1346 = vrot.lane.b32.xlu0 %v1279, 96
      %v1347 = vpop.permute.xlu0 %1346
      %1348 = vrot.lane.b32.xlu0 %v1280, 96
      %v1349 = vpop.permute.xlu0 %1348
      %1350 = vrot.lane.b32.xlu0 %v1281, 96
      %v1351 = vpop.permute.xlu0 %1350
      %1352 = vrot.lane.b32.xlu0 %v1282, 96
      %v1353 = vpop.permute.xlu0 %1352
      %1354 = vrot.lane.b32.xlu0 %v1283, 96
      %v1355 = vpop.permute.xlu0 %1354
      %1356 = vrot.lane.b32.xlu0 %v1284, 96
      %v1357 = vpop.permute.xlu0 %1356
      %1358 = vrot.lane.b32.xlu0 %v1285, 96
      %v1359 = vpop.permute.xlu0 %1358
      %1360 = vrot.lane.b32.xlu0 %v1286, 96
      %v1361 = vpop.permute.xlu0 %1360
      %1362 = vrot.lane.b32.xlu0 %v1287, 96
      %v1363 = vpop.permute.xlu0 %1362
      %1364 = vrot.lane.b32.xlu0 %v1288, 96
      %v1365 = vpop.permute.xlu0 %1364
      %1366 = vrot.lane.b32.xlu0 %v1289, 96
      %v1367 = vpop.permute.xlu0 %1366
      %1368 = vrot.lane.b32.xlu0 %v1290, 96
      %v1369 = vpop.permute.xlu0 %1368
      %1370 = vrot.lane.b32.xlu0 %v1291, 96
      %v1371 = vpop.permute.xlu0 %1370
      %1372 = vrot.lane.b32.xlu0 %v1292, 96
      %v1373 = vpop.permute.xlu0 %1372
      %1374 = vrot.lane.b32.xlu0 %v1293, 96
      %v1375 = vpop.permute.xlu0 %1374
      %1376 = vrot.lane.b32.xlu0 %v1294, 96
      %v1377 = vpop.permute.xlu0 %1376
      %1378 = vrot.lane.b32.xlu0 %v1295, 96
      %v1379 = vpop.permute.xlu0 %1378
      %1380 = vrot.lane.b32.xlu0 %v1296, 96
      %v1381 = vpop.permute.xlu0 %1380
      %1382 = vrot.lane.b32.xlu0 %v1297, 96
      %v1383 = vpop.permute.xlu0 %1382
      %1384 = vrot.lane.b32.xlu0 %v1298, 96
      %v1385 = vpop.permute.xlu0 %1384
      %1386 = vrot.lane.b32.xlu0 %v1299, 96
      %v1387 = vpop.permute.xlu0 %1386
      %1388 = vrot.lane.b32.xlu0 %v1300, 96
      %v1389 = vpop.permute.xlu0 %1388
      %1390 = vrot.lane.b32.xlu0 %v1301, 96
      %v1391 = vpop.permute.xlu0 %1390
      %1392 = vrot.lane.b32.xlu0 %v1302, 96
      %v1393 = vpop.permute.xlu0 %1392
      %1394 = vrot.lane.b32.xlu0 %v1303, 96
      %v1395 = vpop.permute.xlu0 %1394
      %1396 = vrot.lane.b32.xlu0 %v1304, 96
      %v1397 = vpop.permute.xlu0 %1396
      %1398 = vrot.lane.b32.xlu0 %v1305, 96
      %v1399 = vpop.permute.xlu0 %1398
      %1400 = vrot.lane.b32.xlu0 %v1306, 96
      %v1401 = vpop.permute.xlu0 %1400
      %1402 = vrot.lane.b32.xlu0 %v1307, 96
      %v1403 = vpop.permute.xlu0 %1402
      %1436 = vst.msk [vmem:[#allocation2 + $0x8] sm:$0xff] %vm794, %v1341
      %1437 = vst.msk [vmem:[#allocation2 + $0x20] sm:$0xff] %vm794, %v1343
      %1438 = vst.msk [vmem:[#allocation2 + $0x38] sm:$0xff] %vm794, %v1345
      %1439 = vst.msk [vmem:[#allocation2 + $0x50] sm:$0xff] %vm794, %v1347
      %1440 = vst.msk [vmem:[#allocation2 + $0x68] sm:$0xff] %vm794, %v1349
      %1441 = vst.msk [vmem:[#allocation2 + $0x80] sm:$0xff] %vm794, %v1351
      %1442 = vst.msk [vmem:[#allocation2 + $0x98] sm:$0xff] %vm794, %v1353
      %1443 = vst.msk [vmem:[#allocation2 + $0xb0] sm:$0xff] %vm794, %v1355
      %1444 = vst.msk [vmem:[#allocation2 + $0xc8] sm:$0xff] %vm794, %v1357
      %1445 = vst.msk [vmem:[#allocation2 + $0xe0] sm:$0xff] %vm794, %v1359
      %1446 = vst.msk [vmem:[#allocation2 + $0xf8] sm:$0xff] %vm794, %v1361
      %1447 = vst.msk [vmem:[#allocation2 + $0x110] sm:$0xff] %vm794, %v1363
      %1448 = vst.msk [vmem:[#allocation2 + $0x128] sm:$0xff] %vm794, %v1365
      %1449 = vst.msk [vmem:[#allocation2 + $0x140] sm:$0xff] %vm794, %v1367
      %1450 = vst.msk [vmem:[#allocation2 + $0x158] sm:$0xff] %vm794, %v1369
      %1451 = vst.msk [vmem:[#allocation2 + $0x170] sm:$0xff] %vm794, %v1371
      %1452 = vst.msk [vmem:[#allocation2 + $0x188] sm:$0xff] %vm794, %v1373
      %1453 = vst.msk [vmem:[#allocation2 + $0x1a0] sm:$0xff] %vm794, %v1375
      %1454 = vst.msk [vmem:[#allocation2 + $0x1b8] sm:$0xff] %vm794, %v1377
      %1455 = vst.msk [vmem:[#allocation2 + $0x1d0] sm:$0xff] %vm794, %v1379
      %1456 = vst.msk [vmem:[#allocation2 + $0x1e8] sm:$0xff] %vm794, %v1381
      %1457 = vst.msk [vmem:[#allocation2 + $0x200] sm:$0xff] %vm794, %v1383
      %1458 = vst.msk [vmem:[#allocation2 + $0x218] sm:$0xff] %vm794, %v1385
      %1459 = vst.msk [vmem:[#allocation2 + $0x230] sm:$0xff] %vm794, %v1387
      %1460 = vst.msk [vmem:[#allocation2 + $0x248] sm:$0xff] %vm794, %v1389
      %1461 = vst.msk [vmem:[#allocation2 + $0x260] sm:$0xff] %vm794, %v1391
      %1462 = vst.msk [vmem:[#allocation2 + $0x278] sm:$0xff] %vm794, %v1393
      %1463 = vst.msk [vmem:[#allocation2 + $0x290] sm:$0xff] %vm794, %v1395
      %1464 = vst.msk [vmem:[#allocation2 + $0x2a8] sm:$0xff] %vm794, %v1397
      %1465 = vst.msk [vmem:[#allocation2 + $0x2c0] sm:$0xff] %vm794, %v1399
      %1466 = vst.msk [vmem:[#allocation2 + $0x2d8] sm:$0xff] %vm794, %v1401
      %1467 = vst.msk [vmem:[#allocation2 + $0x2f0] sm:$0xff] %vm794, %v1403
      %v1468 = vld [vmem:[%s1083 + $0x2] sm:$0xff]
      %v1469 = vld [vmem:[%s1083 + $0xa] sm:$0xff]
      %v1470 = vld [vmem:[%s1083 + $0x1a] sm:$0xff]
      %v1471 = vld [vmem:[%s1083 + $0x22] sm:$0xff]
      %v1472 = vld [vmem:[%s1083 + $0x32] sm:$0xff]
      %v1473 = vld [vmem:[%s1083 + $0x3a] sm:$0xff]
      %v1474 = vld [vmem:[%s1083 + $0x4a] sm:$0xff]
      %v1475 = vld [vmem:[%s1083 + $0x52] sm:$0xff]
      %v1476 = vld [vmem:[%s1083 + $0x62] sm:$0xff]
      %v1477 = vld [vmem:[%s1083 + $0x6a] sm:$0xff]
      %v1478 = vld [vmem:[%s1083 + $0x7a] sm:$0xff]
      %v1479 = vld [vmem:[%s1083 + $0x82] sm:$0xff]
      %v1480 = vld [vmem:[%s1083 + $0x92] sm:$0xff]
      %v1481 = vld [vmem:[%s1083 + $0x9a] sm:$0xff]
      %v1482 = vld [vmem:[%s1083 + $0xaa] sm:$0xff]
      %v1483 = vld [vmem:[%s1083 + $0xb2] sm:$0xff]
      %v1484 = vld [vmem:[%s1083 + $0xc2] sm:$0xff]
      %v1485 = vld [vmem:[%s1083 + $0xca] sm:$0xff]
      %v1486 = vld [vmem:[%s1083 + $0xda] sm:$0xff]
      %v1487 = vld [vmem:[%s1083 + $0xe2] sm:$0xff]
      %v1488 = vld [vmem:[%s1083 + $0xf2] sm:$0xff]
      %v1489 = vld [vmem:[%s1083 + $0xfa] sm:$0xff]
      %v1490 = vld [vmem:[%s1083 + $0x10a] sm:$0xff]
      %v1491 = vld [vmem:[%s1083 + $0x112] sm:$0xff]
      %v1492 = vld [vmem:[%s1083 + $0x122] sm:$0xff]
      %v1493 = vld [vmem:[%s1083 + $0x12a] sm:$0xff]
      %v1494 = vld [vmem:[%s1083 + $0x13a] sm:$0xff]
      %v1495 = vld [vmem:[%s1083 + $0x142] sm:$0xff]
      %v1496 = vld [vmem:[%s1083 + $0x152] sm:$0xff]
      %v1497 = vld [vmem:[%s1083 + $0x15a] sm:$0xff]
      %v1498 = vld [vmem:[%s1083 + $0x16a] sm:$0xff]
      %v1499 = vld [vmem:[%s1083 + $0x172] sm:$0xff]
      %1500 = vst.msk [vmem:[#allocation2 + $0x10] sm:$0xff] %vm214, %v1468
      %1501 = vst.msk [vmem:[#allocation2 + $0x28] sm:$0xff] %vm214, %v1469
      %1502 = vst.msk [vmem:[#allocation2 + $0x40] sm:$0xff] %vm214, %v1470
      %1503 = vst.msk [vmem:[#allocation2 + $0x58] sm:$0xff] %vm214, %v1471
      %1504 = vst.msk [vmem:[#allocation2 + $0x70] sm:$0xff] %vm214, %v1472
      %1505 = vst.msk [vmem:[#allocation2 + $0x88] sm:$0xff] %vm214, %v1473
      %1506 = vst.msk [vmem:[#allocation2 + $0xa0] sm:$0xff] %vm214, %v1474
      %1507 = vst.msk [vmem:[#allocation2 + $0xb8] sm:$0xff] %vm214, %v1475
      %1508 = vst.msk [vmem:[#allocation2 + $0xd0] sm:$0xff] %vm214, %v1476
      %1509 = vst.msk [vmem:[#allocation2 + $0xe8] sm:$0xff] %vm214, %v1477
      %1510 = vst.msk [vmem:[#allocation2 + $0x100] sm:$0xff] %vm214, %v1478
      %1511 = vst.msk [vmem:[#allocation2 + $0x118] sm:$0xff] %vm214, %v1479
      %1512 = vst.msk [vmem:[#allocation2 + $0x130] sm:$0xff] %vm214, %v1480
      %1513 = vst.msk [vmem:[#allocation2 + $0x148] sm:$0xff] %vm214, %v1481
      %1514 = vst.msk [vmem:[#allocation2 + $0x160] sm:$0xff] %vm214, %v1482
      %1515 = vst.msk [vmem:[#allocation2 + $0x178] sm:$0xff] %vm214, %v1483
      %1516 = vst.msk [vmem:[#allocation2 + $0x190] sm:$0xff] %vm214, %v1484
      %1517 = vst.msk [vmem:[#allocation2 + $0x1a8] sm:$0xff] %vm214, %v1485
      %1518 = vst.msk [vmem:[#allocation2 + $0x1c0] sm:$0xff] %vm214, %v1486
      %1519 = vst.msk [vmem:[#allocation2 + $0x1d8] sm:$0xff] %vm214, %v1487
      %1520 = vst.msk [vmem:[#allocation2 + $0x1f0] sm:$0xff] %vm214, %v1488
      %1521 = vst.msk [vmem:[#allocation2 + $0x208] sm:$0xff] %vm214, %v1489
      %1522 = vst.msk [vmem:[#allocation2 + $0x220] sm:$0xff] %vm214, %v1490
      %1523 = vst.msk [vmem:[#allocation2 + $0x238] sm:$0xff] %vm214, %v1491
      %1524 = vst.msk [vmem:[#allocation2 + $0x250] sm:$0xff] %vm214, %v1492
      %1525 = vst.msk [vmem:[#allocation2 + $0x268] sm:$0xff] %vm214, %v1493
      %1526 = vst.msk [vmem:[#allocation2 + $0x280] sm:$0xff] %vm214, %v1494
      %1527 = vst.msk [vmem:[#allocation2 + $0x298] sm:$0xff] %vm214, %v1495
      %1528 = vst.msk [vmem:[#allocation2 + $0x2b0] sm:$0xff] %vm214, %v1496
      %1529 = vst.msk [vmem:[#allocation2 + $0x2c8] sm:$0xff] %vm214, %v1497
      %1530 = vst.msk [vmem:[#allocation2 + $0x2e0] sm:$0xff] %vm214, %v1498
      %1531 = vst.msk [vmem:[#allocation2 + $0x2f8] sm:$0xff] %vm214, %v1499
      %v1532 = vld [vmem:[#allocation2] sm:$0xff]
      %v1533 = vld [vmem:[#allocation2 + $0x8] sm:$0xff]
      %v1534 = vld [vmem:[#allocation2 + $0x10] sm:$0xff]
      %v1535 = vld [vmem:[#allocation2 + $0x18] sm:$0xff]
      %v1536 = vld [vmem:[#allocation2 + $0x20] sm:$0xff]
      %v1537 = vld [vmem:[#allocation2 + $0x28] sm:$0xff]
      %v1538 = vld [vmem:[#allocation2 + $0x30] sm:$0xff]
      %v1539 = vld [vmem:[#allocation2 + $0x38] sm:$0xff]
      %v1540 = vld [vmem:[#allocation2 + $0x40] sm:$0xff]
      %v1541 = vld [vmem:[#allocation2 + $0x48] sm:$0xff]
      %v1542 = vld [vmem:[#allocation2 + $0x50] sm:$0xff]
      %v1543 = vld [vmem:[#allocation2 + $0x58] sm:$0xff]
      %v1544 = vld [vmem:[#allocation2 + $0x60] sm:$0xff]
      %v1545 = vld [vmem:[#allocation2 + $0x68] sm:$0xff]
      %v1546 = vld [vmem:[#allocation2 + $0x70] sm:$0xff]
      %v1547 = vld [vmem:[#allocation2 + $0x78] sm:$0xff]
      %v1548 = vld [vmem:[#allocation2 + $0x80] sm:$0xff]
      %v1549 = vld [vmem:[#allocation2 + $0x88] sm:$0xff]
      %v1550 = vld [vmem:[#allocation2 + $0x90] sm:$0xff]
      %v1551 = vld [vmem:[#allocation2 + $0x98] sm:$0xff]
      %v1552 = vld [vmem:[#allocation2 + $0xa0] sm:$0xff]
      %v1553 = vld [vmem:[#allocation2 + $0xa8] sm:$0xff]
      %v1554 = vld [vmem:[#allocation2 + $0xb0] sm:$0xff]
      %v1555 = vld [vmem:[#allocation2 + $0xb8] sm:$0xff]
      %v1556 = vld [vmem:[#allocation2 + $0xc0] sm:$0xff]
      %v1557 = vld [vmem:[#allocation2 + $0xc8] sm:$0xff]
      %v1558 = vld [vmem:[#allocation2 + $0xd0] sm:$0xff]
      %v1559 = vld [vmem:[#allocation2 + $0xd8] sm:$0xff]
      %v1560 = vld [vmem:[#allocation2 + $0xe0] sm:$0xff]
      %v1561 = vld [vmem:[#allocation2 + $0xe8] sm:$0xff]
      %v1562 = vld [vmem:[#allocation2 + $0xf0] sm:$0xff]
      %v1563 = vld [vmem:[#allocation2 + $0xf8] sm:$0xff]
      %v1564 = vld [vmem:[#allocation2 + $0x100] sm:$0xff]
      %v1565 = vld [vmem:[#allocation2 + $0x108] sm:$0xff]
      %v1566 = vld [vmem:[#allocation2 + $0x110] sm:$0xff]
      %v1567 = vld [vmem:[#allocation2 + $0x118] sm:$0xff]
      %v1568 = vld [vmem:[#allocation2 + $0x120] sm:$0xff]
      %v1569 = vld [vmem:[#allocation2 + $0x128] sm:$0xff]
      %v1570 = vld [vmem:[#allocation2 + $0x130] sm:$0xff]
      %v1571 = vld [vmem:[#allocation2 + $0x138] sm:$0xff]
      %v1572 = vld [vmem:[#allocation2 + $0x140] sm:$0xff]
      %v1573 = vld [vmem:[#allocation2 + $0x148] sm:$0xff]
      %v1574 = vld [vmem:[#allocation2 + $0x150] sm:$0xff]
      %v1575 = vld [vmem:[#allocation2 + $0x158] sm:$0xff]
      %v1576 = vld [vmem:[#allocation2 + $0x160] sm:$0xff]
      %v1577 = vld [vmem:[#allocation2 + $0x168] sm:$0xff]
      %v1578 = vld [vmem:[#allocation2 + $0x170] sm:$0xff]
      %v1579 = vld [vmem:[#allocation2 + $0x178] sm:$0xff]
      %v1580 = vld [vmem:[#allocation2 + $0x180] sm:$0xff]
      %v1581 = vld [vmem:[#allocation2 + $0x188] sm:$0xff]
      %v1582 = vld [vmem:[#allocation2 + $0x190] sm:$0xff]
      %v1583 = vld [vmem:[#allocation2 + $0x198] sm:$0xff]
      %v1584 = vld [vmem:[#allocation2 + $0x1a0] sm:$0xff]
      %v1585 = vld [vmem:[#allocation2 + $0x1a8] sm:$0xff]
      %v1586 = vld [vmem:[#allocation2 + $0x1b0] sm:$0xff]
      %v1587 = vld [vmem:[#allocation2 + $0x1b8] sm:$0xff]
      %v1588 = vld [vmem:[#allocation2 + $0x1c0] sm:$0xff]
      %v1589 = vld [vmem:[#allocation2 + $0x1c8] sm:$0xff]
      %v1590 = vld [vmem:[#allocation2 + $0x1d0] sm:$0xff]
      %v1591 = vld [vmem:[#allocation2 + $0x1d8] sm:$0xff]
      %v1592 = vld [vmem:[#allocation2 + $0x1e0] sm:$0xff]
      %v1593 = vld [vmem:[#allocation2 + $0x1e8] sm:$0xff]
      %v1594 = vld [vmem:[#allocation2 + $0x1f0] sm:$0xff]
      %v1595 = vld [vmem:[#allocation2 + $0x1f8] sm:$0xff]
      %v1596 = vld [vmem:[#allocation2 + $0x200] sm:$0xff]
      %v1597 = vld [vmem:[#allocation2 + $0x208] sm:$0xff]
      %v1598 = vld [vmem:[#allocation2 + $0x210] sm:$0xff]
      %v1599 = vld [vmem:[#allocation2 + $0x218] sm:$0xff]
      %v1600 = vld [vmem:[#allocation2 + $0x220] sm:$0xff]
      %v1601 = vld [vmem:[#allocation2 + $0x228] sm:$0xff]
      %v1602 = vld [vmem:[#allocation2 + $0x230] sm:$0xff]
      %v1603 = vld [vmem:[#allocation2 + $0x238] sm:$0xff]
      %v1604 = vld [vmem:[#allocation2 + $0x240] sm:$0xff]
      %v1605 = vld [vmem:[#allocation2 + $0x248] sm:$0xff]
      %v1606 = vld [vmem:[#allocation2 + $0x250] sm:$0xff]
      %v1607 = vld [vmem:[#allocation2 + $0x258] sm:$0xff]
      %v1608 = vld [vmem:[#allocation2 + $0x260] sm:$0xff]
      %v1609 = vld [vmem:[#allocation2 + $0x268] sm:$0xff]
      %v1610 = vld [vmem:[#allocation2 + $0x270] sm:$0xff]
      %v1611 = vld [vmem:[#allocation2 + $0x278] sm:$0xff]
      %v1612 = vld [vmem:[#allocation2 + $0x280] sm:$0xff]
      %v1613 = vld [vmem:[#allocation2 + $0x288] sm:$0xff]
      %v1614 = vld [vmem:[#allocation2 + $0x290] sm:$0xff]
      %v1615 = vld [vmem:[#allocation2 + $0x298] sm:$0xff]
      %v1616 = vld [vmem:[#allocation2 + $0x2a0] sm:$0xff]
      %v1617 = vld [vmem:[#allocation2 + $0x2a8] sm:$0xff]
      %v1618 = vld [vmem:[#allocation2 + $0x2b0] sm:$0xff]
      %v1619 = vld [vmem:[#allocation2 + $0x2b8] sm:$0xff]
      %v1620 = vld [vmem:[#allocation2 + $0x2c0] sm:$0xff]
      %v1621 = vld [vmem:[#allocation2 + $0x2c8] sm:$0xff]
      %v1622 = vld [vmem:[#allocation2 + $0x2d0] sm:$0xff]
      %v1623 = vld [vmem:[#allocation2 + $0x2d8] sm:$0xff]
      %v1624 = vld [vmem:[#allocation2 + $0x2e0] sm:$0xff]
      %v1625 = vld [vmem:[#allocation2 + $0x2e8] sm:$0xff]
      %v1626 = vld [vmem:[#allocation2 + $0x2f0] sm:$0xff]
      %v1627 = vld [vmem:[#allocation2 + $0x2f8] sm:$0xff]
      %v1628 = vld [vmem:[%s1] sm:$0xff]
      %v1629 = vld [vmem:[%s1 + $0x8] sm:$0xff]
      %v1630 = vld [vmem:[%s1 + $0x10] sm:$0xff]
      %v1631 = vld [vmem:[%s1 + $0x18] sm:$0xff]
      %v1632 = vld [vmem:[%s1 + $0x20] sm:$0xff]
      %v1633 = vld [vmem:[%s1 + $0x28] sm:$0xff]
      %v1634 = vld [vmem:[%s1 + $0x30] sm:$0xff]
      %v1635 = vld [vmem:[%s1 + $0x38] sm:$0xff]
      %v1636 = vld [vmem:[%s1 + $0x40] sm:$0xff]
      %v1637 = vld [vmem:[%s1 + $0x48] sm:$0xff]
      %v1638 = vld [vmem:[%s1 + $0x50] sm:$0xff]
      %v1639 = vld [vmem:[%s1 + $0x58] sm:$0xff]
      %v1640 = vld [vmem:[%s1 + $0x60] sm:$0xff]
      %v1641 = vld [vmem:[%s1 + $0x68] sm:$0xff]
      %v1642 = vld [vmem:[%s1 + $0x70] sm:$0xff]
      %v1643 = vld [vmem:[%s1 + $0x78] sm:$0xff]
      %v1644 = vld [vmem:[%s1 + $0x80] sm:$0xff]
      %v1645 = vld [vmem:[%s1 + $0x88] sm:$0xff]
      %v1646 = vld [vmem:[%s1 + $0x90] sm:$0xff]
      %v1647 = vld [vmem:[%s1 + $0x98] sm:$0xff]
      %v1648 = vld [vmem:[%s1 + $0xa0] sm:$0xff]
      %v1649 = vld [vmem:[%s1 + $0xa8] sm:$0xff]
      %v1650 = vld [vmem:[%s1 + $0xb0] sm:$0xff]
      %v1651 = vld [vmem:[%s1 + $0xb8] sm:$0xff]
      %v1652 = vld [vmem:[%s1 + $0xc0] sm:$0xff]
      %v1653 = vld [vmem:[%s1 + $0xc8] sm:$0xff]
      %v1654 = vld [vmem:[%s1 + $0xd0] sm:$0xff]
      %v1655 = vld [vmem:[%s1 + $0xd8] sm:$0xff]
      %v1656 = vld [vmem:[%s1 + $0xe0] sm:$0xff]
      %v1657 = vld [vmem:[%s1 + $0xe8] sm:$0xff]
      %v1658 = vld [vmem:[%s1 + $0xf0] sm:$0xff]
      %v1659 = vld [vmem:[%s1 + $0xf8] sm:$0xff]
      %v1660 = vld [vmem:[%s1 + $0x100] sm:$0xff]
      %v1661 = vld [vmem:[%s1 + $0x108] sm:$0xff]
      %v1662 = vld [vmem:[%s1 + $0x110] sm:$0xff]
      %v1663 = vld [vmem:[%s1 + $0x118] sm:$0xff]
      %v1665 = vsel %vm214, %v1534, 0
      %v1668 = vsel %vm214, %v1537, 0
      %v1671 = vsel %vm214, %v1540, 0
      %v1674 = vsel %vm214, %v1543, 0
      %v1677 = vsel %vm214, %v1546, 0
      %v1680 = vsel %vm214, %v1549, 0
      %v1683 = vsel %vm214, %v1552, 0
      %v1686 = vsel %vm214, %v1555, 0
      %v1689 = vsel %vm214, %v1558, 0
      %v1692 = vsel %vm214, %v1561, 0
      %v1695 = vsel %vm214, %v1564, 0
      %v1698 = vsel %vm214, %v1567, 0
      %v1701 = vsel %vm214, %v1570, 0
      %v1704 = vsel %vm214, %v1573, 0
      %v1707 = vsel %vm214, %v1576, 0
      %v1710 = vsel %vm214, %v1579, 0
      %v1713 = vsel %vm214, %v1582, 0
      %v1716 = vsel %vm214, %v1585, 0
      %v1719 = vsel %vm214, %v1588, 0
      %v1722 = vsel %vm214, %v1591, 0
      %v1725 = vsel %vm214, %v1594, 0
      %v1728 = vsel %vm214, %v1597, 0
      %v1731 = vsel %vm214, %v1600, 0
      %v1734 = vsel %vm214, %v1603, 0
      %v1737 = vsel %vm214, %v1606, 0
      %v1740 = vsel %vm214, %v1609, 0
      %v1743 = vsel %vm214, %v1612, 0
      %v1746 = vsel %vm214, %v1615, 0
      %v1749 = vsel %vm214, %v1618, 0
      %v1752 = vsel %vm214, %v1621, 0
      %v1755 = vsel %vm214, %v1624, 0
      %v1758 = vsel %vm214, %v1627, 0
      %1760 = vmatprep.subr.mxu0 0.0
      %v1761 = vand.u32 %v1628, 4294901760
      %1762 = vmatpush1.msra.mxu0 %v1761
      %1763 = vmatprep.subr.mxu0 0.0
      %v1764 = vand.u32 %v1629, 4294901760
      %1765 = vmatpush1.msra.mxu0 %v1764
      %1766 = vmatprep.subr.mxu0 0.0
      %v1767 = vand.u32 %v1630, 4294901760
      %1768 = vmatpush1.msra.mxu0 %v1767
      %1769 = vmatprep.subr.mxu0 0.0
      %v1770 = vand.u32 %v1631, 4294901760
      %1771 = vmatpush1.msra.mxu0 %v1770
      %1772 = vmatprep.subr.mxu0 0.0
      %v1773 = vand.u32 %v1632, 4294901760
      %1774 = vmatpush1.msra.mxu0 %v1773
      %1775 = vmatprep.subr.mxu0 0.0
      %v1776 = vand.u32 %v1633, 4294901760
      %1777 = vmatpush1.msra.mxu0 %v1776
      %1778 = vmatprep.subr.mxu0 0.0
      %v1779 = vand.u32 %v1634, 4294901760
      %1780 = vmatpush1.msra.mxu0 %v1779
      %1781 = vmatprep.subr.mxu0 0.0
      %v1782 = vand.u32 %v1635, 4294901760
      %1783 = vmatpush1.msra.mxu0 %v1782
      %1784 = vmatprep.subr.mxu0 0.0
      %v1785 = vand.u32 %v1636, 4294901760
      %1786 = vmatpush1.msra.mxu0 %v1785
      %1787 = vmatprep.subr.mxu0 0.0
      %v1788 = vand.u32 %v1637, 4294901760
      %1789 = vmatpush1.msra.mxu0 %v1788
      %1790 = vmatprep.subr.mxu0 0.0
      %v1791 = vand.u32 %v1638, 4294901760
      %1792 = vmatpush1.msra.mxu0 %v1791
      %1793 = vmatprep.subr.mxu0 0.0
      %v1794 = vand.u32 %v1639, 4294901760
      %1795 = vmatpush1.msra.mxu0 %v1794
      %1796 = vmatprep.subr.mxu0 0.0
      %v1797 = vand.u32 %v1640, 4294901760
      %1798 = vmatpush1.msra.mxu0 %v1797
      %1799 = vmatprep.subr.mxu0 0.0
      %v1800 = vand.u32 %v1641, 4294901760
      %1801 = vmatpush1.msra.mxu0 %v1800
      %1802 = vmatprep.subr.mxu0 0.0
      %v1803 = vand.u32 %v1642, 4294901760
      %1804 = vmatpush1.msra.mxu0 %v1803
      %1805 = vmatprep.subr.mxu0 0.0
      %v1806 = vand.u32 %v1643, 4294901760
      %1807 = vmatpush1.msra.mxu0 %v1806
      %1808 = vmatprep.subr.mxu0 0.0
      %v1809 = vand.u32 %v1644, 4294901760
      %1810 = vmatpush1.msra.mxu0 %v1809
      %1811 = vmatprep.subr.mxu0 0.0
      %v1812 = vand.u32 %v1645, 4294901760
      %1813 = vmatpush1.msra.mxu0 %v1812
      %1814 = vmatprep.subr.mxu0 0.0
      %v1815 = vand.u32 %v1646, 4294901760
      %1816 = vmatpush1.msra.mxu0 %v1815
      %1817 = vmatprep.subr.mxu0 0.0
      %v1818 = vand.u32 %v1647, 4294901760
      %1819 = vmatpush1.msra.mxu0 %v1818
      %1820 = vmatprep.subr.mxu0 0.0
      %v1821 = vand.u32 %v1648, 4294901760
      %1822 = vmatpush1.msra.mxu0 %v1821
      %1823 = vmatprep.subr.mxu0 0.0
      %v1824 = vand.u32 %v1649, 4294901760
      %1825 = vmatpush1.msra.mxu0 %v1824
      %1826 = vmatprep.subr.mxu0 0.0
      %v1827 = vand.u32 %v1650, 4294901760
      %1828 = vmatpush1.msra.mxu0 %v1827
      %1829 = vmatprep.subr.mxu0 0.0
      %v1830 = vand.u32 %v1651, 4294901760
      %1831 = vmatpush1.msra.mxu0 %v1830
      %1832 = vmatprep.subr.mxu0 0.0
      %v1833 = vand.u32 %v1652, 4294901760
      %1834 = vmatpush1.msra.mxu0 %v1833
      %1835 = vmatprep.subr.mxu0 0.0
      %v1836 = vand.u32 %v1653, 4294901760
      %1837 = vmatpush1.msra.mxu0 %v1836
      %1838 = vmatprep.subr.mxu0 0.0
      %v1839 = vand.u32 %v1654, 4294901760
      %1840 = vmatpush1.msra.mxu0 %v1839
      %1841 = vmatprep.subr.mxu0 0.0
      %v1842 = vand.u32 %v1655, 4294901760
      %1843 = vmatpush1.msra.mxu0 %v1842
      %1844 = vmatprep.subr.mxu0 0.0
      %v1845 = vand.u32 %v1656, 4294901760
      %1846 = vmatpush1.msra.mxu0 %v1845
      %1847 = vmatprep.subr.mxu0 0.0
      %v1848 = vand.u32 %v1657, 4294901760
      %1849 = vmatpush1.msra.mxu0 %v1848
      %1850 = vmatprep.subr.mxu0 0.0
      %v1851 = vand.u32 %v1658, 4294901760
      %1852 = vmatpush1.msra.mxu0 %v1851
      %1853 = vmatprep.subr.mxu0 0.0
      %v1854 = vand.u32 %v1659, 4294901760
      %1855 = vmatpush1.msra.mxu0 %v1854
      %v1856 = vand.u32 %v1533, 4294901760
      %v1857 = vsub.f32 %v1533, %v1856
      %v1858 = vand.u32 %v1857, 4294901760
      %v1859 = vsub.f32 %v1857, %v1858
      %v1860 = vand.u32 %v1859, 4294901760
      %1861 = vmatprep.mubr.f32.mxu0 %v1860
      %v1862 = vand.u32 %v1532, 4294901760
      %v1863 = vsub.f32 %v1532, %v1862
      %v1864 = vand.u32 %v1863, 4294901760
      %v1865 = vsub.f32 %v1863, %v1864
      %v1866 = vand.u32 %v1865, 4294901760
      %1867 = vmatmul.mubr.f32.gmra.mrb[0].mxu0 %v1866
      %v1868 = vpop.f32.mrb[0].mxu0
      %v1869 = vadd.f32 0.0, %v1868
      %v1870 = vpop.f32.mrb[0].mxu0
      %v1871 = vand.u32 %v1536, 4294901760
      %v1872 = vsub.f32 %v1536, %v1871
      %v1873 = vand.u32 %v1872, 4294901760
      %v1874 = vsub.f32 %v1872, %v1873
      %v1875 = vand.u32 %v1874, 4294901760
      %1876 = vmatprep.mubr.f32.mxu0 %v1875
      %v1877 = vand.u32 %v1535, 4294901760
      %v1878 = vsub.f32 %v1535, %v1877
      %v1879 = vand.u32 %v1878, 4294901760
      %v1880 = vsub.f32 %v1878, %v1879
      %v1881 = vand.u32 %v1880, 4294901760
      %1882 = vmatmul.mubr.f32.gmra.mrb[0].mxu0 %v1881
      %v1883 = vpop.f32.mrb[0].mxu0
      %v1884 = vadd.f32 0.0, %v1883
      %v1885 = vpop.f32.mrb[0].mxu0
      %v1886 = vand.u32 %v1539, 4294901760
      %v1887 = vsub.f32 %v1539, %v1886
      %v1888 = vand.u32 %v1887, 4294901760
      %v1889 = vsub.f32 %v1887, %v1888
      %v1890 = vand.u32 %v1889, 4294901760
      %1891 = vmatprep.mubr.f32.mxu0 %v1890
      %v1892 = vand.u32 %v1538, 4294901760
      %v1893 = vsub.f32 %v1538, %v1892
      %v1894 = vand.u32 %v1893, 4294901760
      %v1895 = vsub.f32 %v1893, %v1894
      %v1896 = vand.u32 %v1895, 4294901760
      %1897 = vmatmul.mubr.f32.gmra.mrb[0].mxu0 %v1896
      %v1898 = vpop.f32.mrb[0].mxu0
      %v1899 = vadd.f32 0.0, %v1898
      %v1900 = vpop.f32.mrb[0].mxu0
      %v1901 = vand.u32 %v1542, 4294901760
      %v1902 = vsub.f32 %v1542, %v1901
      %v1903 = vand.u32 %v1902, 4294901760
      %v1904 = vsub.f32 %v1902, %v1903
      %v1905 = vand.u32 %v1904, 4294901760
      %1906 = vmatprep.mubr.f32.mxu0 %v1905
      %v1907 = vand.u32 %v1541, 4294901760
      %v1908 = vsub.f32 %v1541, %v1907
      %v1909 = vand.u32 %v1908, 4294901760
      %v1910 = vsub.f32 %v1908, %v1909
      %v1911 = vand.u32 %v1910, 4294901760
      %1912 = vmatmul.mubr.f32.gmra.mrb[0].mxu0 %v1911
      %v1913 = vpop.f32.mrb[0].mxu0
      %v1914 = vadd.f32 0.0, %v1913
      %v1915 = vpop.f32.mrb[0].mxu0
      %v1916 = vand.u32 %v1545, 4294901760
      %v1917 = vsub.f32 %v1545, %v1916
      %v1918 = vand.u32 %v1917, 4294901760
      %v1919 = vsub.f32 %v1917, %v1918
      %v1920 = vand.u32 %v1919, 4294901760
      %1921 = vmatprep.mubr.f32.mxu0 %v1920
      %v1922 = vand.u32 %v1544, 4294901760
      %v1923 = vsub.f32 %v1544, %v1922
      %v1924 = vand.u32 %v1923, 4294901760
      %v1925 = vsub.f32 %v1923, %v1924
      %v1926 = vand.u32 %v1925, 4294901760
      %1927 = vmatmul.mubr.f32.gmra.mrb[0].mxu0 %v1926
      %v1928 = vpop.f32.mrb[0].mxu0
      %v1929 = vadd.f32 0.0, %v1928
      %v1930 = vpop.f32.mrb[0].mxu0
      %v1931 = vand.u32 %v1548, 4294901760
      %v1932 = vsub.f32 %v1548, %v1931
      %v1933 = vand.u32 %v1932, 4294901760
      %v1934 = vsub.f32 %v1932, %v1933
      %v1935 = vand.u32 %v1934, 4294901760
      %1936 = vmatprep.mubr.f32.mxu0 %v1935
      %v1937 = vand.u32 %v1547, 4294901760
      %v1938 = vsub.f32 %v1547, %v1937
      %v1939 = vand.u32 %v1938, 4294901760
      %v1940 = vsub.f32 %v1938, %v1939
      %v1941 = vand.u32 %v1940, 4294901760
      %1942 = vmatmul.mubr.f32.gmra.mrb[0].mxu0 %v1941
      %v1943 = vpop.f32.mrb[0].mxu0
      %v1944 = vadd.f32 0.0, %v1943
      %v1945 = vpop.f32.mrb[0].mxu0
      %v1946 = vand.u32 %v1551, 4294901760
      %v1947 = vsub.f32 %v1551, %v1946
      %v1948 = vand.u32 %v1947, 4294901760
      %v1949 = vsub.f32 %v1947, %v1948
      %v1950 = vand.u32 %v1949, 4294901760
      %1951 = vmatprep.mubr.f32.mxu0 %v1950
      %v1952 = vand.u32 %v1550, 4294901760
      %v1953 = vsub.f32 %v1550, %v1952
      %v1954 = vand.u32 %v1953, 4294901760
      %v1955 = vsub.f32 %v1953, %v1954
      %v1956 = vand.u32 %v1955, 4294901760
      %1957 = vmatmul.mubr.f32.gmra.mrb[0].mxu0 %v1956
      %v1958 = vpop.f32.mrb[0].mxu0
      %v1959 = vadd.f32 0.0, %v1958
      %v1960 = vpop.f32.mrb[0].mxu0
      %v1961 = vand.u32 %v1554, 4294901760
      %v1962 = vsub.f32 %v1554, %v1961
      %v1963 = vand.u32 %v1962, 4294901760
      %v1964 = vsub.f32 %v1962, %v1963
      %v1965 = vand.u32 %v1964, 4294901760
      %1966 = vmatprep.mubr.f32.mxu0 %v1965
      %v1967 = vand.u32 %v1553, 4294901760
      %v1968 = vsub.f32 %v1553, %v1967
      %v1969 = vand.u32 %v1968, 4294901760
      %v1970 = vsub.f32 %v1968, %v1969
      %v1971 = vand.u32 %v1970, 4294901760
      %1972 = vmatmul.mubr.f32.gmra.mrb[0].mxu0 %v1971
      %v1973 = vpop.f32.mrb[0].mxu0
      %v1974 = vadd.f32 0.0, %v1973
      %v1975 = vpop.f32.mrb[0].mxu0
      %v1976 = vand.u32 %v1557, 4294901760
      %v1977 = vsub.f32 %v1557, %v1976
      %v1978 = vand.u32 %v1977, 4294901760
      %v1979 = vsub.f32 %v1977, %v1978
      %v1980 = vand.u32 %v1979, 4294901760
      %1981 = vmatprep.mubr.f32.mxu0 %v1980
      %v1982 = vand.u32 %v1556, 4294901760
      %v1983 = vsub.f32 %v1556, %v1982
      %v1984 = vand.u32 %v1983, 4294901760
      %v1985 = vsub.f32 %v1983, %v1984
      %v1986 = vand.u32 %v1985, 4294901760
      %1987 = vmatmul.mubr.f32.gmra.mrb[0].mxu0 %v1986
      %v1988 = vpop.f32.mrb[0].mxu0
      %v1989 = vadd.f32 0.0, %v1988
      %v1990 = vpop.f32.mrb[0].mxu0
      %v1991 = vand.u32 %v1560, 4294901760
      %v1992 = vsub.f32 %v1560, %v1991
      %v1993 = vand.u32 %v1992, 4294901760
      %v1994 = vsub.f32 %v1992, %v1993
      %v1995 = vand.u32 %v1994, 4294901760
      %1996 = vmatprep.mubr.f32.mxu0 %v1995
      %v1997 = vand.u32 %v1559, 4294901760
      %v1998 = vsub.f32 %v1559, %v1997
      %v1999 = vand.u32 %v1998, 4294901760
      %v2000 = vsub.f32 %v1998, %v1999
      %v2001 = vand.u32 %v2000, 4294901760
      %2002 = vmatmul.mubr.f32.gmra.mrb[0].mxu0 %v2001
      %v2003 = vpop.f32.mrb[0].mxu0
      %v2004 = vadd.f32 0.0, %v2003
      %v2005 = vpop.f32.mrb[0].mxu0
      %v2006 = vand.u32 %v1563, 4294901760
      %v2007 = vsub.f32 %v1563, %v2006
      %v2008 = vand.u32 %v2007, 4294901760
      %v2009 = vsub.f32 %v2007, %v2008
      %v2010 = vand.u32 %v2009, 4294901760
      %2011 = vmatprep.mubr.f32.mxu0 %v2010
      %v2012 = vand.u32 %v1562, 4294901760
      %v2013 = vsub.f32 %v1562, %v2012
      %v2014 = vand.u32 %v2013, 4294901760
      %v2015 = vsub.f32 %v2013, %v2014
      %v2016 = vand.u32 %v2015, 4294901760
      %2017 = vmatmul.mubr.f32.gmra.mrb[0].mxu0 %v2016
      %v2018 = vpop.f32.mrb[0].mxu0
      %v2019 = vadd.f32 0.0, %v2018
      %v2020 = vpop.f32.mrb[0].mxu0
      %v2021 = vand.u32 %v1566, 4294901760
      %v2022 = vsub.f32 %v1566, %v2021
      %v2023 = vand.u32 %v2022, 4294901760
      %v2024 = vsub.f32 %v2022, %v2023
      %v2025 = vand.u32 %v2024, 4294901760
      %2026 = vmatprep.mubr.f32.mxu0 %v2025
      %v2027 = vand.u32 %v1565, 4294901760
      %v2028 = vsub.f32 %v1565, %v2027
      %v2029 = vand.u32 %v2028, 4294901760
      %v2030 = vsub.f32 %v2028, %v2029
      %v2031 = vand.u32 %v2030, 4294901760
      %2032 = vmatmul.mubr.f32.gmra.mrb[0].mxu0 %v2031
      %v2033 = vpop.f32.mrb[0].mxu0
      %v2034 = vadd.f32 0.0, %v2033
      %v2035 = vpop.f32.mrb[0].mxu0
      %v2036 = vand.u32 %v1569, 4294901760
      %v2037 = vsub.f32 %v1569, %v2036
      %v2038 = vand.u32 %v2037, 4294901760
      %v2039 = vsub.f32 %v2037, %v2038
      %v2040 = vand.u32 %v2039, 4294901760
      %2041 = vmatprep.mubr.f32.mxu0 %v2040
      %v2042 = vand.u32 %v1568, 4294901760
      %v2043 = vsub.f32 %v1568, %v2042
      %v2044 = vand.u32 %v2043, 4294901760
      %v2045 = vsub.f32 %v2043, %v2044
      %v2046 = vand.u32 %v2045, 4294901760
      %2047 = vmatmul.mubr.f32.gmra.mrb[0].mxu0 %v2046
      %v2048 = vpop.f32.mrb[0].mxu0
      %v2049 = vadd.f32 0.0, %v2048
      %v2050 = vpop.f32.mrb[0].mxu0
      %v2051 = vand.u32 %v1572, 4294901760
      %v2052 = vsub.f32 %v1572, %v2051
      %v2053 = vand.u32 %v2052, 4294901760
      %v2054 = vsub.f32 %v2052, %v2053
      %v2055 = vand.u32 %v2054, 4294901760
      %2056 = vmatprep.mubr.f32.mxu0 %v2055
      %v2057 = vand.u32 %v1571, 4294901760
      %v2058 = vsub.f32 %v1571, %v2057
      %v2059 = vand.u32 %v2058, 4294901760
      %v2060 = vsub.f32 %v2058, %v2059
      %v2061 = vand.u32 %v2060, 4294901760
      %2062 = vmatmul.mubr.f32.gmra.mrb[0].mxu0 %v2061
      %v2063 = vpop.f32.mrb[0].mxu0
      %v2064 = vadd.f32 0.0, %v2063
      %v2065 = vpop.f32.mrb[0].mxu0
      %v2066 = vand.u32 %v1575, 4294901760
      %v2067 = vsub.f32 %v1575, %v2066
      %v2068 = vand.u32 %v2067, 4294901760
      %v2069 = vsub.f32 %v2067, %v2068
      %v2070 = vand.u32 %v2069, 4294901760
      %2071 = vmatprep.mubr.f32.mxu0 %v2070
      %v2072 = vand.u32 %v1574, 4294901760
      %v2073 = vsub.f32 %v1574, %v2072
      %v2074 = vand.u32 %v2073, 4294901760
      %v2075 = vsub.f32 %v2073, %v2074
      %v2076 = vand.u32 %v2075, 4294901760
      %2077 = vmatmul.mubr.f32.gmra.mrb[0].mxu0 %v2076
      %v2078 = vpop.f32.mrb[0].mxu0
      %v2079 = vadd.f32 0.0, %v2078
      %v2080 = vpop.f32.mrb[0].mxu0
      %v2081 = vand.u32 %v1578, 4294901760
      %v2082 = vsub.f32 %v1578, %v2081
      %v2083 = vand.u32 %v2082, 4294901760
      %v2084 = vsub.f32 %v2082, %v2083
      %v2085 = vand.u32 %v2084, 4294901760
      %2086 = vmatprep.mubr.f32.mxu0 %v2085
      %v2087 = vand.u32 %v1577, 4294901760
      %v2088 = vsub.f32 %v1577, %v2087
      %v2089 = vand.u32 %v2088, 4294901760
      %v2090 = vsub.f32 %v2088, %v2089
      %v2091 = vand.u32 %v2090, 4294901760
      %2092 = vmatmul.mubr.f32.gmra.mrb[0].mxu0 %v2091
      %v2093 = vpop.f32.mrb[0].mxu0
      %v2094 = vadd.f32 0.0, %v2093
      %v2095 = vpop.f32.mrb[0].mxu0
      %v2096 = vand.u32 %v1581, 4294901760
      %v2097 = vsub.f32 %v1581, %v2096
      %v2098 = vand.u32 %v2097, 4294901760
      %v2099 = vsub.f32 %v2097, %v2098
      %v2100 = vand.u32 %v2099, 4294901760
      %2101 = vmatprep.mubr.f32.mxu0 %v2100
      %v2102 = vand.u32 %v1580, 4294901760
      %v2103 = vsub.f32 %v1580, %v2102
      %v2104 = vand.u32 %v2103, 4294901760
      %v2105 = vsub.f32 %v2103, %v2104
      %v2106 = vand.u32 %v2105, 4294901760
      %2107 = vmatmul.mubr.f32.gmra.mrb[0].mxu0 %v2106
      %v2108 = vpop.f32.mrb[0].mxu0
      %v2109 = vadd.f32 0.0, %v2108
      %v2110 = vpop.f32.mrb[0].mxu0
      %v2111 = vand.u32 %v1584, 4294901760
      %v2112 = vsub.f32 %v1584, %v2111
      %v2113 = vand.u32 %v2112, 4294901760
      %v2114 = vsub.f32 %v2112, %v2113
      %v2115 = vand.u32 %v2114, 4294901760
      %2116 = vmatprep.mubr.f32.mxu0 %v2115
      %v2117 = vand.u32 %v1583, 4294901760
      %v2118 = vsub.f32 %v1583, %v2117
      %v2119 = vand.u32 %v2118, 4294901760
      %v2120 = vsub.f32 %v2118, %v2119
      %v2121 = vand.u32 %v2120, 4294901760
      %2122 = vmatmul.mubr.f32.gmra.mrb[0].mxu0 %v2121
      %v2123 = vpop.f32.mrb[0].mxu0
      %v2124 = vadd.f32 0.0, %v2123
      %v2125 = vpop.f32.mrb[0].mxu0
      %v2126 = vand.u32 %v1587, 4294901760
      %v2127 = vsub.f32 %v1587, %v2126
      %v2128 = vand.u32 %v2127, 4294901760
      %v2129 = vsub.f32 %v2127, %v2128
      %v2130 = vand.u32 %v2129, 4294901760
      %2131 = vmatprep.mubr.f32.mxu0 %v2130
      %v2132 = vand.u32 %v1586, 4294901760
      %v2133 = vsub.f32 %v1586, %v2132
      %v2134 = vand.u32 %v2133, 4294901760
      %v2135 = vsub.f32 %v2133, %v2134
      %v2136 = vand.u32 %v2135, 4294901760
      %2137 = vmatmul.mubr.f32.gmra.mrb[0].mxu0 %v2136
      %v2138 = vpop.f32.mrb[0].mxu0
      %v2139 = vadd.f32 0.0, %v2138
      %v2140 = vpop.f32.mrb[0].mxu0
      %v2141 = vand.u32 %v1590, 4294901760
      %v2142 = vsub.f32 %v1590, %v2141
      %v2143 = vand.u32 %v2142, 4294901760
      %v2144 = vsub.f32 %v2142, %v2143
      %v2145 = vand.u32 %v2144, 4294901760
      %2146 = vmatprep.mubr.f32.mxu0 %v2145
      %v2147 = vand.u32 %v1589, 4294901760
      %v2148 = vsub.f32 %v1589, %v2147
      %v2149 = vand.u32 %v2148, 4294901760
      %v2150 = vsub.f32 %v2148, %v2149
      %v2151 = vand.u32 %v2150, 4294901760
      %2152 = vmatmul.mubr.f32.gmra.mrb[0].mxu0 %v2151
      %v2153 = vpop.f32.mrb[0].mxu0
      %v2154 = vadd.f32 0.0, %v2153
      %v2155 = vpop.f32.mrb[0].mxu0
      %v2156 = vand.u32 %v1593, 4294901760
      %v2157 = vsub.f32 %v1593, %v2156
      %v2158 = vand.u32 %v2157, 4294901760
      %v2159 = vsub.f32 %v2157, %v2158
      %v2160 = vand.u32 %v2159, 4294901760
      %2161 = vmatprep.mubr.f32.mxu0 %v2160
      %v2162 = vand.u32 %v1592, 4294901760
      %v2163 = vsub.f32 %v1592, %v2162
      %v2164 = vand.u32 %v2163, 4294901760
      %v2165 = vsub.f32 %v2163, %v2164
      %v2166 = vand.u32 %v2165, 4294901760
      %2167 = vmatmul.mubr.f32.gmra.mrb[0].mxu0 %v2166
      %v2168 = vpop.f32.mrb[0].mxu0
      %v2169 = vadd.f32 0.0, %v2168
      %v2170 = vpop.f32.mrb[0].mxu0
      %v2171 = vand.u32 %v1596, 4294901760
      %v2172 = vsub.f32 %v1596, %v2171
      %v2173 = vand.u32 %v2172, 4294901760
      %v2174 = vsub.f32 %v2172, %v2173
      %v2175 = vand.u32 %v2174, 4294901760
      %2176 = vmatprep.mubr.f32.mxu0 %v2175
      %v2177 = vand.u32 %v1595, 4294901760
      %v2178 = vsub.f32 %v1595, %v2177
      %v2179 = vand.u32 %v2178, 4294901760
      %v2180 = vsub.f32 %v2178, %v2179
      %v2181 = vand.u32 %v2180, 4294901760
      %2182 = vmatmul.mubr.f32.gmra.mrb[0].mxu0 %v2181
      %v2183 = vpop.f32.mrb[0].mxu0
      %v2184 = vadd.f32 0.0, %v2183
      %v2185 = vpop.f32.mrb[0].mxu0
      %v2186 = vand.u32 %v1599, 4294901760
      %v2187 = vsub.f32 %v1599, %v2186
      %v2188 = vand.u32 %v2187, 4294901760
      %v2189 = vsub.f32 %v2187, %v2188
      %v2190 = vand.u32 %v2189, 4294901760
      %2191 = vmatprep.mubr.f32.mxu0 %v2190
      %v2192 = vand.u32 %v1598, 4294901760
      %v2193 = vsub.f32 %v1598, %v2192
      %v2194 = vand.u32 %v2193, 4294901760
      %v2195 = vsub.f32 %v2193, %v2194
      %v2196 = vand.u32 %v2195, 4294901760
      %2197 = vmatmul.mubr.f32.gmra.mrb[0].mxu0 %v2196
      %v2198 = vpop.f32.mrb[0].mxu0
      %v2199 = vadd.f32 0.0, %v2198
      %v2200 = vpop.f32.mrb[0].mxu0
      %v2201 = vand.u32 %v1602, 4294901760
      %v2202 = vsub.f32 %v1602, %v2201
      %v2203 = vand.u32 %v2202, 4294901760
      %v2204 = vsub.f32 %v2202, %v2203
      %v2205 = vand.u32 %v2204, 4294901760
      %2206 = vmatprep.mubr.f32.mxu0 %v2205
      %v2207 = vand.u32 %v1601, 4294901760
      %v2208 = vsub.f32 %v1601, %v2207
      %v2209 = vand.u32 %v2208, 4294901760
      %v2210 = vsub.f32 %v2208, %v2209
      %v2211 = vand.u32 %v2210, 4294901760
      %2212 = vmatmul.mubr.f32.gmra.mrb[0].mxu0 %v2211
      %v2213 = vpop.f32.mrb[0].mxu0
      %v2214 = vadd.f32 0.0, %v2213
      %v2215 = vpop.f32.mrb[0].mxu0
      %v2216 = vand.u32 %v1605, 4294901760
      %v2217 = vsub.f32 %v1605, %v2216
      %v2218 = vand.u32 %v2217, 4294901760
      %v2219 = vsub.f32 %v2217, %v2218
      %v2220 = vand.u32 %v2219, 4294901760
      %2221 = vmatprep.mubr.f32.mxu0 %v2220
      %v2222 = vand.u32 %v1604, 4294901760
      %v2223 = vsub.f32 %v1604, %v2222
      %v2224 = vand.u32 %v2223, 4294901760
      %v2225 = vsub.f32 %v2223, %v2224
      %v2226 = vand.u32 %v2225, 4294901760
      %2227 = vmatmul.mubr.f32.gmra.mrb[0].mxu0 %v2226
      %v2228 = vpop.f32.mrb[0].mxu0
      %v2229 = vadd.f32 0.0, %v2228
      %v2230 = vpop.f32.mrb[0].mxu0
      %v2231 = vand.u32 %v1608, 4294901760
      %v2232 = vsub.f32 %v1608, %v2231
      %v2233 = vand.u32 %v2232, 4294901760
      %v2234 = vsub.f32 %v2232, %v2233
      %v2235 = vand.u32 %v2234, 4294901760
      %2236 = vmatprep.mubr.f32.mxu0 %v2235
      %v2237 = vand.u32 %v1607, 4294901760
      %v2238 = vsub.f32 %v1607, %v2237
      %v2239 = vand.u32 %v2238, 4294901760
      %v2240 = vsub.f32 %v2238, %v2239
      %v2241 = vand.u32 %v2240, 4294901760
      %2242 = vmatmul.mubr.f32.gmra.mrb[0].mxu0 %v2241
      %v2243 = vpop.f32.mrb[0].mxu0
      %v2244 = vadd.f32 0.0, %v2243
      %v2245 = vpop.f32.mrb[0].mxu0
      %v2246 = vand.u32 %v1611, 4294901760
      %v2247 = vsub.f32 %v1611, %v2246
      %v2248 = vand.u32 %v2247, 4294901760
      %v2249 = vsub.f32 %v2247, %v2248
      %v2250 = vand.u32 %v2249, 4294901760
      %2251 = vmatprep.mubr.f32.mxu0 %v2250
      %v2252 = vand.u32 %v1610, 4294901760
      %v2253 = vsub.f32 %v1610, %v2252
      %v2254 = vand.u32 %v2253, 4294901760
      %v2255 = vsub.f32 %v2253, %v2254
      %v2256 = vand.u32 %v2255, 4294901760
      %2257 = vmatmul.mubr.f32.gmra.mrb[0].mxu0 %v2256
      %v2258 = vpop.f32.mrb[0].mxu0
      %v2259 = vadd.f32 0.0, %v2258
      %v2260 = vpop.f32.mrb[0].mxu0
      %v2261 = vand.u32 %v1614, 4294901760
      %v2262 = vsub.f32 %v1614, %v2261
      %v2263 = vand.u32 %v2262, 4294901760
      %v2264 = vsub.f32 %v2262, %v2263
      %v2265 = vand.u32 %v2264, 4294901760
      %2266 = vmatprep.mubr.f32.mxu0 %v2265
      %v2267 = vand.u32 %v1613, 4294901760
      %v2268 = vsub.f32 %v1613, %v2267
      %v2269 = vand.u32 %v2268, 4294901760
      %v2270 = vsub.f32 %v2268, %v2269
      %v2271 = vand.u32 %v2270, 4294901760
      %2272 = vmatmul.mubr.f32.gmra.mrb[0].mxu0 %v2271
      %v2273 = vpop.f32.mrb[0].mxu0
      %v2274 = vadd.f32 0.0, %v2273
      %v2275 = vpop.f32.mrb[0].mxu0
      %v2276 = vand.u32 %v1617, 4294901760
      %v2277 = vsub.f32 %v1617, %v2276
      %v2278 = vand.u32 %v2277, 4294901760
      %v2279 = vsub.f32 %v2277, %v2278
      %v2280 = vand.u32 %v2279, 4294901760
      %2281 = vmatprep.mubr.f32.mxu0 %v2280
      %v2282 = vand.u32 %v1616, 4294901760
      %v2283 = vsub.f32 %v1616, %v2282
      %v2284 = vand.u32 %v2283, 4294901760
      %v2285 = vsub.f32 %v2283, %v2284
      %v2286 = vand.u32 %v2285, 4294901760
      %2287 = vmatmul.mubr.f32.gmra.mrb[0].mxu0 %v2286
      %v2288 = vpop.f32.mrb[0].mxu0
      %v2289 = vadd.f32 0.0, %v2288
      %v2290 = vpop.f32.mrb[0].mxu0
      %v2291 = vand.u32 %v1620, 4294901760
      %v2292 = vsub.f32 %v1620, %v2291
      %v2293 = vand.u32 %v2292, 4294901760
      %v2294 = vsub.f32 %v2292, %v2293
      %v2295 = vand.u32 %v2294, 4294901760
      %2296 = vmatprep.mubr.f32.mxu0 %v2295
      %v2297 = vand.u32 %v1619, 4294901760
      %v2298 = vsub.f32 %v1619, %v2297
      %v2299 = vand.u32 %v2298, 4294901760
      %v2300 = vsub.f32 %v2298, %v2299
      %v2301 = vand.u32 %v2300, 4294901760
      %2302 = vmatmul.mubr.f32.gmra.mrb[0].mxu0 %v2301
      %v2303 = vpop.f32.mrb[0].mxu0
      %v2304 = vadd.f32 0.0, %v2303
      %v2305 = vpop.f32.mrb[0].mxu0
      %v2306 = vand.u32 %v1623, 4294901760
      %v2307 = vsub.f32 %v1623, %v2306
      %v2308 = vand.u32 %v2307, 4294901760
      %v2309 = vsub.f32 %v2307, %v2308
      %v2310 = vand.u32 %v2309, 4294901760
      %2311 = vmatprep.mubr.f32.mxu0 %v2310
      %v2312 = vand.u32 %v1622, 4294901760
      %v2313 = vsub.f32 %v1622, %v2312
      %v2314 = vand.u32 %v2313, 4294901760
      %v2315 = vsub.f32 %v2313, %v2314
      %v2316 = vand.u32 %v2315, 4294901760
      %2317 = vmatmul.mubr.f32.gmra.mrb[0].mxu0 %v2316
      %v2318 = vpop.f32.mrb[0].mxu0
      %v2319 = vadd.f32 0.0, %v2318
      %v2320 = vpop.f32.mrb[0].mxu0
      %v2321 = vand.u32 %v1626, 4294901760
      %v2322 = vsub.f32 %v1626, %v2321
      %v2323 = vand.u32 %v2322, 4294901760
      %v2324 = vsub.f32 %v2322, %v2323
      %v2325 = vand.u32 %v2324, 4294901760
      %2326 = vmatprep.mubr.f32.mxu0 %v2325
      %v2327 = vand.u32 %v1625, 4294901760
      %v2328 = vsub.f32 %v1625, %v2327
      %v2329 = vand.u32 %v2328, 4294901760
      %v2330 = vsub.f32 %v2328, %v2329
      %v2331 = vand.u32 %v2330, 4294901760
      %2332 = vmatmul.mubr.f32.gmra.mrb[0].mxu0 %v2331
      %v2333 = vpop.f32.mrb[0].mxu0
      %v2334 = vadd.f32 0.0, %v2333
      %v2335 = vpop.f32.mrb[0].mxu0
      %2336 = vdwg.mxu0
      %2337 = vmatprep.subr.mxu0 0.0
      %v2338 = vand.u32 %v1628, 4294901760
      %v2339 = vsub.f32 %v1628, %v2338
      %v2340 = vand.u32 %v2339, 4294901760
      %v2341 = vsub.f32 %v2339, %v2340
      %v2342 = vand.u32 %v2341, 4294901760
      %2343 = vmatpush1.msra.mxu0 %v2342
      %2344 = vmatprep.subr.mxu0 0.0
      %v2345 = vand.u32 %v1629, 4294901760
      %v2346 = vsub.f32 %v1629, %v2345
      %v2347 = vand.u32 %v2346, 4294901760
      %v2348 = vsub.f32 %v2346, %v2347
      %v2349 = vand.u32 %v2348, 4294901760
      %2350 = vmatpush1.msra.mxu0 %v2349
      %2351 = vmatprep.subr.mxu0 0.0
      %v2352 = vand.u32 %v1630, 4294901760
      %v2353 = vsub.f32 %v1630, %v2352
      %v2354 = vand.u32 %v2353, 4294901760
      %v2355 = vsub.f32 %v2353, %v2354
      %v2356 = vand.u32 %v2355, 4294901760
      %2357 = vmatpush1.msra.mxu0 %v2356
      %2358 = vmatprep.subr.mxu0 0.0
      %v2359 = vand.u32 %v1631, 4294901760
      %v2360 = vsub.f32 %v1631, %v2359
      %v2361 = vand.u32 %v2360, 4294901760
      %v2362 = vsub.f32 %v2360, %v2361
      %v2363 = vand.u32 %v2362, 4294901760
      %2364 = vmatpush1.msra.mxu0 %v2363
      %2365 = vmatprep.subr.mxu0 0.0
      %v2366 = vand.u32 %v1632, 4294901760
      %v2367 = vsub.f32 %v1632, %v2366
      %v2368 = vand.u32 %v2367, 4294901760
      %v2369 = vsub.f32 %v2367, %v2368
      %v2370 = vand.u32 %v2369, 4294901760
      %2371 = vmatpush1.msra.mxu0 %v2370
      %2372 = vmatprep.subr.mxu0 0.0
      %v2373 = vand.u32 %v1633, 4294901760
      %v2374 = vsub.f32 %v1633, %v2373
      %v2375 = vand.u32 %v2374, 4294901760
      %v2376 = vsub.f32 %v2374, %v2375
      %v2377 = vand.u32 %v2376, 4294901760
      %2378 = vmatpush1.msra.mxu0 %v2377
      %2379 = vmatprep.subr.mxu0 0.0
      %v2380 = vand.u32 %v1634, 4294901760
      %v2381 = vsub.f32 %v1634, %v2380
      %v2382 = vand.u32 %v2381, 4294901760
      %v2383 = vsub.f32 %v2381, %v2382
      %v2384 = vand.u32 %v2383, 4294901760
      %2385 = vmatpush1.msra.mxu0 %v2384
      %2386 = vmatprep.subr.mxu0 0.0
      %v2387 = vand.u32 %v1635, 4294901760
      %v2388 = vsub.f32 %v1635, %v2387
      %v2389 = vand.u32 %v2388, 4294901760
      %v2390 = vsub.f32 %v2388, %v2389
      %v2391 = vand.u32 %v2390, 4294901760
      %2392 = vmatpush1.msra.mxu0 %v2391
      %2393 = vmatprep.subr.mxu0 0.0
      %v2394 = vand.u32 %v1636, 4294901760
      %v2395 = vsub.f32 %v1636, %v2394
      %v2396 = vand.u32 %v2395, 4294901760
      %v2397 = vsub.f32 %v2395, %v2396
      %v2398 = vand.u32 %v2397, 4294901760
      %2399 = vmatpush1.msra.mxu0 %v2398
      %2400 = vmatprep.subr.mxu0 0.0
      %v2401 = vand.u32 %v1637, 4294901760
      %v2402 = vsub.f32 %v1637, %v2401
      %v2403 = vand.u32 %v2402, 4294901760
      %v2404 = vsub.f32 %v2402, %v2403
      %v2405 = vand.u32 %v2404, 4294901760
      %2406 = vmatpush1.msra.mxu0 %v2405
      %2407 = vmatprep.subr.mxu0 0.0
      %v2408 = vand.u32 %v1638, 4294901760
      %v2409 = vsub.f32 %v1638, %v2408
      %v2410 = vand.u32 %v2409, 4294901760
      %v2411 = vsub.f32 %v2409, %v2410
      %v2412 = vand.u32 %v2411, 4294901760
      %2413 = vmatpush1.msra.mxu0 %v2412
      %2414 = vmatprep.subr.mxu0 0.0
      %v2415 = vand.u32 %v1639, 4294901760
      %v2416 = vsub.f32 %v1639, %v2415
      %v2417 = vand.u32 %v2416, 4294901760
      %v2418 = vsub.f32 %v2416, %v2417
      %v2419 = vand.u32 %v2418, 4294901760
      %2420 = vmatpush1.msra.mxu0 %v2419
      %2421 = vmatprep.subr.mxu0 0.0
      %v2422 = vand.u32 %v1640, 4294901760
      %v2423 = vsub.f32 %v1640, %v2422
      %v2424 = vand.u32 %v2423, 4294901760
      %v2425 = vsub.f32 %v2423, %v2424
      %v2426 = vand.u32 %v2425, 4294901760
      %2427 = vmatpush1.msra.mxu0 %v2426
      %2428 = vmatprep.subr.mxu0 0.0
      %v2429 = vand.u32 %v1641, 4294901760
      %v2430 = vsub.f32 %v1641, %v2429
      %v2431 = vand.u32 %v2430, 4294901760
      %v2432 = vsub.f32 %v2430, %v2431
      %v2433 = vand.u32 %v2432, 4294901760
      %2434 = vmatpush1.msra.mxu0 %v2433
      %2435 = vmatprep.subr.mxu0 0.0
      %v2436 = vand.u32 %v1642, 4294901760
      %v2437 = vsub.f32 %v1642, %v2436
      %v2438 = vand.u32 %v2437, 4294901760
      %v2439 = vsub.f32 %v2437, %v2438
      %v2440 = vand.u32 %v2439, 4294901760
      %2441 = vmatpush1.msra.mxu0 %v2440
      %2442 = vmatprep.subr.mxu0 0.0
      %v2443 = vand.u32 %v1643, 4294901760
      %v2444 = vsub.f32 %v1643, %v2443
      %v2445 = vand.u32 %v2444, 4294901760
      %v2446 = vsub.f32 %v2444, %v2445
      %v2447 = vand.u32 %v2446, 4294901760
      %2448 = vmatpush1.msra.mxu0 %v2447
      %2449 = vmatprep.subr.mxu0 0.0
      %v2450 = vand.u32 %v1644, 4294901760
      %v2451 = vsub.f32 %v1644, %v2450
      %v2452 = vand.u32 %v2451, 4294901760
      %v2453 = vsub.f32 %v2451, %v2452
      %v2454 = vand.u32 %v2453, 4294901760
      %2455 = vmatpush1.msra.mxu0 %v2454
      %2456 = vmatprep.subr.mxu0 0.0
      %v2457 = vand.u32 %v1645, 4294901760
      %v2458 = vsub.f32 %v1645, %v2457
      %v2459 = vand.u32 %v2458, 4294901760
      %v2460 = vsub.f32 %v2458, %v2459
      %v2461 = vand.u32 %v2460, 4294901760
      %2462 = vmatpush1.msra.mxu0 %v2461
      %2463 = vmatprep.subr.mxu0 0.0
      %v2464 = vand.u32 %v1646, 4294901760
      %v2465 = vsub.f32 %v1646, %v2464
      %v2466 = vand.u32 %v2465, 4294901760
      %v2467 = vsub.f32 %v2465, %v2466
      %v2468 = vand.u32 %v2467, 4294901760
      %2469 = vmatpush1.msra.mxu0 %v2468
      %2470 = vmatprep.subr.mxu0 0.0
      %v2471 = vand.u32 %v1647, 4294901760
      %v2472 = vsub.f32 %v1647, %v2471
      %v2473 = vand.u32 %v2472, 4294901760
      %v2474 = vsub.f32 %v2472, %v2473
      %v2475 = vand.u32 %v2474, 4294901760
      %2476 = vmatpush1.msra.mxu0 %v2475
      %2477 = vmatprep.subr.mxu0 0.0
      %v2478 = vand.u32 %v1648, 4294901760
      %v2479 = vsub.f32 %v1648, %v2478
      %v2480 = vand.u32 %v2479, 4294901760
      %v2481 = vsub.f32 %v2479, %v2480
      %v2482 = vand.u32 %v2481, 4294901760
      %2483 = vmatpush1.msra.mxu0 %v2482
      %2484 = vmatprep.subr.mxu0 0.0
      %v2485 = vand.u32 %v1649, 4294901760
      %v2486 = vsub.f32 %v1649, %v2485
      %v2487 = vand.u32 %v2486, 4294901760
      %v2488 = vsub.f32 %v2486, %v2487
      %v2489 = vand.u32 %v2488, 4294901760
      %2490 = vmatpush1.msra.mxu0 %v2489
      %2491 = vmatprep.subr.mxu0 0.0
      %v2492 = vand.u32 %v1650, 4294901760
      %v2493 = vsub.f32 %v1650, %v2492
      %v2494 = vand.u32 %v2493, 4294901760
      %v2495 = vsub.f32 %v2493, %v2494
      %v2496 = vand.u32 %v2495, 4294901760
      %2497 = vmatpush1.msra.mxu0 %v2496
      %2498 = vmatprep.subr.mxu0 0.0
      %v2499 = vand.u32 %v1651, 4294901760
      %v2500 = vsub.f32 %v1651, %v2499
      %v2501 = vand.u32 %v2500, 4294901760
      %v2502 = vsub.f32 %v2500, %v2501
      %v2503 = vand.u32 %v2502, 4294901760
      %2504 = vmatpush1.msra.mxu0 %v2503
      %2505 = vmatprep.subr.mxu0 0.0
      %v2506 = vand.u32 %v1652, 4294901760
      %v2507 = vsub.f32 %v1652, %v2506
      %v2508 = vand.u32 %v2507, 4294901760
      %v2509 = vsub.f32 %v2507, %v2508
      %v2510 = vand.u32 %v2509, 4294901760
      %2511 = vmatpush1.msra.mxu0 %v2510
      %2512 = vmatprep.subr.mxu0 0.0
      %v2513 = vand.u32 %v1653, 4294901760
      %v2514 = vsub.f32 %v1653, %v2513
      %v2515 = vand.u32 %v2514, 4294901760
      %v2516 = vsub.f32 %v2514, %v2515
      %v2517 = vand.u32 %v2516, 4294901760
      %2518 = vmatpush1.msra.mxu0 %v2517
      %2519 = vmatprep.subr.mxu0 0.0
      %v2520 = vand.u32 %v1654, 4294901760
      %v2521 = vsub.f32 %v1654, %v2520
      %v2522 = vand.u32 %v2521, 4294901760
      %v2523 = vsub.f32 %v2521, %v2522
      %v2524 = vand.u32 %v2523, 4294901760
      %2525 = vmatpush1.msra.mxu0 %v2524
      %2526 = vmatprep.subr.mxu0 0.0
      %v2527 = vand.u32 %v1655, 4294901760
      %v2528 = vsub.f32 %v1655, %v2527
      %v2529 = vand.u32 %v2528, 4294901760
      %v2530 = vsub.f32 %v2528, %v2529
      %v2531 = vand.u32 %v2530, 4294901760
      %2532 = vmatpush1.msra.mxu0 %v2531
      %2533 = vmatprep.subr.mxu0 0.0
      %v2534 = vand.u32 %v1656, 4294901760
      %v2535 = vsub.f32 %v1656, %v2534
      %v2536 = vand.u32 %v2535, 4294901760
      %v2537 = vsub.f32 %v2535, %v2536
      %v2538 = vand.u32 %v2537, 4294901760
      %2539 = vmatpush1.msra.mxu0 %v2538
      %2540 = vmatprep.subr.mxu0 0.0
      %v2541 = vand.u32 %v1657, 4294901760
      %v2542 = vsub.f32 %v1657, %v2541
      %v2543 = vand.u32 %v2542, 4294901760
      %v2544 = vsub.f32 %v2542, %v2543
      %v2545 = vand.u32 %v2544, 4294901760
      %2546 = vmatpush1.msra.mxu0 %v2545
      %2547 = vmatprep.subr.mxu0 0.0
      %v2548 = vand.u32 %v1658, 4294901760
      %v2549 = vsub.f32 %v1658, %v2548
      %v2550 = vand.u32 %v2549, 4294901760
      %v2551 = vsub.f32 %v2549, %v2550
      %v2552 = vand.u32 %v2551, 4294901760
      %2553 = vmatpush1.msra.mxu0 %v2552
      %2554 = vmatprep.subr.mxu0 0.0
      %v2555 = vand.u32 %v1659, 4294901760
      %v2556 = vsub.f32 %v1659, %v2555
      %v2557 = vand.u32 %v2556, 4294901760
      %v2558 = vsub.f32 %v2556, %v2557
      %v2559 = vand.u32 %v2558, 4294901760
      %2560 = vmatpush1.msra.mxu0 %v2559
      %v2561 = vand.u32 %v1533, 4294901760
      %2562 = vmatprep.mubr.f32.mxu0 %v2561
      %v2563 = vand.u32 %v1532, 4294901760
      %2564 = vmatmul.mubr.f32.gmra.mrb[0].mxu0 %v2563
      %v2565 = vpop.f32.mrb[0].mxu0
      %v2566 = vadd.f32 %v1869, %v2565
      %v2567 = vpop.f32.mrb[0].mxu0
      %v2568 = vand.u32 %v1536, 4294901760
      %2569 = vmatprep.mubr.f32.mxu0 %v2568
      %v2570 = vand.u32 %v1535, 4294901760
      %2571 = vmatmul.mubr.f32.gmra.mrb[0].mxu0 %v2570
      %v2572 = vpop.f32.mrb[0].mxu0
      %v2573 = vadd.f32 %v1884, %v2572
      %v2574 = vpop.f32.mrb[0].mxu0
      %v2575 = vand.u32 %v1539, 4294901760
      %2576 = vmatprep.mubr.f32.mxu0 %v2575
      %v2577 = vand.u32 %v1538, 4294901760
      %2578 = vmatmul.mubr.f32.gmra.mrb[0].mxu0 %v2577
      %v2579 = vpop.f32.mrb[0].mxu0
      %v2580 = vadd.f32 %v1899, %v2579
      %v2581 = vpop.f32.mrb[0].mxu0
      %v2582 = vand.u32 %v1542, 4294901760
      %2583 = vmatprep.mubr.f32.mxu0 %v2582
      %v2584 = vand.u32 %v1541, 4294901760
      %2585 = vmatmul.mubr.f32.gmra.mrb[0].mxu0 %v2584
      %v2586 = vpop.f32.mrb[0].mxu0
      %v2587 = vadd.f32 %v1914, %v2586
      %v2588 = vpop.f32.mrb[0].mxu0
      %v2589 = vand.u32 %v1545, 4294901760
      %2590 = vmatprep.mubr.f32.mxu0 %v2589
      %v2591 = vand.u32 %v1544, 4294901760
      %2592 = vmatmul.mubr.f32.gmra.mrb[0].mxu0 %v2591
      %v2593 = vpop.f32.mrb[0].mxu0
      %v2594 = vadd.f32 %v1929, %v2593
      %v2595 = vpop.f32.mrb[0].mxu0
      %v2596 = vand.u32 %v1548, 4294901760
      %2597 = vmatprep.mubr.f32.mxu0 %v2596
      %v2598 = vand.u32 %v1547, 4294901760
      %2599 = vmatmul.mubr.f32.gmra.mrb[0].mxu0 %v2598
      %v2600 = vpop.f32.mrb[0].mxu0
      %v2601 = vadd.f32 %v1944, %v2600
      %v2602 = vpop.f32.mrb[0].mxu0
      %v2603 = vand.u32 %v1551, 4294901760
      %2604 = vmatprep.mubr.f32.mxu0 %v2603
      %v2605 = vand.u32 %v1550, 4294901760
      %2606 = vmatmul.mubr.f32.gmra.mrb[0].mxu0 %v2605
      %v2607 = vpop.f32.mrb[0].mxu0
      %v2608 = vadd.f32 %v1959, %v2607
      %v2609 = vpop.f32.mrb[0].mxu0
      %v2610 = vand.u32 %v1554, 4294901760
      %2611 = vmatprep.mubr.f32.mxu0 %v2610
      %v2612 = vand.u32 %v1553, 4294901760
      %2613 = vmatmul.mubr.f32.gmra.mrb[0].mxu0 %v2612
      %v2614 = vpop.f32.mrb[0].mxu0
      %v2615 = vadd.f32 %v1974, %v2614
      %v2616 = vpop.f32.mrb[0].mxu0
      %v2617 = vand.u32 %v1557, 4294901760
      %2618 = vmatprep.mubr.f32.mxu0 %v2617
      %v2619 = vand.u32 %v1556, 4294901760
      %2620 = vmatmul.mubr.f32.gmra.mrb[0].mxu0 %v2619
      %v2621 = vpop.f32.mrb[0].mxu0
      %v2622 = vadd.f32 %v1989, %v2621
      %v2623 = vpop.f32.mrb[0].mxu0
      %v2624 = vand.u32 %v1560, 4294901760
      %2625 = vmatprep.mubr.f32.mxu0 %v2624
      %v2626 = vand.u32 %v1559, 4294901760
      %2627 = vmatmul.mubr.f32.gmra.mrb[0].mxu0 %v2626
      %v2628 = vpop.f32.mrb[0].mxu0
      %v2629 = vadd.f32 %v2004, %v2628
      %v2630 = vpop.f32.mrb[0].mxu0
      %v2631 = vand.u32 %v1563, 4294901760
      %2632 = vmatprep.mubr.f32.mxu0 %v2631
      %v2633 = vand.u32 %v1562, 4294901760
      %2634 = vmatmul.mubr.f32.gmra.mrb[0].mxu0 %v2633
      %v2635 = vpop.f32.mrb[0].mxu0
      %v2636 = vadd.f32 %v2019, %v2635
      %v2637 = vpop.f32.mrb[0].mxu0
      %v2638 = vand.u32 %v1566, 4294901760
      %2639 = vmatprep.mubr.f32.mxu0 %v2638
      %v2640 = vand.u32 %v1565, 4294901760
      %2641 = vmatmul.mubr.f32.gmra.mrb[0].mxu0 %v2640
      %v2642 = vpop.f32.mrb[0].mxu0
      %v2643 = vadd.f32 %v2034, %v2642
      %v2644 = vpop.f32.mrb[0].mxu0
      %v2645 = vand.u32 %v1569, 4294901760
      %2646 = vmatprep.mubr.f32.mxu0 %v2645
      %v2647 = vand.u32 %v1568, 4294901760
      %2648 = vmatmul.mubr.f32.gmra.mrb[0].mxu0 %v2647
      %v2649 = vpop.f32.mrb[0].mxu0
      %v2650 = vadd.f32 %v2049, %v2649
      %v2651 = vpop.f32.mrb[0].mxu0
      %v2652 = vand.u32 %v1572, 4294901760
      %2653 = vmatprep.mubr.f32.mxu0 %v2652
      %v2654 = vand.u32 %v1571, 4294901760
      %2655 = vmatmul.mubr.f32.gmra.mrb[0].mxu0 %v2654
      %v2656 = vpop.f32.mrb[0].mxu0
      %v2657 = vadd.f32 %v2064, %v2656
      %v2658 = vpop.f32.mrb[0].mxu0
      %v2659 = vand.u32 %v1575, 4294901760
      %2660 = vmatprep.mubr.f32.mxu0 %v2659
      %v2661 = vand.u32 %v1574, 4294901760
      %2662 = vmatmul.mubr.f32.gmra.mrb[0].mxu0 %v2661
      %v2663 = vpop.f32.mrb[0].mxu0
      %v2664 = vadd.f32 %v2079, %v2663
      %v2665 = vpop.f32.mrb[0].mxu0
      %v2666 = vand.u32 %v1578, 4294901760
      %2667 = vmatprep.mubr.f32.mxu0 %v2666
      %v2668 = vand.u32 %v1577, 4294901760
      %2669 = vmatmul.mubr.f32.gmra.mrb[0].mxu0 %v2668
      %v2670 = vpop.f32.mrb[0].mxu0
      %v2671 = vadd.f32 %v2094, %v2670
      %v2672 = vpop.f32.mrb[0].mxu0
      %v2673 = vand.u32 %v1581, 4294901760
      %2674 = vmatprep.mubr.f32.mxu0 %v2673
      %v2675 = vand.u32 %v1580, 4294901760
      %2676 = vmatmul.mubr.f32.gmra.mrb[0].mxu0 %v2675
      %v2677 = vpop.f32.mrb[0].mxu0
      %v2678 = vadd.f32 %v2109, %v2677
      %v2679 = vpop.f32.mrb[0].mxu0
      %v2680 = vand.u32 %v1584, 4294901760
      %2681 = vmatprep.mubr.f32.mxu0 %v2680
      %v2682 = vand.u32 %v1583, 4294901760
      %2683 = vmatmul.mubr.f32.gmra.mrb[0].mxu0 %v2682
      %v2684 = vpop.f32.mrb[0].mxu0
      %v2685 = vadd.f32 %v2124, %v2684
      %v2686 = vpop.f32.mrb[0].mxu0
      %v2687 = vand.u32 %v1587, 4294901760
      %2688 = vmatprep.mubr.f32.mxu0 %v2687
      %v2689 = vand.u32 %v1586, 4294901760
      %2690 = vmatmul.mubr.f32.gmra.mrb[0].mxu0 %v2689
      %v2691 = vpop.f32.mrb[0].mxu0
      %v2692 = vadd.f32 %v2139, %v2691
      %v2693 = vpop.f32.mrb[0].mxu0
      %v2694 = vand.u32 %v1590, 4294901760
      %2695 = vmatprep.mubr.f32.mxu0 %v2694
      %v2696 = vand.u32 %v1589, 4294901760
      %2697 = vmatmul.mubr.f32.gmra.mrb[0].mxu0 %v2696
      %v2698 = vpop.f32.mrb[0].mxu0
      %v2699 = vadd.f32 %v2154, %v2698
      %v2700 = vpop.f32.mrb[0].mxu0
      %v2701 = vand.u32 %v1593, 4294901760
      %2702 = vmatprep.mubr.f32.mxu0 %v2701
      %v2703 = vand.u32 %v1592, 4294901760
      %2704 = vmatmul.mubr.f32.gmra.mrb[0].mxu0 %v2703
      %v2705 = vpop.f32.mrb[0].mxu0
      %v2706 = vadd.f32 %v2169, %v2705
      %v2707 = vpop.f32.mrb[0].mxu0
      %v2708 = vand.u32 %v1596, 4294901760
      %2709 = vmatprep.mubr.f32.mxu0 %v2708
      %v2710 = vand.u32 %v1595, 4294901760
      %2711 = vmatmul.mubr.f32.gmra.mrb[0].mxu0 %v2710
      %v2712 = vpop.f32.mrb[0].mxu0
      %v2713 = vadd.f32 %v2184, %v2712
      %v2714 = vpop.f32.mrb[0].mxu0
      %v2715 = vand.u32 %v1599, 4294901760
      %2716 = vmatprep.mubr.f32.mxu0 %v2715
      %v2717 = vand.u32 %v1598, 4294901760
      %2718 = vmatmul.mubr.f32.gmra.mrb[0].mxu0 %v2717
      %v2719 = vpop.f32.mrb[0].mxu0
      %v2720 = vadd.f32 %v2199, %v2719
      %v2721 = vpop.f32.mrb[0].mxu0
      %v2722 = vand.u32 %v1602, 4294901760
      %2723 = vmatprep.mubr.f32.mxu0 %v2722
      %v2724 = vand.u32 %v1601, 4294901760
      %2725 = vmatmul.mubr.f32.gmra.mrb[0].mxu0 %v2724
      %v2726 = vpop.f32.mrb[0].mxu0
      %v2727 = vadd.f32 %v2214, %v2726
      %v2728 = vpop.f32.mrb[0].mxu0
      %v2729 = vand.u32 %v1605, 4294901760
      %2730 = vmatprep.mubr.f32.mxu0 %v2729
      %v2731 = vand.u32 %v1604, 4294901760
      %2732 = vmatmul.mubr.f32.gmra.mrb[0].mxu0 %v2731
      %v2733 = vpop.f32.mrb[0].mxu0
      %v2734 = vadd.f32 %v2229, %v2733
      %v2735 = vpop.f32.mrb[0].mxu0
      %v2736 = vand.u32 %v1608, 4294901760
      %2737 = vmatprep.mubr.f32.mxu0 %v2736
      %v2738 = vand.u32 %v1607, 4294901760
      %2739 = vmatmul.mubr.f32.gmra.mrb[0].mxu0 %v2738
      %v2740 = vpop.f32.mrb[0].mxu0
      %v2741 = vadd.f32 %v2244, %v2740
      %v2742 = vpop.f32.mrb[0].mxu0
      %v2743 = vand.u32 %v1611, 4294901760
      %2744 = vmatprep.mubr.f32.mxu0 %v2743
      %v2745 = vand.u32 %v1610, 4294901760
      %2746 = vmatmul.mubr.f32.gmra.mrb[0].mxu0 %v2745
      %v2747 = vpop.f32.mrb[0].mxu0
      %v2748 = vadd.f32 %v2259, %v2747
      %v2749 = vpop.f32.mrb[0].mxu0
      %v2750 = vand.u32 %v1614, 4294901760
      %2751 = vmatprep.mubr.f32.mxu0 %v2750
      %v2752 = vand.u32 %v1613, 4294901760
      %2753 = vmatmul.mubr.f32.gmra.mrb[0].mxu0 %v2752
      %v2754 = vpop.f32.mrb[0].mxu0
      %v2755 = vadd.f32 %v2274, %v2754
      %v2756 = vpop.f32.mrb[0].mxu0
      %v2757 = vand.u32 %v1617, 4294901760
      %2758 = vmatprep.mubr.f32.mxu0 %v2757
      %v2759 = vand.u32 %v1616, 4294901760
      %2760 = vmatmul.mubr.f32.gmra.mrb[0].mxu0 %v2759
      %v2761 = vpop.f32.mrb[0].mxu0
      %v2762 = vadd.f32 %v2289, %v2761
      %v2763 = vpop.f32.mrb[0].mxu0
      %v2764 = vand.u32 %v1620, 4294901760
      %2765 = vmatprep.mubr.f32.mxu0 %v2764
      %v2766 = vand.u32 %v1619, 4294901760
      %2767 = vmatmul.mubr.f32.gmra.mrb[0].mxu0 %v2766
      %v2768 = vpop.f32.mrb[0].mxu0
      %v2769 = vadd.f32 %v2304, %v2768
      %v2770 = vpop.f32.mrb[0].mxu0
      %v2771 = vand.u32 %v1623, 4294901760
      %2772 = vmatprep.mubr.f32.mxu0 %v2771
      %v2773 = vand.u32 %v1622, 4294901760
      %2774 = vmatmul.mubr.f32.gmra.mrb[0].mxu0 %v2773
      %v2775 = vpop.f32.mrb[0].mxu0
      %v2776 = vadd.f32 %v2319, %v2775
      %v2777 = vpop.f32.mrb[0].mxu0
      %v2778 = vand.u32 %v1626, 4294901760
      %2779 = vmatprep.mubr.f32.mxu0 %v2778
      %v2780 = vand.u32 %v1625, 4294901760
      %2781 = vmatmul.mubr.f32.gmra.mrb[0].mxu0 %v2780
      %v2782 = vpop.f32.mrb[0].mxu0
      %v2783 = vadd.f32 %v2334, %v2782
      %v2784 = vpop.f32.mrb[0].mxu0
      %2785 = vdwg.mxu0
      %2786 = vmatprep.subr.mxu0 0.0
      %v2787 = vand.u32 %v1628, 4294901760
      %v2788 = vsub.f32 %v1628, %v2787
      %2789 = vmatpush1.msra.mxu0 %v2788
      %2790 = vmatprep.subr.mxu0 0.0
      %v2791 = vand.u32 %v1629, 4294901760
      %v2792 = vsub.f32 %v1629, %v2791
      %2793 = vmatpush1.msra.mxu0 %v2792
      %2794 = vmatprep.subr.mxu0 0.0
      %v2795 = vand.u32 %v1630, 4294901760
      %v2796 = vsub.f32 %v1630, %v2795
      %2797 = vmatpush1.msra.mxu0 %v2796
      %2798 = vmatprep.subr.mxu0 0.0
      %v2799 = vand.u32 %v1631, 4294901760
      %v2800 = vsub.f32 %v1631, %v2799
      %2801 = vmatpush1.msra.mxu0 %v2800
      %2802 = vmatprep.subr.mxu0 0.0
      %v2803 = vand.u32 %v1632, 4294901760
      %v2804 = vsub.f32 %v1632, %v2803
      %2805 = vmatpush1.msra.mxu0 %v2804
      %2806 = vmatprep.subr.mxu0 0.0
      %v2807 = vand.u32 %v1633, 4294901760
      %v2808 = vsub.f32 %v1633, %v2807
      %2809 = vmatpush1.msra.mxu0 %v2808
      %2810 = vmatprep.subr.mxu0 0.0
      %v2811 = vand.u32 %v1634, 4294901760
      %v2812 = vsub.f32 %v1634, %v2811
      %2813 = vmatpush1.msra.mxu0 %v2812
      %2814 = vmatprep.subr.mxu0 0.0
      %v2815 = vand.u32 %v1635, 4294901760
      %v2816 = vsub.f32 %v1635, %v2815
      %2817 = vmatpush1.msra.mxu0 %v2816
      %2818 = vmatprep.subr.mxu0 0.0
      %v2819 = vand.u32 %v1636, 4294901760
      %v2820 = vsub.f32 %v1636, %v2819
      %2821 = vmatpush1.msra.mxu0 %v2820
      %2822 = vmatprep.subr.mxu0 0.0
      %v2823 = vand.u32 %v1637, 4294901760
      %v2824 = vsub.f32 %v1637, %v2823
      %2825 = vmatpush1.msra.mxu0 %v2824
      %2826 = vmatprep.subr.mxu0 0.0
      %v2827 = vand.u32 %v1638, 4294901760
      %v2828 = vsub.f32 %v1638, %v2827
      %2829 = vmatpush1.msra.mxu0 %v2828
      %2830 = vmatprep.subr.mxu0 0.0
      %v2831 = vand.u32 %v1639, 4294901760
      %v2832 = vsub.f32 %v1639, %v2831
      %2833 = vmatpush1.msra.mxu0 %v2832
      %2834 = vmatprep.subr.mxu0 0.0
      %v2835 = vand.u32 %v1640, 4294901760
      %v2836 = vsub.f32 %v1640, %v2835
      %2837 = vmatpush1.msra.mxu0 %v2836
      %2838 = vmatprep.subr.mxu0 0.0
      %v2839 = vand.u32 %v1641, 4294901760
      %v2840 = vsub.f32 %v1641, %v2839
      %2841 = vmatpush1.msra.mxu0 %v2840
      %2842 = vmatprep.subr.mxu0 0.0
      %v2843 = vand.u32 %v1642, 4294901760
      %v2844 = vsub.f32 %v1642, %v2843
      %2845 = vmatpush1.msra.mxu0 %v2844
      %2846 = vmatprep.subr.mxu0 0.0
      %v2847 = vand.u32 %v1643, 4294901760
      %v2848 = vsub.f32 %v1643, %v2847
      %2849 = vmatpush1.msra.mxu0 %v2848
      %2850 = vmatprep.subr.mxu0 0.0
      %v2851 = vand.u32 %v1644, 4294901760
      %v2852 = vsub.f32 %v1644, %v2851
      %2853 = vmatpush1.msra.mxu0 %v2852
      %2854 = vmatprep.subr.mxu0 0.0
      %v2855 = vand.u32 %v1645, 4294901760
      %v2856 = vsub.f32 %v1645, %v2855
      %2857 = vmatpush1.msra.mxu0 %v2856
      %2858 = vmatprep.subr.mxu0 0.0
      %v2859 = vand.u32 %v1646, 4294901760
      %v2860 = vsub.f32 %v1646, %v2859
      %2861 = vmatpush1.msra.mxu0 %v2860
      %2862 = vmatprep.subr.mxu0 0.0
      %v2863 = vand.u32 %v1647, 4294901760
      %v2864 = vsub.f32 %v1647, %v2863
      %2865 = vmatpush1.msra.mxu0 %v2864
      %2866 = vmatprep.subr.mxu0 0.0
      %v2867 = vand.u32 %v1648, 4294901760
      %v2868 = vsub.f32 %v1648, %v2867
      %2869 = vmatpush1.msra.mxu0 %v2868
      %2870 = vmatprep.subr.mxu0 0.0
      %v2871 = vand.u32 %v1649, 4294901760
      %v2872 = vsub.f32 %v1649, %v2871
      %2873 = vmatpush1.msra.mxu0 %v2872
      %2874 = vmatprep.subr.mxu0 0.0
      %v2875 = vand.u32 %v1650, 4294901760
      %v2876 = vsub.f32 %v1650, %v2875
      %2877 = vmatpush1.msra.mxu0 %v2876
      %2878 = vmatprep.subr.mxu0 0.0
      %v2879 = vand.u32 %v1651, 4294901760
      %v2880 = vsub.f32 %v1651, %v2879
      %2881 = vmatpush1.msra.mxu0 %v2880
      %2882 = vmatprep.subr.mxu0 0.0
      %v2883 = vand.u32 %v1652, 4294901760
      %v2884 = vsub.f32 %v1652, %v2883
      %2885 = vmatpush1.msra.mxu0 %v2884
      %2886 = vmatprep.subr.mxu0 0.0
      %v2887 = vand.u32 %v1653, 4294901760
      %v2888 = vsub.f32 %v1653, %v2887
      %2889 = vmatpush1.msra.mxu0 %v2888
      %2890 = vmatprep.subr.mxu0 0.0
      %v2891 = vand.u32 %v1654, 4294901760
      %v2892 = vsub.f32 %v1654, %v2891
      %2893 = vmatpush1.msra.mxu0 %v2892
      %2894 = vmatprep.subr.mxu0 0.0
      %v2895 = vand.u32 %v1655, 4294901760
      %v2896 = vsub.f32 %v1655, %v2895
      %2897 = vmatpush1.msra.mxu0 %v2896
      %2898 = vmatprep.subr.mxu0 0.0
      %v2899 = vand.u32 %v1656, 4294901760
      %v2900 = vsub.f32 %v1656, %v2899
      %2901 = vmatpush1.msra.mxu0 %v2900
      %2902 = vmatprep.subr.mxu0 0.0
      %v2903 = vand.u32 %v1657, 4294901760
      %v2904 = vsub.f32 %v1657, %v2903
      %2905 = vmatpush1.msra.mxu0 %v2904
      %2906 = vmatprep.subr.mxu0 0.0
      %v2907 = vand.u32 %v1658, 4294901760
      %v2908 = vsub.f32 %v1658, %v2907
      %2909 = vmatpush1.msra.mxu0 %v2908
      %2910 = vmatprep.subr.mxu0 0.0
      %v2911 = vand.u32 %v1659, 4294901760
      %v2912 = vsub.f32 %v1659, %v2911
      %2913 = vmatpush1.msra.mxu0 %v2912
      %v2914 = vand.u32 %v1533, 4294901760
      %v2915 = vsub.f32 %v1533, %v2914
      %2916 = vmatprep.mubr.f32.mxu0 %v2915
      %v2917 = vand.u32 %v1532, 4294901760
      %v2918 = vsub.f32 %v1532, %v2917
      %2919 = vmatmul.mubr.f32.gmra.mrb[0].mxu0 %v2918
      %v2920 = vpop.f32.mrb[0].mxu0
      %v2921 = vadd.f32 %v2566, %v2920
      %v2922 = vpop.f32.mrb[0].mxu0
      %v2923 = vand.u32 %v1536, 4294901760
      %v2924 = vsub.f32 %v1536, %v2923
      %2925 = vmatprep.mubr.f32.mxu0 %v2924
      %v2926 = vand.u32 %v1535, 4294901760
      %v2927 = vsub.f32 %v1535, %v2926
      %2928 = vmatmul.mubr.f32.gmra.mrb[0].mxu0 %v2927
      %v2929 = vpop.f32.mrb[0].mxu0
      %v2930 = vadd.f32 %v2573, %v2929
      %v2931 = vpop.f32.mrb[0].mxu0
      %v2932 = vand.u32 %v1539, 4294901760
      %v2933 = vsub.f32 %v1539, %v2932
      %2934 = vmatprep.mubr.f32.mxu0 %v2933
      %v2935 = vand.u32 %v1538, 4294901760
      %v2936 = vsub.f32 %v1538, %v2935
      %2937 = vmatmul.mubr.f32.gmra.mrb[0].mxu0 %v2936
      %v2938 = vpop.f32.mrb[0].mxu0
      %v2939 = vadd.f32 %v2580, %v2938
      %v2940 = vpop.f32.mrb[0].mxu0
      %v2941 = vand.u32 %v1542, 4294901760
      %v2942 = vsub.f32 %v1542, %v2941
      %2943 = vmatprep.mubr.f32.mxu0 %v2942
      %v2944 = vand.u32 %v1541, 4294901760
      %v2945 = vsub.f32 %v1541, %v2944
      %2946 = vmatmul.mubr.f32.gmra.mrb[0].mxu0 %v2945
      %v2947 = vpop.f32.mrb[0].mxu0
      %v2948 = vadd.f32 %v2587, %v2947
      %v2949 = vpop.f32.mrb[0].mxu0
      %v2950 = vand.u32 %v1545, 4294901760
      %v2951 = vsub.f32 %v1545, %v2950
      %2952 = vmatprep.mubr.f32.mxu0 %v2951
      %v2953 = vand.u32 %v1544, 4294901760
      %v2954 = vsub.f32 %v1544, %v2953
      %2955 = vmatmul.mubr.f32.gmra.mrb[0].mxu0 %v2954
      %v2956 = vpop.f32.mrb[0].mxu0
      %v2957 = vadd.f32 %v2594, %v2956
      %v2958 = vpop.f32.mrb[0].mxu0
      %v2959 = vand.u32 %v1548, 4294901760
      %v2960 = vsub.f32 %v1548, %v2959
      %2961 = vmatprep.mubr.f32.mxu0 %v2960
      %v2962 = vand.u32 %v1547, 4294901760
      %v2963 = vsub.f32 %v1547, %v2962
      %2964 = vmatmul.mubr.f32.gmra.mrb[0].mxu0 %v2963
      %v2965 = vpop.f32.mrb[0].mxu0
      %v2966 = vadd.f32 %v2601, %v2965
      %v2967 = vpop.f32.mrb[0].mxu0
      %v2968 = vand.u32 %v1551, 4294901760
      %v2969 = vsub.f32 %v1551, %v2968
      %2970 = vmatprep.mubr.f32.mxu0 %v2969
      %v2971 = vand.u32 %v1550, 4294901760
      %v2972 = vsub.f32 %v1550, %v2971
      %2973 = vmatmul.mubr.f32.gmra.mrb[0].mxu0 %v2972
      %v2974 = vpop.f32.mrb[0].mxu0
      %v2975 = vadd.f32 %v2608, %v2974
      %v2976 = vpop.f32.mrb[0].mxu0
      %v2977 = vand.u32 %v1554, 4294901760
      %v2978 = vsub.f32 %v1554, %v2977
      %2979 = vmatprep.mubr.f32.mxu0 %v2978
      %v2980 = vand.u32 %v1553, 4294901760
      %v2981 = vsub.f32 %v1553, %v2980
      %2982 = vmatmul.mubr.f32.gmra.mrb[0].mxu0 %v2981
      %v2983 = vpop.f32.mrb[0].mxu0
      %v2984 = vadd.f32 %v2615, %v2983
      %v2985 = vpop.f32.mrb[0].mxu0
      %v2986 = vand.u32 %v1557, 4294901760
      %v2987 = vsub.f32 %v1557, %v2986
      %2988 = vmatprep.mubr.f32.mxu0 %v2987
      %v2989 = vand.u32 %v1556, 4294901760
      %v2990 = vsub.f32 %v1556, %v2989
      %2991 = vmatmul.mubr.f32.gmra.mrb[0].mxu0 %v2990
      %v2992 = vpop.f32.mrb[0].mxu0
      %v2993 = vadd.f32 %v2622, %v2992
      %v2994 = vpop.f32.mrb[0].mxu0
      %v2995 = vand.u32 %v1560, 4294901760
      %v2996 = vsub.f32 %v1560, %v2995
      %2997 = vmatprep.mubr.f32.mxu0 %v2996
      %v2998 = vand.u32 %v1559, 4294901760
      %v2999 = vsub.f32 %v1559, %v2998
      %3000 = vmatmul.mubr.f32.gmra.mrb[0].mxu0 %v2999
      %v3001 = vpop.f32.mrb[0].mxu0
      %v3002 = vadd.f32 %v2629, %v3001
      %v3003 = vpop.f32.mrb[0].mxu0
      %v3004 = vand.u32 %v1563, 4294901760
      %v3005 = vsub.f32 %v1563, %v3004
      %3006 = vmatprep.mubr.f32.mxu0 %v3005
      %v3007 = vand.u32 %v1562, 4294901760
      %v3008 = vsub.f32 %v1562, %v3007
      %3009 = vmatmul.mubr.f32.gmra.mrb[0].mxu0 %v3008
      %v3010 = vpop.f32.mrb[0].mxu0
      %v3011 = vadd.f32 %v2636, %v3010
      %v3012 = vpop.f32.mrb[0].mxu0
      %v3013 = vand.u32 %v1566, 4294901760
      %v3014 = vsub.f32 %v1566, %v3013
      %3015 = vmatprep.mubr.f32.mxu0 %v3014
      %v3016 = vand.u32 %v1565, 4294901760
      %v3017 = vsub.f32 %v1565, %v3016
      %3018 = vmatmul.mubr.f32.gmra.mrb[0].mxu0 %v3017
      %v3019 = vpop.f32.mrb[0].mxu0
      %v3020 = vadd.f32 %v2643, %v3019
      %v3021 = vpop.f32.mrb[0].mxu0
      %v3022 = vand.u32 %v1569, 4294901760
      %v3023 = vsub.f32 %v1569, %v3022
      %3024 = vmatprep.mubr.f32.mxu0 %v3023
      %v3025 = vand.u32 %v1568, 4294901760
      %v3026 = vsub.f32 %v1568, %v3025
      %3027 = vmatmul.mubr.f32.gmra.mrb[0].mxu0 %v3026
      %v3028 = vpop.f32.mrb[0].mxu0
      %v3029 = vadd.f32 %v2650, %v3028
      %v3030 = vpop.f32.mrb[0].mxu0
      %v3031 = vand.u32 %v1572, 4294901760
      %v3032 = vsub.f32 %v1572, %v3031
      %3033 = vmatprep.mubr.f32.mxu0 %v3032
      %v3034 = vand.u32 %v1571, 4294901760
      %v3035 = vsub.f32 %v1571, %v3034
      %3036 = vmatmul.mubr.f32.gmra.mrb[0].mxu0 %v3035
      %v3037 = vpop.f32.mrb[0].mxu0
      %v3038 = vadd.f32 %v2657, %v3037
      %v3039 = vpop.f32.mrb[0].mxu0
      %v3040 = vand.u32 %v1575, 4294901760
      %v3041 = vsub.f32 %v1575, %v3040
      %3042 = vmatprep.mubr.f32.mxu0 %v3041
      %v3043 = vand.u32 %v1574, 4294901760
      %v3044 = vsub.f32 %v1574, %v3043
      %3045 = vmatmul.mubr.f32.gmra.mrb[0].mxu0 %v3044
      %v3046 = vpop.f32.mrb[0].mxu0
      %v3047 = vadd.f32 %v2664, %v3046
      %v3048 = vpop.f32.mrb[0].mxu0
      %v3049 = vand.u32 %v1578, 4294901760
      %v3050 = vsub.f32 %v1578, %v3049
      %3051 = vmatprep.mubr.f32.mxu0 %v3050
      %v3052 = vand.u32 %v1577, 4294901760
      %v3053 = vsub.f32 %v1577, %v3052
      %3054 = vmatmul.mubr.f32.gmra.mrb[0].mxu0 %v3053
      %v3055 = vpop.f32.mrb[0].mxu0
      %v3056 = vadd.f32 %v2671, %v3055
      %v3057 = vpop.f32.mrb[0].mxu0
      %v3058 = vand.u32 %v1581, 4294901760
      %v3059 = vsub.f32 %v1581, %v3058
      %3060 = vmatprep.mubr.f32.mxu0 %v3059
      %v3061 = vand.u32 %v1580, 4294901760
      %v3062 = vsub.f32 %v1580, %v3061
      %3063 = vmatmul.mubr.f32.gmra.mrb[0].mxu0 %v3062
      %v3064 = vpop.f32.mrb[0].mxu0
      %v3065 = vadd.f32 %v2678, %v3064
      %v3066 = vpop.f32.mrb[0].mxu0
      %v3067 = vand.u32 %v1584, 4294901760
      %v3068 = vsub.f32 %v1584, %v3067
      %3069 = vmatprep.mubr.f32.mxu0 %v3068
      %v3070 = vand.u32 %v1583, 4294901760
      %v3071 = vsub.f32 %v1583, %v3070
      %3072 = vmatmul.mubr.f32.gmra.mrb[0].mxu0 %v3071
      %v3073 = vpop.f32.mrb[0].mxu0
      %v3074 = vadd.f32 %v2685, %v3073
      %v3075 = vpop.f32.mrb[0].mxu0
      %v3076 = vand.u32 %v1587, 4294901760
      %v3077 = vsub.f32 %v1587, %v3076
      %3078 = vmatprep.mubr.f32.mxu0 %v3077
      %v3079 = vand.u32 %v1586, 4294901760
      %v3080 = vsub.f32 %v1586, %v3079
      %3081 = vmatmul.mubr.f32.gmra.mrb[0].mxu0 %v3080
      %v3082 = vpop.f32.mrb[0].mxu0
      %v3083 = vadd.f32 %v2692, %v3082
      %v3084 = vpop.f32.mrb[0].mxu0
      %v3085 = vand.u32 %v1590, 4294901760
      %v3086 = vsub.f32 %v1590, %v3085
      %3087 = vmatprep.mubr.f32.mxu0 %v3086
      %v3088 = vand.u32 %v1589, 4294901760
      %v3089 = vsub.f32 %v1589, %v3088
      %3090 = vmatmul.mubr.f32.gmra.mrb[0].mxu0 %v3089
      %v3091 = vpop.f32.mrb[0].mxu0
      %v3092 = vadd.f32 %v2699, %v3091
      %v3093 = vpop.f32.mrb[0].mxu0
      %v3094 = vand.u32 %v1593, 4294901760
      %v3095 = vsub.f32 %v1593, %v3094
      %3096 = vmatprep.mubr.f32.mxu0 %v3095
      %v3097 = vand.u32 %v1592, 4294901760
      %v3098 = vsub.f32 %v1592, %v3097
      %3099 = vmatmul.mubr.f32.gmra.mrb[0].mxu0 %v3098
      %v3100 = vpop.f32.mrb[0].mxu0
      %v3101 = vadd.f32 %v2706, %v3100
      %v3102 = vpop.f32.mrb[0].mxu0
      %v3103 = vand.u32 %v1596, 4294901760
      %v3104 = vsub.f32 %v1596, %v3103
      %3105 = vmatprep.mubr.f32.mxu0 %v3104
      %v3106 = vand.u32 %v1595, 4294901760
      %v3107 = vsub.f32 %v1595, %v3106
      %3108 = vmatmul.mubr.f32.gmra.mrb[0].mxu0 %v3107
      %v3109 = vpop.f32.mrb[0].mxu0
      %v3110 = vadd.f32 %v2713, %v3109
      %v3111 = vpop.f32.mrb[0].mxu0
      %v3112 = vand.u32 %v1599, 4294901760
      %v3113 = vsub.f32 %v1599, %v3112
      %3114 = vmatprep.mubr.f32.mxu0 %v3113
      %v3115 = vand.u32 %v1598, 4294901760
      %v3116 = vsub.f32 %v1598, %v3115
      %3117 = vmatmul.mubr.f32.gmra.mrb[0].mxu0 %v3116
      %v3118 = vpop.f32.mrb[0].mxu0
      %v3119 = vadd.f32 %v2720, %v3118
      %v3120 = vpop.f32.mrb[0].mxu0
      %v3121 = vand.u32 %v1602, 4294901760
      %v3122 = vsub.f32 %v1602, %v3121
      %3123 = vmatprep.mubr.f32.mxu0 %v3122
      %v3124 = vand.u32 %v1601, 4294901760
      %v3125 = vsub.f32 %v1601, %v3124
      %3126 = vmatmul.mubr.f32.gmra.mrb[0].mxu0 %v3125
      %v3127 = vpop.f32.mrb[0].mxu0
      %v3128 = vadd.f32 %v2727, %v3127
      %v3129 = vpop.f32.mrb[0].mxu0
      %v3130 = vand.u32 %v1605, 4294901760
      %v3131 = vsub.f32 %v1605, %v3130
      %3132 = vmatprep.mubr.f32.mxu0 %v3131
      %v3133 = vand.u32 %v1604, 4294901760
      %v3134 = vsub.f32 %v1604, %v3133
      %3135 = vmatmul.mubr.f32.gmra.mrb[0].mxu0 %v3134
      %v3136 = vpop.f32.mrb[0].mxu0
      %v3137 = vadd.f32 %v2734, %v3136
      %v3138 = vpop.f32.mrb[0].mxu0
      %v3139 = vand.u32 %v1608, 4294901760
      %v3140 = vsub.f32 %v1608, %v3139
      %3141 = vmatprep.mubr.f32.mxu0 %v3140
      %v3142 = vand.u32 %v1607, 4294901760
      %v3143 = vsub.f32 %v1607, %v3142
      %3144 = vmatmul.mubr.f32.gmra.mrb[0].mxu0 %v3143
      %v3145 = vpop.f32.mrb[0].mxu0
      %v3146 = vadd.f32 %v2741, %v3145
      %v3147 = vpop.f32.mrb[0].mxu0
      %v3148 = vand.u32 %v1611, 4294901760
      %v3149 = vsub.f32 %v1611, %v3148
      %3150 = vmatprep.mubr.f32.mxu0 %v3149
      %v3151 = vand.u32 %v1610, 4294901760
      %v3152 = vsub.f32 %v1610, %v3151
      %3153 = vmatmul.mubr.f32.gmra.mrb[0].mxu0 %v3152
      %v3154 = vpop.f32.mrb[0].mxu0
      %v3155 = vadd.f32 %v2748, %v3154
      %v3156 = vpop.f32.mrb[0].mxu0
      %v3157 = vand.u32 %v1614, 4294901760
      %v3158 = vsub.f32 %v1614, %v3157
      %3159 = vmatprep.mubr.f32.mxu0 %v3158
      %v3160 = vand.u32 %v1613, 4294901760
      %v3161 = vsub.f32 %v1613, %v3160
      %3162 = vmatmul.mubr.f32.gmra.mrb[0].mxu0 %v3161
      %v3163 = vpop.f32.mrb[0].mxu0
      %v3164 = vadd.f32 %v2755, %v3163
      %v3165 = vpop.f32.mrb[0].mxu0
      %v3166 = vand.u32 %v1617, 4294901760
      %v3167 = vsub.f32 %v1617, %v3166
      %3168 = vmatprep.mubr.f32.mxu0 %v3167
      %v3169 = vand.u32 %v1616, 4294901760
      %v3170 = vsub.f32 %v1616, %v3169
      %3171 = vmatmul.mubr.f32.gmra.mrb[0].mxu0 %v3170
      %v3172 = vpop.f32.mrb[0].mxu0
      %v3173 = vadd.f32 %v2762, %v3172
      %v3174 = vpop.f32.mrb[0].mxu0
      %v3175 = vand.u32 %v1620, 4294901760
      %v3176 = vsub.f32 %v1620, %v3175
      %3177 = vmatprep.mubr.f32.mxu0 %v3176
      %v3178 = vand.u32 %v1619, 4294901760
      %v3179 = vsub.f32 %v1619, %v3178
      %3180 = vmatmul.mubr.f32.gmra.mrb[0].mxu0 %v3179
      %v3181 = vpop.f32.mrb[0].mxu0
      %v3182 = vadd.f32 %v2769, %v3181
      %v3183 = vpop.f32.mrb[0].mxu0
      %v3184 = vand.u32 %v1623, 4294901760
      %v3185 = vsub.f32 %v1623, %v3184
      %3186 = vmatprep.mubr.f32.mxu0 %v3185
      %v3187 = vand.u32 %v1622, 4294901760
      %v3188 = vsub.f32 %v1622, %v3187
      %3189 = vmatmul.mubr.f32.gmra.mrb[0].mxu0 %v3188
      %v3190 = vpop.f32.mrb[0].mxu0
      %v3191 = vadd.f32 %v2776, %v3190
      %v3192 = vpop.f32.mrb[0].mxu0
      %v3193 = vand.u32 %v1626, 4294901760
      %v3194 = vsub.f32 %v1626, %v3193
      %3195 = vmatprep.mubr.f32.mxu0 %v3194
      %v3196 = vand.u32 %v1625, 4294901760
      %v3197 = vsub.f32 %v1625, %v3196
      %3198 = vmatmul.mubr.f32.gmra.mrb[0].mxu0 %v3197
      %v3199 = vpop.f32.mrb[0].mxu0
      %v3200 = vadd.f32 %v2783, %v3199
      %v3201 = vpop.f32.mrb[0].mxu0
      %3202 = vdwg.mxu0
      %3203 = vmatprep.subr.mxu0 0.0
      %v3204 = vand.u32 %v1628, 4294901760
      %3205 = vmatpush1.msra.mxu0 %v3204
      %3206 = vmatprep.subr.mxu0 0.0
      %v3207 = vand.u32 %v1629, 4294901760
      %3208 = vmatpush1.msra.mxu0 %v3207
      %3209 = vmatprep.subr.mxu0 0.0
      %v3210 = vand.u32 %v1630, 4294901760
      %3211 = vmatpush1.msra.mxu0 %v3210
      %3212 = vmatprep.subr.mxu0 0.0
      %v3213 = vand.u32 %v1631, 4294901760
      %3214 = vmatpush1.msra.mxu0 %v3213
      %3215 = vmatprep.subr.mxu0 0.0
      %v3216 = vand.u32 %v1632, 4294901760
      %3217 = vmatpush1.msra.mxu0 %v3216
      %3218 = vmatprep.subr.mxu0 0.0
      %v3219 = vand.u32 %v1633, 4294901760
      %3220 = vmatpush1.msra.mxu0 %v3219
      %3221 = vmatprep.subr.mxu0 0.0
      %v3222 = vand.u32 %v1634, 4294901760
      %3223 = vmatpush1.msra.mxu0 %v3222
      %3224 = vmatprep.subr.mxu0 0.0
      %v3225 = vand.u32 %v1635, 4294901760
      %3226 = vmatpush1.msra.mxu0 %v3225
      %3227 = vmatprep.subr.mxu0 0.0
      %v3228 = vand.u32 %v1636, 4294901760
      %3229 = vmatpush1.msra.mxu0 %v3228
      %3230 = vmatprep.subr.mxu0 0.0
      %v3231 = vand.u32 %v1637, 4294901760
      %3232 = vmatpush1.msra.mxu0 %v3231
      %3233 = vmatprep.subr.mxu0 0.0
      %v3234 = vand.u32 %v1638, 4294901760
      %3235 = vmatpush1.msra.mxu0 %v3234
      %3236 = vmatprep.subr.mxu0 0.0
      %v3237 = vand.u32 %v1639, 4294901760
      %3238 = vmatpush1.msra.mxu0 %v3237
      %3239 = vmatprep.subr.mxu0 0.0
      %v3240 = vand.u32 %v1640, 4294901760
      %3241 = vmatpush1.msra.mxu0 %v3240
      %3242 = vmatprep.subr.mxu0 0.0
      %v3243 = vand.u32 %v1641, 4294901760
      %3244 = vmatpush1.msra.mxu0 %v3243
      %3245 = vmatprep.subr.mxu0 0.0
      %v3246 = vand.u32 %v1642, 4294901760
      %3247 = vmatpush1.msra.mxu0 %v3246
      %3248 = vmatprep.subr.mxu0 0.0
      %v3249 = vand.u32 %v1643, 4294901760
      %3250 = vmatpush1.msra.mxu0 %v3249
      %3251 = vmatprep.subr.mxu0 0.0
      %v3252 = vand.u32 %v1644, 4294901760
      %3253 = vmatpush1.msra.mxu0 %v3252
      %3254 = vmatprep.subr.mxu0 0.0
      %v3255 = vand.u32 %v1645, 4294901760
      %3256 = vmatpush1.msra.mxu0 %v3255
      %3257 = vmatprep.subr.mxu0 0.0
      %v3258 = vand.u32 %v1646, 4294901760
      %3259 = vmatpush1.msra.mxu0 %v3258
      %3260 = vmatprep.subr.mxu0 0.0
      %v3261 = vand.u32 %v1647, 4294901760
      %3262 = vmatpush1.msra.mxu0 %v3261
      %3263 = vmatprep.subr.mxu0 0.0
      %v3264 = vand.u32 %v1648, 4294901760
      %3265 = vmatpush1.msra.mxu0 %v3264
      %3266 = vmatprep.subr.mxu0 0.0
      %v3267 = vand.u32 %v1649, 4294901760
      %3268 = vmatpush1.msra.mxu0 %v3267
      %3269 = vmatprep.subr.mxu0 0.0
      %v3270 = vand.u32 %v1650, 4294901760
      %3271 = vmatpush1.msra.mxu0 %v3270
      %3272 = vmatprep.subr.mxu0 0.0
      %v3273 = vand.u32 %v1651, 4294901760
      %3274 = vmatpush1.msra.mxu0 %v3273
      %3275 = vmatprep.subr.mxu0 0.0
      %v3276 = vand.u32 %v1652, 4294901760
      %3277 = vmatpush1.msra.mxu0 %v3276
      %3278 = vmatprep.subr.mxu0 0.0
      %v3279 = vand.u32 %v1653, 4294901760
      %3280 = vmatpush1.msra.mxu0 %v3279
      %3281 = vmatprep.subr.mxu0 0.0
      %v3282 = vand.u32 %v1654, 4294901760
      %3283 = vmatpush1.msra.mxu0 %v3282
      %3284 = vmatprep.subr.mxu0 0.0
      %v3285 = vand.u32 %v1655, 4294901760
      %3286 = vmatpush1.msra.mxu0 %v3285
      %3287 = vmatprep.subr.mxu0 0.0
      %v3288 = vand.u32 %v1656, 4294901760
      %3289 = vmatpush1.msra.mxu0 %v3288
      %3290 = vmatprep.subr.mxu0 0.0
      %v3291 = vand.u32 %v1657, 4294901760
      %3292 = vmatpush1.msra.mxu0 %v3291
      %3293 = vmatprep.subr.mxu0 0.0
      %v3294 = vand.u32 %v1658, 4294901760
      %3295 = vmatpush1.msra.mxu0 %v3294
      %3296 = vmatprep.subr.mxu0 0.0
      %v3297 = vand.u32 %v1659, 4294901760
      %3298 = vmatpush1.msra.mxu0 %v3297
      %v3299 = vand.u32 %v1533, 4294901760
      %v3300 = vsub.f32 %v1533, %v3299
      %v3301 = vand.u32 %v3300, 4294901760
      %3302 = vmatprep.mubr.f32.mxu0 %v3301
      %v3303 = vand.u32 %v1532, 4294901760
      %v3304 = vsub.f32 %v1532, %v3303
      %v3305 = vand.u32 %v3304, 4294901760
      %3306 = vmatmul.mubr.f32.gmra.mrb[0].mxu0 %v3305
      %v3307 = vpop.f32.mrb[0].mxu0
      %v3308 = vadd.f32 %v2921, %v3307
      %v3309 = vpop.f32.mrb[0].mxu0
      %v3310 = vand.u32 %v1536, 4294901760
      %v3311 = vsub.f32 %v1536, %v3310
      %v3312 = vand.u32 %v3311, 4294901760
      %3313 = vmatprep.mubr.f32.mxu0 %v3312
      %v3314 = vand.u32 %v1535, 4294901760
      %v3315 = vsub.f32 %v1535, %v3314
      %v3316 = vand.u32 %v3315, 4294901760
      %3317 = vmatmul.mubr.f32.gmra.mrb[0].mxu0 %v3316
      %v3318 = vpop.f32.mrb[0].mxu0
      %v3319 = vadd.f32 %v2930, %v3318
      %v3320 = vpop.f32.mrb[0].mxu0
      %v3321 = vand.u32 %v1539, 4294901760
      %v3322 = vsub.f32 %v1539, %v3321
      %v3323 = vand.u32 %v3322, 4294901760
      %3324 = vmatprep.mubr.f32.mxu0 %v3323
      %v3325 = vand.u32 %v1538, 4294901760
      %v3326 = vsub.f32 %v1538, %v3325
      %v3327 = vand.u32 %v3326, 4294901760
      %3328 = vmatmul.mubr.f32.gmra.mrb[0].mxu0 %v3327
      %v3329 = vpop.f32.mrb[0].mxu0
      %v3330 = vadd.f32 %v2939, %v3329
      %v3331 = vpop.f32.mrb[0].mxu0
      %v3332 = vand.u32 %v1542, 4294901760
      %v3333 = vsub.f32 %v1542, %v3332
      %v3334 = vand.u32 %v3333, 4294901760
      %3335 = vmatprep.mubr.f32.mxu0 %v3334
      %v3336 = vand.u32 %v1541, 4294901760
      %v3337 = vsub.f32 %v1541, %v3336
      %v3338 = vand.u32 %v3337, 4294901760
      %3339 = vmatmul.mubr.f32.gmra.mrb[0].mxu0 %v3338
      %v3340 = vpop.f32.mrb[0].mxu0
      %v3341 = vadd.f32 %v2948, %v3340
      %v3342 = vpop.f32.mrb[0].mxu0
      %v3343 = vand.u32 %v1545, 4294901760
      %v3344 = vsub.f32 %v1545, %v3343
      %v3345 = vand.u32 %v3344, 4294901760
      %3346 = vmatprep.mubr.f32.mxu0 %v3345
      %v3347 = vand.u32 %v1544, 4294901760
      %v3348 = vsub.f32 %v1544, %v3347
      %v3349 = vand.u32 %v3348, 4294901760
      %3350 = vmatmul.mubr.f32.gmra.mrb[0].mxu0 %v3349
      %v3351 = vpop.f32.mrb[0].mxu0
      %v3352 = vadd.f32 %v2957, %v3351
      %v3353 = vpop.f32.mrb[0].mxu0
      %v3354 = vand.u32 %v1548, 4294901760
      %v3355 = vsub.f32 %v1548, %v3354
      %v3356 = vand.u32 %v3355, 4294901760
      %3357 = vmatprep.mubr.f32.mxu0 %v3356
      %v3358 = vand.u32 %v1547, 4294901760
      %v3359 = vsub.f32 %v1547, %v3358
      %v3360 = vand.u32 %v3359, 4294901760
      %3361 = vmatmul.mubr.f32.gmra.mrb[0].mxu0 %v3360
      %v3362 = vpop.f32.mrb[0].mxu0
      %v3363 = vadd.f32 %v2966, %v3362
      %v3364 = vpop.f32.mrb[0].mxu0
      %v3365 = vand.u32 %v1551, 4294901760
      %v3366 = vsub.f32 %v1551, %v3365
      %v3367 = vand.u32 %v3366, 4294901760
      %3368 = vmatprep.mubr.f32.mxu0 %v3367
      %v3369 = vand.u32 %v1550, 4294901760
      %v3370 = vsub.f32 %v1550, %v3369
      %v3371 = vand.u32 %v3370, 4294901760
      %3372 = vmatmul.mubr.f32.gmra.mrb[0].mxu0 %v3371
      %v3373 = vpop.f32.mrb[0].mxu0
      %v3374 = vadd.f32 %v2975, %v3373
      %v3375 = vpop.f32.mrb[0].mxu0
      %v3376 = vand.u32 %v1554, 4294901760
      %v3377 = vsub.f32 %v1554, %v3376
      %v3378 = vand.u32 %v3377, 4294901760
      %3379 = vmatprep.mubr.f32.mxu0 %v3378
      %v3380 = vand.u32 %v1553, 4294901760
      %v3381 = vsub.f32 %v1553, %v3380
      %v3382 = vand.u32 %v3381, 4294901760
      %3383 = vmatmul.mubr.f32.gmra.mrb[0].mxu0 %v3382
      %v3384 = vpop.f32.mrb[0].mxu0
      %v3385 = vadd.f32 %v2984, %v3384
      %v3386 = vpop.f32.mrb[0].mxu0
      %v3387 = vand.u32 %v1557, 4294901760
      %v3388 = vsub.f32 %v1557, %v3387
      %v3389 = vand.u32 %v3388, 4294901760
      %3390 = vmatprep.mubr.f32.mxu0 %v3389
      %v3391 = vand.u32 %v1556, 4294901760
      %v3392 = vsub.f32 %v1556, %v3391
      %v3393 = vand.u32 %v3392, 4294901760
      %3394 = vmatmul.mubr.f32.gmra.mrb[0].mxu0 %v3393
      %v3395 = vpop.f32.mrb[0].mxu0
      %v3396 = vadd.f32 %v2993, %v3395
      %v3397 = vpop.f32.mrb[0].mxu0
      %v3398 = vand.u32 %v1560, 4294901760
      %v3399 = vsub.f32 %v1560, %v3398
      %v3400 = vand.u32 %v3399, 4294901760
      %3401 = vmatprep.mubr.f32.mxu0 %v3400
      %v3402 = vand.u32 %v1559, 4294901760
      %v3403 = vsub.f32 %v1559, %v3402
      %v3404 = vand.u32 %v3403, 4294901760
      %3405 = vmatmul.mubr.f32.gmra.mrb[0].mxu0 %v3404
      %v3406 = vpop.f32.mrb[0].mxu0
      %v3407 = vadd.f32 %v3002, %v3406
      %v3408 = vpop.f32.mrb[0].mxu0
      %v3409 = vand.u32 %v1563, 4294901760
      %v3410 = vsub.f32 %v1563, %v3409
      %v3411 = vand.u32 %v3410, 4294901760
      %3412 = vmatprep.mubr.f32.mxu0 %v3411
      %v3413 = vand.u32 %v1562, 4294901760
      %v3414 = vsub.f32 %v1562, %v3413
      %v3415 = vand.u32 %v3414, 4294901760
      %3416 = vmatmul.mubr.f32.gmra.mrb[0].mxu0 %v3415
      %v3417 = vpop.f32.mrb[0].mxu0
      %v3418 = vadd.f32 %v3011, %v3417
      %v3419 = vpop.f32.mrb[0].mxu0
      %v3420 = vand.u32 %v1566, 4294901760
      %v3421 = vsub.f32 %v1566, %v3420
      %v3422 = vand.u32 %v3421, 4294901760
      %3423 = vmatprep.mubr.f32.mxu0 %v3422
      %v3424 = vand.u32 %v1565, 4294901760
      %v3425 = vsub.f32 %v1565, %v3424
      %v3426 = vand.u32 %v3425, 4294901760
      %3427 = vmatmul.mubr.f32.gmra.mrb[0].mxu0 %v3426
      %v3428 = vpop.f32.mrb[0].mxu0
      %v3429 = vadd.f32 %v3020, %v3428
      %v3430 = vpop.f32.mrb[0].mxu0
      %v3431 = vand.u32 %v1569, 4294901760
      %v3432 = vsub.f32 %v1569, %v3431
      %v3433 = vand.u32 %v3432, 4294901760
      %3434 = vmatprep.mubr.f32.mxu0 %v3433
      %v3435 = vand.u32 %v1568, 4294901760
      %v3436 = vsub.f32 %v1568, %v3435
      %v3437 = vand.u32 %v3436, 4294901760
      %3438 = vmatmul.mubr.f32.gmra.mrb[0].mxu0 %v3437
      %v3439 = vpop.f32.mrb[0].mxu0
      %v3440 = vadd.f32 %v3029, %v3439
      %v3441 = vpop.f32.mrb[0].mxu0
      %v3442 = vand.u32 %v1572, 4294901760
      %v3443 = vsub.f32 %v1572, %v3442
      %v3444 = vand.u32 %v3443, 4294901760
      %3445 = vmatprep.mubr.f32.mxu0 %v3444
      %v3446 = vand.u32 %v1571, 4294901760
      %v3447 = vsub.f32 %v1571, %v3446
      %v3448 = vand.u32 %v3447, 4294901760
      %3449 = vmatmul.mubr.f32.gmra.mrb[0].mxu0 %v3448
      %v3450 = vpop.f32.mrb[0].mxu0
      %v3451 = vadd.f32 %v3038, %v3450
      %v3452 = vpop.f32.mrb[0].mxu0
      %v3453 = vand.u32 %v1575, 4294901760
      %v3454 = vsub.f32 %v1575, %v3453
      %v3455 = vand.u32 %v3454, 4294901760
      %3456 = vmatprep.mubr.f32.mxu0 %v3455
      %v3457 = vand.u32 %v1574, 4294901760
      %v3458 = vsub.f32 %v1574, %v3457
      %v3459 = vand.u32 %v3458, 4294901760
      %3460 = vmatmul.mubr.f32.gmra.mrb[0].mxu0 %v3459
      %v3461 = vpop.f32.mrb[0].mxu0
      %v3462 = vadd.f32 %v3047, %v3461
      %v3463 = vpop.f32.mrb[0].mxu0
      %v3464 = vand.u32 %v1578, 4294901760
      %v3465 = vsub.f32 %v1578, %v3464
      %v3466 = vand.u32 %v3465, 4294901760
      %3467 = vmatprep.mubr.f32.mxu0 %v3466
      %v3468 = vand.u32 %v1577, 4294901760
      %v3469 = vsub.f32 %v1577, %v3468
      %v3470 = vand.u32 %v3469, 4294901760
      %3471 = vmatmul.mubr.f32.gmra.mrb[0].mxu0 %v3470
      %v3472 = vpop.f32.mrb[0].mxu0
      %v3473 = vadd.f32 %v3056, %v3472
      %v3474 = vpop.f32.mrb[0].mxu0
      %v3475 = vand.u32 %v1581, 4294901760
      %v3476 = vsub.f32 %v1581, %v3475
      %v3477 = vand.u32 %v3476, 4294901760
      %3478 = vmatprep.mubr.f32.mxu0 %v3477
      %v3479 = vand.u32 %v1580, 4294901760
      %v3480 = vsub.f32 %v1580, %v3479
      %v3481 = vand.u32 %v3480, 4294901760
      %3482 = vmatmul.mubr.f32.gmra.mrb[0].mxu0 %v3481
      %v3483 = vpop.f32.mrb[0].mxu0
      %v3484 = vadd.f32 %v3065, %v3483
      %v3485 = vpop.f32.mrb[0].mxu0
      %v3486 = vand.u32 %v1584, 4294901760
      %v3487 = vsub.f32 %v1584, %v3486
      %v3488 = vand.u32 %v3487, 4294901760
      %3489 = vmatprep.mubr.f32.mxu0 %v3488
      %v3490 = vand.u32 %v1583, 4294901760
      %v3491 = vsub.f32 %v1583, %v3490
      %v3492 = vand.u32 %v3491, 4294901760
      %3493 = vmatmul.mubr.f32.gmra.mrb[0].mxu0 %v3492
      %v3494 = vpop.f32.mrb[0].mxu0
      %v3495 = vadd.f32 %v3074, %v3494
      %v3496 = vpop.f32.mrb[0].mxu0
      %v3497 = vand.u32 %v1587, 4294901760
      %v3498 = vsub.f32 %v1587, %v3497
      %v3499 = vand.u32 %v3498, 4294901760
      %3500 = vmatprep.mubr.f32.mxu0 %v3499
      %v3501 = vand.u32 %v1586, 4294901760
      %v3502 = vsub.f32 %v1586, %v3501
      %v3503 = vand.u32 %v3502, 4294901760
      %3504 = vmatmul.mubr.f32.gmra.mrb[0].mxu0 %v3503
      %v3505 = vpop.f32.mrb[0].mxu0
      %v3506 = vadd.f32 %v3083, %v3505
      %v3507 = vpop.f32.mrb[0].mxu0
      %v3508 = vand.u32 %v1590, 4294901760
      %v3509 = vsub.f32 %v1590, %v3508
      %v3510 = vand.u32 %v3509, 4294901760
      %3511 = vmatprep.mubr.f32.mxu0 %v3510
      %v3512 = vand.u32 %v1589, 4294901760
      %v3513 = vsub.f32 %v1589, %v3512
      %v3514 = vand.u32 %v3513, 4294901760
      %3515 = vmatmul.mubr.f32.gmra.mrb[0].mxu0 %v3514
      %v3516 = vpop.f32.mrb[0].mxu0
      %v3517 = vadd.f32 %v3092, %v3516
      %v3518 = vpop.f32.mrb[0].mxu0
      %v3519 = vand.u32 %v1593, 4294901760
      %v3520 = vsub.f32 %v1593, %v3519
      %v3521 = vand.u32 %v3520, 4294901760
      %3522 = vmatprep.mubr.f32.mxu0 %v3521
      %v3523 = vand.u32 %v1592, 4294901760
      %v3524 = vsub.f32 %v1592, %v3523
      %v3525 = vand.u32 %v3524, 4294901760
      %3526 = vmatmul.mubr.f32.gmra.mrb[0].mxu0 %v3525
      %v3527 = vpop.f32.mrb[0].mxu0
      %v3528 = vadd.f32 %v3101, %v3527
      %v3529 = vpop.f32.mrb[0].mxu0
      %v3530 = vand.u32 %v1596, 4294901760
      %v3531 = vsub.f32 %v1596, %v3530
      %v3532 = vand.u32 %v3531, 4294901760
      %3533 = vmatprep.mubr.f32.mxu0 %v3532
      %v3534 = vand.u32 %v1595, 4294901760
      %v3535 = vsub.f32 %v1595, %v3534
      %v3536 = vand.u32 %v3535, 4294901760
      %3537 = vmatmul.mubr.f32.gmra.mrb[0].mxu0 %v3536
      %v3538 = vpop.f32.mrb[0].mxu0
      %v3539 = vadd.f32 %v3110, %v3538
      %v3540 = vpop.f32.mrb[0].mxu0
      %v3541 = vand.u32 %v1599, 4294901760
      %v3542 = vsub.f32 %v1599, %v3541
      %v3543 = vand.u32 %v3542, 4294901760
      %3544 = vmatprep.mubr.f32.mxu0 %v3543
      %v3545 = vand.u32 %v1598, 4294901760
      %v3546 = vsub.f32 %v1598, %v3545
      %v3547 = vand.u32 %v3546, 4294901760
      %3548 = vmatmul.mubr.f32.gmra.mrb[0].mxu0 %v3547
      %v3549 = vpop.f32.mrb[0].mxu0
      %v3550 = vadd.f32 %v3119, %v3549
      %v3551 = vpop.f32.mrb[0].mxu0
      %v3552 = vand.u32 %v1602, 4294901760
      %v3553 = vsub.f32 %v1602, %v3552
      %v3554 = vand.u32 %v3553, 4294901760
      %3555 = vmatprep.mubr.f32.mxu0 %v3554
      %v3556 = vand.u32 %v1601, 4294901760
      %v3557 = vsub.f32 %v1601, %v3556
      %v3558 = vand.u32 %v3557, 4294901760
      %3559 = vmatmul.mubr.f32.gmra.mrb[0].mxu0 %v3558
      %v3560 = vpop.f32.mrb[0].mxu0
      %v3561 = vadd.f32 %v3128, %v3560
      %v3562 = vpop.f32.mrb[0].mxu0
      %v3563 = vand.u32 %v1605, 4294901760
      %v3564 = vsub.f32 %v1605, %v3563
      %v3565 = vand.u32 %v3564, 4294901760
      %3566 = vmatprep.mubr.f32.mxu0 %v3565
      %v3567 = vand.u32 %v1604, 4294901760
      %v3568 = vsub.f32 %v1604, %v3567
      %v3569 = vand.u32 %v3568, 4294901760
      %3570 = vmatmul.mubr.f32.gmra.mrb[0].mxu0 %v3569
      %v3571 = vpop.f32.mrb[0].mxu0
      %v3572 = vadd.f32 %v3137, %v3571
      %v3573 = vpop.f32.mrb[0].mxu0
      %v3574 = vand.u32 %v1608, 4294901760
      %v3575 = vsub.f32 %v1608, %v3574
      %v3576 = vand.u32 %v3575, 4294901760
      %3577 = vmatprep.mubr.f32.mxu0 %v3576
      %v3578 = vand.u32 %v1607, 4294901760
      %v3579 = vsub.f32 %v1607, %v3578
      %v3580 = vand.u32 %v3579, 4294901760
      %3581 = vmatmul.mubr.f32.gmra.mrb[0].mxu0 %v3580
      %v3582 = vpop.f32.mrb[0].mxu0
      %v3583 = vadd.f32 %v3146, %v3582
      %v3584 = vpop.f32.mrb[0].mxu0
      %v3585 = vand.u32 %v1611, 4294901760
      %v3586 = vsub.f32 %v1611, %v3585
      %v3587 = vand.u32 %v3586, 4294901760
      %3588 = vmatprep.mubr.f32.mxu0 %v3587
      %v3589 = vand.u32 %v1610, 4294901760
      %v3590 = vsub.f32 %v1610, %v3589
      %v3591 = vand.u32 %v3590, 4294901760
      %3592 = vmatmul.mubr.f32.gmra.mrb[0].mxu0 %v3591
      %v3593 = vpop.f32.mrb[0].mxu0
      %v3594 = vadd.f32 %v3155, %v3593
      %v3595 = vpop.f32.mrb[0].mxu0
      %v3596 = vand.u32 %v1614, 4294901760
      %v3597 = vsub.f32 %v1614, %v3596
      %v3598 = vand.u32 %v3597, 4294901760
      %3599 = vmatprep.mubr.f32.mxu0 %v3598
      %v3600 = vand.u32 %v1613, 4294901760
      %v3601 = vsub.f32 %v1613, %v3600
      %v3602 = vand.u32 %v3601, 4294901760
      %3603 = vmatmul.mubr.f32.gmra.mrb[0].mxu0 %v3602
      %v3604 = vpop.f32.mrb[0].mxu0
      %v3605 = vadd.f32 %v3164, %v3604
      %v3606 = vpop.f32.mrb[0].mxu0
      %v3607 = vand.u32 %v1617, 4294901760
      %v3608 = vsub.f32 %v1617, %v3607
      %v3609 = vand.u32 %v3608, 4294901760
      %3610 = vmatprep.mubr.f32.mxu0 %v3609
      %v3611 = vand.u32 %v1616, 4294901760
      %v3612 = vsub.f32 %v1616, %v3611
      %v3613 = vand.u32 %v3612, 4294901760
      %3614 = vmatmul.mubr.f32.gmra.mrb[0].mxu0 %v3613
      %v3615 = vpop.f32.mrb[0].mxu0
      %v3616 = vadd.f32 %v3173, %v3615
      %v3617 = vpop.f32.mrb[0].mxu0
      %v3618 = vand.u32 %v1620, 4294901760
      %v3619 = vsub.f32 %v1620, %v3618
      %v3620 = vand.u32 %v3619, 4294901760
      %3621 = vmatprep.mubr.f32.mxu0 %v3620
      %v3622 = vand.u32 %v1619, 4294901760
      %v3623 = vsub.f32 %v1619, %v3622
      %v3624 = vand.u32 %v3623, 4294901760
      %3625 = vmatmul.mubr.f32.gmra.mrb[0].mxu0 %v3624
      %v3626 = vpop.f32.mrb[0].mxu0
      %v3627 = vadd.f32 %v3182, %v3626
      %v3628 = vpop.f32.mrb[0].mxu0
      %v3629 = vand.u32 %v1623, 4294901760
      %v3630 = vsub.f32 %v1623, %v3629
      %v3631 = vand.u32 %v3630, 4294901760
      %3632 = vmatprep.mubr.f32.mxu0 %v3631
      %v3633 = vand.u32 %v1622, 4294901760
      %v3634 = vsub.f32 %v1622, %v3633
      %v3635 = vand.u32 %v3634, 4294901760
      %3636 = vmatmul.mubr.f32.gmra.mrb[0].mxu0 %v3635
      %v3637 = vpop.f32.mrb[0].mxu0
      %v3638 = vadd.f32 %v3191, %v3637
      %v3639 = vpop.f32.mrb[0].mxu0
      %v3640 = vand.u32 %v1626, 4294901760
      %v3641 = vsub.f32 %v1626, %v3640
      %v3642 = vand.u32 %v3641, 4294901760
      %3643 = vmatprep.mubr.f32.mxu0 %v3642
      %v3644 = vand.u32 %v1625, 4294901760
      %v3645 = vsub.f32 %v1625, %v3644
      %v3646 = vand.u32 %v3645, 4294901760
      %3647 = vmatmul.mubr.f32.gmra.mrb[0].mxu0 %v3646
      %v3648 = vpop.f32.mrb[0].mxu0
      %v3649 = vadd.f32 %v3200, %v3648
      %v3650 = vpop.f32.mrb[0].mxu0
      %3651 = vdwg.mxu0
      %3652 = vmatprep.subr.mxu0 0.0
      %v3653 = vand.u32 %v1628, 4294901760
      %v3654 = vsub.f32 %v1628, %v3653
      %v3655 = vand.u32 %v3654, 4294901760
      %3656 = vmatpush1.msra.mxu0 %v3655
      %3657 = vmatprep.subr.mxu0 0.0
      %v3658 = vand.u32 %v1629, 4294901760
      %v3659 = vsub.f32 %v1629, %v3658
      %v3660 = vand.u32 %v3659, 4294901760
      %3661 = vmatpush1.msra.mxu0 %v3660
      %3662 = vmatprep.subr.mxu0 0.0
      %v3663 = vand.u32 %v1630, 4294901760
      %v3664 = vsub.f32 %v1630, %v3663
      %v3665 = vand.u32 %v3664, 4294901760
      %3666 = vmatpush1.msra.mxu0 %v3665
      %3667 = vmatprep.subr.mxu0 0.0
      %v3668 = vand.u32 %v1631, 4294901760
      %v3669 = vsub.f32 %v1631, %v3668
      %v3670 = vand.u32 %v3669, 4294901760
      %3671 = vmatpush1.msra.mxu0 %v3670
      %3672 = vmatprep.subr.mxu0 0.0
      %v3673 = vand.u32 %v1632, 4294901760
      %v3674 = vsub.f32 %v1632, %v3673
      %v3675 = vand.u32 %v3674, 4294901760
      %3676 = vmatpush1.msra.mxu0 %v3675
      %3677 = vmatprep.subr.mxu0 0.0
      %v3678 = vand.u32 %v1633, 4294901760
      %v3679 = vsub.f32 %v1633, %v3678
      %v3680 = vand.u32 %v3679, 4294901760
      %3681 = vmatpush1.msra.mxu0 %v3680
      %3682 = vmatprep.subr.mxu0 0.0
      %v3683 = vand.u32 %v1634, 4294901760
      %v3684 = vsub.f32 %v1634, %v3683
      %v3685 = vand.u32 %v3684, 4294901760
      %3686 = vmatpush1.msra.mxu0 %v3685
      %3687 = vmatprep.subr.mxu0 0.0
      %v3688 = vand.u32 %v1635, 4294901760
      %v3689 = vsub.f32 %v1635, %v3688
      %v3690 = vand.u32 %v3689, 4294901760
      %3691 = vmatpush1.msra.mxu0 %v3690
      %3692 = vmatprep.subr.mxu0 0.0
      %v3693 = vand.u32 %v1636, 4294901760
      %v3694 = vsub.f32 %v1636, %v3693
      %v3695 = vand.u32 %v3694, 4294901760
      %3696 = vmatpush1.msra.mxu0 %v3695
      %3697 = vmatprep.subr.mxu0 0.0
      %v3698 = vand.u32 %v1637, 4294901760
      %v3699 = vsub.f32 %v1637, %v3698
      %v3700 = vand.u32 %v3699, 4294901760
      %3701 = vmatpush1.msra.mxu0 %v3700
      %3702 = vmatprep.subr.mxu0 0.0
      %v3703 = vand.u32 %v1638, 4294901760
      %v3704 = vsub.f32 %v1638, %v3703
      %v3705 = vand.u32 %v3704, 4294901760
      %3706 = vmatpush1.msra.mxu0 %v3705
      %3707 = vmatprep.subr.mxu0 0.0
      %v3708 = vand.u32 %v1639, 4294901760
      %v3709 = vsub.f32 %v1639, %v3708
      %v3710 = vand.u32 %v3709, 4294901760
      %3711 = vmatpush1.msra.mxu0 %v3710
      %3712 = vmatprep.subr.mxu0 0.0
      %v3713 = vand.u32 %v1640, 4294901760
      %v3714 = vsub.f32 %v1640, %v3713
      %v3715 = vand.u32 %v3714, 4294901760
      %3716 = vmatpush1.msra.mxu0 %v3715
      %3717 = vmatprep.subr.mxu0 0.0
      %v3718 = vand.u32 %v1641, 4294901760
      %v3719 = vsub.f32 %v1641, %v3718
      %v3720 = vand.u32 %v3719, 4294901760
      %3721 = vmatpush1.msra.mxu0 %v3720
      %3722 = vmatprep.subr.mxu0 0.0
      %v3723 = vand.u32 %v1642, 4294901760
      %v3724 = vsub.f32 %v1642, %v3723
      %v3725 = vand.u32 %v3724, 4294901760
      %3726 = vmatpush1.msra.mxu0 %v3725
      %3727 = vmatprep.subr.mxu0 0.0
      %v3728 = vand.u32 %v1643, 4294901760
      %v3729 = vsub.f32 %v1643, %v3728
      %v3730 = vand.u32 %v3729, 4294901760
      %3731 = vmatpush1.msra.mxu0 %v3730
      %3732 = vmatprep.subr.mxu0 0.0
      %v3733 = vand.u32 %v1644, 4294901760
      %v3734 = vsub.f32 %v1644, %v3733
      %v3735 = vand.u32 %v3734, 4294901760
      %3736 = vmatpush1.msra.mxu0 %v3735
      %3737 = vmatprep.subr.mxu0 0.0
      %v3738 = vand.u32 %v1645, 4294901760
      %v3739 = vsub.f32 %v1645, %v3738
      %v3740 = vand.u32 %v3739, 4294901760
      %3741 = vmatpush1.msra.mxu0 %v3740
      %3742 = vmatprep.subr.mxu0 0.0
      %v3743 = vand.u32 %v1646, 4294901760
      %v3744 = vsub.f32 %v1646, %v3743
      %v3745 = vand.u32 %v3744, 4294901760
      %3746 = vmatpush1.msra.mxu0 %v3745
      %3747 = vmatprep.subr.mxu0 0.0
      %v3748 = vand.u32 %v1647, 4294901760
      %v3749 = vsub.f32 %v1647, %v3748
      %v3750 = vand.u32 %v3749, 4294901760
      %3751 = vmatpush1.msra.mxu0 %v3750
      %3752 = vmatprep.subr.mxu0 0.0
      %v3753 = vand.u32 %v1648, 4294901760
      %v3754 = vsub.f32 %v1648, %v3753
      %v3755 = vand.u32 %v3754, 4294901760
      %3756 = vmatpush1.msra.mxu0 %v3755
      %3757 = vmatprep.subr.mxu0 0.0
      %v3758 = vand.u32 %v1649, 4294901760
      %v3759 = vsub.f32 %v1649, %v3758
      %v3760 = vand.u32 %v3759, 4294901760
      %3761 = vmatpush1.msra.mxu0 %v3760
      %3762 = vmatprep.subr.mxu0 0.0
      %v3763 = vand.u32 %v1650, 4294901760
      %v3764 = vsub.f32 %v1650, %v3763
      %v3765 = vand.u32 %v3764, 4294901760
      %3766 = vmatpush1.msra.mxu0 %v3765
      %3767 = vmatprep.subr.mxu0 0.0
      %v3768 = vand.u32 %v1651, 4294901760
      %v3769 = vsub.f32 %v1651, %v3768
      %v3770 = vand.u32 %v3769, 4294901760
      %3771 = vmatpush1.msra.mxu0 %v3770
      %3772 = vmatprep.subr.mxu0 0.0
      %v3773 = vand.u32 %v1652, 4294901760
      %v3774 = vsub.f32 %v1652, %v3773
      %v3775 = vand.u32 %v3774, 4294901760
      %3776 = vmatpush1.msra.mxu0 %v3775
      %3777 = vmatprep.subr.mxu0 0.0
      %v3778 = vand.u32 %v1653, 4294901760
      %v3779 = vsub.f32 %v1653, %v3778
      %v3780 = vand.u32 %v3779, 4294901760
      %3781 = vmatpush1.msra.mxu0 %v3780
      %3782 = vmatprep.subr.mxu0 0.0
      %v3783 = vand.u32 %v1654, 4294901760
      %v3784 = vsub.f32 %v1654, %v3783
      %v3785 = vand.u32 %v3784, 4294901760
      %3786 = vmatpush1.msra.mxu0 %v3785
      %3787 = vmatprep.subr.mxu0 0.0
      %v3788 = vand.u32 %v1655, 4294901760
      %v3789 = vsub.f32 %v1655, %v3788
      %v3790 = vand.u32 %v3789, 4294901760
      %3791 = vmatpush1.msra.mxu0 %v3790
      %3792 = vmatprep.subr.mxu0 0.0
      %v3793 = vand.u32 %v1656, 4294901760
      %v3794 = vsub.f32 %v1656, %v3793
      %v3795 = vand.u32 %v3794, 4294901760
      %3796 = vmatpush1.msra.mxu0 %v3795
      %3797 = vmatprep.subr.mxu0 0.0
      %v3798 = vand.u32 %v1657, 4294901760
      %v3799 = vsub.f32 %v1657, %v3798
      %v3800 = vand.u32 %v3799, 4294901760
      %3801 = vmatpush1.msra.mxu0 %v3800
      %3802 = vmatprep.subr.mxu0 0.0
      %v3803 = vand.u32 %v1658, 4294901760
      %v3804 = vsub.f32 %v1658, %v3803
      %v3805 = vand.u32 %v3804, 4294901760
      %3806 = vmatpush1.msra.mxu0 %v3805
      %3807 = vmatprep.subr.mxu0 0.0
      %v3808 = vand.u32 %v1659, 4294901760
      %v3809 = vsub.f32 %v1659, %v3808
      %v3810 = vand.u32 %v3809, 4294901760
      %3811 = vmatpush1.msra.mxu0 %v3810
      %v3812 = vand.u32 %v1533, 4294901760
      %3813 = vmatprep.mubr.f32.mxu0 %v3812
      %v3814 = vand.u32 %v1532, 4294901760
      %3815 = vmatmul.mubr.f32.gmra.mrb[0].mxu0 %v3814
      %v3816 = vpop.f32.mrb[0].mxu0
      %v3817 = vadd.f32 %v3308, %v3816
      %v3818 = vpop.f32.mrb[0].mxu0
      %v3819 = vand.u32 %v1536, 4294901760
      %3820 = vmatprep.mubr.f32.mxu0 %v3819
      %v3821 = vand.u32 %v1535, 4294901760
      %3822 = vmatmul.mubr.f32.gmra.mrb[0].mxu0 %v3821
      %v3823 = vpop.f32.mrb[0].mxu0
      %v3824 = vadd.f32 %v3319, %v3823
      %v3825 = vpop.f32.mrb[0].mxu0
      %v3826 = vand.u32 %v1539, 4294901760
      %3827 = vmatprep.mubr.f32.mxu0 %v3826
      %v3828 = vand.u32 %v1538, 4294901760
      %3829 = vmatmul.mubr.f32.gmra.mrb[0].mxu0 %v3828
      %v3830 = vpop.f32.mrb[0].mxu0
      %v3831 = vadd.f32 %v3330, %v3830
      %v3832 = vpop.f32.mrb[0].mxu0
      %v3833 = vand.u32 %v1542, 4294901760
      %3834 = vmatprep.mubr.f32.mxu0 %v3833
      %v3835 = vand.u32 %v1541, 4294901760
      %3836 = vmatmul.mubr.f32.gmra.mrb[0].mxu0 %v3835
      %v3837 = vpop.f32.mrb[0].mxu0
      %v3838 = vadd.f32 %v3341, %v3837
      %v3839 = vpop.f32.mrb[0].mxu0
      %v3840 = vand.u32 %v1545, 4294901760
      %3841 = vmatprep.mubr.f32.mxu0 %v3840
      %v3842 = vand.u32 %v1544, 4294901760
      %3843 = vmatmul.mubr.f32.gmra.mrb[0].mxu0 %v3842
      %v3844 = vpop.f32.mrb[0].mxu0
      %v3845 = vadd.f32 %v3352, %v3844
      %v3846 = vpop.f32.mrb[0].mxu0
      %v3847 = vand.u32 %v1548, 4294901760
      %3848 = vmatprep.mubr.f32.mxu0 %v3847
      %v3849 = vand.u32 %v1547, 4294901760
      %3850 = vmatmul.mubr.f32.gmra.mrb[0].mxu0 %v3849
      %v3851 = vpop.f32.mrb[0].mxu0
      %v3852 = vadd.f32 %v3363, %v3851
      %v3853 = vpop.f32.mrb[0].mxu0
      %v3854 = vand.u32 %v1551, 4294901760
      %3855 = vmatprep.mubr.f32.mxu0 %v3854
      %v3856 = vand.u32 %v1550, 4294901760
      %3857 = vmatmul.mubr.f32.gmra.mrb[0].mxu0 %v3856
      %v3858 = vpop.f32.mrb[0].mxu0
      %v3859 = vadd.f32 %v3374, %v3858
      %v3860 = vpop.f32.mrb[0].mxu0
      %v3861 = vand.u32 %v1554, 4294901760
      %3862 = vmatprep.mubr.f32.mxu0 %v3861
      %v3863 = vand.u32 %v1553, 4294901760
      %3864 = vmatmul.mubr.f32.gmra.mrb[0].mxu0 %v3863
      %v3865 = vpop.f32.mrb[0].mxu0
      %v3866 = vadd.f32 %v3385, %v3865
      %v3867 = vpop.f32.mrb[0].mxu0
      %v3868 = vand.u32 %v1557, 4294901760
      %3869 = vmatprep.mubr.f32.mxu0 %v3868
      %v3870 = vand.u32 %v1556, 4294901760
      %3871 = vmatmul.mubr.f32.gmra.mrb[0].mxu0 %v3870
      %v3872 = vpop.f32.mrb[0].mxu0
      %v3873 = vadd.f32 %v3396, %v3872
      %v3874 = vpop.f32.mrb[0].mxu0
      %v3875 = vand.u32 %v1560, 4294901760
      %3876 = vmatprep.mubr.f32.mxu0 %v3875
      %v3877 = vand.u32 %v1559, 4294901760
      %3878 = vmatmul.mubr.f32.gmra.mrb[0].mxu0 %v3877
      %v3879 = vpop.f32.mrb[0].mxu0
      %v3880 = vadd.f32 %v3407, %v3879
      %v3881 = vpop.f32.mrb[0].mxu0
      %v3882 = vand.u32 %v1563, 4294901760
      %3883 = vmatprep.mubr.f32.mxu0 %v3882
      %v3884 = vand.u32 %v1562, 4294901760
      %3885 = vmatmul.mubr.f32.gmra.mrb[0].mxu0 %v3884
      %v3886 = vpop.f32.mrb[0].mxu0
      %v3887 = vadd.f32 %v3418, %v3886
      %v3888 = vpop.f32.mrb[0].mxu0
      %v3889 = vand.u32 %v1566, 4294901760
      %3890 = vmatprep.mubr.f32.mxu0 %v3889
      %v3891 = vand.u32 %v1565, 4294901760
      %3892 = vmatmul.mubr.f32.gmra.mrb[0].mxu0 %v3891
      %v3893 = vpop.f32.mrb[0].mxu0
      %v3894 = vadd.f32 %v3429, %v3893
      %v3895 = vpop.f32.mrb[0].mxu0
      %v3896 = vand.u32 %v1569, 4294901760
      %3897 = vmatprep.mubr.f32.mxu0 %v3896
      %v3898 = vand.u32 %v1568, 4294901760
      %3899 = vmatmul.mubr.f32.gmra.mrb[0].mxu0 %v3898
      %v3900 = vpop.f32.mrb[0].mxu0
      %v3901 = vadd.f32 %v3440, %v3900
      %v3902 = vpop.f32.mrb[0].mxu0
      %v3903 = vand.u32 %v1572, 4294901760
      %3904 = vmatprep.mubr.f32.mxu0 %v3903
      %v3905 = vand.u32 %v1571, 4294901760
      %3906 = vmatmul.mubr.f32.gmra.mrb[0].mxu0 %v3905
      %v3907 = vpop.f32.mrb[0].mxu0
      %v3908 = vadd.f32 %v3451, %v3907
      %v3909 = vpop.f32.mrb[0].mxu0
      %v3910 = vand.u32 %v1575, 4294901760
      %3911 = vmatprep.mubr.f32.mxu0 %v3910
      %v3912 = vand.u32 %v1574, 4294901760
      %3913 = vmatmul.mubr.f32.gmra.mrb[0].mxu0 %v3912
      %v3914 = vpop.f32.mrb[0].mxu0
      %v3915 = vadd.f32 %v3462, %v3914
      %v3916 = vpop.f32.mrb[0].mxu0
      %v3917 = vand.u32 %v1578, 4294901760
      %3918 = vmatprep.mubr.f32.mxu0 %v3917
      %v3919 = vand.u32 %v1577, 4294901760
      %3920 = vmatmul.mubr.f32.gmra.mrb[0].mxu0 %v3919
      %v3921 = vpop.f32.mrb[0].mxu0
      %v3922 = vadd.f32 %v3473, %v3921
      %v3923 = vpop.f32.mrb[0].mxu0
      %v3924 = vand.u32 %v1581, 4294901760
      %3925 = vmatprep.mubr.f32.mxu0 %v3924
      %v3926 = vand.u32 %v1580, 4294901760
      %3927 = vmatmul.mubr.f32.gmra.mrb[0].mxu0 %v3926
      %v3928 = vpop.f32.mrb[0].mxu0
      %v3929 = vadd.f32 %v3484, %v3928
      %v3930 = vpop.f32.mrb[0].mxu0
      %v3931 = vand.u32 %v1584, 4294901760
      %3932 = vmatprep.mubr.f32.mxu0 %v3931
      %v3933 = vand.u32 %v1583, 4294901760
      %3934 = vmatmul.mubr.f32.gmra.mrb[0].mxu0 %v3933
      %v3935 = vpop.f32.mrb[0].mxu0
      %v3936 = vadd.f32 %v3495, %v3935
      %v3937 = vpop.f32.mrb[0].mxu0
      %v3938 = vand.u32 %v1587, 4294901760
      %3939 = vmatprep.mubr.f32.mxu0 %v3938
      %v3940 = vand.u32 %v1586, 4294901760
      %3941 = vmatmul.mubr.f32.gmra.mrb[0].mxu0 %v3940
      %v3942 = vpop.f32.mrb[0].mxu0
      %v3943 = vadd.f32 %v3506, %v3942
      %v3944 = vpop.f32.mrb[0].mxu0
      %v3945 = vand.u32 %v1590, 4294901760
      %3946 = vmatprep.mubr.f32.mxu0 %v3945
      %v3947 = vand.u32 %v1589, 4294901760
      %3948 = vmatmul.mubr.f32.gmra.mrb[0].mxu0 %v3947
      %v3949 = vpop.f32.mrb[0].mxu0
      %v3950 = vadd.f32 %v3517, %v3949
      %v3951 = vpop.f32.mrb[0].mxu0
      %v3952 = vand.u32 %v1593, 4294901760
      %3953 = vmatprep.mubr.f32.mxu0 %v3952
      %v3954 = vand.u32 %v1592, 4294901760
      %3955 = vmatmul.mubr.f32.gmra.mrb[0].mxu0 %v3954
      %v3956 = vpop.f32.mrb[0].mxu0
      %v3957 = vadd.f32 %v3528, %v3956
      %v3958 = vpop.f32.mrb[0].mxu0
      %v3959 = vand.u32 %v1596, 4294901760
      %3960 = vmatprep.mubr.f32.mxu0 %v3959
      %v3961 = vand.u32 %v1595, 4294901760
      %3962 = vmatmul.mubr.f32.gmra.mrb[0].mxu0 %v3961
      %v3963 = vpop.f32.mrb[0].mxu0
      %v3964 = vadd.f32 %v3539, %v3963
      %v3965 = vpop.f32.mrb[0].mxu0
      %v3966 = vand.u32 %v1599, 4294901760
      %3967 = vmatprep.mubr.f32.mxu0 %v3966
      %v3968 = vand.u32 %v1598, 4294901760
      %3969 = vmatmul.mubr.f32.gmra.mrb[0].mxu0 %v3968
      %v3970 = vpop.f32.mrb[0].mxu0
      %v3971 = vadd.f32 %v3550, %v3970
      %v3972 = vpop.f32.mrb[0].mxu0
      %v3973 = vand.u32 %v1602, 4294901760
      %3974 = vmatprep.mubr.f32.mxu0 %v3973
      %v3975 = vand.u32 %v1601, 4294901760
      %3976 = vmatmul.mubr.f32.gmra.mrb[0].mxu0 %v3975
      %v3977 = vpop.f32.mrb[0].mxu0
      %v3978 = vadd.f32 %v3561, %v3977
      %v3979 = vpop.f32.mrb[0].mxu0
      %v3980 = vand.u32 %v1605, 4294901760
      %3981 = vmatprep.mubr.f32.mxu0 %v3980
      %v3982 = vand.u32 %v1604, 4294901760
      %3983 = vmatmul.mubr.f32.gmra.mrb[0].mxu0 %v3982
      %v3984 = vpop.f32.mrb[0].mxu0
      %v3985 = vadd.f32 %v3572, %v3984
      %v3986 = vpop.f32.mrb[0].mxu0
      %v3987 = vand.u32 %v1608, 4294901760
      %3988 = vmatprep.mubr.f32.mxu0 %v3987
      %v3989 = vand.u32 %v1607, 4294901760
      %3990 = vmatmul.mubr.f32.gmra.mrb[0].mxu0 %v3989
      %v3991 = vpop.f32.mrb[0].mxu0
      %v3992 = vadd.f32 %v3583, %v3991
      %v3993 = vpop.f32.mrb[0].mxu0
      %v3994 = vand.u32 %v1611, 4294901760
      %3995 = vmatprep.mubr.f32.mxu0 %v3994
      %v3996 = vand.u32 %v1610, 4294901760
      %3997 = vmatmul.mubr.f32.gmra.mrb[0].mxu0 %v3996
      %v3998 = vpop.f32.mrb[0].mxu0
      %v3999 = vadd.f32 %v3594, %v3998
      %v4000 = vpop.f32.mrb[0].mxu0
      %v4001 = vand.u32 %v1614, 4294901760
      %4002 = vmatprep.mubr.f32.mxu0 %v4001
      %v4003 = vand.u32 %v1613, 4294901760
      %4004 = vmatmul.mubr.f32.gmra.mrb[0].mxu0 %v4003
      %v4005 = vpop.f32.mrb[0].mxu0
      %v4006 = vadd.f32 %v3605, %v4005
      %v4007 = vpop.f32.mrb[0].mxu0
      %v4008 = vand.u32 %v1617, 4294901760
      %4009 = vmatprep.mubr.f32.mxu0 %v4008
      %v4010 = vand.u32 %v1616, 4294901760
      %4011 = vmatmul.mubr.f32.gmra.mrb[0].mxu0 %v4010
      %v4012 = vpop.f32.mrb[0].mxu0
      %v4013 = vadd.f32 %v3616, %v4012
      %v4014 = vpop.f32.mrb[0].mxu0
      %v4015 = vand.u32 %v1620, 4294901760
      %4016 = vmatprep.mubr.f32.mxu0 %v4015
      %v4017 = vand.u32 %v1619, 4294901760
      %4018 = vmatmul.mubr.f32.gmra.mrb[0].mxu0 %v4017
      %v4019 = vpop.f32.mrb[0].mxu0
      %v4020 = vadd.f32 %v3627, %v4019
      %v4021 = vpop.f32.mrb[0].mxu0
      %v4022 = vand.u32 %v1623, 4294901760
      %4023 = vmatprep.mubr.f32.mxu0 %v4022
      %v4024 = vand.u32 %v1622, 4294901760
      %4025 = vmatmul.mubr.f32.gmra.mrb[0].mxu0 %v4024
      %v4026 = vpop.f32.mrb[0].mxu0
      %v4027 = vadd.f32 %v3638, %v4026
      %v4028 = vpop.f32.mrb[0].mxu0
      %v4029 = vand.u32 %v1626, 4294901760
      %4030 = vmatprep.mubr.f32.mxu0 %v4029
      %v4031 = vand.u32 %v1625, 4294901760
      %4032 = vmatmul.mubr.f32.gmra.mrb[0].mxu0 %v4031
      %v4033 = vpop.f32.mrb[0].mxu0
      %v4034 = vadd.f32 %v3649, %v4033
      %v4035 = vpop.f32.mrb[0].mxu0
      %4036 = vdwg.mxu0
      %4037 = vmatprep.subr.mxu0 0.0
      %v4038 = vand.u32 %v1628, 4294901760
      %4039 = vmatpush1.msra.mxu0 %v4038
      %4040 = vmatprep.subr.mxu0 0.0
      %v4041 = vand.u32 %v1629, 4294901760
      %4042 = vmatpush1.msra.mxu0 %v4041
      %4043 = vmatprep.subr.mxu0 0.0
      %v4044 = vand.u32 %v1630, 4294901760
      %4045 = vmatpush1.msra.mxu0 %v4044
      %4046 = vmatprep.subr.mxu0 0.0
      %v4047 = vand.u32 %v1631, 4294901760
      %4048 = vmatpush1.msra.mxu0 %v4047
      %4049 = vmatprep.subr.mxu0 0.0
      %v4050 = vand.u32 %v1632, 4294901760
      %4051 = vmatpush1.msra.mxu0 %v4050
      %4052 = vmatprep.subr.mxu0 0.0
      %v4053 = vand.u32 %v1633, 4294901760
      %4054 = vmatpush1.msra.mxu0 %v4053
      %4055 = vmatprep.subr.mxu0 0.0
      %v4056 = vand.u32 %v1634, 4294901760
      %4057 = vmatpush1.msra.mxu0 %v4056
      %4058 = vmatprep.subr.mxu0 0.0
      %v4059 = vand.u32 %v1635, 4294901760
      %4060 = vmatpush1.msra.mxu0 %v4059
      %4061 = vmatprep.subr.mxu0 0.0
      %v4062 = vand.u32 %v1636, 4294901760
      %4063 = vmatpush1.msra.mxu0 %v4062
      %4064 = vmatprep.subr.mxu0 0.0
      %v4065 = vand.u32 %v1637, 4294901760
      %4066 = vmatpush1.msra.mxu0 %v4065
      %4067 = vmatprep.subr.mxu0 0.0
      %v4068 = vand.u32 %v1638, 4294901760
      %4069 = vmatpush1.msra.mxu0 %v4068
      %4070 = vmatprep.subr.mxu0 0.0
      %v4071 = vand.u32 %v1639, 4294901760
      %4072 = vmatpush1.msra.mxu0 %v4071
      %4073 = vmatprep.subr.mxu0 0.0
      %v4074 = vand.u32 %v1640, 4294901760
      %4075 = vmatpush1.msra.mxu0 %v4074
      %4076 = vmatprep.subr.mxu0 0.0
      %v4077 = vand.u32 %v1641, 4294901760
      %4078 = vmatpush1.msra.mxu0 %v4077
      %4079 = vmatprep.subr.mxu0 0.0
      %v4080 = vand.u32 %v1642, 4294901760
      %4081 = vmatpush1.msra.mxu0 %v4080
      %4082 = vmatprep.subr.mxu0 0.0
      %v4083 = vand.u32 %v1643, 4294901760
      %4084 = vmatpush1.msra.mxu0 %v4083
      %4085 = vmatprep.subr.mxu0 0.0
      %v4086 = vand.u32 %v1644, 4294901760
      %4087 = vmatpush1.msra.mxu0 %v4086
      %4088 = vmatprep.subr.mxu0 0.0
      %v4089 = vand.u32 %v1645, 4294901760
      %4090 = vmatpush1.msra.mxu0 %v4089
      %4091 = vmatprep.subr.mxu0 0.0
      %v4092 = vand.u32 %v1646, 4294901760
      %4093 = vmatpush1.msra.mxu0 %v4092
      %4094 = vmatprep.subr.mxu0 0.0
      %v4095 = vand.u32 %v1647, 4294901760
      %4096 = vmatpush1.msra.mxu0 %v4095
      %4097 = vmatprep.subr.mxu0 0.0
      %v4098 = vand.u32 %v1648, 4294901760
      %4099 = vmatpush1.msra.mxu0 %v4098
      %4100 = vmatprep.subr.mxu0 0.0
      %v4101 = vand.u32 %v1649, 4294901760
      %4102 = vmatpush1.msra.mxu0 %v4101
      %4103 = vmatprep.subr.mxu0 0.0
      %v4104 = vand.u32 %v1650, 4294901760
      %4105 = vmatpush1.msra.mxu0 %v4104
      %4106 = vmatprep.subr.mxu0 0.0
      %v4107 = vand.u32 %v1651, 4294901760
      %4108 = vmatpush1.msra.mxu0 %v4107
      %4109 = vmatprep.subr.mxu0 0.0
      %v4110 = vand.u32 %v1652, 4294901760
      %4111 = vmatpush1.msra.mxu0 %v4110
      %4112 = vmatprep.subr.mxu0 0.0
      %v4113 = vand.u32 %v1653, 4294901760
      %4114 = vmatpush1.msra.mxu0 %v4113
      %4115 = vmatprep.subr.mxu0 0.0
      %v4116 = vand.u32 %v1654, 4294901760
      %4117 = vmatpush1.msra.mxu0 %v4116
      %4118 = vmatprep.subr.mxu0 0.0
      %v4119 = vand.u32 %v1655, 4294901760
      %4120 = vmatpush1.msra.mxu0 %v4119
      %4121 = vmatprep.subr.mxu0 0.0
      %v4122 = vand.u32 %v1656, 4294901760
      %4123 = vmatpush1.msra.mxu0 %v4122
      %4124 = vmatprep.subr.mxu0 0.0
      %v4125 = vand.u32 %v1657, 4294901760
      %4126 = vmatpush1.msra.mxu0 %v4125
      %4127 = vmatprep.subr.mxu0 0.0
      %v4128 = vand.u32 %v1658, 4294901760
      %4129 = vmatpush1.msra.mxu0 %v4128
      %4130 = vmatprep.subr.mxu0 0.0
      %v4131 = vand.u32 %v1659, 4294901760
      %4132 = vmatpush1.msra.mxu0 %v4131
      %v4133 = vand.u32 %v1533, 4294901760
      %4134 = vmatprep.mubr.f32.mxu0 %v4133
      %v4135 = vand.u32 %v1532, 4294901760
      %4136 = vmatmul.mubr.f32.gmra.mrb[0].mxu0 %v4135
      %v4137 = vpop.f32.mrb[0].mxu0
      %v4138 = vadd.f32 %v3817, %v4137
      %v4139 = vpop.f32.mrb[0].mxu0
      %v4140 = vand.u32 %v1536, 4294901760
      %4141 = vmatprep.mubr.f32.mxu0 %v4140
      %v4142 = vand.u32 %v1535, 4294901760
      %4143 = vmatmul.mubr.f32.gmra.mrb[0].mxu0 %v4142
      %v4144 = vpop.f32.mrb[0].mxu0
      %v4145 = vadd.f32 %v3824, %v4144
      %v4146 = vpop.f32.mrb[0].mxu0
      %v4147 = vand.u32 %v1539, 4294901760
      %4148 = vmatprep.mubr.f32.mxu0 %v4147
      %v4149 = vand.u32 %v1538, 4294901760
      %4150 = vmatmul.mubr.f32.gmra.mrb[0].mxu0 %v4149
      %v4151 = vpop.f32.mrb[0].mxu0
      %v4152 = vadd.f32 %v3831, %v4151
      %v4153 = vpop.f32.mrb[0].mxu0
      %v4154 = vand.u32 %v1542, 4294901760
      %4155 = vmatprep.mubr.f32.mxu0 %v4154
      %v4156 = vand.u32 %v1541, 4294901760
      %4157 = vmatmul.mubr.f32.gmra.mrb[0].mxu0 %v4156
      %v4158 = vpop.f32.mrb[0].mxu0
      %v4159 = vadd.f32 %v3838, %v4158
      %v4160 = vpop.f32.mrb[0].mxu0
      %v4161 = vand.u32 %v1545, 4294901760
      %4162 = vmatprep.mubr.f32.mxu0 %v4161
      %v4163 = vand.u32 %v1544, 4294901760
      %4164 = vmatmul.mubr.f32.gmra.mrb[0].mxu0 %v4163
      %v4165 = vpop.f32.mrb[0].mxu0
      %v4166 = vadd.f32 %v3845, %v4165
      %v4167 = vpop.f32.mrb[0].mxu0
      %v4168 = vand.u32 %v1548, 4294901760
      %4169 = vmatprep.mubr.f32.mxu0 %v4168
      %v4170 = vand.u32 %v1547, 4294901760
      %4171 = vmatmul.mubr.f32.gmra.mrb[0].mxu0 %v4170
      %v4172 = vpop.f32.mrb[0].mxu0
      %v4173 = vadd.f32 %v3852, %v4172
      %v4174 = vpop.f32.mrb[0].mxu0
      %v4175 = vand.u32 %v1551, 4294901760
      %4176 = vmatprep.mubr.f32.mxu0 %v4175
      %v4177 = vand.u32 %v1550, 4294901760
      %4178 = vmatmul.mubr.f32.gmra.mrb[0].mxu0 %v4177
      %v4179 = vpop.f32.mrb[0].mxu0
      %v4180 = vadd.f32 %v3859, %v4179
      %v4181 = vpop.f32.mrb[0].mxu0
      %v4182 = vand.u32 %v1554, 4294901760
      %4183 = vmatprep.mubr.f32.mxu0 %v4182
      %v4184 = vand.u32 %v1553, 4294901760
      %4185 = vmatmul.mubr.f32.gmra.mrb[0].mxu0 %v4184
      %v4186 = vpop.f32.mrb[0].mxu0
      %v4187 = vadd.f32 %v3866, %v4186
      %v4188 = vpop.f32.mrb[0].mxu0
      %v4189 = vand.u32 %v1557, 4294901760
      %4190 = vmatprep.mubr.f32.mxu0 %v4189
      %v4191 = vand.u32 %v1556, 4294901760
      %4192 = vmatmul.mubr.f32.gmra.mrb[0].mxu0 %v4191
      %v4193 = vpop.f32.mrb[0].mxu0
      %v4194 = vadd.f32 %v3873, %v4193
      %v4195 = vpop.f32.mrb[0].mxu0
      %v4196 = vand.u32 %v1560, 4294901760
      %4197 = vmatprep.mubr.f32.mxu0 %v4196
      %v4198 = vand.u32 %v1559, 4294901760
      %4199 = vmatmul.mubr.f32.gmra.mrb[0].mxu0 %v4198
      %v4200 = vpop.f32.mrb[0].mxu0
      %v4201 = vadd.f32 %v3880, %v4200
      %v4202 = vpop.f32.mrb[0].mxu0
      %v4203 = vand.u32 %v1563, 4294901760
      %4204 = vmatprep.mubr.f32.mxu0 %v4203
      %v4205 = vand.u32 %v1562, 4294901760
      %4206 = vmatmul.mubr.f32.gmra.mrb[0].mxu0 %v4205
      %v4207 = vpop.f32.mrb[0].mxu0
      %v4208 = vadd.f32 %v3887, %v4207
      %v4209 = vpop.f32.mrb[0].mxu0
      %v4210 = vand.u32 %v1566, 4294901760
      %4211 = vmatprep.mubr.f32.mxu0 %v4210
      %v4212 = vand.u32 %v1565, 4294901760
      %4213 = vmatmul.mubr.f32.gmra.mrb[0].mxu0 %v4212
      %v4214 = vpop.f32.mrb[0].mxu0
      %v4215 = vadd.f32 %v3894, %v4214
      %v4216 = vpop.f32.mrb[0].mxu0
      %v4217 = vand.u32 %v1569, 4294901760
      %4218 = vmatprep.mubr.f32.mxu0 %v4217
      %v4219 = vand.u32 %v1568, 4294901760
      %4220 = vmatmul.mubr.f32.gmra.mrb[0].mxu0 %v4219
      %v4221 = vpop.f32.mrb[0].mxu0
      %v4222 = vadd.f32 %v3901, %v4221
      %v4223 = vpop.f32.mrb[0].mxu0
      %v4224 = vand.u32 %v1572, 4294901760
      %4225 = vmatprep.mubr.f32.mxu0 %v4224
      %v4226 = vand.u32 %v1571, 4294901760
      %4227 = vmatmul.mubr.f32.gmra.mrb[0].mxu0 %v4226
      %v4228 = vpop.f32.mrb[0].mxu0
      %v4229 = vadd.f32 %v3908, %v4228
      %v4230 = vpop.f32.mrb[0].mxu0
      %v4231 = vand.u32 %v1575, 4294901760
      %4232 = vmatprep.mubr.f32.mxu0 %v4231
      %v4233 = vand.u32 %v1574, 4294901760
      %4234 = vmatmul.mubr.f32.gmra.mrb[0].mxu0 %v4233
      %v4235 = vpop.f32.mrb[0].mxu0
      %v4236 = vadd.f32 %v3915, %v4235
      %v4237 = vpop.f32.mrb[0].mxu0
      %v4238 = vand.u32 %v1578, 4294901760
      %4239 = vmatprep.mubr.f32.mxu0 %v4238
      %v4240 = vand.u32 %v1577, 4294901760
      %4241 = vmatmul.mubr.f32.gmra.mrb[0].mxu0 %v4240
      %v4242 = vpop.f32.mrb[0].mxu0
      %v4243 = vadd.f32 %v3922, %v4242
      %v4244 = vpop.f32.mrb[0].mxu0
      %v4245 = vand.u32 %v1581, 4294901760
      %4246 = vmatprep.mubr.f32.mxu0 %v4245
      %v4247 = vand.u32 %v1580, 4294901760
      %4248 = vmatmul.mubr.f32.gmra.mrb[0].mxu0 %v4247
      %v4249 = vpop.f32.mrb[0].mxu0
      %v4250 = vadd.f32 %v3929, %v4249
      %v4251 = vpop.f32.mrb[0].mxu0
      %v4252 = vand.u32 %v1584, 4294901760
      %4253 = vmatprep.mubr.f32.mxu0 %v4252
      %v4254 = vand.u32 %v1583, 4294901760
      %4255 = vmatmul.mubr.f32.gmra.mrb[0].mxu0 %v4254
      %v4256 = vpop.f32.mrb[0].mxu0
      %v4257 = vadd.f32 %v3936, %v4256
      %v4258 = vpop.f32.mrb[0].mxu0
      %v4259 = vand.u32 %v1587, 4294901760
      %4260 = vmatprep.mubr.f32.mxu0 %v4259
      %v4261 = vand.u32 %v1586, 4294901760
      %4262 = vmatmul.mubr.f32.gmra.mrb[0].mxu0 %v4261
      %v4263 = vpop.f32.mrb[0].mxu0
      %v4264 = vadd.f32 %v3943, %v4263
      %v4265 = vpop.f32.mrb[0].mxu0
      %v4266 = vand.u32 %v1590, 4294901760
      %4267 = vmatprep.mubr.f32.mxu0 %v4266
      %v4268 = vand.u32 %v1589, 4294901760
      %4269 = vmatmul.mubr.f32.gmra.mrb[0].mxu0 %v4268
      %v4270 = vpop.f32.mrb[0].mxu0
      %v4271 = vadd.f32 %v3950, %v4270
      %v4272 = vpop.f32.mrb[0].mxu0
      %v4273 = vand.u32 %v1593, 4294901760
      %4274 = vmatprep.mubr.f32.mxu0 %v4273
      %v4275 = vand.u32 %v1592, 4294901760
      %4276 = vmatmul.mubr.f32.gmra.mrb[0].mxu0 %v4275
      %v4277 = vpop.f32.mrb[0].mxu0
      %v4278 = vadd.f32 %v3957, %v4277
      %v4279 = vpop.f32.mrb[0].mxu0
      %v4280 = vand.u32 %v1596, 4294901760
      %4281 = vmatprep.mubr.f32.mxu0 %v4280
      %v4282 = vand.u32 %v1595, 4294901760
      %4283 = vmatmul.mubr.f32.gmra.mrb[0].mxu0 %v4282
      %v4284 = vpop.f32.mrb[0].mxu0
      %v4285 = vadd.f32 %v3964, %v4284
      %v4286 = vpop.f32.mrb[0].mxu0
      %v4287 = vand.u32 %v1599, 4294901760
      %4288 = vmatprep.mubr.f32.mxu0 %v4287
      %v4289 = vand.u32 %v1598, 4294901760
      %4290 = vmatmul.mubr.f32.gmra.mrb[0].mxu0 %v4289
      %v4291 = vpop.f32.mrb[0].mxu0
      %v4292 = vadd.f32 %v3971, %v4291
      %v4293 = vpop.f32.mrb[0].mxu0
      %v4294 = vand.u32 %v1602, 4294901760
      %4295 = vmatprep.mubr.f32.mxu0 %v4294
      %v4296 = vand.u32 %v1601, 4294901760
      %4297 = vmatmul.mubr.f32.gmra.mrb[0].mxu0 %v4296
      %v4298 = vpop.f32.mrb[0].mxu0
      %v4299 = vadd.f32 %v3978, %v4298
      %v4300 = vpop.f32.mrb[0].mxu0
      %v4301 = vand.u32 %v1605, 4294901760
      %4302 = vmatprep.mubr.f32.mxu0 %v4301
      %v4303 = vand.u32 %v1604, 4294901760
      %4304 = vmatmul.mubr.f32.gmra.mrb[0].mxu0 %v4303
      %v4305 = vpop.f32.mrb[0].mxu0
      %v4306 = vadd.f32 %v3985, %v4305
      %v4307 = vpop.f32.mrb[0].mxu0
      %v4308 = vand.u32 %v1608, 4294901760
      %4309 = vmatprep.mubr.f32.mxu0 %v4308
      %v4310 = vand.u32 %v1607, 4294901760
      %4311 = vmatmul.mubr.f32.gmra.mrb[0].mxu0 %v4310
      %v4312 = vpop.f32.mrb[0].mxu0
      %v4313 = vadd.f32 %v3992, %v4312
      %v4314 = vpop.f32.mrb[0].mxu0
      %v4315 = vand.u32 %v1611, 4294901760
      %4316 = vmatprep.mubr.f32.mxu0 %v4315
      %v4317 = vand.u32 %v1610, 4294901760
      %4318 = vmatmul.mubr.f32.gmra.mrb[0].mxu0 %v4317
      %v4319 = vpop.f32.mrb[0].mxu0
      %v4320 = vadd.f32 %v3999, %v4319
      %v4321 = vpop.f32.mrb[0].mxu0
      %v4322 = vand.u32 %v1614, 4294901760
      %4323 = vmatprep.mubr.f32.mxu0 %v4322
      %v4324 = vand.u32 %v1613, 4294901760
      %4325 = vmatmul.mubr.f32.gmra.mrb[0].mxu0 %v4324
      %v4326 = vpop.f32.mrb[0].mxu0
      %v4327 = vadd.f32 %v4006, %v4326
      %v4328 = vpop.f32.mrb[0].mxu0
      %v4329 = vand.u32 %v1617, 4294901760
      %4330 = vmatprep.mubr.f32.mxu0 %v4329
      %v4331 = vand.u32 %v1616, 4294901760
      %4332 = vmatmul.mubr.f32.gmra.mrb[0].mxu0 %v4331
      %v4333 = vpop.f32.mrb[0].mxu0
      %v4334 = vadd.f32 %v4013, %v4333
      %v4335 = vpop.f32.mrb[0].mxu0
      %v4336 = vand.u32 %v1620, 4294901760
      %4337 = vmatprep.mubr.f32.mxu0 %v4336
      %v4338 = vand.u32 %v1619, 4294901760
      %4339 = vmatmul.mubr.f32.gmra.mrb[0].mxu0 %v4338
      %v4340 = vpop.f32.mrb[0].mxu0
      %v4341 = vadd.f32 %v4020, %v4340
      %v4342 = vpop.f32.mrb[0].mxu0
      %v4343 = vand.u32 %v1623, 4294901760
      %4344 = vmatprep.mubr.f32.mxu0 %v4343
      %v4345 = vand.u32 %v1622, 4294901760
      %4346 = vmatmul.mubr.f32.gmra.mrb[0].mxu0 %v4345
      %v4347 = vpop.f32.mrb[0].mxu0
      %v4348 = vadd.f32 %v4027, %v4347
      %v4349 = vpop.f32.mrb[0].mxu0
      %v4350 = vand.u32 %v1626, 4294901760
      %4351 = vmatprep.mubr.f32.mxu0 %v4350
      %v4352 = vand.u32 %v1625, 4294901760
      %4353 = vmatmul.mubr.f32.gmra.mrb[0].mxu0 %v4352
      %v4354 = vpop.f32.mrb[0].mxu0
      %v4355 = vadd.f32 %v4034, %v4354
      %v4356 = vpop.f32.mrb[0].mxu0
      %4357 = vdwg.mxu0
      %4358 = vmatprep.subr.mxu0 0.0
      %v4359 = vand.u32 %v1660, 4294901760
      %4360 = vmatpush1.msra.mxu0 %v4359
      %4361 = vmatprep.subr.mxu0 0.0
      %v4362 = vand.u32 %v1661, 4294901760
      %4363 = vmatpush1.msra.mxu0 %v4362
      %4364 = vmatprep.subr.mxu0 0.0
      %v4365 = vand.u32 %v1662, 4294901760
      %4366 = vmatpush1.msra.mxu0 %v4365
      %4367 = vmatprep.subr.mxu0 0.0
      %v4368 = vand.u32 %v1663, 4294901760
      %4369 = vmatpush1.msra.mxu0 %v4368
      %4370 = vmatprep.subr.mxu0 0.0
      %4371 = vmatpush1.msra.mxu0 0.0
      %4372 = vmatprep.subr.mxu0 0.0
      %4373 = vmatpush1.msra.mxu0 0.0
      %4374 = vmatprep.subr.mxu0 0.0
      %4375 = vmatpush1.msra.mxu0 0.0
      %4376 = vmatprep.subr.mxu0 0.0
      %4377 = vmatpush1.msra.mxu0 0.0
      %4378 = vmatprep.subr.mxu0 0.0
      %4379 = vmatpush1.msra.mxu0 0.0
      %4380 = vmatprep.subr.mxu0 0.0
      %4381 = vmatpush1.msra.mxu0 0.0
      %4382 = vmatprep.subr.mxu0 0.0
      %4383 = vmatpush1.msra.mxu0 0.0
      %4384 = vmatprep.subr.mxu0 0.0
      %4385 = vmatpush1.msra.mxu0 0.0
      %4386 = vmatprep.subr.mxu0 0.0
      %4387 = vmatpush1.msra.mxu0 0.0
      %4388 = vmatprep.subr.mxu0 0.0
      %4389 = vmatpush1.msra.mxu0 0.0
      %4390 = vmatprep.subr.mxu0 0.0
      %4391 = vmatpush1.msra.mxu0 0.0
      %4392 = vmatprep.subr.mxu0 0.0
      %4393 = vmatpush1.msra.mxu0 0.0
      %4394 = vmatprep.subr.mxu0 0.0
      %4395 = vmatpush1.msra.mxu0 0.0
      %4396 = vmatprep.subr.mxu0 0.0
      %4397 = vmatpush1.msra.mxu0 0.0
      %4398 = vmatprep.subr.mxu0 0.0
      %4399 = vmatpush1.msra.mxu0 0.0
      %4400 = vmatprep.subr.mxu0 0.0
      %4401 = vmatpush1.msra.mxu0 0.0
      %4402 = vmatprep.subr.mxu0 0.0
      %4403 = vmatpush1.msra.mxu0 0.0
      %4404 = vmatprep.subr.mxu0 0.0
      %4405 = vmatpush1.msra.mxu0 0.0
      %4406 = vmatprep.subr.mxu0 0.0
      %4407 = vmatpush1.msra.mxu0 0.0
      %4408 = vmatprep.subr.mxu0 0.0
      %4409 = vmatpush1.msra.mxu0 0.0
      %4410 = vmatprep.subr.mxu0 0.0
      %4411 = vmatpush1.msra.mxu0 0.0
      %4412 = vmatprep.subr.mxu0 0.0
      %4413 = vmatpush1.msra.mxu0 0.0
      %4414 = vmatprep.subr.mxu0 0.0
      %4415 = vmatpush1.msra.mxu0 0.0
      %4416 = vmatprep.subr.mxu0 0.0
      %4417 = vmatpush1.msra.mxu0 0.0
      %4418 = vmatprep.subr.mxu0 0.0
      %4419 = vmatpush1.msra.mxu0 0.0
      %4420 = vmatprep.subr.mxu0 0.0
      %4421 = vmatpush1.msra.mxu0 0.0
      %4422 = vmatprep.subr.mxu0 0.0
      %4423 = vmatpush1.msra.mxu0 0.0
      %4424 = vmatprep.subr.mxu0 0.0
      %4425 = vmatpush1.msra.mxu0 0.0
      %4426 = vmatprep.mubr.f32.mxu0 0.0
      %v4427 = vand.u32 %v1665, 4294901760
      %v4428 = vsub.f32 %v1665, %v4427
      %v4429 = vand.u32 %v4428, 4294901760
      %v4430 = vsub.f32 %v4428, %v4429
      %v4431 = vand.u32 %v4430, 4294901760
      %4432 = vmatmul.mubr.f32.gmra.mrb[0].mxu0 %v4431
      %v4433 = vpop.f32.mrb[0].mxu0
      %v4434 = vadd.f32 %v4138, %v4433
      %v4435 = vpop.f32.mrb[0].mxu0
      %4436 = vmatprep.mubr.f32.mxu0 0.0
      %v4437 = vand.u32 %v1668, 4294901760
      %v4438 = vsub.f32 %v1668, %v4437
      %v4439 = vand.u32 %v4438, 4294901760
      %v4440 = vsub.f32 %v4438, %v4439
      %v4441 = vand.u32 %v4440, 4294901760
      %4442 = vmatmul.mubr.f32.gmra.mrb[0].mxu0 %v4441
      %v4443 = vpop.f32.mrb[0].mxu0
      %v4444 = vadd.f32 %v4145, %v4443
      %v4445 = vpop.f32.mrb[0].mxu0
      %4446 = vmatprep.mubr.f32.mxu0 0.0
      %v4447 = vand.u32 %v1671, 4294901760
      %v4448 = vsub.f32 %v1671, %v4447
      %v4449 = vand.u32 %v4448, 4294901760
      %v4450 = vsub.f32 %v4448, %v4449
      %v4451 = vand.u32 %v4450, 4294901760
      %4452 = vmatmul.mubr.f32.gmra.mrb[0].mxu0 %v4451
      %v4453 = vpop.f32.mrb[0].mxu0
      %v4454 = vadd.f32 %v4152, %v4453
      %v4455 = vpop.f32.mrb[0].mxu0
      %4456 = vmatprep.mubr.f32.mxu0 0.0
      %v4457 = vand.u32 %v1674, 4294901760
      %v4458 = vsub.f32 %v1674, %v4457
      %v4459 = vand.u32 %v4458, 4294901760
      %v4460 = vsub.f32 %v4458, %v4459
      %v4461 = vand.u32 %v4460, 4294901760
      %4462 = vmatmul.mubr.f32.gmra.mrb[0].mxu0 %v4461
      %v4463 = vpop.f32.mrb[0].mxu0
      %v4464 = vadd.f32 %v4159, %v4463
      %v4465 = vpop.f32.mrb[0].mxu0
      %4466 = vmatprep.mubr.f32.mxu0 0.0
      %v4467 = vand.u32 %v1677, 4294901760
      %v4468 = vsub.f32 %v1677, %v4467
      %v4469 = vand.u32 %v4468, 4294901760
      %v4470 = vsub.f32 %v4468, %v4469
      %v4471 = vand.u32 %v4470, 4294901760
      %4472 = vmatmul.mubr.f32.gmra.mrb[0].mxu0 %v4471
      %v4473 = vpop.f32.mrb[0].mxu0
      %v4474 = vadd.f32 %v4166, %v4473
      %v4475 = vpop.f32.mrb[0].mxu0
      %4476 = vmatprep.mubr.f32.mxu0 0.0
      %v4477 = vand.u32 %v1680, 4294901760
      %v4478 = vsub.f32 %v1680, %v4477
      %v4479 = vand.u32 %v4478, 4294901760
      %v4480 = vsub.f32 %v4478, %v4479
      %v4481 = vand.u32 %v4480, 4294901760
      %4482 = vmatmul.mubr.f32.gmra.mrb[0].mxu0 %v4481
      %v4483 = vpop.f32.mrb[0].mxu0
      %v4484 = vadd.f32 %v4173, %v4483
      %v4485 = vpop.f32.mrb[0].mxu0
      %4486 = vmatprep.mubr.f32.mxu0 0.0
      %v4487 = vand.u32 %v1683, 4294901760
      %v4488 = vsub.f32 %v1683, %v4487
      %v4489 = vand.u32 %v4488, 4294901760
      %v4490 = vsub.f32 %v4488, %v4489
      %v4491 = vand.u32 %v4490, 4294901760
      %4492 = vmatmul.mubr.f32.gmra.mrb[0].mxu0 %v4491
      %v4493 = vpop.f32.mrb[0].mxu0
      %v4494 = vadd.f32 %v4180, %v4493
      %v4495 = vpop.f32.mrb[0].mxu0
      %4496 = vmatprep.mubr.f32.mxu0 0.0
      %v4497 = vand.u32 %v1686, 4294901760
      %v4498 = vsub.f32 %v1686, %v4497
      %v4499 = vand.u32 %v4498, 4294901760
      %v4500 = vsub.f32 %v4498, %v4499
      %v4501 = vand.u32 %v4500, 4294901760
      %4502 = vmatmul.mubr.f32.gmra.mrb[0].mxu0 %v4501
      %v4503 = vpop.f32.mrb[0].mxu0
      %v4504 = vadd.f32 %v4187, %v4503
      %v4505 = vpop.f32.mrb[0].mxu0
      %4506 = vmatprep.mubr.f32.mxu0 0.0
      %v4507 = vand.u32 %v1689, 4294901760
      %v4508 = vsub.f32 %v1689, %v4507
      %v4509 = vand.u32 %v4508, 4294901760
      %v4510 = vsub.f32 %v4508, %v4509
      %v4511 = vand.u32 %v4510, 4294901760
      %4512 = vmatmul.mubr.f32.gmra.mrb[0].mxu0 %v4511
      %v4513 = vpop.f32.mrb[0].mxu0
      %v4514 = vadd.f32 %v4194, %v4513
      %v4515 = vpop.f32.mrb[0].mxu0
      %4516 = vmatprep.mubr.f32.mxu0 0.0
      %v4517 = vand.u32 %v1692, 4294901760
      %v4518 = vsub.f32 %v1692, %v4517
      %v4519 = vand.u32 %v4518, 4294901760
      %v4520 = vsub.f32 %v4518, %v4519
      %v4521 = vand.u32 %v4520, 4294901760
      %4522 = vmatmul.mubr.f32.gmra.mrb[0].mxu0 %v4521
      %v4523 = vpop.f32.mrb[0].mxu0
      %v4524 = vadd.f32 %v4201, %v4523
      %v4525 = vpop.f32.mrb[0].mxu0
      %4526 = vmatprep.mubr.f32.mxu0 0.0
      %v4527 = vand.u32 %v1695, 4294901760
      %v4528 = vsub.f32 %v1695, %v4527
      %v4529 = vand.u32 %v4528, 4294901760
      %v4530 = vsub.f32 %v4528, %v4529
      %v4531 = vand.u32 %v4530, 4294901760
      %4532 = vmatmul.mubr.f32.gmra.mrb[0].mxu0 %v4531
      %v4533 = vpop.f32.mrb[0].mxu0
      %v4534 = vadd.f32 %v4208, %v4533
      %v4535 = vpop.f32.mrb[0].mxu0
      %4536 = vmatprep.mubr.f32.mxu0 0.0
      %v4537 = vand.u32 %v1698, 4294901760
      %v4538 = vsub.f32 %v1698, %v4537
      %v4539 = vand.u32 %v4538, 4294901760
      %v4540 = vsub.f32 %v4538, %v4539
      %v4541 = vand.u32 %v4540, 4294901760
      %4542 = vmatmul.mubr.f32.gmra.mrb[0].mxu0 %v4541
      %v4543 = vpop.f32.mrb[0].mxu0
      %v4544 = vadd.f32 %v4215, %v4543
      %v4545 = vpop.f32.mrb[0].mxu0
      %4546 = vmatprep.mubr.f32.mxu0 0.0
      %v4547 = vand.u32 %v1701, 4294901760
      %v4548 = vsub.f32 %v1701, %v4547
      %v4549 = vand.u32 %v4548, 4294901760
      %v4550 = vsub.f32 %v4548, %v4549
      %v4551 = vand.u32 %v4550, 4294901760
      %4552 = vmatmul.mubr.f32.gmra.mrb[0].mxu0 %v4551
      %v4553 = vpop.f32.mrb[0].mxu0
      %v4554 = vadd.f32 %v4222, %v4553
      %v4555 = vpop.f32.mrb[0].mxu0
      %4556 = vmatprep.mubr.f32.mxu0 0.0
      %v4557 = vand.u32 %v1704, 4294901760
      %v4558 = vsub.f32 %v1704, %v4557
      %v4559 = vand.u32 %v4558, 4294901760
      %v4560 = vsub.f32 %v4558, %v4559
      %v4561 = vand.u32 %v4560, 4294901760
      %4562 = vmatmul.mubr.f32.gmra.mrb[0].mxu0 %v4561
      %v4563 = vpop.f32.mrb[0].mxu0
      %v4564 = vadd.f32 %v4229, %v4563
      %v4565 = vpop.f32.mrb[0].mxu0
      %4566 = vmatprep.mubr.f32.mxu0 0.0
      %v4567 = vand.u32 %v1707, 4294901760
      %v4568 = vsub.f32 %v1707, %v4567
      %v4569 = vand.u32 %v4568, 4294901760
      %v4570 = vsub.f32 %v4568, %v4569
      %v4571 = vand.u32 %v4570, 4294901760
      %4572 = vmatmul.mubr.f32.gmra.mrb[0].mxu0 %v4571
      %v4573 = vpop.f32.mrb[0].mxu0
      %v4574 = vadd.f32 %v4236, %v4573
      %v4575 = vpop.f32.mrb[0].mxu0
      %4576 = vmatprep.mubr.f32.mxu0 0.0
      %v4577 = vand.u32 %v1710, 4294901760
      %v4578 = vsub.f32 %v1710, %v4577
      %v4579 = vand.u32 %v4578, 4294901760
      %v4580 = vsub.f32 %v4578, %v4579
      %v4581 = vand.u32 %v4580, 4294901760
      %4582 = vmatmul.mubr.f32.gmra.mrb[0].mxu0 %v4581
      %v4583 = vpop.f32.mrb[0].mxu0
      %v4584 = vadd.f32 %v4243, %v4583
      %v4585 = vpop.f32.mrb[0].mxu0
      %4586 = vmatprep.mubr.f32.mxu0 0.0
      %v4587 = vand.u32 %v1713, 4294901760
      %v4588 = vsub.f32 %v1713, %v4587
      %v4589 = vand.u32 %v4588, 4294901760
      %v4590 = vsub.f32 %v4588, %v4589
      %v4591 = vand.u32 %v4590, 4294901760
      %4592 = vmatmul.mubr.f32.gmra.mrb[0].mxu0 %v4591
      %v4593 = vpop.f32.mrb[0].mxu0
      %v4594 = vadd.f32 %v4250, %v4593
      %v4595 = vpop.f32.mrb[0].mxu0
      %4596 = vmatprep.mubr.f32.mxu0 0.0
      %v4597 = vand.u32 %v1716, 4294901760
      %v4598 = vsub.f32 %v1716, %v4597
      %v4599 = vand.u32 %v4598, 4294901760
      %v4600 = vsub.f32 %v4598, %v4599
      %v4601 = vand.u32 %v4600, 4294901760
      %4602 = vmatmul.mubr.f32.gmra.mrb[0].mxu0 %v4601
      %v4603 = vpop.f32.mrb[0].mxu0
      %v4604 = vadd.f32 %v4257, %v4603
      %v4605 = vpop.f32.mrb[0].mxu0
      %4606 = vmatprep.mubr.f32.mxu0 0.0
      %v4607 = vand.u32 %v1719, 4294901760
      %v4608 = vsub.f32 %v1719, %v4607
      %v4609 = vand.u32 %v4608, 4294901760
      %v4610 = vsub.f32 %v4608, %v4609
      %v4611 = vand.u32 %v4610, 4294901760
      %4612 = vmatmul.mubr.f32.gmra.mrb[0].mxu0 %v4611
      %v4613 = vpop.f32.mrb[0].mxu0
      %v4614 = vadd.f32 %v4264, %v4613
      %v4615 = vpop.f32.mrb[0].mxu0
      %4616 = vmatprep.mubr.f32.mxu0 0.0
      %v4617 = vand.u32 %v1722, 4294901760
      %v4618 = vsub.f32 %v1722, %v4617
      %v4619 = vand.u32 %v4618, 4294901760
      %v4620 = vsub.f32 %v4618, %v4619
      %v4621 = vand.u32 %v4620, 4294901760
      %4622 = vmatmul.mubr.f32.gmra.mrb[0].mxu0 %v4621
      %v4623 = vpop.f32.mrb[0].mxu0
      %v4624 = vadd.f32 %v4271, %v4623
      %v4625 = vpop.f32.mrb[0].mxu0
      %4626 = vmatprep.mubr.f32.mxu0 0.0
      %v4627 = vand.u32 %v1725, 4294901760
      %v4628 = vsub.f32 %v1725, %v4627
      %v4629 = vand.u32 %v4628, 4294901760
      %v4630 = vsub.f32 %v4628, %v4629
      %v4631 = vand.u32 %v4630, 4294901760
      %4632 = vmatmul.mubr.f32.gmra.mrb[0].mxu0 %v4631
      %v4633 = vpop.f32.mrb[0].mxu0
      %v4634 = vadd.f32 %v4278, %v4633
      %v4635 = vpop.f32.mrb[0].mxu0
      %4636 = vmatprep.mubr.f32.mxu0 0.0
      %v4637 = vand.u32 %v1728, 4294901760
      %v4638 = vsub.f32 %v1728, %v4637
      %v4639 = vand.u32 %v4638, 4294901760
      %v4640 = vsub.f32 %v4638, %v4639
      %v4641 = vand.u32 %v4640, 4294901760
      %4642 = vmatmul.mubr.f32.gmra.mrb[0].mxu0 %v4641
      %v4643 = vpop.f32.mrb[0].mxu0
      %v4644 = vadd.f32 %v4285, %v4643
      %v4645 = vpop.f32.mrb[0].mxu0
      %4646 = vmatprep.mubr.f32.mxu0 0.0
      %v4647 = vand.u32 %v1731, 4294901760
      %v4648 = vsub.f32 %v1731, %v4647
      %v4649 = vand.u32 %v4648, 4294901760
      %v4650 = vsub.f32 %v4648, %v4649
      %v4651 = vand.u32 %v4650, 4294901760
      %4652 = vmatmul.mubr.f32.gmra.mrb[0].mxu0 %v4651
      %v4653 = vpop.f32.mrb[0].mxu0
      %v4654 = vadd.f32 %v4292, %v4653
      %v4655 = vpop.f32.mrb[0].mxu0
      %4656 = vmatprep.mubr.f32.mxu0 0.0
      %v4657 = vand.u32 %v1734, 4294901760
      %v4658 = vsub.f32 %v1734, %v4657
      %v4659 = vand.u32 %v4658, 4294901760
      %v4660 = vsub.f32 %v4658, %v4659
      %v4661 = vand.u32 %v4660, 4294901760
      %4662 = vmatmul.mubr.f32.gmra.mrb[0].mxu0 %v4661
      %v4663 = vpop.f32.mrb[0].mxu0
      %v4664 = vadd.f32 %v4299, %v4663
      %v4665 = vpop.f32.mrb[0].mxu0
      %4666 = vmatprep.mubr.f32.mxu0 0.0
      %v4667 = vand.u32 %v1737, 4294901760
      %v4668 = vsub.f32 %v1737, %v4667
      %v4669 = vand.u32 %v4668, 4294901760
      %v4670 = vsub.f32 %v4668, %v4669
      %v4671 = vand.u32 %v4670, 4294901760
      %4672 = vmatmul.mubr.f32.gmra.mrb[0].mxu0 %v4671
      %v4673 = vpop.f32.mrb[0].mxu0
      %v4674 = vadd.f32 %v4306, %v4673
      %v4675 = vpop.f32.mrb[0].mxu0
      %4676 = vmatprep.mubr.f32.mxu0 0.0
      %v4677 = vand.u32 %v1740, 4294901760
      %v4678 = vsub.f32 %v1740, %v4677
      %v4679 = vand.u32 %v4678, 4294901760
      %v4680 = vsub.f32 %v4678, %v4679
      %v4681 = vand.u32 %v4680, 4294901760
      %4682 = vmatmul.mubr.f32.gmra.mrb[0].mxu0 %v4681
      %v4683 = vpop.f32.mrb[0].mxu0
      %v4684 = vadd.f32 %v4313, %v4683
      %v4685 = vpop.f32.mrb[0].mxu0
      %4686 = vmatprep.mubr.f32.mxu0 0.0
      %v4687 = vand.u32 %v1743, 4294901760
      %v4688 = vsub.f32 %v1743, %v4687
      %v4689 = vand.u32 %v4688, 4294901760
      %v4690 = vsub.f32 %v4688, %v4689
      %v4691 = vand.u32 %v4690, 4294901760
      %4692 = vmatmul.mubr.f32.gmra.mrb[0].mxu0 %v4691
      %v4693 = vpop.f32.mrb[0].mxu0
      %v4694 = vadd.f32 %v4320, %v4693
      %v4695 = vpop.f32.mrb[0].mxu0
      %4696 = vmatprep.mubr.f32.mxu0 0.0
      %v4697 = vand.u32 %v1746, 4294901760
      %v4698 = vsub.f32 %v1746, %v4697
      %v4699 = vand.u32 %v4698, 4294901760
      %v4700 = vsub.f32 %v4698, %v4699
      %v4701 = vand.u32 %v4700, 4294901760
      %4702 = vmatmul.mubr.f32.gmra.mrb[0].mxu0 %v4701
      %v4703 = vpop.f32.mrb[0].mxu0
      %v4704 = vadd.f32 %v4327, %v4703
      %v4705 = vpop.f32.mrb[0].mxu0
      %4706 = vmatprep.mubr.f32.mxu0 0.0
      %v4707 = vand.u32 %v1749, 4294901760
      %v4708 = vsub.f32 %v1749, %v4707
      %v4709 = vand.u32 %v4708, 4294901760
      %v4710 = vsub.f32 %v4708, %v4709
      %v4711 = vand.u32 %v4710, 4294901760
      %4712 = vmatmul.mubr.f32.gmra.mrb[0].mxu0 %v4711
      %v4713 = vpop.f32.mrb[0].mxu0
      %v4714 = vadd.f32 %v4334, %v4713
      %v4715 = vpop.f32.mrb[0].mxu0
      %4716 = vmatprep.mubr.f32.mxu0 0.0
      %v4717 = vand.u32 %v1752, 4294901760
      %v4718 = vsub.f32 %v1752, %v4717
      %v4719 = vand.u32 %v4718, 4294901760
      %v4720 = vsub.f32 %v4718, %v4719
      %v4721 = vand.u32 %v4720, 4294901760
      %4722 = vmatmul.mubr.f32.gmra.mrb[0].mxu0 %v4721
      %v4723 = vpop.f32.mrb[0].mxu0
      %v4724 = vadd.f32 %v4341, %v4723
      %v4725 = vpop.f32.mrb[0].mxu0
      %4726 = vmatprep.mubr.f32.mxu0 0.0
      %v4727 = vand.u32 %v1755, 4294901760
      %v4728 = vsub.f32 %v1755, %v4727
      %v4729 = vand.u32 %v4728, 4294901760
      %v4730 = vsub.f32 %v4728, %v4729
      %v4731 = vand.u32 %v4730, 4294901760
      %4732 = vmatmul.mubr.f32.gmra.mrb[0].mxu0 %v4731
      %v4733 = vpop.f32.mrb[0].mxu0
      %v4734 = vadd.f32 %v4348, %v4733
      %v4735 = vpop.f32.mrb[0].mxu0
      %4736 = vmatprep.mubr.f32.mxu0 0.0
      %v4737 = vand.u32 %v1758, 4294901760
      %v4738 = vsub.f32 %v1758, %v4737
      %v4739 = vand.u32 %v4738, 4294901760
      %v4740 = vsub.f32 %v4738, %v4739
      %v4741 = vand.u32 %v4740, 4294901760
      %4742 = vmatmul.mubr.f32.gmra.mrb[0].mxu0 %v4741
      %v4743 = vpop.f32.mrb[0].mxu0
      %v4744 = vadd.f32 %v4355, %v4743
      %v4745 = vpop.f32.mrb[0].mxu0
      %4746 = vdwg.mxu0
      %4747 = vmatprep.subr.mxu0 0.0
      %v4748 = vand.u32 %v1660, 4294901760
      %v4749 = vsub.f32 %v1660, %v4748
      %v4750 = vand.u32 %v4749, 4294901760
      %v4751 = vsub.f32 %v4749, %v4750
      %v4752 = vand.u32 %v4751, 4294901760
      %4753 = vmatpush1.msra.mxu0 %v4752
      %4754 = vmatprep.subr.mxu0 0.0
      %v4755 = vand.u32 %v1661, 4294901760
      %v4756 = vsub.f32 %v1661, %v4755
      %v4757 = vand.u32 %v4756, 4294901760
      %v4758 = vsub.f32 %v4756, %v4757
      %v4759 = vand.u32 %v4758, 4294901760
      %4760 = vmatpush1.msra.mxu0 %v4759
      %4761 = vmatprep.subr.mxu0 0.0
      %v4762 = vand.u32 %v1662, 4294901760
      %v4763 = vsub.f32 %v1662, %v4762
      %v4764 = vand.u32 %v4763, 4294901760
      %v4765 = vsub.f32 %v4763, %v4764
      %v4766 = vand.u32 %v4765, 4294901760
      %4767 = vmatpush1.msra.mxu0 %v4766
      %4768 = vmatprep.subr.mxu0 0.0
      %v4769 = vand.u32 %v1663, 4294901760
      %v4770 = vsub.f32 %v1663, %v4769
      %v4771 = vand.u32 %v4770, 4294901760
      %v4772 = vsub.f32 %v4770, %v4771
      %v4773 = vand.u32 %v4772, 4294901760
      %4774 = vmatpush1.msra.mxu0 %v4773
      %4775 = vmatprep.subr.mxu0 0.0
      %4776 = vmatpush1.msra.mxu0 0.0
      %4777 = vmatprep.subr.mxu0 0.0
      %4778 = vmatpush1.msra.mxu0 0.0
      %4779 = vmatprep.subr.mxu0 0.0
      %4780 = vmatpush1.msra.mxu0 0.0
      %4781 = vmatprep.subr.mxu0 0.0
      %4782 = vmatpush1.msra.mxu0 0.0
      %4783 = vmatprep.subr.mxu0 0.0
      %4784 = vmatpush1.msra.mxu0 0.0
      %4785 = vmatprep.subr.mxu0 0.0
      %4786 = vmatpush1.msra.mxu0 0.0
      %4787 = vmatprep.subr.mxu0 0.0
      %4788 = vmatpush1.msra.mxu0 0.0
      %4789 = vmatprep.subr.mxu0 0.0
      %4790 = vmatpush1.msra.mxu0 0.0
      %4791 = vmatprep.subr.mxu0 0.0
      %4792 = vmatpush1.msra.mxu0 0.0
      %4793 = vmatprep.subr.mxu0 0.0
      %4794 = vmatpush1.msra.mxu0 0.0
      %4795 = vmatprep.subr.mxu0 0.0
      %4796 = vmatpush1.msra.mxu0 0.0
      %4797 = vmatprep.subr.mxu0 0.0
      %4798 = vmatpush1.msra.mxu0 0.0
      %4799 = vmatprep.subr.mxu0 0.0
      %4800 = vmatpush1.msra.mxu0 0.0
      %4801 = vmatprep.subr.mxu0 0.0
      %4802 = vmatpush1.msra.mxu0 0.0
      %4803 = vmatprep.subr.mxu0 0.0
      %4804 = vmatpush1.msra.mxu0 0.0
      %4805 = vmatprep.subr.mxu0 0.0
      %4806 = vmatpush1.msra.mxu0 0.0
      %4807 = vmatprep.subr.mxu0 0.0
      %4808 = vmatpush1.msra.mxu0 0.0
      %4809 = vmatprep.subr.mxu0 0.0
      %4810 = vmatpush1.msra.mxu0 0.0
      %4811 = vmatprep.subr.mxu0 0.0
      %4812 = vmatpush1.msra.mxu0 0.0
      %4813 = vmatprep.subr.mxu0 0.0
      %4814 = vmatpush1.msra.mxu0 0.0
      %4815 = vmatprep.subr.mxu0 0.0
      %4816 = vmatpush1.msra.mxu0 0.0
      %4817 = vmatprep.subr.mxu0 0.0
      %4818 = vmatpush1.msra.mxu0 0.0
      %4819 = vmatprep.subr.mxu0 0.0
      %4820 = vmatpush1.msra.mxu0 0.0
      %4821 = vmatprep.subr.mxu0 0.0
      %4822 = vmatpush1.msra.mxu0 0.0
      %4823 = vmatprep.subr.mxu0 0.0
      %4824 = vmatpush1.msra.mxu0 0.0
      %4825 = vmatprep.subr.mxu0 0.0
      %4826 = vmatpush1.msra.mxu0 0.0
      %4827 = vmatprep.subr.mxu0 0.0
      %4828 = vmatpush1.msra.mxu0 0.0
      %4829 = vmatprep.subr.mxu0 0.0
      %4830 = vmatpush1.msra.mxu0 0.0
      %4831 = vmatprep.mubr.f32.mxu0 0.0
      %v4832 = vand.u32 %v1665, 4294901760
      %4833 = vmatmul.mubr.f32.gmra.mrb[0].mxu0 %v4832
      %v4834 = vpop.f32.mrb[0].mxu0
      %v4835 = vadd.f32 %v4434, %v4834
      %v4836 = vpop.f32.mrb[0].mxu0
      %4837 = vmatprep.mubr.f32.mxu0 0.0
      %v4838 = vand.u32 %v1668, 4294901760
      %4839 = vmatmul.mubr.f32.gmra.mrb[0].mxu0 %v4838
      %v4840 = vpop.f32.mrb[0].mxu0
      %v4841 = vadd.f32 %v4444, %v4840
      %v4842 = vpop.f32.mrb[0].mxu0
      %4843 = vmatprep.mubr.f32.mxu0 0.0
      %v4844 = vand.u32 %v1671, 4294901760
      %4845 = vmatmul.mubr.f32.gmra.mrb[0].mxu0 %v4844
      %v4846 = vpop.f32.mrb[0].mxu0
      %v4847 = vadd.f32 %v4454, %v4846
      %v4848 = vpop.f32.mrb[0].mxu0
      %4849 = vmatprep.mubr.f32.mxu0 0.0
      %v4850 = vand.u32 %v1674, 4294901760
      %4851 = vmatmul.mubr.f32.gmra.mrb[0].mxu0 %v4850
      %v4852 = vpop.f32.mrb[0].mxu0
      %v4853 = vadd.f32 %v4464, %v4852
      %v4854 = vpop.f32.mrb[0].mxu0
      %4855 = vmatprep.mubr.f32.mxu0 0.0
      %v4856 = vand.u32 %v1677, 4294901760
      %4857 = vmatmul.mubr.f32.gmra.mrb[0].mxu0 %v4856
      %v4858 = vpop.f32.mrb[0].mxu0
      %v4859 = vadd.f32 %v4474, %v4858
      %v4860 = vpop.f32.mrb[0].mxu0
      %4861 = vmatprep.mubr.f32.mxu0 0.0
      %v4862 = vand.u32 %v1680, 4294901760
      %4863 = vmatmul.mubr.f32.gmra.mrb[0].mxu0 %v4862
      %v4864 = vpop.f32.mrb[0].mxu0
      %v4865 = vadd.f32 %v4484, %v4864
      %v4866 = vpop.f32.mrb[0].mxu0
      %4867 = vmatprep.mubr.f32.mxu0 0.0
      %v4868 = vand.u32 %v1683, 4294901760
      %4869 = vmatmul.mubr.f32.gmra.mrb[0].mxu0 %v4868
      %v4870 = vpop.f32.mrb[0].mxu0
      %v4871 = vadd.f32 %v4494, %v4870
      %v4872 = vpop.f32.mrb[0].mxu0
      %4873 = vmatprep.mubr.f32.mxu0 0.0
      %v4874 = vand.u32 %v1686, 4294901760
      %4875 = vmatmul.mubr.f32.gmra.mrb[0].mxu0 %v4874
      %v4876 = vpop.f32.mrb[0].mxu0
      %v4877 = vadd.f32 %v4504, %v4876
      %v4878 = vpop.f32.mrb[0].mxu0
      %4879 = vmatprep.mubr.f32.mxu0 0.0
      %v4880 = vand.u32 %v1689, 4294901760
      %4881 = vmatmul.mubr.f32.gmra.mrb[0].mxu0 %v4880
      %v4882 = vpop.f32.mrb[0].mxu0
      %v4883 = vadd.f32 %v4514, %v4882
      %v4884 = vpop.f32.mrb[0].mxu0
      %4885 = vmatprep.mubr.f32.mxu0 0.0
      %v4886 = vand.u32 %v1692, 4294901760
      %4887 = vmatmul.mubr.f32.gmra.mrb[0].mxu0 %v4886
      %v4888 = vpop.f32.mrb[0].mxu0
      %v4889 = vadd.f32 %v4524, %v4888
      %v4890 = vpop.f32.mrb[0].mxu0
      %4891 = vmatprep.mubr.f32.mxu0 0.0
      %v4892 = vand.u32 %v1695, 4294901760
      %4893 = vmatmul.mubr.f32.gmra.mrb[0].mxu0 %v4892
      %v4894 = vpop.f32.mrb[0].mxu0
      %v4895 = vadd.f32 %v4534, %v4894
      %v4896 = vpop.f32.mrb[0].mxu0
      %4897 = vmatprep.mubr.f32.mxu0 0.0
      %v4898 = vand.u32 %v1698, 4294901760
      %4899 = vmatmul.mubr.f32.gmra.mrb[0].mxu0 %v4898
      %v4900 = vpop.f32.mrb[0].mxu0
      %v4901 = vadd.f32 %v4544, %v4900
      %v4902 = vpop.f32.mrb[0].mxu0
      %4903 = vmatprep.mubr.f32.mxu0 0.0
      %v4904 = vand.u32 %v1701, 4294901760
      %4905 = vmatmul.mubr.f32.gmra.mrb[0].mxu0 %v4904
      %v4906 = vpop.f32.mrb[0].mxu0
      %v4907 = vadd.f32 %v4554, %v4906
      %v4908 = vpop.f32.mrb[0].mxu0
      %4909 = vmatprep.mubr.f32.mxu0 0.0
      %v4910 = vand.u32 %v1704, 4294901760
      %4911 = vmatmul.mubr.f32.gmra.mrb[0].mxu0 %v4910
      %v4912 = vpop.f32.mrb[0].mxu0
      %v4913 = vadd.f32 %v4564, %v4912
      %v4914 = vpop.f32.mrb[0].mxu0
      %4915 = vmatprep.mubr.f32.mxu0 0.0
      %v4916 = vand.u32 %v1707, 4294901760
      %4917 = vmatmul.mubr.f32.gmra.mrb[0].mxu0 %v4916
      %v4918 = vpop.f32.mrb[0].mxu0
      %v4919 = vadd.f32 %v4574, %v4918
      %v4920 = vpop.f32.mrb[0].mxu0
      %4921 = vmatprep.mubr.f32.mxu0 0.0
      %v4922 = vand.u32 %v1710, 4294901760
      %4923 = vmatmul.mubr.f32.gmra.mrb[0].mxu0 %v4922
      %v4924 = vpop.f32.mrb[0].mxu0
      %v4925 = vadd.f32 %v4584, %v4924
      %v4926 = vpop.f32.mrb[0].mxu0
      %4927 = vmatprep.mubr.f32.mxu0 0.0
      %v4928 = vand.u32 %v1713, 4294901760
      %4929 = vmatmul.mubr.f32.gmra.mrb[0].mxu0 %v4928
      %v4930 = vpop.f32.mrb[0].mxu0
      %v4931 = vadd.f32 %v4594, %v4930
      %v4932 = vpop.f32.mrb[0].mxu0
      %4933 = vmatprep.mubr.f32.mxu0 0.0
      %v4934 = vand.u32 %v1716, 4294901760
      %4935 = vmatmul.mubr.f32.gmra.mrb[0].mxu0 %v4934
      %v4936 = vpop.f32.mrb[0].mxu0
      %v4937 = vadd.f32 %v4604, %v4936
      %v4938 = vpop.f32.mrb[0].mxu0
      %4939 = vmatprep.mubr.f32.mxu0 0.0
      %v4940 = vand.u32 %v1719, 4294901760
      %4941 = vmatmul.mubr.f32.gmra.mrb[0].mxu0 %v4940
      %v4942 = vpop.f32.mrb[0].mxu0
      %v4943 = vadd.f32 %v4614, %v4942
      %v4944 = vpop.f32.mrb[0].mxu0
      %4945 = vmatprep.mubr.f32.mxu0 0.0
      %v4946 = vand.u32 %v1722, 4294901760
      %4947 = vmatmul.mubr.f32.gmra.mrb[0].mxu0 %v4946
      %v4948 = vpop.f32.mrb[0].mxu0
      %v4949 = vadd.f32 %v4624, %v4948
      %v4950 = vpop.f32.mrb[0].mxu0
      %4951 = vmatprep.mubr.f32.mxu0 0.0
      %v4952 = vand.u32 %v1725, 4294901760
      %4953 = vmatmul.mubr.f32.gmra.mrb[0].mxu0 %v4952
      %v4954 = vpop.f32.mrb[0].mxu0
      %v4955 = vadd.f32 %v4634, %v4954
      %v4956 = vpop.f32.mrb[0].mxu0
      %4957 = vmatprep.mubr.f32.mxu0 0.0
      %v4958 = vand.u32 %v1728, 4294901760
      %4959 = vmatmul.mubr.f32.gmra.mrb[0].mxu0 %v4958
      %v4960 = vpop.f32.mrb[0].mxu0
      %v4961 = vadd.f32 %v4644, %v4960
      %v4962 = vpop.f32.mrb[0].mxu0
      %4963 = vmatprep.mubr.f32.mxu0 0.0
      %v4964 = vand.u32 %v1731, 4294901760
      %4965 = vmatmul.mubr.f32.gmra.mrb[0].mxu0 %v4964
      %v4966 = vpop.f32.mrb[0].mxu0
      %v4967 = vadd.f32 %v4654, %v4966
      %v4968 = vpop.f32.mrb[0].mxu0
      %4969 = vmatprep.mubr.f32.mxu0 0.0
      %v4970 = vand.u32 %v1734, 4294901760
      %4971 = vmatmul.mubr.f32.gmra.mrb[0].mxu0 %v4970
      %v4972 = vpop.f32.mrb[0].mxu0
      %v4973 = vadd.f32 %v4664, %v4972
      %v4974 = vpop.f32.mrb[0].mxu0
      %4975 = vmatprep.mubr.f32.mxu0 0.0
      %v4976 = vand.u32 %v1737, 4294901760
      %4977 = vmatmul.mubr.f32.gmra.mrb[0].mxu0 %v4976
      %v4978 = vpop.f32.mrb[0].mxu0
      %v4979 = vadd.f32 %v4674, %v4978
      %v4980 = vpop.f32.mrb[0].mxu0
      %4981 = vmatprep.mubr.f32.mxu0 0.0
      %v4982 = vand.u32 %v1740, 4294901760
      %4983 = vmatmul.mubr.f32.gmra.mrb[0].mxu0 %v4982
      %v4984 = vpop.f32.mrb[0].mxu0
      %v4985 = vadd.f32 %v4684, %v4984
      %v4986 = vpop.f32.mrb[0].mxu0
      %4987 = vmatprep.mubr.f32.mxu0 0.0
      %v4988 = vand.u32 %v1743, 4294901760
      %4989 = vmatmul.mubr.f32.gmra.mrb[0].mxu0 %v4988
      %v4990 = vpop.f32.mrb[0].mxu0
      %v4991 = vadd.f32 %v4694, %v4990
      %v4992 = vpop.f32.mrb[0].mxu0
      %4993 = vmatprep.mubr.f32.mxu0 0.0
      %v4994 = vand.u32 %v1746, 4294901760
      %4995 = vmatmul.mubr.f32.gmra.mrb[0].mxu0 %v4994
      %v4996 = vpop.f32.mrb[0].mxu0
      %v4997 = vadd.f32 %v4704, %v4996
      %v4998 = vpop.f32.mrb[0].mxu0
      %4999 = vmatprep.mubr.f32.mxu0 0.0
      %v5000 = vand.u32 %v1749, 4294901760
      %5001 = vmatmul.mubr.f32.gmra.mrb[0].mxu0 %v5000
      %v5002 = vpop.f32.mrb[0].mxu0
      %v5003 = vadd.f32 %v4714, %v5002
      %v5004 = vpop.f32.mrb[0].mxu0
      %5005 = vmatprep.mubr.f32.mxu0 0.0
      %v5006 = vand.u32 %v1752, 4294901760
      %5007 = vmatmul.mubr.f32.gmra.mrb[0].mxu0 %v5006
      %v5008 = vpop.f32.mrb[0].mxu0
      %v5009 = vadd.f32 %v4724, %v5008
      %v5010 = vpop.f32.mrb[0].mxu0
      %5011 = vmatprep.mubr.f32.mxu0 0.0
      %v5012 = vand.u32 %v1755, 4294901760
      %5013 = vmatmul.mubr.f32.gmra.mrb[0].mxu0 %v5012
      %v5014 = vpop.f32.mrb[0].mxu0
      %v5015 = vadd.f32 %v4734, %v5014
      %v5016 = vpop.f32.mrb[0].mxu0
      %5017 = vmatprep.mubr.f32.mxu0 0.0
      %v5018 = vand.u32 %v1758, 4294901760
      %5019 = vmatmul.mubr.f32.gmra.mrb[0].mxu0 %v5018
      %v5020 = vpop.f32.mrb[0].mxu0
      %v5021 = vadd.f32 %v4744, %v5020
      %v5022 = vpop.f32.mrb[0].mxu0
      %5023 = vdwg.mxu0
      %5024 = vmatprep.subr.mxu0 0.0
      %v5025 = vand.u32 %v1660, 4294901760
      %v5026 = vsub.f32 %v1660, %v5025
      %5027 = vmatpush1.msra.mxu0 %v5026
      %5028 = vmatprep.subr.mxu0 0.0
      %v5029 = vand.u32 %v1661, 4294901760
      %v5030 = vsub.f32 %v1661, %v5029
      %5031 = vmatpush1.msra.mxu0 %v5030
      %5032 = vmatprep.subr.mxu0 0.0
      %v5033 = vand.u32 %v1662, 4294901760
      %v5034 = vsub.f32 %v1662, %v5033
      %5035 = vmatpush1.msra.mxu0 %v5034
      %5036 = vmatprep.subr.mxu0 0.0
      %v5037 = vand.u32 %v1663, 4294901760
      %v5038 = vsub.f32 %v1663, %v5037
      %5039 = vmatpush1.msra.mxu0 %v5038
      %5040 = vmatprep.subr.mxu0 0.0
      %5041 = vmatpush1.msra.mxu0 0.0
      %5042 = vmatprep.subr.mxu0 0.0
      %5043 = vmatpush1.msra.mxu0 0.0
      %5044 = vmatprep.subr.mxu0 0.0
      %5045 = vmatpush1.msra.mxu0 0.0
      %5046 = vmatprep.subr.mxu0 0.0
      %5047 = vmatpush1.msra.mxu0 0.0
      %5048 = vmatprep.subr.mxu0 0.0
      %5049 = vmatpush1.msra.mxu0 0.0
      %5050 = vmatprep.subr.mxu0 0.0
      %5051 = vmatpush1.msra.mxu0 0.0
      %5052 = vmatprep.subr.mxu0 0.0
      %5053 = vmatpush1.msra.mxu0 0.0
      %5054 = vmatprep.subr.mxu0 0.0
      %5055 = vmatpush1.msra.mxu0 0.0
      %5056 = vmatprep.subr.mxu0 0.0
      %5057 = vmatpush1.msra.mxu0 0.0
      %5058 = vmatprep.subr.mxu0 0.0
      %5059 = vmatpush1.msra.mxu0 0.0
      %5060 = vmatprep.subr.mxu0 0.0
      %5061 = vmatpush1.msra.mxu0 0.0
      %5062 = vmatprep.subr.mxu0 0.0
      %5063 = vmatpush1.msra.mxu0 0.0
      %5064 = vmatprep.subr.mxu0 0.0
      %5065 = vmatpush1.msra.mxu0 0.0
      %5066 = vmatprep.subr.mxu0 0.0
      %5067 = vmatpush1.msra.mxu0 0.0
      %5068 = vmatprep.subr.mxu0 0.0
      %5069 = vmatpush1.msra.mxu0 0.0
      %5070 = vmatprep.subr.mxu0 0.0
      %5071 = vmatpush1.msra.mxu0 0.0
      %5072 = vmatprep.subr.mxu0 0.0
      %5073 = vmatpush1.msra.mxu0 0.0
      %5074 = vmatprep.subr.mxu0 0.0
      %5075 = vmatpush1.msra.mxu0 0.0
      %5076 = vmatprep.subr.mxu0 0.0
      %5077 = vmatpush1.msra.mxu0 0.0
      %5078 = vmatprep.subr.mxu0 0.0
      %5079 = vmatpush1.msra.mxu0 0.0
      %5080 = vmatprep.subr.mxu0 0.0
      %5081 = vmatpush1.msra.mxu0 0.0
      %5082 = vmatprep.subr.mxu0 0.0
      %5083 = vmatpush1.msra.mxu0 0.0
      %5084 = vmatprep.subr.mxu0 0.0
      %5085 = vmatpush1.msra.mxu0 0.0
      %5086 = vmatprep.subr.mxu0 0.0
      %5087 = vmatpush1.msra.mxu0 0.0
      %5088 = vmatprep.subr.mxu0 0.0
      %5089 = vmatpush1.msra.mxu0 0.0
      %5090 = vmatprep.subr.mxu0 0.0
      %5091 = vmatpush1.msra.mxu0 0.0
      %5092 = vmatprep.subr.mxu0 0.0
      %5093 = vmatpush1.msra.mxu0 0.0
      %5094 = vmatprep.subr.mxu0 0.0
      %5095 = vmatpush1.msra.mxu0 0.0
      %5096 = vmatprep.mubr.f32.mxu0 0.0
      %v5097 = vand.u32 %v1665, 4294901760
      %v5098 = vsub.f32 %v1665, %v5097
      %5099 = vmatmul.mubr.f32.gmra.mrb[0].mxu0 %v5098
      %v5100 = vpop.f32.mrb[0].mxu0
      %v5101 = vadd.f32 %v4835, %v5100
      %v5102 = vpop.f32.mrb[0].mxu0
      %5103 = vmatprep.mubr.f32.mxu0 0.0
      %v5104 = vand.u32 %v1668, 4294901760
      %v5105 = vsub.f32 %v1668, %v5104
      %5106 = vmatmul.mubr.f32.gmra.mrb[0].mxu0 %v5105
      %v5107 = vpop.f32.mrb[0].mxu0
      %v5108 = vadd.f32 %v4841, %v5107
      %v5109 = vpop.f32.mrb[0].mxu0
      %5110 = vmatprep.mubr.f32.mxu0 0.0
      %v5111 = vand.u32 %v1671, 4294901760
      %v5112 = vsub.f32 %v1671, %v5111
      %5113 = vmatmul.mubr.f32.gmra.mrb[0].mxu0 %v5112
      %v5114 = vpop.f32.mrb[0].mxu0
      %v5115 = vadd.f32 %v4847, %v5114
      %v5116 = vpop.f32.mrb[0].mxu0
      %5117 = vmatprep.mubr.f32.mxu0 0.0
      %v5118 = vand.u32 %v1674, 4294901760
      %v5119 = vsub.f32 %v1674, %v5118
      %5120 = vmatmul.mubr.f32.gmra.mrb[0].mxu0 %v5119
      %v5121 = vpop.f32.mrb[0].mxu0
      %v5122 = vadd.f32 %v4853, %v5121
      %v5123 = vpop.f32.mrb[0].mxu0
      %5124 = vmatprep.mubr.f32.mxu0 0.0
      %v5125 = vand.u32 %v1677, 4294901760
      %v5126 = vsub.f32 %v1677, %v5125
      %5127 = vmatmul.mubr.f32.gmra.mrb[0].mxu0 %v5126
      %v5128 = vpop.f32.mrb[0].mxu0
      %v5129 = vadd.f32 %v4859, %v5128
      %v5130 = vpop.f32.mrb[0].mxu0
      %5131 = vmatprep.mubr.f32.mxu0 0.0
      %v5132 = vand.u32 %v1680, 4294901760
      %v5133 = vsub.f32 %v1680, %v5132
      %5134 = vmatmul.mubr.f32.gmra.mrb[0].mxu0 %v5133
      %v5135 = vpop.f32.mrb[0].mxu0
      %v5136 = vadd.f32 %v4865, %v5135
      %v5137 = vpop.f32.mrb[0].mxu0
      %5138 = vmatprep.mubr.f32.mxu0 0.0
      %v5139 = vand.u32 %v1683, 4294901760
      %v5140 = vsub.f32 %v1683, %v5139
      %5141 = vmatmul.mubr.f32.gmra.mrb[0].mxu0 %v5140
      %v5142 = vpop.f32.mrb[0].mxu0
      %v5143 = vadd.f32 %v4871, %v5142
      %v5144 = vpop.f32.mrb[0].mxu0
      %5145 = vmatprep.mubr.f32.mxu0 0.0
      %v5146 = vand.u32 %v1686, 4294901760
      %v5147 = vsub.f32 %v1686, %v5146
      %5148 = vmatmul.mubr.f32.gmra.mrb[0].mxu0 %v5147
      %v5149 = vpop.f32.mrb[0].mxu0
      %v5150 = vadd.f32 %v4877, %v5149
      %v5151 = vpop.f32.mrb[0].mxu0
      %5152 = vmatprep.mubr.f32.mxu0 0.0
      %v5153 = vand.u32 %v1689, 4294901760
      %v5154 = vsub.f32 %v1689, %v5153
      %5155 = vmatmul.mubr.f32.gmra.mrb[0].mxu0 %v5154
      %v5156 = vpop.f32.mrb[0].mxu0
      %v5157 = vadd.f32 %v4883, %v5156
      %v5158 = vpop.f32.mrb[0].mxu0
      %5159 = vmatprep.mubr.f32.mxu0 0.0
      %v5160 = vand.u32 %v1692, 4294901760
      %v5161 = vsub.f32 %v1692, %v5160
      %5162 = vmatmul.mubr.f32.gmra.mrb[0].mxu0 %v5161
      %v5163 = vpop.f32.mrb[0].mxu0
      %v5164 = vadd.f32 %v4889, %v5163
      %v5165 = vpop.f32.mrb[0].mxu0
      %5166 = vmatprep.mubr.f32.mxu0 0.0
      %v5167 = vand.u32 %v1695, 4294901760
      %v5168 = vsub.f32 %v1695, %v5167
      %5169 = vmatmul.mubr.f32.gmra.mrb[0].mxu0 %v5168
      %v5170 = vpop.f32.mrb[0].mxu0
      %v5171 = vadd.f32 %v4895, %v5170
      %v5172 = vpop.f32.mrb[0].mxu0
      %5173 = vmatprep.mubr.f32.mxu0 0.0
      %v5174 = vand.u32 %v1698, 4294901760
      %v5175 = vsub.f32 %v1698, %v5174
      %5176 = vmatmul.mubr.f32.gmra.mrb[0].mxu0 %v5175
      %v5177 = vpop.f32.mrb[0].mxu0
      %v5178 = vadd.f32 %v4901, %v5177
      %v5179 = vpop.f32.mrb[0].mxu0
      %5180 = vmatprep.mubr.f32.mxu0 0.0
      %v5181 = vand.u32 %v1701, 4294901760
      %v5182 = vsub.f32 %v1701, %v5181
      %5183 = vmatmul.mubr.f32.gmra.mrb[0].mxu0 %v5182
      %v5184 = vpop.f32.mrb[0].mxu0
      %v5185 = vadd.f32 %v4907, %v5184
      %v5186 = vpop.f32.mrb[0].mxu0
      %5187 = vmatprep.mubr.f32.mxu0 0.0
      %v5188 = vand.u32 %v1704, 4294901760
      %v5189 = vsub.f32 %v1704, %v5188
      %5190 = vmatmul.mubr.f32.gmra.mrb[0].mxu0 %v5189
      %v5191 = vpop.f32.mrb[0].mxu0
      %v5192 = vadd.f32 %v4913, %v5191
      %v5193 = vpop.f32.mrb[0].mxu0
      %5194 = vmatprep.mubr.f32.mxu0 0.0
      %v5195 = vand.u32 %v1707, 4294901760
      %v5196 = vsub.f32 %v1707, %v5195
      %5197 = vmatmul.mubr.f32.gmra.mrb[0].mxu0 %v5196
      %v5198 = vpop.f32.mrb[0].mxu0
      %v5199 = vadd.f32 %v4919, %v5198
      %v5200 = vpop.f32.mrb[0].mxu0
      %5201 = vmatprep.mubr.f32.mxu0 0.0
      %v5202 = vand.u32 %v1710, 4294901760
      %v5203 = vsub.f32 %v1710, %v5202
      %5204 = vmatmul.mubr.f32.gmra.mrb[0].mxu0 %v5203
      %v5205 = vpop.f32.mrb[0].mxu0
      %v5206 = vadd.f32 %v4925, %v5205
      %v5207 = vpop.f32.mrb[0].mxu0
      %5208 = vmatprep.mubr.f32.mxu0 0.0
      %v5209 = vand.u32 %v1713, 4294901760
      %v5210 = vsub.f32 %v1713, %v5209
      %5211 = vmatmul.mubr.f32.gmra.mrb[0].mxu0 %v5210
      %v5212 = vpop.f32.mrb[0].mxu0
      %v5213 = vadd.f32 %v4931, %v5212
      %v5214 = vpop.f32.mrb[0].mxu0
      %5215 = vmatprep.mubr.f32.mxu0 0.0
      %v5216 = vand.u32 %v1716, 4294901760
      %v5217 = vsub.f32 %v1716, %v5216
      %5218 = vmatmul.mubr.f32.gmra.mrb[0].mxu0 %v5217
      %v5219 = vpop.f32.mrb[0].mxu0
      %v5220 = vadd.f32 %v4937, %v5219
      %v5221 = vpop.f32.mrb[0].mxu0
      %5222 = vmatprep.mubr.f32.mxu0 0.0
      %v5223 = vand.u32 %v1719, 4294901760
      %v5224 = vsub.f32 %v1719, %v5223
      %5225 = vmatmul.mubr.f32.gmra.mrb[0].mxu0 %v5224
      %v5226 = vpop.f32.mrb[0].mxu0
      %v5227 = vadd.f32 %v4943, %v5226
      %v5228 = vpop.f32.mrb[0].mxu0
      %5229 = vmatprep.mubr.f32.mxu0 0.0
      %v5230 = vand.u32 %v1722, 4294901760
      %v5231 = vsub.f32 %v1722, %v5230
      %5232 = vmatmul.mubr.f32.gmra.mrb[0].mxu0 %v5231
      %v5233 = vpop.f32.mrb[0].mxu0
      %v5234 = vadd.f32 %v4949, %v5233
      %v5235 = vpop.f32.mrb[0].mxu0
      %5236 = vmatprep.mubr.f32.mxu0 0.0
      %v5237 = vand.u32 %v1725, 4294901760
      %v5238 = vsub.f32 %v1725, %v5237
      %5239 = vmatmul.mubr.f32.gmra.mrb[0].mxu0 %v5238
      %v5240 = vpop.f32.mrb[0].mxu0
      %v5241 = vadd.f32 %v4955, %v5240
      %v5242 = vpop.f32.mrb[0].mxu0
      %5243 = vmatprep.mubr.f32.mxu0 0.0
      %v5244 = vand.u32 %v1728, 4294901760
      %v5245 = vsub.f32 %v1728, %v5244
      %5246 = vmatmul.mubr.f32.gmra.mrb[0].mxu0 %v5245
      %v5247 = vpop.f32.mrb[0].mxu0
      %v5248 = vadd.f32 %v4961, %v5247
      %v5249 = vpop.f32.mrb[0].mxu0
      %5250 = vmatprep.mubr.f32.mxu0 0.0
      %v5251 = vand.u32 %v1731, 4294901760
      %v5252 = vsub.f32 %v1731, %v5251
      %5253 = vmatmul.mubr.f32.gmra.mrb[0].mxu0 %v5252
      %v5254 = vpop.f32.mrb[0].mxu0
      %v5255 = vadd.f32 %v4967, %v5254
      %v5256 = vpop.f32.mrb[0].mxu0
      %5257 = vmatprep.mubr.f32.mxu0 0.0
      %v5258 = vand.u32 %v1734, 4294901760
      %v5259 = vsub.f32 %v1734, %v5258
      %5260 = vmatmul.mubr.f32.gmra.mrb[0].mxu0 %v5259
      %v5261 = vpop.f32.mrb[0].mxu0
      %v5262 = vadd.f32 %v4973, %v5261
      %v5263 = vpop.f32.mrb[0].mxu0
      %5264 = vmatprep.mubr.f32.mxu0 0.0
      %v5265 = vand.u32 %v1737, 4294901760
      %v5266 = vsub.f32 %v1737, %v5265
      %5267 = vmatmul.mubr.f32.gmra.mrb[0].mxu0 %v5266
      %v5268 = vpop.f32.mrb[0].mxu0
      %v5269 = vadd.f32 %v4979, %v5268
      %v5270 = vpop.f32.mrb[0].mxu0
      %5271 = vmatprep.mubr.f32.mxu0 0.0
      %v5272 = vand.u32 %v1740, 4294901760
      %v5273 = vsub.f32 %v1740, %v5272
      %5274 = vmatmul.mubr.f32.gmra.mrb[0].mxu0 %v5273
      %v5275 = vpop.f32.mrb[0].mxu0
      %v5276 = vadd.f32 %v4985, %v5275
      %v5277 = vpop.f32.mrb[0].mxu0
      %5278 = vmatprep.mubr.f32.mxu0 0.0
      %v5279 = vand.u32 %v1743, 4294901760
      %v5280 = vsub.f32 %v1743, %v5279
      %5281 = vmatmul.mubr.f32.gmra.mrb[0].mxu0 %v5280
      %v5282 = vpop.f32.mrb[0].mxu0
      %v5283 = vadd.f32 %v4991, %v5282
      %v5284 = vpop.f32.mrb[0].mxu0
      %5285 = vmatprep.mubr.f32.mxu0 0.0
      %v5286 = vand.u32 %v1746, 4294901760
      %v5287 = vsub.f32 %v1746, %v5286
      %5288 = vmatmul.mubr.f32.gmra.mrb[0].mxu0 %v5287
      %v5289 = vpop.f32.mrb[0].mxu0
      %v5290 = vadd.f32 %v4997, %v5289
      %v5291 = vpop.f32.mrb[0].mxu0
      %5292 = vmatprep.mubr.f32.mxu0 0.0
      %v5293 = vand.u32 %v1749, 4294901760
      %v5294 = vsub.f32 %v1749, %v5293
      %5295 = vmatmul.mubr.f32.gmra.mrb[0].mxu0 %v5294
      %v5296 = vpop.f32.mrb[0].mxu0
      %v5297 = vadd.f32 %v5003, %v5296
      %v5298 = vpop.f32.mrb[0].mxu0
      %5299 = vmatprep.mubr.f32.mxu0 0.0
      %v5300 = vand.u32 %v1752, 4294901760
      %v5301 = vsub.f32 %v1752, %v5300
      %5302 = vmatmul.mubr.f32.gmra.mrb[0].mxu0 %v5301
      %v5303 = vpop.f32.mrb[0].mxu0
      %v5304 = vadd.f32 %v5009, %v5303
      %v5305 = vpop.f32.mrb[0].mxu0
      %5306 = vmatprep.mubr.f32.mxu0 0.0
      %v5307 = vand.u32 %v1755, 4294901760
      %v5308 = vsub.f32 %v1755, %v5307
      %5309 = vmatmul.mubr.f32.gmra.mrb[0].mxu0 %v5308
      %v5310 = vpop.f32.mrb[0].mxu0
      %v5311 = vadd.f32 %v5015, %v5310
      %v5312 = vpop.f32.mrb[0].mxu0
      %5313 = vmatprep.mubr.f32.mxu0 0.0
      %v5314 = vand.u32 %v1758, 4294901760
      %v5315 = vsub.f32 %v1758, %v5314
      %5316 = vmatmul.mubr.f32.gmra.mrb[0].mxu0 %v5315
      %v5317 = vpop.f32.mrb[0].mxu0
      %v5318 = vadd.f32 %v5021, %v5317
      %v5319 = vpop.f32.mrb[0].mxu0
      %5320 = vdwg.mxu0
      %5321 = vmatprep.subr.mxu0 0.0
      %v5322 = vand.u32 %v1660, 4294901760
      %5323 = vmatpush1.msra.mxu0 %v5322
      %5324 = vmatprep.subr.mxu0 0.0
      %v5325 = vand.u32 %v1661, 4294901760
      %5326 = vmatpush1.msra.mxu0 %v5325
      %5327 = vmatprep.subr.mxu0 0.0
      %v5328 = vand.u32 %v1662, 4294901760
      %5329 = vmatpush1.msra.mxu0 %v5328
      %5330 = vmatprep.subr.mxu0 0.0
      %v5331 = vand.u32 %v1663, 4294901760
      %5332 = vmatpush1.msra.mxu0 %v5331
      %5333 = vmatprep.subr.mxu0 0.0
      %5334 = vmatpush1.msra.mxu0 0.0
      %5335 = vmatprep.subr.mxu0 0.0
      %5336 = vmatpush1.msra.mxu0 0.0
      %5337 = vmatprep.subr.mxu0 0.0
      %5338 = vmatpush1.msra.mxu0 0.0
      %5339 = vmatprep.subr.mxu0 0.0
      %5340 = vmatpush1.msra.mxu0 0.0
      %5341 = vmatprep.subr.mxu0 0.0
      %5342 = vmatpush1.msra.mxu0 0.0
      %5343 = vmatprep.subr.mxu0 0.0
      %5344 = vmatpush1.msra.mxu0 0.0
      %5345 = vmatprep.subr.mxu0 0.0
      %5346 = vmatpush1.msra.mxu0 0.0
      %5347 = vmatprep.subr.mxu0 0.0
      %5348 = vmatpush1.msra.mxu0 0.0
      %5349 = vmatprep.subr.mxu0 0.0
      %5350 = vmatpush1.msra.mxu0 0.0
      %5351 = vmatprep.subr.mxu0 0.0
      %5352 = vmatpush1.msra.mxu0 0.0
      %5353 = vmatprep.subr.mxu0 0.0
      %5354 = vmatpush1.msra.mxu0 0.0
      %5355 = vmatprep.subr.mxu0 0.0
      %5356 = vmatpush1.msra.mxu0 0.0
      %5357 = vmatprep.subr.mxu0 0.0
      %5358 = vmatpush1.msra.mxu0 0.0
      %5359 = vmatprep.subr.mxu0 0.0
      %5360 = vmatpush1.msra.mxu0 0.0
      %5361 = vmatprep.subr.mxu0 0.0
      %5362 = vmatpush1.msra.mxu0 0.0
      %5363 = vmatprep.subr.mxu0 0.0
      %5364 = vmatpush1.msra.mxu0 0.0
      %5365 = vmatprep.subr.mxu0 0.0
      %5366 = vmatpush1.msra.mxu0 0.0
      %5367 = vmatprep.subr.mxu0 0.0
      %5368 = vmatpush1.msra.mxu0 0.0
      %5369 = vmatprep.subr.mxu0 0.0
      %5370 = vmatpush1.msra.mxu0 0.0
      %5371 = vmatprep.subr.mxu0 0.0
      %5372 = vmatpush1.msra.mxu0 0.0
      %5373 = vmatprep.subr.mxu0 0.0
      %5374 = vmatpush1.msra.mxu0 0.0
      %5375 = vmatprep.subr.mxu0 0.0
      %5376 = vmatpush1.msra.mxu0 0.0
      %5377 = vmatprep.subr.mxu0 0.0
      %5378 = vmatpush1.msra.mxu0 0.0
      %5379 = vmatprep.subr.mxu0 0.0
      %5380 = vmatpush1.msra.mxu0 0.0
      %5381 = vmatprep.subr.mxu0 0.0
      %5382 = vmatpush1.msra.mxu0 0.0
      %5383 = vmatprep.subr.mxu0 0.0
      %5384 = vmatpush1.msra.mxu0 0.0
      %5385 = vmatprep.subr.mxu0 0.0
      %5386 = vmatpush1.msra.mxu0 0.0
      %5387 = vmatprep.subr.mxu0 0.0
      %5388 = vmatpush1.msra.mxu0 0.0
      %5389 = vmatprep.mubr.f32.mxu0 0.0
      %v5390 = vand.u32 %v1665, 4294901760
      %v5391 = vsub.f32 %v1665, %v5390
      %v5392 = vand.u32 %v5391, 4294901760
      %5393 = vmatmul.mubr.f32.gmra.mrb[0].mxu0 %v5392
      %v5394 = vpop.f32.mrb[0].mxu0
      %v5395 = vadd.f32 %v5101, %v5394
      %v5396 = vpop.f32.mrb[0].mxu0
      %5397 = vmatprep.mubr.f32.mxu0 0.0
      %v5398 = vand.u32 %v1668, 4294901760
      %v5399 = vsub.f32 %v1668, %v5398
      %v5400 = vand.u32 %v5399, 4294901760
      %5401 = vmatmul.mubr.f32.gmra.mrb[0].mxu0 %v5400
      %v5402 = vpop.f32.mrb[0].mxu0
      %v5403 = vadd.f32 %v5108, %v5402
      %v5404 = vpop.f32.mrb[0].mxu0
      %5405 = vmatprep.mubr.f32.mxu0 0.0
      %v5406 = vand.u32 %v1671, 4294901760
      %v5407 = vsub.f32 %v1671, %v5406
      %v5408 = vand.u32 %v5407, 4294901760
      %5409 = vmatmul.mubr.f32.gmra.mrb[0].mxu0 %v5408
      %v5410 = vpop.f32.mrb[0].mxu0
      %v5411 = vadd.f32 %v5115, %v5410
      %v5412 = vpop.f32.mrb[0].mxu0
      %5413 = vmatprep.mubr.f32.mxu0 0.0
      %v5414 = vand.u32 %v1674, 4294901760
      %v5415 = vsub.f32 %v1674, %v5414
      %v5416 = vand.u32 %v5415, 4294901760
      %5417 = vmatmul.mubr.f32.gmra.mrb[0].mxu0 %v5416
      %v5418 = vpop.f32.mrb[0].mxu0
      %v5419 = vadd.f32 %v5122, %v5418
      %v5420 = vpop.f32.mrb[0].mxu0
      %5421 = vmatprep.mubr.f32.mxu0 0.0
      %v5422 = vand.u32 %v1677, 4294901760
      %v5423 = vsub.f32 %v1677, %v5422
      %v5424 = vand.u32 %v5423, 4294901760
      %5425 = vmatmul.mubr.f32.gmra.mrb[0].mxu0 %v5424
      %v5426 = vpop.f32.mrb[0].mxu0
      %v5427 = vadd.f32 %v5129, %v5426
      %v5428 = vpop.f32.mrb[0].mxu0
      %5429 = vmatprep.mubr.f32.mxu0 0.0
      %v5430 = vand.u32 %v1680, 4294901760
      %v5431 = vsub.f32 %v1680, %v5430
      %v5432 = vand.u32 %v5431, 4294901760
      %5433 = vmatmul.mubr.f32.gmra.mrb[0].mxu0 %v5432
      %v5434 = vpop.f32.mrb[0].mxu0
      %v5435 = vadd.f32 %v5136, %v5434
      %v5436 = vpop.f32.mrb[0].mxu0
      %5437 = vmatprep.mubr.f32.mxu0 0.0
      %v5438 = vand.u32 %v1683, 4294901760
      %v5439 = vsub.f32 %v1683, %v5438
      %v5440 = vand.u32 %v5439, 4294901760
      %5441 = vmatmul.mubr.f32.gmra.mrb[0].mxu0 %v5440
      %v5442 = vpop.f32.mrb[0].mxu0
      %v5443 = vadd.f32 %v5143, %v5442
      %v5444 = vpop.f32.mrb[0].mxu0
      %5445 = vmatprep.mubr.f32.mxu0 0.0
      %v5446 = vand.u32 %v1686, 4294901760
      %v5447 = vsub.f32 %v1686, %v5446
      %v5448 = vand.u32 %v5447, 4294901760
      %5449 = vmatmul.mubr.f32.gmra.mrb[0].mxu0 %v5448
      %v5450 = vpop.f32.mrb[0].mxu0
      %v5451 = vadd.f32 %v5150, %v5450
      %v5452 = vpop.f32.mrb[0].mxu0
      %5453 = vmatprep.mubr.f32.mxu0 0.0
      %v5454 = vand.u32 %v1689, 4294901760
      %v5455 = vsub.f32 %v1689, %v5454
      %v5456 = vand.u32 %v5455, 4294901760
      %5457 = vmatmul.mubr.f32.gmra.mrb[0].mxu0 %v5456
      %v5458 = vpop.f32.mrb[0].mxu0
      %v5459 = vadd.f32 %v5157, %v5458
      %v5460 = vpop.f32.mrb[0].mxu0
      %5461 = vmatprep.mubr.f32.mxu0 0.0
      %v5462 = vand.u32 %v1692, 4294901760
      %v5463 = vsub.f32 %v1692, %v5462
      %v5464 = vand.u32 %v5463, 4294901760
      %5465 = vmatmul.mubr.f32.gmra.mrb[0].mxu0 %v5464
      %v5466 = vpop.f32.mrb[0].mxu0
      %v5467 = vadd.f32 %v5164, %v5466
      %v5468 = vpop.f32.mrb[0].mxu0
      %5469 = vmatprep.mubr.f32.mxu0 0.0
      %v5470 = vand.u32 %v1695, 4294901760
      %v5471 = vsub.f32 %v1695, %v5470
      %v5472 = vand.u32 %v5471, 4294901760
      %5473 = vmatmul.mubr.f32.gmra.mrb[0].mxu0 %v5472
      %v5474 = vpop.f32.mrb[0].mxu0
      %v5475 = vadd.f32 %v5171, %v5474
      %v5476 = vpop.f32.mrb[0].mxu0
      %5477 = vmatprep.mubr.f32.mxu0 0.0
      %v5478 = vand.u32 %v1698, 4294901760
      %v5479 = vsub.f32 %v1698, %v5478
      %v5480 = vand.u32 %v5479, 4294901760
      %5481 = vmatmul.mubr.f32.gmra.mrb[0].mxu0 %v5480
      %v5482 = vpop.f32.mrb[0].mxu0
      %v5483 = vadd.f32 %v5178, %v5482
      %v5484 = vpop.f32.mrb[0].mxu0
      %5485 = vmatprep.mubr.f32.mxu0 0.0
      %v5486 = vand.u32 %v1701, 4294901760
      %v5487 = vsub.f32 %v1701, %v5486
      %v5488 = vand.u32 %v5487, 4294901760
      %5489 = vmatmul.mubr.f32.gmra.mrb[0].mxu0 %v5488
      %v5490 = vpop.f32.mrb[0].mxu0
      %v5491 = vadd.f32 %v5185, %v5490
      %v5492 = vpop.f32.mrb[0].mxu0
      %5493 = vmatprep.mubr.f32.mxu0 0.0
      %v5494 = vand.u32 %v1704, 4294901760
      %v5495 = vsub.f32 %v1704, %v5494
      %v5496 = vand.u32 %v5495, 4294901760
      %5497 = vmatmul.mubr.f32.gmra.mrb[0].mxu0 %v5496
      %v5498 = vpop.f32.mrb[0].mxu0
      %v5499 = vadd.f32 %v5192, %v5498
      %v5500 = vpop.f32.mrb[0].mxu0
      %5501 = vmatprep.mubr.f32.mxu0 0.0
      %v5502 = vand.u32 %v1707, 4294901760
      %v5503 = vsub.f32 %v1707, %v5502
      %v5504 = vand.u32 %v5503, 4294901760
      %5505 = vmatmul.mubr.f32.gmra.mrb[0].mxu0 %v5504
      %v5506 = vpop.f32.mrb[0].mxu0
      %v5507 = vadd.f32 %v5199, %v5506
      %v5508 = vpop.f32.mrb[0].mxu0
      %5509 = vmatprep.mubr.f32.mxu0 0.0
      %v5510 = vand.u32 %v1710, 4294901760
      %v5511 = vsub.f32 %v1710, %v5510
      %v5512 = vand.u32 %v5511, 4294901760
      %5513 = vmatmul.mubr.f32.gmra.mrb[0].mxu0 %v5512
      %v5514 = vpop.f32.mrb[0].mxu0
      %v5515 = vadd.f32 %v5206, %v5514
      %v5516 = vpop.f32.mrb[0].mxu0
      %5517 = vmatprep.mubr.f32.mxu0 0.0
      %v5518 = vand.u32 %v1713, 4294901760
      %v5519 = vsub.f32 %v1713, %v5518
      %v5520 = vand.u32 %v5519, 4294901760
      %5521 = vmatmul.mubr.f32.gmra.mrb[0].mxu0 %v5520
      %v5522 = vpop.f32.mrb[0].mxu0
      %v5523 = vadd.f32 %v5213, %v5522
      %v5524 = vpop.f32.mrb[0].mxu0
      %5525 = vmatprep.mubr.f32.mxu0 0.0
      %v5526 = vand.u32 %v1716, 4294901760
      %v5527 = vsub.f32 %v1716, %v5526
      %v5528 = vand.u32 %v5527, 4294901760
      %5529 = vmatmul.mubr.f32.gmra.mrb[0].mxu0 %v5528
      %v5530 = vpop.f32.mrb[0].mxu0
      %v5531 = vadd.f32 %v5220, %v5530
      %v5532 = vpop.f32.mrb[0].mxu0
      %5533 = vmatprep.mubr.f32.mxu0 0.0
      %v5534 = vand.u32 %v1719, 4294901760
      %v5535 = vsub.f32 %v1719, %v5534
      %v5536 = vand.u32 %v5535, 4294901760
      %5537 = vmatmul.mubr.f32.gmra.mrb[0].mxu0 %v5536
      %v5538 = vpop.f32.mrb[0].mxu0
      %v5539 = vadd.f32 %v5227, %v5538
      %v5540 = vpop.f32.mrb[0].mxu0
      %5541 = vmatprep.mubr.f32.mxu0 0.0
      %v5542 = vand.u32 %v1722, 4294901760
      %v5543 = vsub.f32 %v1722, %v5542
      %v5544 = vand.u32 %v5543, 4294901760
      %5545 = vmatmul.mubr.f32.gmra.mrb[0].mxu0 %v5544
      %v5546 = vpop.f32.mrb[0].mxu0
      %v5547 = vadd.f32 %v5234, %v5546
      %v5548 = vpop.f32.mrb[0].mxu0
      %5549 = vmatprep.mubr.f32.mxu0 0.0
      %v5550 = vand.u32 %v1725, 4294901760
      %v5551 = vsub.f32 %v1725, %v5550
      %v5552 = vand.u32 %v5551, 4294901760
      %5553 = vmatmul.mubr.f32.gmra.mrb[0].mxu0 %v5552
      %v5554 = vpop.f32.mrb[0].mxu0
      %v5555 = vadd.f32 %v5241, %v5554
      %v5556 = vpop.f32.mrb[0].mxu0
      %5557 = vmatprep.mubr.f32.mxu0 0.0
      %v5558 = vand.u32 %v1728, 4294901760
      %v5559 = vsub.f32 %v1728, %v5558
      %v5560 = vand.u32 %v5559, 4294901760
      %5561 = vmatmul.mubr.f32.gmra.mrb[0].mxu0 %v5560
      %v5562 = vpop.f32.mrb[0].mxu0
      %v5563 = vadd.f32 %v5248, %v5562
      %v5564 = vpop.f32.mrb[0].mxu0
      %5565 = vmatprep.mubr.f32.mxu0 0.0
      %v5566 = vand.u32 %v1731, 4294901760
      %v5567 = vsub.f32 %v1731, %v5566
      %v5568 = vand.u32 %v5567, 4294901760
      %5569 = vmatmul.mubr.f32.gmra.mrb[0].mxu0 %v5568
      %v5570 = vpop.f32.mrb[0].mxu0
      %v5571 = vadd.f32 %v5255, %v5570
      %v5572 = vpop.f32.mrb[0].mxu0
      %5573 = vmatprep.mubr.f32.mxu0 0.0
      %v5574 = vand.u32 %v1734, 4294901760
      %v5575 = vsub.f32 %v1734, %v5574
      %v5576 = vand.u32 %v5575, 4294901760
      %5577 = vmatmul.mubr.f32.gmra.mrb[0].mxu0 %v5576
      %v5578 = vpop.f32.mrb[0].mxu0
      %v5579 = vadd.f32 %v5262, %v5578
      %v5580 = vpop.f32.mrb[0].mxu0
      %5581 = vmatprep.mubr.f32.mxu0 0.0
      %v5582 = vand.u32 %v1737, 4294901760
      %v5583 = vsub.f32 %v1737, %v5582
      %v5584 = vand.u32 %v5583, 4294901760
      %5585 = vmatmul.mubr.f32.gmra.mrb[0].mxu0 %v5584
      %v5586 = vpop.f32.mrb[0].mxu0
      %v5587 = vadd.f32 %v5269, %v5586
      %v5588 = vpop.f32.mrb[0].mxu0
      %5589 = vmatprep.mubr.f32.mxu0 0.0
      %v5590 = vand.u32 %v1740, 4294901760
      %v5591 = vsub.f32 %v1740, %v5590
      %v5592 = vand.u32 %v5591, 4294901760
      %5593 = vmatmul.mubr.f32.gmra.mrb[0].mxu0 %v5592
      %v5594 = vpop.f32.mrb[0].mxu0
      %v5595 = vadd.f32 %v5276, %v5594
      %v5596 = vpop.f32.mrb[0].mxu0
      %5597 = vmatprep.mubr.f32.mxu0 0.0
      %v5598 = vand.u32 %v1743, 4294901760
      %v5599 = vsub.f32 %v1743, %v5598
      %v5600 = vand.u32 %v5599, 4294901760
      %5601 = vmatmul.mubr.f32.gmra.mrb[0].mxu0 %v5600
      %v5602 = vpop.f32.mrb[0].mxu0
      %v5603 = vadd.f32 %v5283, %v5602
      %v5604 = vpop.f32.mrb[0].mxu0
      %5605 = vmatprep.mubr.f32.mxu0 0.0
      %v5606 = vand.u32 %v1746, 4294901760
      %v5607 = vsub.f32 %v1746, %v5606
      %v5608 = vand.u32 %v5607, 4294901760
      %5609 = vmatmul.mubr.f32.gmra.mrb[0].mxu0 %v5608
      %v5610 = vpop.f32.mrb[0].mxu0
      %v5611 = vadd.f32 %v5290, %v5610
      %v5612 = vpop.f32.mrb[0].mxu0
      %5613 = vmatprep.mubr.f32.mxu0 0.0
      %v5614 = vand.u32 %v1749, 4294901760
      %v5615 = vsub.f32 %v1749, %v5614
      %v5616 = vand.u32 %v5615, 4294901760
      %5617 = vmatmul.mubr.f32.gmra.mrb[0].mxu0 %v5616
      %v5618 = vpop.f32.mrb[0].mxu0
      %v5619 = vadd.f32 %v5297, %v5618
      %v5620 = vpop.f32.mrb[0].mxu0
      %5621 = vmatprep.mubr.f32.mxu0 0.0
      %v5622 = vand.u32 %v1752, 4294901760
      %v5623 = vsub.f32 %v1752, %v5622
      %v5624 = vand.u32 %v5623, 4294901760
      %5625 = vmatmul.mubr.f32.gmra.mrb[0].mxu0 %v5624
      %v5626 = vpop.f32.mrb[0].mxu0
      %v5627 = vadd.f32 %v5304, %v5626
      %v5628 = vpop.f32.mrb[0].mxu0
      %5629 = vmatprep.mubr.f32.mxu0 0.0
      %v5630 = vand.u32 %v1755, 4294901760
      %v5631 = vsub.f32 %v1755, %v5630
      %v5632 = vand.u32 %v5631, 4294901760
      %5633 = vmatmul.mubr.f32.gmra.mrb[0].mxu0 %v5632
      %v5634 = vpop.f32.mrb[0].mxu0
      %v5635 = vadd.f32 %v5311, %v5634
      %v5636 = vpop.f32.mrb[0].mxu0
      %5637 = vmatprep.mubr.f32.mxu0 0.0
      %v5638 = vand.u32 %v1758, 4294901760
      %v5639 = vsub.f32 %v1758, %v5638
      %v5640 = vand.u32 %v5639, 4294901760
      %5641 = vmatmul.mubr.f32.gmra.mrb[0].mxu0 %v5640
      %v5642 = vpop.f32.mrb[0].mxu0
      %v5643 = vadd.f32 %v5318, %v5642
      %v5644 = vpop.f32.mrb[0].mxu0
      %5645 = vdwg.mxu0
      %5646 = vmatprep.subr.mxu0 0.0
      %v5647 = vand.u32 %v1660, 4294901760
      %v5648 = vsub.f32 %v1660, %v5647
      %v5649 = vand.u32 %v5648, 4294901760
      %5650 = vmatpush1.msra.mxu0 %v5649
      %5651 = vmatprep.subr.mxu0 0.0
      %v5652 = vand.u32 %v1661, 4294901760
      %v5653 = vsub.f32 %v1661, %v5652
      %v5654 = vand.u32 %v5653, 4294901760
      %5655 = vmatpush1.msra.mxu0 %v5654
      %5656 = vmatprep.subr.mxu0 0.0
      %v5657 = vand.u32 %v1662, 4294901760
      %v5658 = vsub.f32 %v1662, %v5657
      %v5659 = vand.u32 %v5658, 4294901760
      %5660 = vmatpush1.msra.mxu0 %v5659
      %5661 = vmatprep.subr.mxu0 0.0
      %v5662 = vand.u32 %v1663, 4294901760
      %v5663 = vsub.f32 %v1663, %v5662
      %v5664 = vand.u32 %v5663, 4294901760
      %5665 = vmatpush1.msra.mxu0 %v5664
      %5666 = vmatprep.subr.mxu0 0.0
      %5667 = vmatpush1.msra.mxu0 0.0
      %5668 = vmatprep.subr.mxu0 0.0
      %5669 = vmatpush1.msra.mxu0 0.0
      %5670 = vmatprep.subr.mxu0 0.0
      %5671 = vmatpush1.msra.mxu0 0.0
      %5672 = vmatprep.subr.mxu0 0.0
      %5673 = vmatpush1.msra.mxu0 0.0
      %5674 = vmatprep.subr.mxu0 0.0
      %5675 = vmatpush1.msra.mxu0 0.0
      %5676 = vmatprep.subr.mxu0 0.0
      %5677 = vmatpush1.msra.mxu0 0.0
      %5678 = vmatprep.subr.mxu0 0.0
      %5679 = vmatpush1.msra.mxu0 0.0
      %5680 = vmatprep.subr.mxu0 0.0
      %5681 = vmatpush1.msra.mxu0 0.0
      %5682 = vmatprep.subr.mxu0 0.0
      %5683 = vmatpush1.msra.mxu0 0.0
      %5684 = vmatprep.subr.mxu0 0.0
      %5685 = vmatpush1.msra.mxu0 0.0
      %5686 = vmatprep.subr.mxu0 0.0
      %5687 = vmatpush1.msra.mxu0 0.0
      %5688 = vmatprep.subr.mxu0 0.0
      %5689 = vmatpush1.msra.mxu0 0.0
      %5690 = vmatprep.subr.mxu0 0.0
      %5691 = vmatpush1.msra.mxu0 0.0
      %5692 = vmatprep.subr.mxu0 0.0
      %5693 = vmatpush1.msra.mxu0 0.0
      %5694 = vmatprep.subr.mxu0 0.0
      %5695 = vmatpush1.msra.mxu0 0.0
      %5696 = vmatprep.subr.mxu0 0.0
      %5697 = vmatpush1.msra.mxu0 0.0
      %5698 = vmatprep.subr.mxu0 0.0
      %5699 = vmatpush1.msra.mxu0 0.0
      %5700 = vmatprep.subr.mxu0 0.0
      %5701 = vmatpush1.msra.mxu0 0.0
      %5702 = vmatprep.subr.mxu0 0.0
      %5703 = vmatpush1.msra.mxu0 0.0
      %5704 = vmatprep.subr.mxu0 0.0
      %5705 = vmatpush1.msra.mxu0 0.0
      %5706 = vmatprep.subr.mxu0 0.0
      %5707 = vmatpush1.msra.mxu0 0.0
      %5708 = vmatprep.subr.mxu0 0.0
      %5709 = vmatpush1.msra.mxu0 0.0
      %5710 = vmatprep.subr.mxu0 0.0
      %5711 = vmatpush1.msra.mxu0 0.0
      %5712 = vmatprep.subr.mxu0 0.0
      %5713 = vmatpush1.msra.mxu0 0.0
      %5714 = vmatprep.subr.mxu0 0.0
      %5715 = vmatpush1.msra.mxu0 0.0
      %5716 = vmatprep.subr.mxu0 0.0
      %5717 = vmatpush1.msra.mxu0 0.0
      %5718 = vmatprep.subr.mxu0 0.0
      %5719 = vmatpush1.msra.mxu0 0.0
      %5720 = vmatprep.subr.mxu0 0.0
      %5721 = vmatpush1.msra.mxu0 0.0
      %5722 = vmatprep.mubr.f32.mxu0 0.0
      %v5723 = vand.u32 %v1665, 4294901760
      %5724 = vmatmul.mubr.f32.gmra.mrb[0].mxu0 %v5723
      %v5725 = vpop.f32.mrb[0].mxu0
      %v5726 = vadd.f32 %v5395, %v5725
      %v5727 = vpop.f32.mrb[0].mxu0
      %5728 = vmatprep.mubr.f32.mxu0 0.0
      %v5729 = vand.u32 %v1668, 4294901760
      %5730 = vmatmul.mubr.f32.gmra.mrb[0].mxu0 %v5729
      %v5731 = vpop.f32.mrb[0].mxu0
      %v5732 = vadd.f32 %v5403, %v5731
      %v5733 = vpop.f32.mrb[0].mxu0
      %5734 = vmatprep.mubr.f32.mxu0 0.0
      %v5735 = vand.u32 %v1671, 4294901760
      %5736 = vmatmul.mubr.f32.gmra.mrb[0].mxu0 %v5735
      %v5737 = vpop.f32.mrb[0].mxu0
      %v5738 = vadd.f32 %v5411, %v5737
      %v5739 = vpop.f32.mrb[0].mxu0
      %5740 = vmatprep.mubr.f32.mxu0 0.0
      %v5741 = vand.u32 %v1674, 4294901760
      %5742 = vmatmul.mubr.f32.gmra.mrb[0].mxu0 %v5741
      %v5743 = vpop.f32.mrb[0].mxu0
      %v5744 = vadd.f32 %v5419, %v5743
      %v5745 = vpop.f32.mrb[0].mxu0
      %5746 = vmatprep.mubr.f32.mxu0 0.0
      %v5747 = vand.u32 %v1677, 4294901760
      %5748 = vmatmul.mubr.f32.gmra.mrb[0].mxu0 %v5747
      %v5749 = vpop.f32.mrb[0].mxu0
      %v5750 = vadd.f32 %v5427, %v5749
      %v5751 = vpop.f32.mrb[0].mxu0
      %5752 = vmatprep.mubr.f32.mxu0 0.0
      %v5753 = vand.u32 %v1680, 4294901760
      %5754 = vmatmul.mubr.f32.gmra.mrb[0].mxu0 %v5753
      %v5755 = vpop.f32.mrb[0].mxu0
      %v5756 = vadd.f32 %v5435, %v5755
      %v5757 = vpop.f32.mrb[0].mxu0
      %5758 = vmatprep.mubr.f32.mxu0 0.0
      %v5759 = vand.u32 %v1683, 4294901760
      %5760 = vmatmul.mubr.f32.gmra.mrb[0].mxu0 %v5759
      %v5761 = vpop.f32.mrb[0].mxu0
      %v5762 = vadd.f32 %v5443, %v5761
      %v5763 = vpop.f32.mrb[0].mxu0
      %5764 = vmatprep.mubr.f32.mxu0 0.0
      %v5765 = vand.u32 %v1686, 4294901760
      %5766 = vmatmul.mubr.f32.gmra.mrb[0].mxu0 %v5765
      %v5767 = vpop.f32.mrb[0].mxu0
      %v5768 = vadd.f32 %v5451, %v5767
      %v5769 = vpop.f32.mrb[0].mxu0
      %5770 = vmatprep.mubr.f32.mxu0 0.0
      %v5771 = vand.u32 %v1689, 4294901760
      %5772 = vmatmul.mubr.f32.gmra.mrb[0].mxu0 %v5771
      %v5773 = vpop.f32.mrb[0].mxu0
      %v5774 = vadd.f32 %v5459, %v5773
      %v5775 = vpop.f32.mrb[0].mxu0
      %5776 = vmatprep.mubr.f32.mxu0 0.0
      %v5777 = vand.u32 %v1692, 4294901760
      %5778 = vmatmul.mubr.f32.gmra.mrb[0].mxu0 %v5777
      %v5779 = vpop.f32.mrb[0].mxu0
      %v5780 = vadd.f32 %v5467, %v5779
      %v5781 = vpop.f32.mrb[0].mxu0
      %5782 = vmatprep.mubr.f32.mxu0 0.0
      %v5783 = vand.u32 %v1695, 4294901760
      %5784 = vmatmul.mubr.f32.gmra.mrb[0].mxu0 %v5783
      %v5785 = vpop.f32.mrb[0].mxu0
      %v5786 = vadd.f32 %v5475, %v5785
      %v5787 = vpop.f32.mrb[0].mxu0
      %5788 = vmatprep.mubr.f32.mxu0 0.0
      %v5789 = vand.u32 %v1698, 4294901760
      %5790 = vmatmul.mubr.f32.gmra.mrb[0].mxu0 %v5789
      %v5791 = vpop.f32.mrb[0].mxu0
      %v5792 = vadd.f32 %v5483, %v5791
      %v5793 = vpop.f32.mrb[0].mxu0
      %5794 = vmatprep.mubr.f32.mxu0 0.0
      %v5795 = vand.u32 %v1701, 4294901760
      %5796 = vmatmul.mubr.f32.gmra.mrb[0].mxu0 %v5795
      %v5797 = vpop.f32.mrb[0].mxu0
      %v5798 = vadd.f32 %v5491, %v5797
      %v5799 = vpop.f32.mrb[0].mxu0
      %5800 = vmatprep.mubr.f32.mxu0 0.0
      %v5801 = vand.u32 %v1704, 4294901760
      %5802 = vmatmul.mubr.f32.gmra.mrb[0].mxu0 %v5801
      %v5803 = vpop.f32.mrb[0].mxu0
      %v5804 = vadd.f32 %v5499, %v5803
      %v5805 = vpop.f32.mrb[0].mxu0
      %5806 = vmatprep.mubr.f32.mxu0 0.0
      %v5807 = vand.u32 %v1707, 4294901760
      %5808 = vmatmul.mubr.f32.gmra.mrb[0].mxu0 %v5807
      %v5809 = vpop.f32.mrb[0].mxu0
      %v5810 = vadd.f32 %v5507, %v5809
      %v5811 = vpop.f32.mrb[0].mxu0
      %5812 = vmatprep.mubr.f32.mxu0 0.0
      %v5813 = vand.u32 %v1710, 4294901760
      %5814 = vmatmul.mubr.f32.gmra.mrb[0].mxu0 %v5813
      %v5815 = vpop.f32.mrb[0].mxu0
      %v5816 = vadd.f32 %v5515, %v5815
      %v5817 = vpop.f32.mrb[0].mxu0
      %5818 = vmatprep.mubr.f32.mxu0 0.0
      %v5819 = vand.u32 %v1713, 4294901760
      %5820 = vmatmul.mubr.f32.gmra.mrb[0].mxu0 %v5819
      %v5821 = vpop.f32.mrb[0].mxu0
      %v5822 = vadd.f32 %v5523, %v5821
      %v5823 = vpop.f32.mrb[0].mxu0
      %5824 = vmatprep.mubr.f32.mxu0 0.0
      %v5825 = vand.u32 %v1716, 4294901760
      %5826 = vmatmul.mubr.f32.gmra.mrb[0].mxu0 %v5825
      %v5827 = vpop.f32.mrb[0].mxu0
      %v5828 = vadd.f32 %v5531, %v5827
      %v5829 = vpop.f32.mrb[0].mxu0
      %5830 = vmatprep.mubr.f32.mxu0 0.0
      %v5831 = vand.u32 %v1719, 4294901760
      %5832 = vmatmul.mubr.f32.gmra.mrb[0].mxu0 %v5831
      %v5833 = vpop.f32.mrb[0].mxu0
      %v5834 = vadd.f32 %v5539, %v5833
      %v5835 = vpop.f32.mrb[0].mxu0
      %5836 = vmatprep.mubr.f32.mxu0 0.0
      %v5837 = vand.u32 %v1722, 4294901760
      %5838 = vmatmul.mubr.f32.gmra.mrb[0].mxu0 %v5837
      %v5839 = vpop.f32.mrb[0].mxu0
      %v5840 = vadd.f32 %v5547, %v5839
      %v5841 = vpop.f32.mrb[0].mxu0
      %5842 = vmatprep.mubr.f32.mxu0 0.0
      %v5843 = vand.u32 %v1725, 4294901760
      %5844 = vmatmul.mubr.f32.gmra.mrb[0].mxu0 %v5843
      %v5845 = vpop.f32.mrb[0].mxu0
      %v5846 = vadd.f32 %v5555, %v5845
      %v5847 = vpop.f32.mrb[0].mxu0
      %5848 = vmatprep.mubr.f32.mxu0 0.0
      %v5849 = vand.u32 %v1728, 4294901760
      %5850 = vmatmul.mubr.f32.gmra.mrb[0].mxu0 %v5849
      %v5851 = vpop.f32.mrb[0].mxu0
      %v5852 = vadd.f32 %v5563, %v5851
      %v5853 = vpop.f32.mrb[0].mxu0
      %5854 = vmatprep.mubr.f32.mxu0 0.0
      %v5855 = vand.u32 %v1731, 4294901760
      %5856 = vmatmul.mubr.f32.gmra.mrb[0].mxu0 %v5855
      %v5857 = vpop.f32.mrb[0].mxu0
      %v5858 = vadd.f32 %v5571, %v5857
      %v5859 = vpop.f32.mrb[0].mxu0
      %5860 = vmatprep.mubr.f32.mxu0 0.0
      %v5861 = vand.u32 %v1734, 4294901760
      %5862 = vmatmul.mubr.f32.gmra.mrb[0].mxu0 %v5861
      %v5863 = vpop.f32.mrb[0].mxu0
      %v5864 = vadd.f32 %v5579, %v5863
      %v5865 = vpop.f32.mrb[0].mxu0
      %5866 = vmatprep.mubr.f32.mxu0 0.0
      %v5867 = vand.u32 %v1737, 4294901760
      %5868 = vmatmul.mubr.f32.gmra.mrb[0].mxu0 %v5867
      %v5869 = vpop.f32.mrb[0].mxu0
      %v5870 = vadd.f32 %v5587, %v5869
      %v5871 = vpop.f32.mrb[0].mxu0
      %5872 = vmatprep.mubr.f32.mxu0 0.0
      %v5873 = vand.u32 %v1740, 4294901760
      %5874 = vmatmul.mubr.f32.gmra.mrb[0].mxu0 %v5873
      %v5875 = vpop.f32.mrb[0].mxu0
      %v5876 = vadd.f32 %v5595, %v5875
      %v5877 = vpop.f32.mrb[0].mxu0
      %5878 = vmatprep.mubr.f32.mxu0 0.0
      %v5879 = vand.u32 %v1743, 4294901760
      %5880 = vmatmul.mubr.f32.gmra.mrb[0].mxu0 %v5879
      %v5881 = vpop.f32.mrb[0].mxu0
      %v5882 = vadd.f32 %v5603, %v5881
      %v5883 = vpop.f32.mrb[0].mxu0
      %5884 = vmatprep.mubr.f32.mxu0 0.0
      %v5885 = vand.u32 %v1746, 4294901760
      %5886 = vmatmul.mubr.f32.gmra.mrb[0].mxu0 %v5885
      %v5887 = vpop.f32.mrb[0].mxu0
      %v5888 = vadd.f32 %v5611, %v5887
      %v5889 = vpop.f32.mrb[0].mxu0
      %5890 = vmatprep.mubr.f32.mxu0 0.0
      %v5891 = vand.u32 %v1749, 4294901760
      %5892 = vmatmul.mubr.f32.gmra.mrb[0].mxu0 %v5891
      %v5893 = vpop.f32.mrb[0].mxu0
      %v5894 = vadd.f32 %v5619, %v5893
      %v5895 = vpop.f32.mrb[0].mxu0
      %5896 = vmatprep.mubr.f32.mxu0 0.0
      %v5897 = vand.u32 %v1752, 4294901760
      %5898 = vmatmul.mubr.f32.gmra.mrb[0].mxu0 %v5897
      %v5899 = vpop.f32.mrb[0].mxu0
      %v5900 = vadd.f32 %v5627, %v5899
      %v5901 = vpop.f32.mrb[0].mxu0
      %5902 = vmatprep.mubr.f32.mxu0 0.0
      %v5903 = vand.u32 %v1755, 4294901760
      %5904 = vmatmul.mubr.f32.gmra.mrb[0].mxu0 %v5903
      %v5905 = vpop.f32.mrb[0].mxu0
      %v5906 = vadd.f32 %v5635, %v5905
      %v5907 = vpop.f32.mrb[0].mxu0
      %5908 = vmatprep.mubr.f32.mxu0 0.0
      %v5909 = vand.u32 %v1758, 4294901760
      %5910 = vmatmul.mubr.f32.gmra.mrb[0].mxu0 %v5909
      %v5911 = vpop.f32.mrb[0].mxu0
      %v5912 = vadd.f32 %v5643, %v5911
      %v5913 = vpop.f32.mrb[0].mxu0
      %5914 = vdwg.mxu0
      %5915 = vmatprep.subr.mxu0 0.0
      %v5916 = vand.u32 %v1660, 4294901760
      %5917 = vmatpush1.msra.mxu0 %v5916
      %5918 = vmatprep.subr.mxu0 0.0
      %v5919 = vand.u32 %v1661, 4294901760
      %5920 = vmatpush1.msra.mxu0 %v5919
      %5921 = vmatprep.subr.mxu0 0.0
      %v5922 = vand.u32 %v1662, 4294901760
      %5923 = vmatpush1.msra.mxu0 %v5922
      %5924 = vmatprep.subr.mxu0 0.0
      %v5925 = vand.u32 %v1663, 4294901760
      %5926 = vmatpush1.msra.mxu0 %v5925
      %5927 = vmatprep.subr.mxu0 0.0
      %5928 = vmatpush1.msra.mxu0 0.0
      %5929 = vmatprep.subr.mxu0 0.0
      %5930 = vmatpush1.msra.mxu0 0.0
      %5931 = vmatprep.subr.mxu0 0.0
      %5932 = vmatpush1.msra.mxu0 0.0
      %5933 = vmatprep.subr.mxu0 0.0
      %5934 = vmatpush1.msra.mxu0 0.0
      %5935 = vmatprep.subr.mxu0 0.0
      %5936 = vmatpush1.msra.mxu0 0.0
      %5937 = vmatprep.subr.mxu0 0.0
      %5938 = vmatpush1.msra.mxu0 0.0
      %5939 = vmatprep.subr.mxu0 0.0
      %5940 = vmatpush1.msra.mxu0 0.0
      %5941 = vmatprep.subr.mxu0 0.0
      %5942 = vmatpush1.msra.mxu0 0.0
      %5943 = vmatprep.subr.mxu0 0.0
      %5944 = vmatpush1.msra.mxu0 0.0
      %5945 = vmatprep.subr.mxu0 0.0
      %5946 = vmatpush1.msra.mxu0 0.0
      %5947 = vmatprep.subr.mxu0 0.0
      %5948 = vmatpush1.msra.mxu0 0.0
      %5949 = vmatprep.subr.mxu0 0.0
      %5950 = vmatpush1.msra.mxu0 0.0
      %5951 = vmatprep.subr.mxu0 0.0
      %5952 = vmatpush1.msra.mxu0 0.0
      %5953 = vmatprep.subr.mxu0 0.0
      %5954 = vmatpush1.msra.mxu0 0.0
      %5955 = vmatprep.subr.mxu0 0.0
      %5956 = vmatpush1.msra.mxu0 0.0
      %5957 = vmatprep.subr.mxu0 0.0
      %5958 = vmatpush1.msra.mxu0 0.0
      %5959 = vmatprep.subr.mxu0 0.0
      %5960 = vmatpush1.msra.mxu0 0.0
      %5961 = vmatprep.subr.mxu0 0.0
      %5962 = vmatpush1.msra.mxu0 0.0
      %5963 = vmatprep.subr.mxu0 0.0
      %5964 = vmatpush1.msra.mxu0 0.0
      %5965 = vmatprep.subr.mxu0 0.0
      %5966 = vmatpush1.msra.mxu0 0.0
      %5967 = vmatprep.subr.mxu0 0.0
      %5968 = vmatpush1.msra.mxu0 0.0
      %5969 = vmatprep.subr.mxu0 0.0
      %5970 = vmatpush1.msra.mxu0 0.0
      %5971 = vmatprep.subr.mxu0 0.0
      %5972 = vmatpush1.msra.mxu0 0.0
      %5973 = vmatprep.subr.mxu0 0.0
      %5974 = vmatpush1.msra.mxu0 0.0
      %5975 = vmatprep.subr.mxu0 0.0
      %5976 = vmatpush1.msra.mxu0 0.0
      %5977 = vmatprep.subr.mxu0 0.0
      %5978 = vmatpush1.msra.mxu0 0.0
      %5979 = vmatprep.subr.mxu0 0.0
      %5980 = vmatpush1.msra.mxu0 0.0
      %5981 = vmatprep.subr.mxu0 0.0
      %5982 = vmatpush1.msra.mxu0 0.0
      %5983 = vmatprep.mubr.f32.mxu0 0.0
      %v5984 = vand.u32 %v1665, 4294901760
      %5985 = vmatmul.mubr.f32.gmra.mrb[0].mxu0 %v5984
      %v5986 = vpop.f32.mrb[0].mxu0
      %v5987 = vadd.f32 %v5726, %v5986
      %v5988 = vpop.f32.mrb[0].mxu0
      %5989 = vmatprep.mubr.f32.mxu0 0.0
      %v5990 = vand.u32 %v1668, 4294901760
      %5991 = vmatmul.mubr.f32.gmra.mrb[0].mxu0 %v5990
      %v5992 = vpop.f32.mrb[0].mxu0
      %v5993 = vadd.f32 %v5732, %v5992
      %v5994 = vpop.f32.mrb[0].mxu0
      %5995 = vmatprep.mubr.f32.mxu0 0.0
      %v5996 = vand.u32 %v1671, 4294901760
      %5997 = vmatmul.mubr.f32.gmra.mrb[0].mxu0 %v5996
      %v5998 = vpop.f32.mrb[0].mxu0
      %v5999 = vadd.f32 %v5738, %v5998
      %v6000 = vpop.f32.mrb[0].mxu0
      %6001 = vmatprep.mubr.f32.mxu0 0.0
      %v6002 = vand.u32 %v1674, 4294901760
      %6003 = vmatmul.mubr.f32.gmra.mrb[0].mxu0 %v6002
      %v6004 = vpop.f32.mrb[0].mxu0
      %v6005 = vadd.f32 %v5744, %v6004
      %v6006 = vpop.f32.mrb[0].mxu0
      %6007 = vmatprep.mubr.f32.mxu0 0.0
      %v6008 = vand.u32 %v1677, 4294901760
      %6009 = vmatmul.mubr.f32.gmra.mrb[0].mxu0 %v6008
      %v6010 = vpop.f32.mrb[0].mxu0
      %v6011 = vadd.f32 %v5750, %v6010
      %v6012 = vpop.f32.mrb[0].mxu0
      %6013 = vmatprep.mubr.f32.mxu0 0.0
      %v6014 = vand.u32 %v1680, 4294901760
      %6015 = vmatmul.mubr.f32.gmra.mrb[0].mxu0 %v6014
      %v6016 = vpop.f32.mrb[0].mxu0
      %v6017 = vadd.f32 %v5756, %v6016
      %v6018 = vpop.f32.mrb[0].mxu0
      %6019 = vmatprep.mubr.f32.mxu0 0.0
      %v6020 = vand.u32 %v1683, 4294901760
      %6021 = vmatmul.mubr.f32.gmra.mrb[0].mxu0 %v6020
      %v6022 = vpop.f32.mrb[0].mxu0
      %v6023 = vadd.f32 %v5762, %v6022
      %v6024 = vpop.f32.mrb[0].mxu0
      %6025 = vmatprep.mubr.f32.mxu0 0.0
      %v6026 = vand.u32 %v1686, 4294901760
      %6027 = vmatmul.mubr.f32.gmra.mrb[0].mxu0 %v6026
      %v6028 = vpop.f32.mrb[0].mxu0
      %v6029 = vadd.f32 %v5768, %v6028
      %v6030 = vpop.f32.mrb[0].mxu0
      %6031 = vmatprep.mubr.f32.mxu0 0.0
      %v6032 = vand.u32 %v1689, 4294901760
      %6033 = vmatmul.mubr.f32.gmra.mrb[0].mxu0 %v6032
      %v6034 = vpop.f32.mrb[0].mxu0
      %v6035 = vadd.f32 %v5774, %v6034
      %v6036 = vpop.f32.mrb[0].mxu0
      %6037 = vmatprep.mubr.f32.mxu0 0.0
      %v6038 = vand.u32 %v1692, 4294901760
      %6039 = vmatmul.mubr.f32.gmra.mrb[0].mxu0 %v6038
      %v6040 = vpop.f32.mrb[0].mxu0
      %v6041 = vadd.f32 %v5780, %v6040
      %v6042 = vpop.f32.mrb[0].mxu0
      %6043 = vmatprep.mubr.f32.mxu0 0.0
      %v6044 = vand.u32 %v1695, 4294901760
      %6045 = vmatmul.mubr.f32.gmra.mrb[0].mxu0 %v6044
      %v6046 = vpop.f32.mrb[0].mxu0
      %v6047 = vadd.f32 %v5786, %v6046
      %v6048 = vpop.f32.mrb[0].mxu0
      %6049 = vmatprep.mubr.f32.mxu0 0.0
      %v6050 = vand.u32 %v1698, 4294901760
      %6051 = vmatmul.mubr.f32.gmra.mrb[0].mxu0 %v6050
      %v6052 = vpop.f32.mrb[0].mxu0
      %v6053 = vadd.f32 %v5792, %v6052
      %v6054 = vpop.f32.mrb[0].mxu0
      %6055 = vmatprep.mubr.f32.mxu0 0.0
      %v6056 = vand.u32 %v1701, 4294901760
      %6057 = vmatmul.mubr.f32.gmra.mrb[0].mxu0 %v6056
      %v6058 = vpop.f32.mrb[0].mxu0
      %v6059 = vadd.f32 %v5798, %v6058
      %v6060 = vpop.f32.mrb[0].mxu0
      %6061 = vmatprep.mubr.f32.mxu0 0.0
      %v6062 = vand.u32 %v1704, 4294901760
      %6063 = vmatmul.mubr.f32.gmra.mrb[0].mxu0 %v6062
      %v6064 = vpop.f32.mrb[0].mxu0
      %v6065 = vadd.f32 %v5804, %v6064
      %v6066 = vpop.f32.mrb[0].mxu0
      %6067 = vmatprep.mubr.f32.mxu0 0.0
      %v6068 = vand.u32 %v1707, 4294901760
      %6069 = vmatmul.mubr.f32.gmra.mrb[0].mxu0 %v6068
      %v6070 = vpop.f32.mrb[0].mxu0
      %v6071 = vadd.f32 %v5810, %v6070
      %v6072 = vpop.f32.mrb[0].mxu0
      %6073 = vmatprep.mubr.f32.mxu0 0.0
      %v6074 = vand.u32 %v1710, 4294901760
      %6075 = vmatmul.mubr.f32.gmra.mrb[0].mxu0 %v6074
      %v6076 = vpop.f32.mrb[0].mxu0
      %v6077 = vadd.f32 %v5816, %v6076
      %v6078 = vpop.f32.mrb[0].mxu0
      %6079 = vmatprep.mubr.f32.mxu0 0.0
      %v6080 = vand.u32 %v1713, 4294901760
      %6081 = vmatmul.mubr.f32.gmra.mrb[0].mxu0 %v6080
      %v6082 = vpop.f32.mrb[0].mxu0
      %v6083 = vadd.f32 %v5822, %v6082
      %v6084 = vpop.f32.mrb[0].mxu0
      %6085 = vmatprep.mubr.f32.mxu0 0.0
      %v6086 = vand.u32 %v1716, 4294901760
      %6087 = vmatmul.mubr.f32.gmra.mrb[0].mxu0 %v6086
      %v6088 = vpop.f32.mrb[0].mxu0
      %v6089 = vadd.f32 %v5828, %v6088
      %v6090 = vpop.f32.mrb[0].mxu0
      %6091 = vmatprep.mubr.f32.mxu0 0.0
      %v6092 = vand.u32 %v1719, 4294901760
      %6093 = vmatmul.mubr.f32.gmra.mrb[0].mxu0 %v6092
      %v6094 = vpop.f32.mrb[0].mxu0
      %v6095 = vadd.f32 %v5834, %v6094
      %v6096 = vpop.f32.mrb[0].mxu0
      %6097 = vmatprep.mubr.f32.mxu0 0.0
      %v6098 = vand.u32 %v1722, 4294901760
      %6099 = vmatmul.mubr.f32.gmra.mrb[0].mxu0 %v6098
      %v6100 = vpop.f32.mrb[0].mxu0
      %v6101 = vadd.f32 %v5840, %v6100
      %v6102 = vpop.f32.mrb[0].mxu0
      %6103 = vmatprep.mubr.f32.mxu0 0.0
      %v6104 = vand.u32 %v1725, 4294901760
      %6105 = vmatmul.mubr.f32.gmra.mrb[0].mxu0 %v6104
      %v6106 = vpop.f32.mrb[0].mxu0
      %v6107 = vadd.f32 %v5846, %v6106
      %v6108 = vpop.f32.mrb[0].mxu0
      %6109 = vmatprep.mubr.f32.mxu0 0.0
      %v6110 = vand.u32 %v1728, 4294901760
      %6111 = vmatmul.mubr.f32.gmra.mrb[0].mxu0 %v6110
      %v6112 = vpop.f32.mrb[0].mxu0
      %v6113 = vadd.f32 %v5852, %v6112
      %v6114 = vpop.f32.mrb[0].mxu0
      %6115 = vmatprep.mubr.f32.mxu0 0.0
      %v6116 = vand.u32 %v1731, 4294901760
      %6117 = vmatmul.mubr.f32.gmra.mrb[0].mxu0 %v6116
      %v6118 = vpop.f32.mrb[0].mxu0
      %v6119 = vadd.f32 %v5858, %v6118
      %v6120 = vpop.f32.mrb[0].mxu0
      %6121 = vmatprep.mubr.f32.mxu0 0.0
      %v6122 = vand.u32 %v1734, 4294901760
      %6123 = vmatmul.mubr.f32.gmra.mrb[0].mxu0 %v6122
      %v6124 = vpop.f32.mrb[0].mxu0
      %v6125 = vadd.f32 %v5864, %v6124
      %v6126 = vpop.f32.mrb[0].mxu0
      %6127 = vmatprep.mubr.f32.mxu0 0.0
      %v6128 = vand.u32 %v1737, 4294901760
      %6129 = vmatmul.mubr.f32.gmra.mrb[0].mxu0 %v6128
      %v6130 = vpop.f32.mrb[0].mxu0
      %v6131 = vadd.f32 %v5870, %v6130
      %v6132 = vpop.f32.mrb[0].mxu0
      %6133 = vmatprep.mubr.f32.mxu0 0.0
      %v6134 = vand.u32 %v1740, 4294901760
      %6135 = vmatmul.mubr.f32.gmra.mrb[0].mxu0 %v6134
      %v6136 = vpop.f32.mrb[0].mxu0
      %v6137 = vadd.f32 %v5876, %v6136
      %v6138 = vpop.f32.mrb[0].mxu0
      %6139 = vmatprep.mubr.f32.mxu0 0.0
      %v6140 = vand.u32 %v1743, 4294901760
      %6141 = vmatmul.mubr.f32.gmra.mrb[0].mxu0 %v6140
      %v6142 = vpop.f32.mrb[0].mxu0
      %v6143 = vadd.f32 %v5882, %v6142
      %v6144 = vpop.f32.mrb[0].mxu0
      %6145 = vmatprep.mubr.f32.mxu0 0.0
      %v6146 = vand.u32 %v1746, 4294901760
      %6147 = vmatmul.mubr.f32.gmra.mrb[0].mxu0 %v6146
      %v6148 = vpop.f32.mrb[0].mxu0
      %v6149 = vadd.f32 %v5888, %v6148
      %v6150 = vpop.f32.mrb[0].mxu0
      %6151 = vmatprep.mubr.f32.mxu0 0.0
      %v6152 = vand.u32 %v1749, 4294901760
      %6153 = vmatmul.mubr.f32.gmra.mrb[0].mxu0 %v6152
      %v6154 = vpop.f32.mrb[0].mxu0
      %v6155 = vadd.f32 %v5894, %v6154
      %v6156 = vpop.f32.mrb[0].mxu0
      %6157 = vmatprep.mubr.f32.mxu0 0.0
      %v6158 = vand.u32 %v1752, 4294901760
      %6159 = vmatmul.mubr.f32.gmra.mrb[0].mxu0 %v6158
      %v6160 = vpop.f32.mrb[0].mxu0
      %v6161 = vadd.f32 %v5900, %v6160
      %v6162 = vpop.f32.mrb[0].mxu0
      %6163 = vmatprep.mubr.f32.mxu0 0.0
      %v6164 = vand.u32 %v1755, 4294901760
      %6165 = vmatmul.mubr.f32.gmra.mrb[0].mxu0 %v6164
      %v6166 = vpop.f32.mrb[0].mxu0
      %v6167 = vadd.f32 %v5906, %v6166
      %v6168 = vpop.f32.mrb[0].mxu0
      %6169 = vmatprep.mubr.f32.mxu0 0.0
      %v6170 = vand.u32 %v1758, 4294901760
      %6171 = vmatmul.mubr.f32.gmra.mrb[0].mxu0 %v6170
      %v6172 = vpop.f32.mrb[0].mxu0
      %v6173 = vadd.f32 %v5912, %v6172
      %v6174 = vpop.f32.mrb[0].mxu0
      %6175 = vdwg.mxu0
      %v6176 = vsel %vm214, %v5987, 0.0
      %v6177 = vsel %vm214, %v5993, 0.0
      %v6178 = vadd.f32 %v6176, %v6177
      %v6179 = vsel %vm214, %v5999, 0.0
      %v6180 = vadd.f32 %v6178, %v6179
      %v6181 = vsel %vm214, %v6005, 0.0
      %v6182 = vadd.f32 %v6180, %v6181
      %v6183 = vsel %vm214, %v6011, 0.0
      %v6184 = vadd.f32 %v6182, %v6183
      %v6185 = vsel %vm214, %v6017, 0.0
      %v6186 = vadd.f32 %v6184, %v6185
      %v6187 = vsel %vm214, %v6023, 0.0
      %v6188 = vadd.f32 %v6186, %v6187
      %v6189 = vsel %vm214, %v6029, 0.0
      %v6190 = vadd.f32 %v6188, %v6189
      %v6191 = vsel %vm214, %v6035, 0.0
      %v6192 = vadd.f32 %v6190, %v6191
      %v6193 = vsel %vm214, %v6041, 0.0
      %v6194 = vadd.f32 %v6192, %v6193
      %v6195 = vsel %vm214, %v6047, 0.0
      %v6196 = vadd.f32 %v6194, %v6195
      %v6197 = vsel %vm214, %v6053, 0.0
      %v6198 = vadd.f32 %v6196, %v6197
      %v6199 = vsel %vm214, %v6059, 0.0
      %v6200 = vadd.f32 %v6198, %v6199
      %v6201 = vsel %vm214, %v6065, 0.0
      %v6202 = vadd.f32 %v6200, %v6201
      %v6203 = vsel %vm214, %v6071, 0.0
      %v6204 = vadd.f32 %v6202, %v6203
      %v6205 = vsel %vm214, %v6077, 0.0
      %v6206 = vadd.f32 %v6204, %v6205
      %v6207 = vsel %vm214, %v6083, 0.0
      %v6208 = vadd.f32 %v6206, %v6207
      %v6209 = vsel %vm214, %v6089, 0.0
      %v6210 = vadd.f32 %v6208, %v6209
      %v6211 = vsel %vm214, %v6095, 0.0
      %v6212 = vadd.f32 %v6210, %v6211
      %v6213 = vsel %vm214, %v6101, 0.0
      %v6214 = vadd.f32 %v6212, %v6213
      %v6215 = vsel %vm214, %v6107, 0.0
      %v6216 = vadd.f32 %v6214, %v6215
      %v6217 = vsel %vm214, %v6113, 0.0
      %v6218 = vadd.f32 %v6216, %v6217
      %v6219 = vsel %vm214, %v6119, 0.0
      %v6220 = vadd.f32 %v6218, %v6219
      %v6221 = vsel %vm214, %v6125, 0.0
      %v6222 = vadd.f32 %v6220, %v6221
      %v6223 = vsel %vm214, %v6131, 0.0
      %v6224 = vadd.f32 %v6222, %v6223
      %v6225 = vsel %vm214, %v6137, 0.0
      %v6226 = vadd.f32 %v6224, %v6225
      %v6227 = vsel %vm214, %v6143, 0.0
      %v6228 = vadd.f32 %v6226, %v6227
      %v6229 = vsel %vm214, %v6149, 0.0
      %v6230 = vadd.f32 %v6228, %v6229
      %v6231 = vsel %vm214, %v6155, 0.0
      %v6232 = vadd.f32 %v6230, %v6231
      %v6233 = vsel %vm214, %v6161, 0.0
      %v6234 = vadd.f32 %v6232, %v6233
      %v6235 = vsel %vm214, %v6167, 0.0
      %v6236 = vadd.f32 %v6234, %v6235
      %v6237 = vsel %vm214, %v6173, 0.0
      %v6238 = vadd.f32 %v6236, %v6237
      %v6239 = vrot.slane %v6238, 4
      %v6240 = vadd.f32 %v6238, %v6239
      %v6241 = vrot.slane %v6240, 2
      %v6242 = vadd.f32 %v6240, %v6241
      %v6243 = vrot.slane %v6242, 1
      %v6244 = vadd.f32 %v6242, %v6243
      %vm6245 = vcmask 253952
      %6246 = vst.msk [vmem:[%s181] sm:$0x1] %vm6245, %v6244
      %v6247 = vmul.f32 %v5987, %v5987
      %v6248 = vmul.f32 %v5993, %v5993
      %v6249 = vmul.f32 %v5999, %v5999
      %v6250 = vmul.f32 %v6005, %v6005
      %v6251 = vmul.f32 %v6011, %v6011
      %v6252 = vmul.f32 %v6017, %v6017
      %v6253 = vmul.f32 %v6023, %v6023
      %v6254 = vmul.f32 %v6029, %v6029
      %v6255 = vmul.f32 %v6035, %v6035
      %v6256 = vmul.f32 %v6041, %v6041
      %v6257 = vmul.f32 %v6047, %v6047
      %v6258 = vmul.f32 %v6053, %v6053
      %v6259 = vmul.f32 %v6059, %v6059
      %v6260 = vmul.f32 %v6065, %v6065
      %v6261 = vmul.f32 %v6071, %v6071
      %v6262 = vmul.f32 %v6077, %v6077
      %v6263 = vmul.f32 %v6083, %v6083
      %v6264 = vmul.f32 %v6089, %v6089
      %v6265 = vmul.f32 %v6095, %v6095
      %v6266 = vmul.f32 %v6101, %v6101
      %v6267 = vmul.f32 %v6107, %v6107
      %v6268 = vmul.f32 %v6113, %v6113
      %v6269 = vmul.f32 %v6119, %v6119
      %v6270 = vmul.f32 %v6125, %v6125
      %v6271 = vmul.f32 %v6131, %v6131
      %v6272 = vmul.f32 %v6137, %v6137
      %v6273 = vmul.f32 %v6143, %v6143
      %v6274 = vmul.f32 %v6149, %v6149
      %v6275 = vmul.f32 %v6155, %v6155
      %v6276 = vmul.f32 %v6161, %v6161
      %v6277 = vmul.f32 %v6167, %v6167
      %v6278 = vmul.f32 %v6173, %v6173
      %v6279 = vsel %vm214, %v6247, 0.0
      %v6280 = vsel %vm214, %v6248, 0.0
      %v6281 = vadd.f32 %v6279, %v6280
      %v6282 = vsel %vm214, %v6249, 0.0
      %v6283 = vadd.f32 %v6281, %v6282
      %v6284 = vsel %vm214, %v6250, 0.0
      %v6285 = vadd.f32 %v6283, %v6284
      %v6286 = vsel %vm214, %v6251, 0.0
      %v6287 = vadd.f32 %v6285, %v6286
      %v6288 = vsel %vm214, %v6252, 0.0
      %v6289 = vadd.f32 %v6287, %v6288
      %v6290 = vsel %vm214, %v6253, 0.0
      %v6291 = vadd.f32 %v6289, %v6290
      %v6292 = vsel %vm214, %v6254, 0.0
      %v6293 = vadd.f32 %v6291, %v6292
      %v6294 = vsel %vm214, %v6255, 0.0
      %v6295 = vadd.f32 %v6293, %v6294
      %v6296 = vsel %vm214, %v6256, 0.0
      %v6297 = vadd.f32 %v6295, %v6296
      %v6298 = vsel %vm214, %v6257, 0.0
      %v6299 = vadd.f32 %v6297, %v6298
      %v6300 = vsel %vm214, %v6258, 0.0
      %v6301 = vadd.f32 %v6299, %v6300
      %v6302 = vsel %vm214, %v6259, 0.0
      %v6303 = vadd.f32 %v6301, %v6302
      %v6304 = vsel %vm214, %v6260, 0.0
      %v6305 = vadd.f32 %v6303, %v6304
      %v6306 = vsel %vm214, %v6261, 0.0
      %v6307 = vadd.f32 %v6305, %v6306
      %v6308 = vsel %vm214, %v6262, 0.0
      %v6309 = vadd.f32 %v6307, %v6308
      %v6310 = vsel %vm214, %v6263, 0.0
      %v6311 = vadd.f32 %v6309, %v6310
      %v6312 = vsel %vm214, %v6264, 0.0
      %v6313 = vadd.f32 %v6311, %v6312
      %v6314 = vsel %vm214, %v6265, 0.0
      %v6315 = vadd.f32 %v6313, %v6314
      %v6316 = vsel %vm214, %v6266, 0.0
      %v6317 = vadd.f32 %v6315, %v6316
      %v6318 = vsel %vm214, %v6267, 0.0
      %v6319 = vadd.f32 %v6317, %v6318
      %v6320 = vsel %vm214, %v6268, 0.0
      %v6321 = vadd.f32 %v6319, %v6320
      %v6322 = vsel %vm214, %v6269, 0.0
      %v6323 = vadd.f32 %v6321, %v6322
      %v6324 = vsel %vm214, %v6270, 0.0
      %v6325 = vadd.f32 %v6323, %v6324
      %v6326 = vsel %vm214, %v6271, 0.0
      %v6327 = vadd.f32 %v6325, %v6326
      %v6328 = vsel %vm214, %v6272, 0.0
      %v6329 = vadd.f32 %v6327, %v6328
      %v6330 = vsel %vm214, %v6273, 0.0
      %v6331 = vadd.f32 %v6329, %v6330
      %v6332 = vsel %vm214, %v6274, 0.0
      %v6333 = vadd.f32 %v6331, %v6332
      %v6334 = vsel %vm214, %v6275, 0.0
      %v6335 = vadd.f32 %v6333, %v6334
      %v6336 = vsel %vm214, %v6276, 0.0
      %v6337 = vadd.f32 %v6335, %v6336
      %v6338 = vsel %vm214, %v6277, 0.0
      %v6339 = vadd.f32 %v6337, %v6338
      %v6340 = vsel %vm214, %v6278, 0.0
      %v6341 = vadd.f32 %v6339, %v6340
      %v6342 = vrot.slane %v6341, 4
      %v6343 = vadd.f32 %v6341, %v6342
      %v6344 = vrot.slane %v6343, 2
      %v6345 = vadd.f32 %v6343, %v6344
      %v6346 = vrot.slane %v6345, 1
      %v6347 = vadd.f32 %v6345, %v6346
      %6348 = vst.msk [vmem:[%s181 + $0x1] sm:$0x1] %vm6245, %v6347
      %6349 = vst.msk [vmem:[%s177] sm:$0xff] %vm214, %v5987
      %6350 = vst.msk [vmem:[%s177 + $0x8] sm:$0xff] %vm214, %v5993
      %6351 = vst.msk [vmem:[%s177 + $0x10] sm:$0xff] %vm214, %v5999
      %6352 = vst.msk [vmem:[%s177 + $0x18] sm:$0xff] %vm214, %v6005
      %6353 = vst.msk [vmem:[%s177 + $0x20] sm:$0xff] %vm214, %v6011
      %6354 = vst.msk [vmem:[%s177 + $0x28] sm:$0xff] %vm214, %v6017
      %6355 = vst.msk [vmem:[%s177 + $0x30] sm:$0xff] %vm214, %v6023
      %6356 = vst.msk [vmem:[%s177 + $0x38] sm:$0xff] %vm214, %v6029
      %6357 = vst.msk [vmem:[%s177 + $0x40] sm:$0xff] %vm214, %v6035
      %6358 = vst.msk [vmem:[%s177 + $0x48] sm:$0xff] %vm214, %v6041
      %6359 = vst.msk [vmem:[%s177 + $0x50] sm:$0xff] %vm214, %v6047
      %6360 = vst.msk [vmem:[%s177 + $0x58] sm:$0xff] %vm214, %v6053
      %6361 = vst.msk [vmem:[%s177 + $0x60] sm:$0xff] %vm214, %v6059
      %6362 = vst.msk [vmem:[%s177 + $0x68] sm:$0xff] %vm214, %v6065
      %6363 = vst.msk [vmem:[%s177 + $0x70] sm:$0xff] %vm214, %v6071
      %6364 = vst.msk [vmem:[%s177 + $0x78] sm:$0xff] %vm214, %v6077
      %6365 = vst.msk [vmem:[%s177 + $0x80] sm:$0xff] %vm214, %v6083
      %6366 = vst.msk [vmem:[%s177 + $0x88] sm:$0xff] %vm214, %v6089
      %6367 = vst.msk [vmem:[%s177 + $0x90] sm:$0xff] %vm214, %v6095
      %6368 = vst.msk [vmem:[%s177 + $0x98] sm:$0xff] %vm214, %v6101
      %6369 = vst.msk [vmem:[%s177 + $0xa0] sm:$0xff] %vm214, %v6107
      %6370 = vst.msk [vmem:[%s177 + $0xa8] sm:$0xff] %vm214, %v6113
      %6371 = vst.msk [vmem:[%s177 + $0xb0] sm:$0xff] %vm214, %v6119
      %6372 = vst.msk [vmem:[%s177 + $0xb8] sm:$0xff] %vm214, %v6125
      %6373 = vst.msk [vmem:[%s177 + $0xc0] sm:$0xff] %vm214, %v6131
      %6374 = vst.msk [vmem:[%s177 + $0xc8] sm:$0xff] %vm214, %v6137
      %6375 = vst.msk [vmem:[%s177 + $0xd0] sm:$0xff] %vm214, %v6143
      %6376 = vst.msk [vmem:[%s177 + $0xd8] sm:$0xff] %vm214, %v6149
      %6377 = vst.msk [vmem:[%s177 + $0xe0] sm:$0xff] %vm214, %v6155
      %6378 = vst.msk [vmem:[%s177 + $0xe8] sm:$0xff] %vm214, %v6161
      %6379 = vst.msk [vmem:[%s177 + $0xf0] sm:$0xff] %vm214, %v6167
      %6380 = vst.msk [vmem:[%s177 + $0xf8] sm:$0xff] %vm214, %v6173
      %p6381 = scmp.lt.s32.totalorder %s15, 1
      %s6382 = scalar_select %p6381, %s15, 1
      %s6383 = smul.addr %s6382, 32
      %s6384 = smul.addr %s6383, 8
      %s6385 = scalar_lea.vmem %s2, %s6384
      %p6386 = scmp.lt.s32.totalorder %s15, 1
      %s6387 = scalar_select %p6386, %s15, 1
      %s6388 = smul.addr %s6387, 2
      %s6389 = scalar_lea.vmem %s3, %s6388
      // Predicated region
      $region29: #{residual_block_forward.4} parent=27 // pred_check
        %p6390 = pneg %p80
      $region30: #{residual_block_forward.4} parent=27 // pred_check_branch
        %6392 = sbr.rel (%p6390) target = $region32
      $region31: #{residual_block_forward.4} parent=27 // pred_region
        _
      $region32: #{residual_block_forward.4} parent=27 // pred_fallthru
        _
      // Predicated region
      $region33: #{residual_block_forward.4} parent=27 // pred_check
        %p6393 = pneg %p106
      $region34: #{residual_block_forward.4} parent=27 // pred_check_branch
        %6395 = sbr.rel (%p6393) target = $region36
      $region35: #{residual_block_forward.4} parent=27 // pred_region
        _
      $region36: #{residual_block_forward.4} parent=27 // pred_fallthru
        _
    $region28: #{residual_block_forward.4} parent=5 // pred_fallthru
      _
    %p6396 = scmp.le.s32.totalorder 2, %s10
    // Predicated region
    $region37: #{residual_block_forward.4} parent=5 // pred_check
      %p6397 = pneg %p6396
    $region38: #{residual_block_forward.4} parent=5 // pred_check_branch
      %6399 = sbr.rel (%p6397) target = $region40
    $region39: #{residual_block_forward.4} parent=5 // pred_region
      %s6400 = ssub.s32 %s10, 2
      // Predicated region
      $region41: #{residual_block_forward.4} parent=39 // pred_check
        %p6401 = pneg %p86
      $region42: #{residual_block_forward.4} parent=39 // pred_check_branch
        %6403 = sbr.rel (%p6401) target = $region44
      $region43: #{residual_block_forward.4} parent=39 // pred_region
        %p6404 = scmp.lt.s32.totalorder %s16, 1
        %s6405 = scalar_select %p6404, %s16, 1
        %s6406 = smul.addr %s6405, 32
        %s6407 = smul.addr %s6406, 8
        %s6408 = scalar_lea.vmem %s2, %s6407
      $region44: #{residual_block_forward.4} parent=39 // pred_fallthru
        _
      // Predicated region
      $region45: #{residual_block_forward.4} parent=39 // pred_check
        %p6409 = pneg %p112
      $region46: #{residual_block_forward.4} parent=39 // pred_check_branch
        %6411 = sbr.rel (%p6409) target = $region48
      $region47: #{residual_block_forward.4} parent=39 // pred_region
        %p6412 = scmp.lt.s32.totalorder %s16, 1
        %s6413 = scalar_select %p6412, %s16, 1
        %s6414 = smul.addr %s6413, 2
        %s6415 = scalar_lea.vmem %s3, %s6414
      $region48: #{residual_block_forward.4} parent=39 // pred_fallthru
        _
    $region40: #{residual_block_forward.4} parent=5 // pred_fallthru
      _
  $region6: #{residual_block_forward.4} parent=0 // loop_footer
    %s14 = sadd.s32 1, %s10
  $region7: #{residual_block_forward.4} parent=0 // loop_footer_branch
    %9 = sbr.rel target = $region3
  $region8: #{residual_block_forward.4} parent=0 // loop_exit
    _

</llo_original>
